<compile_context>
chip_gen: v7x
topology: tpu7x:2x2x1
jax: 0.10.0
libtpu: 0.0.40
codegen_flags: <defaults>
</compile_context>

<pallas_src>
import jax
import jax.numpy as jnp
import numpy as np
from jax.experimental import pallas as pl
from jax.experimental.pallas import tpu as pltpu


def _round_up(v, m):
    return (v + m - 1) // m * m


# ----------------------------- Pallas kernels ------------------------------


def _make_embed_kernel(num_space):
    """One-time hoisted kernel: per-space voc/seen embeddings (weight-only)."""

    def kernel(*refs):
        voc = refs[0][...]                      # (V, SEM) f32, rows unit-norm
        vec = refs[1][...]                      # (K, SEM) f32
        out0 = 2 + 2 * num_space
        for s in range(num_space):
            ws = refs[2 + 2 * s][...]           # (SEM, d)
            bs = refs[3 + 2 * s][...]           # (1, d)
            # voc_emb = F.normalize(s2e(voc.T).T, 2, 0) -> rows of (V, d)
            ve = jnp.dot(voc, ws, preferred_element_type=jnp.float32) + bs
            inv = jax.lax.rsqrt(
                jnp.maximum(jnp.sum(ve * ve, axis=1, keepdims=True), 1e-24))
            refs[out0 + 2 * s][...] = ve * inv                     # (V, d)
            # seen_emb = s2e(vec.T).T (UN-normalized, as used for space_score)
            refs[out0 + 2 * s + 1][...] = (
                jnp.dot(vec, ws, preferred_element_type=jnp.float32) + bs)

    return kernel


def _make_fused_kernel(num_space):
    """Fused fc_reg + FFN + all embedding spaces + running max.

    refs layout:
      inputs : x, w_reg, b_reg, w_ffn0, b_ffn0, w_ffn1, b_ffn1,
               then per space: w_v0, b_v0, w_v1, b_v1, w_att, b_att,
                               voc_emb, seen_emb
      outputs: bbox_out (TN, R_pad), score_out (TN, K_pad)
      scratch: bbox_acc (TN, R_pad) f32, h0_acc (TN, F) f32
    """
    n_in = 7 + 8 * num_space

    def kernel(*refs):
        (x_ref, wr_ref, br_ref, w0_ref, b0_ref, w1_ref, b1_ref) = refs[:7]
        space_refs = [refs[7 + 8 * s: 7 + 8 * (s + 1)] for s in range(num_space)]
        bbox_ref = refs[n_in]
        score_ref = refs[n_in + 1]
        bbox_acc = refs[n_in + 2]
        h0_acc = refs[n_in + 3]

        k = pl.program_id(1)

        @pl.when(k == 0)
        def _init():
            bbox_acc[...] = jnp.zeros_like(bbox_acc)
            h0_acc[...] = jnp.zeros_like(h0_acc)

        # Reduction over the flattened RoI-feature (d_in) axis: the two big
        # matmuls.  bf16 operands, f32 accumulation.
        x = x_ref[...]                                        # bf16 (TN, TK)
        bbox_acc[...] += jnp.dot(x, wr_ref[...],
                                 preferred_element_type=jnp.float32)
        h0_acc[...] += jnp.dot(x, w0_ref[...],
                               preferred_element_type=jnp.float32)

        @pl.when(k == pl.num_programs(1) - 1)
        def _finalize():
            # fc_reg
            bbox_ref[...] = bbox_acc[...] + br_ref[...]
            # FFN: Linear + ReLU, Linear + ReLU  (small -> stay f32)
            h = jnp.maximum(h0_acc[...] + b0_ref[...], 0.0)
            h = jnp.dot(h, w1_ref[...],
                        preferred_element_type=jnp.float32) + b1_ref[...]
            feat = jnp.maximum(h, 0.0)                         # (TN, F) f32

            res = None
            for s in range(num_space):
                wv0, bv0, wv1, bv1, wa, ba, voce, seene = space_refs[s]
                # vis_emb = v2e(compressed_feature): two stacked Linears
                hv = jnp.dot(feat, wv0[...],
                             preferred_element_type=jnp.float32) + bv0[...]
                vis = jnp.dot(hv, wv1[...],
                              preferred_element_type=jnp.float32) + bv1[...]
                # semantic_score = vis_emb @ voc_emb.T  (contract embed dim)
                sem = jax.lax.dot_general(
                    vis, voce[...], (((1,), (1,)), ((), ())),
                    preferred_element_type=jnp.float32)        # (TN, V)
                # rebuilt_fea = att(semantic_score)
                reb = jnp.dot(sem, wa[...],
                              preferred_element_type=jnp.float32) + ba[...]
                # space_score = rebuilt @ seen_emb.T
                sc = jax.lax.dot_general(
                    reb, seene[...], (((1,), (1,)), ((), ())),
                    preferred_element_type=jnp.float32)        # (TN, K_pad)
                # conclude_multi_res: running element-wise max
                res = sc if res is None else jnp.maximum(res, sc)
            score_ref[...] = res

    return kernel


# ------------------------------ JAX wrapper --------------------------------


def mes_head_forward(x, params):
    """Forward pass; returns (res_score, bbox_pred)."""
    p = params
    num_space = len(p["spaces"])
    N = x.shape[0]
    x_flat = x.reshape(N, -1).astype(jnp.float32)  # == torch x.view(N, -1)
    D = x_flat.shape[1]
    F_out = p["w_ffn1"].shape[1]
    K = p["vec_t"].shape[0]
    V = p["voc_t"].shape[0]
    out_reg = p["w_reg"].shape[1]

    vmem = pl.BlockSpec(memory_space=pltpu.MemorySpace.VMEM)

    # --- 1. one-time, data-independent embedding precompute (hoisted) ------
    embed_in = [p["voc_t"], p["vec_t"]]
    embed_out_shape = []
    for sp in p["spaces"]:
        d = sp["w_s2e"].shape[1]
        embed_in += [sp["w_s2e"], sp["b_s2e"]]
        embed_out_shape += [jax.ShapeDtypeStruct((V, d), jnp.float32),
                            jax.ShapeDtypeStruct((K, d), jnp.float32)]
    embeds = pl.pallas_call(
        _make_embed_kernel(num_space),
        out_shape=tuple(embed_out_shape),
        in_specs=[vmem] * len(embed_in),
        out_specs=tuple([vmem] * len(embed_out_shape)),
    )(*embed_in)
    voc_embs = embeds[0::2]
    seen_embs = embeds[1::2]

    # --- 2. fused backbone + multi-space + max-combine kernel --------------
    bf16 = jnp.bfloat16
    K_pad = _round_up(K, 128)                 # lane-dense score output
    R_pad = _round_up(out_reg, 128)           # lane-dense bbox output
    tile_n = min(128, _round_up(N, 8))        # RoI tile (parallel axis)
    n_pad = _round_up(N, tile_n)
    tile_k = min(512, _round_up(D, 128))      # d_in reduction tile
    d_pad = _round_up(D, tile_k)

    x_p = jnp.pad(x_flat, ((0, n_pad - N), (0, d_pad - D))).astype(bf16)
    w_reg = jnp.pad(p["w_reg"],
                    ((0, d_pad - D), (0, R_pad - out_reg))).astype(bf16)
    b_reg = jnp.pad(p["b_reg"], ((0, 0), (0, R_pad - out_reg)))
    w_f0 = jnp.pad(p["w_ffn0"], ((0, d_pad - D), (0, 0))).astype(bf16)

    inputs = [x_p, w_reg, b_reg, w_f0, p["b_ffn0"], p["w_ffn1"], p["b_ffn1"]]
    in_specs = [
        pl.BlockSpec((tile_n, tile_k), lambda i, k: (i, k)),
        pl.BlockSpec((tile_k, R_pad), lambda i, k: (k, 0)),
        pl.BlockSpec((1, R_pad), lambda i, k: (0, 0)),
        pl.BlockSpec((tile_k, F_out), lambda i, k: (k, 0)),
        pl.BlockSpec((1, F_out), lambda i, k: (0, 0)),
        pl.BlockSpec((F_out, F_out), lambda i, k: (0, 0)),
        pl.BlockSpec((1, F_out), lambda i, k: (0, 0)),
    ]
    for s, sp in enumerate(p["spaces"]):
        d = sp["w_s2e"].shape[1]
        seen_p = jnp.pad(seen_embs[s], ((0, K_pad - K), (0, 0)))
        inputs += [sp["w_v0"], sp["b_v0"], sp["w_v1"], sp["b_v1"],
                   sp["w_att"], sp["b_att"], voc_embs[s], seen_p]
        in_specs += [
            pl.BlockSpec((F_out, 2 * d), lambda i, k: (0, 0)),
            pl.BlockSpec((1, 2 * d), lambda i, k: (0, 0)),
            pl.BlockSpec((2 * d, d), lambda i, k: (0, 0)),
            pl.BlockSpec((1, d), lambda i, k: (0, 0)),
            pl.BlockSpec((V, d), lambda i, k: (0, 0)),
            pl.BlockSpec((1, d), lambda i, k: (0, 0)),
            pl.BlockSpec((V, d), lambda i, k: (0, 0)),
            pl.BlockSpec((K_pad, d), lambda i, k: (0, 0)),
        ]

    bbox_p, score_p = pl.pallas_call(
        _make_fused_kernel(num_space),
        out_shape=(jax.ShapeDtypeStruct((n_pad, R_pad), jnp.float32),
                   jax.ShapeDtypeStruct((n_pad, K_pad), jnp.float32)),
        grid=(n_pad // tile_n, d_pad // tile_k),
        in_specs=in_specs,
        out_specs=(pl.BlockSpec((tile_n, R_pad), lambda i, k: (i, 0)),
                   pl.BlockSpec((tile_n, K_pad), lambda i, k: (i, 0))),
        scratch_shapes=[pltpu.VMEM((tile_n, R_pad), jnp.float32),
                        pltpu.VMEM((tile_n, F_out), jnp.float32)],
        compiler_params=pltpu.CompilerParams(
            dimension_semantics=("parallel", "arbitrary")),
    )(*inputs)

    res_score = score_p[:N, :K]
    bbox_pred = bbox_p[:N, :out_reg]
    return res_score, bbox_pred


def mes_head_reference(x, params):
    """Plain-JAX (f32) reference for numerical checking."""
    p = params
    N = x.shape[0]
    xf = x.reshape(N, -1).astype(jnp.float32)
    bbox = xf @ p["w_reg"] + p["b_reg"]
    h = jnp.maximum(xf @ p["w_ffn0"] + p["b_ffn0"], 0.0)
    feat = jnp.maximum(h @ p["w_ffn1"] + p["b_ffn1"], 0.0)
    scores = []
    for sp in p["spaces"]:
        vis = (feat @ sp["w_v0"] + sp["b_v0"]) @ sp["w_v1"] + sp["b_v1"]
        voc_emb = p["voc_t"] @ sp["w_s2e"] + sp["b_s2e"]
        voc_emb = voc_emb / jnp.maximum(
            jnp.linalg.norm(voc_emb, axis=1, keepdims=True), 1e-12)
        sem_score = vis @ voc_emb.T
        rebuilt = sem_score @ sp["w_att"] + sp["b_att"]
        seen = p["vec_t"] @ sp["w_s2e"] + sp["b_s2e"]
        scores.append(rebuilt @ seen.T)
    res = scores[0]
    for s in scores[1:]:
        res = jnp.maximum(res, s)
    return res, bbox


def init_params(key, *, in_channels, roi_feat_size, num_seen_classes,
                semantic_dims, fc_out_channels, base_space_dimension,
                num_space, voc_size, more_larger_space=True, scale=0.1):
    """Deterministic synthetic parameters matching MESHead.__init__ shapes."""
    d_in = in_channels * roi_feat_size * roi_feat_size

    def linear(k, fan_in, fan_out):
        kw, kb = jax.random.split(k)
        return (scale * jax.random.normal(kw, (fan_in, fan_out), jnp.float32),
                scale * jax.random.normal(kb, (1, fan_out), jnp.float32))

    keys = iter(jax.random.split(key, 4 + 4 * num_space))

    w_reg, b_reg = linear(next(keys), d_in, 4 * num_seen_classes)      # fc_reg
    w_f0, b_f0 = linear(next(keys), d_in, fc_out_channels)             # FFN[0]
    w_f1, b_f1 = linear(next(keys), fc_out_channels, fc_out_channels)  # FFN[1]

    # Fixed word-vector tables (stand-ins for the voc/vec .txt files):
    # voc (SEM, V), L2-normalized along dim 0 as in __init__; vec (SEM, K).
    k_voc, k_vec = jax.random.split(next(keys))
    voc = jax.random.normal(k_voc, (semantic_dims, voc_size), jnp.float32)
    voc = voc / jnp.maximum(jnp.linalg.norm(voc, axis=0, keepdims=True), 1e-12)
    vec = jax.random.normal(k_vec, (semantic_dims, num_seen_classes), jnp.float32)

    spaces = []
    base = 1
    for _ in range(num_space):
        d = base_space_dimension * base
        w_v0, b_v0 = linear(next(keys), fc_out_channels, 2 * d)  # v2e layer 0
        w_v1, b_v1 = linear(next(keys), 2 * d, d)                # v2e layer 1
        w_s2e, b_s2e = linear(next(keys), semantic_dims, d)      # s2e
        w_att, b_att = linear(next(keys), voc_size, d)           # voc attention
        spaces.append(dict(w_v0=w_v0, b_v0=b_v0, w_v1=w_v1, b_v1=b_v1,
                           w_s2e=w_s2e, b_s2e=b_s2e, w_att=w_att, b_att=b_att))
        if more_larger_space:
            base *= 2

    return dict(w_reg=w_reg, b_reg=b_reg,
                w_ffn0=w_f0, b_ffn0=b_f0, w_ffn1=w_f1, b_ffn1=b_f1,
                voc_t=voc.T, vec_t=vec.T, spaces=spaces)


if __name__ == "__main__":
    key = jax.random.PRNGKey(0)
    kx, kp = jax.random.split(key)

    # Small-but-representative shapes (roi_feat_size=7 as in the module);
    # chosen so the fused kernel exercises >1 RoI tile and >1 reduction tile.
    N, C, R = 136, 32, 7       # RoIs, in_channels, roi_feat_size -> d_in=1568
    K = 12                     # num_seen_classes
    SEM = 32                   # semantic_dims
    F_OUT = 64                 # fc_out_channels
    BASE, NSPACE = 16, 3       # base_space_dimension, num_space -> 16/32/64
    V = 24                     # vocabulary size (columns of voc)

    x = jax.random.normal(kx, (N, C, R, R), jnp.float32)
    params = init_params(kp, in_channels=C, roi_feat_size=R,
                         num_seen_classes=K, semantic_dims=SEM,
                         fc_out_channels=F_OUT, base_space_dimension=BASE,
                         num_space=NSPACE, voc_size=V)

    res_score, bbox_pred = jax.jit(mes_head_forward)(x, params)
    res_score = jax.block_until_ready(res_score)
    bbox_pred = jax.block_until_ready(bbox_pred)

    ref_score, ref_bbox = mes_head_reference(x, params)
    assert res_score.shape == (N, K)
    assert bbox_pred.shape == (N, 4 * K)
    # bf16 MXU operands on the big d_in reductions (f32 accumulation, f32
    # downstream) vs pure-f32 reference.
    np.testing.assert_allclose(np.asarray(res_score), np.asarray(ref_score),
                               rtol=5e-2, atol=5e-2)
    np.testing.assert_allclose(np.asarray(bbox_pred), np.asarray(ref_bbox),
                               rtol=5e-2, atol=5e-2)

    print("KERNEL_OK")
</pallas_src>

<mosaic_0001>
module attributes {stable_mosaic.version = 11 : i64} {
  func.func @kernel(%arg0: memref<24x32xf32, #tpu.memory_space<vmem>>, %arg1: memref<12x32xf32, #tpu.memory_space<vmem>>, %arg2: memref<32x16xf32, #tpu.memory_space<vmem>>, %arg3: memref<1x16xf32, #tpu.memory_space<vmem>>, %arg4: memref<32x32xf32, #tpu.memory_space<vmem>>, %arg5: memref<1x32xf32, #tpu.memory_space<vmem>>, %arg6: memref<32x64xf32, #tpu.memory_space<vmem>>, %arg7: memref<1x64xf32, #tpu.memory_space<vmem>>, %arg8: memref<24x16xf32, #tpu.memory_space<vmem>>, %arg9: memref<12x16xf32, #tpu.memory_space<vmem>>, %arg10: memref<24x32xf32, #tpu.memory_space<vmem>>, %arg11: memref<12x32xf32, #tpu.memory_space<vmem>>, %arg12: memref<24x64xf32, #tpu.memory_space<vmem>>, %arg13: memref<12x64xf32, #tpu.memory_space<vmem>>) attributes {dimension_semantics = [], scalar_prefetch = 0 : i64, scratch_operands = 0 : i64, tpu.core_type = #tpu.core_type<tc>} {
    %c0 = arith.constant 0 : index
    %c0_0 = arith.constant 0 : index
    %0 = vector.load %arg0[%c0, %c0_0] : memref<24x32xf32, #tpu.memory_space<vmem>>, vector<24x32xf32>
    %c0_1 = arith.constant 0 : index
    %c0_2 = arith.constant 0 : index
    %1 = vector.load %arg1[%c0_1, %c0_2] : memref<12x32xf32, #tpu.memory_space<vmem>>, vector<12x32xf32>
    %c0_3 = arith.constant 0 : index
    %c0_4 = arith.constant 0 : index
    %2 = vector.load %arg2[%c0_3, %c0_4] : memref<32x16xf32, #tpu.memory_space<vmem>>, vector<32x16xf32>
    %c0_5 = arith.constant 0 : index
    %c0_6 = arith.constant 0 : index
    %3 = vector.load %arg3[%c0_5, %c0_6] : memref<1x16xf32, #tpu.memory_space<vmem>>, vector<1x16xf32>
    %cst = arith.constant dense<0.000000e+00> : vector<24x16xf32>
    %4 = tpu.matmul %0, %2, %cst {dimension_numbers = #tpu.dot_dimension_numbers<[1], [0], [0], [1], [0, 0, 1, 1], [], []>} : vector<24x32xf32>, vector<32x16xf32>, vector<24x16xf32> -> vector<24x16xf32>
    %5 = vector.broadcast %3 : vector<1x16xf32> to vector<24x16xf32>
    %6 = arith.addf %4, %5 : vector<24x16xf32>
    %7 = arith.mulf %6, %6 : vector<24x16xf32>
    %cst_7 = arith.constant dense<0.000000e+00> : vector<24xf32>
    %8 = vector.multi_reduction <add>, %7, %cst_7 [1] : vector<24x16xf32> to vector<24xf32>
    %9 = vector.shape_cast %8 : vector<24xf32> to vector<24x1xf32>
    %cst_8 = arith.constant 1.000000e-24 : f32
    %10 = vector.broadcast %cst_8 : f32 to vector<24x1xf32>
    %11 = arith.maximumf %9, %10 : vector<24x1xf32>
    %12 = math.rsqrt %11 : vector<24x1xf32>
    %13 = vector.broadcast %12 : vector<24x1xf32> to vector<24x16xf32>
    %14 = arith.mulf %6, %13 : vector<24x16xf32>
    %c0_9 = arith.constant 0 : index
    %c0_10 = arith.constant 0 : index
    %15 = vector.load %arg8[%c0_9, %c0_10] : memref<24x16xf32, #tpu.memory_space<vmem>>, vector<24x16xf32>
    tpu.vector_store %arg8[%c0_9, %c0_10], %14 {strides = array<i32>} : memref<24x16xf32, #tpu.memory_space<vmem>>, vector<24x16xf32>,
    %cst_11 = arith.constant dense<0.000000e+00> : vector<12x16xf32>
    %16 = tpu.matmul %1, %2, %cst_11 {dimension_numbers = #tpu.dot_dimension_numbers<[1], [0], [0], [1], [0, 0, 1, 1], [], []>} : vector<12x32xf32>, vector<32x16xf32>, vector<12x16xf32> -> vector<12x16xf32>
    %17 = vector.broadcast %3 : vector<1x16xf32> to vector<12x16xf32>
    %18 = arith.addf %16, %17 : vector<12x16xf32>
    %c0_12 = arith.constant 0 : index
    %c0_13 = arith.constant 0 : index
    %19 = vector.load %arg9[%c0_12, %c0_13] : memref<12x16xf32, #tpu.memory_space<vmem>>, vector<12x16xf32>
    tpu.vector_store %arg9[%c0_12, %c0_13], %18 {strides = array<i32>} : memref<12x16xf32, #tpu.memory_space<vmem>>, vector<12x16xf32>,
    %c0_14 = arith.constant 0 : index
    %c0_15 = arith.constant 0 : index
    %20 = vector.load %arg4[%c0_14, %c0_15] : memref<32x32xf32, #tpu.memory_space<vmem>>, vector<32x32xf32>
    %c0_16 = arith.constant 0 : index
    %c0_17 = arith.constant 0 : index
    %21 = vector.load %arg5[%c0_16, %c0_17] : memref<1x32xf32, #tpu.memory_space<vmem>>, vector<1x32xf32>
    %cst_18 = arith.constant dense<0.000000e+00> : vector<24x32xf32>
    %22 = tpu.matmul %0, %20, %cst_18 {dimension_numbers = #tpu.dot_dimension_numbers<[1], [0], [0], [1], [0, 0, 1, 1], [], []>} : vector<24x32xf32>, vector<32x32xf32>, vector<24x32xf32> -> vector<24x32xf32>
    %23 = vector.broadcast %21 : vector<1x32xf32> to vector<24x32xf32>
    %24 = arith.addf %22, %23 : vector<24x32xf32>
    %25 = arith.mulf %24, %24 : vector<24x32xf32>
    %cst_19 = arith.constant dense<0.000000e+00> : vector<24xf32>
    %26 = vector.multi_reduction <add>, %25, %cst_19 [1] : vector<24x32xf32> to vector<24xf32>
    %27 = vector.shape_cast %26 : vector<24xf32> to vector<24x1xf32>
    %cst_20 = arith.constant 1.000000e-24 : f32
    %28 = vector.broadcast %cst_20 : f32 to vector<24x1xf32>
    %29 = arith.maximumf %27, %28 : vector<24x1xf32>
    %30 = math.rsqrt %29 : vector<24x1xf32>
    %31 = vector.broadcast %30 : vector<24x1xf32> to vector<24x32xf32>
    %32 = arith.mulf %24, %31 : vector<24x32xf32>
    %c0_21 = arith.constant 0 : index
    %c0_22 = arith.constant 0 : index
    %33 = vector.load %arg10[%c0_21, %c0_22] : memref<24x32xf32, #tpu.memory_space<vmem>>, vector<24x32xf32>
    tpu.vector_store %arg10[%c0_21, %c0_22], %32 {strides = array<i32>} : memref<24x32xf32, #tpu.memory_space<vmem>>, vector<24x32xf32>,
    %cst_23 = arith.constant dense<0.000000e+00> : vector<12x32xf32>
    %34 = tpu.matmul %1, %20, %cst_23 {dimension_numbers = #tpu.dot_dimension_numbers<[1], [0], [0], [1], [0, 0, 1, 1], [], []>} : vector<12x32xf32>, vector<32x32xf32>, vector<12x32xf32> -> vector<12x32xf32>
    %35 = vector.broadcast %21 : vector<1x32xf32> to vector<12x32xf32>
    %36 = arith.addf %34, %35 : vector<12x32xf32>
    %c0_24 = arith.constant 0 : index
    %c0_25 = arith.constant 0 : index
    %37 = vector.load %arg11[%c0_24, %c0_25] : memref<12x32xf32, #tpu.memory_space<vmem>>, vector<12x32xf32>
    tpu.vector_store %arg11[%c0_24, %c0_25], %36 {strides = array<i32>} : memref<12x32xf32, #tpu.memory_space<vmem>>, vector<12x32xf32>,
    %c0_26 = arith.constant 0 : index
    %c0_27 = arith.constant 0 : index
    %38 = vector.load %arg6[%c0_26, %c0_27] : memref<32x64xf32, #tpu.memory_space<vmem>>, vector<32x64xf32>
    %c0_28 = arith.constant 0 : index
    %c0_29 = arith.constant 0 : index
    %39 = vector.load %arg7[%c0_28, %c0_29] : memref<1x64xf32, #tpu.memory_space<vmem>>, vector<1x64xf32>
    %cst_30 = arith.constant dense<0.000000e+00> : vector<24x64xf32>
    %40 = tpu.matmul %0, %38, %cst_30 {dimension_numbers = #tpu.dot_dimension_numbers<[1], [0], [0], [1], [0, 0, 1, 1], [], []>} : vector<24x32xf32>, vector<32x64xf32>, vector<24x64xf32> -> vector<24x64xf32>
    %41 = vector.broadcast %39 : vector<1x64xf32> to vector<24x64xf32>
    %42 = arith.addf %40, %41 : vector<24x64xf32>
    %43 = arith.mulf %42, %42 : vector<24x64xf32>
    %cst_31 = arith.constant dense<0.000000e+00> : vector<24xf32>
    %44 = vector.multi_reduction <add>, %43, %cst_31 [1] : vector<24x64xf32> to vector<24xf32>
    %45 = vector.shape_cast %44 : vector<24xf32> to vector<24x1xf32>
    %cst_32 = arith.constant 1.000000e-24 : f32
    %46 = vector.broadcast %cst_32 : f32 to vector<24x1xf32>
    %47 = arith.maximumf %45, %46 : vector<24x1xf32>
    %48 = math.rsqrt %47 : vector<24x1xf32>
    %49 = vector.broadcast %48 : vector<24x1xf32> to vector<24x64xf32>
    %50 = arith.mulf %42, %49 : vector<24x64xf32>
    %c0_33 = arith.constant 0 : index
    %c0_34 = arith.constant 0 : index
    %51 = vector.load %arg12[%c0_33, %c0_34] : memref<24x64xf32, #tpu.memory_space<vmem>>, vector<24x64xf32>
    tpu.vector_store %arg12[%c0_33, %c0_34], %50 {strides = array<i32>} : memref<24x64xf32, #tpu.memory_space<vmem>>, vector<24x64xf32>,
    %cst_35 = arith.constant dense<0.000000e+00> : vector<12x64xf32>
    %52 = tpu.matmul %1, %38, %cst_35 {dimension_numbers = #tpu.dot_dimension_numbers<[1], [0], [0], [1], [0, 0, 1, 1], [], []>} : vector<12x32xf32>, vector<32x64xf32>, vector<12x64xf32> -> vector<12x64xf32>
    %53 = vector.broadcast %39 : vector<1x64xf32> to vector<12x64xf32>
    %54 = arith.addf %52, %53 : vector<12x64xf32>
    %c0_36 = arith.constant 0 : index
    %c0_37 = arith.constant 0 : index
    %55 = vector.load %arg13[%c0_36, %c0_37] : memref<12x64xf32, #tpu.memory_space<vmem>>, vector<12x64xf32>
    tpu.vector_store %arg13[%c0_36, %c0_37], %54 {strides = array<i32>} : memref<12x64xf32, #tpu.memory_space<vmem>>, vector<12x64xf32>,
    return
  }
}

module attributes {stable_mosaic.version = 11 : i64} {
  func.func @kernel(%arg0: i32, %arg1: i32, %arg2: memref<128x512xbf16, #tpu.memory_space<vmem>>, %arg3: memref<512x128xbf16, #tpu.memory_space<vmem>>, %arg4: memref<1x128xf32, #tpu.memory_space<vmem>>, %arg5: memref<512x64xbf16, #tpu.memory_space<vmem>>, %arg6: memref<1x64xf32, #tpu.memory_space<vmem>>, %arg7: memref<64x64xf32, #tpu.memory_space<vmem>>, %arg8: memref<1x64xf32, #tpu.memory_space<vmem>>, %arg9: memref<64x32xf32, #tpu.memory_space<vmem>>, %arg10: memref<1x32xf32, #tpu.memory_space<vmem>>, %arg11: memref<32x16xf32, #tpu.memory_space<vmem>>, %arg12: memref<1x16xf32, #tpu.memory_space<vmem>>, %arg13: memref<24x16xf32, #tpu.memory_space<vmem>>, %arg14: memref<1x16xf32, #tpu.memory_space<vmem>>, %arg15: memref<24x16xf32, #tpu.memory_space<vmem>>, %arg16: memref<128x16xf32, #tpu.memory_space<vmem>>, %arg17: memref<64x64xf32, #tpu.memory_space<vmem>>, %arg18: memref<1x64xf32, #tpu.memory_space<vmem>>, %arg19: memref<64x32xf32, #tpu.memory_space<vmem>>, %arg20: memref<1x32xf32, #tpu.memory_space<vmem>>, %arg21: memref<24x32xf32, #tpu.memory_space<vmem>>, %arg22: memref<1x32xf32, #tpu.memory_space<vmem>>, %arg23: memref<24x32xf32, #tpu.memory_space<vmem>>, %arg24: memref<128x32xf32, #tpu.memory_space<vmem>>, %arg25: memref<64x128xf32, #tpu.memory_space<vmem>>, %arg26: memref<1x128xf32, #tpu.memory_space<vmem>>, %arg27: memref<128x64xf32, #tpu.memory_space<vmem>>, %arg28: memref<1x64xf32, #tpu.memory_space<vmem>>, %arg29: memref<24x64xf32, #tpu.memory_space<vmem>>, %arg30: memref<1x64xf32, #tpu.memory_space<vmem>>, %arg31: memref<24x64xf32, #tpu.memory_space<vmem>>, %arg32: memref<128x64xf32, #tpu.memory_space<vmem>>, %arg33: memref<128x128xf32, #tpu.memory_space<vmem>>, %arg34: memref<128x128xf32, #tpu.memory_space<vmem>>, %arg35: memref<128x128xf32, #tpu.memory_space<vmem>>, %arg36: memref<128x64xf32, #tpu.memory_space<vmem>>) attributes {dimension_semantics = [#tpu.dimension_semantics<parallel>, #tpu.dimension_semantics<arbitrary>], iteration_bounds = array<i64: 2, 4>, scalar_prefetch = 0 : i64, scratch_operands = 2 : i64, tpu.core_type = #tpu.core_type<tc>, window_params = [{transform_indices = @transform_0, window_bounds = array<i64: 128, 512>}, {transform_indices = @transform_1, window_bounds = array<i64: 512, 128>}, {pipeline_mode = #tpu.pipeline_mode<synchronous>, transform_indices = @transform_2, window_bounds = array<i64: 1, 128>}, {transform_indices = @transform_3, window_bounds = array<i64: 512, 64>}, {pipeline_mode = #tpu.pipeline_mode<synchronous>, transform_indices = @transform_4, window_bounds = array<i64: 1, 64>}, {pipeline_mode = #tpu.pipeline_mode<synchronous>, transform_indices = @transform_5, window_bounds = array<i64: 64, 64>}, {pipeline_mode = #tpu.pipeline_mode<synchronous>, transform_indices = @transform_6, window_bounds = array<i64: 1, 64>}, {pipeline_mode = #tpu.pipeline_mode<synchronous>, transform_indices = @transform_7, window_bounds = array<i64: 64, 32>}, {pipeline_mode = #tpu.pipeline_mode<synchronous>, transform_indices = @transform_8, window_bounds = array<i64: 1, 32>}, {pipeline_mode = #tpu.pipeline_mode<synchronous>, transform_indices = @transform_9, window_bounds = array<i64: 32, 16>}, {pipeline_mode = #tpu.pipeline_mode<synchronous>, transform_indices = @transform_10, window_bounds = array<i64: 1, 16>}, {pipeline_mode = #tpu.pipeline_mode<synchronous>, transform_indices = @transform_11, window_bounds = array<i64: 24, 16>}, {pipeline_mode = #tpu.pipeline_mode<synchronous>, transform_indices = @transform_12, window_bounds = array<i64: 1, 16>}, {pipeline_mode = #tpu.pipeline_mode<synchronous>, transform_indices = @transform_13, window_bounds = array<i64: 24, 16>}, {pipeline_mode = #tpu.pipeline_mode<synchronous>, transform_indices = @transform_14, window_bounds = array<i64: 128, 16>}, {pipeline_mode = #tpu.pipeline_mode<synchronous>, transform_indices = @transform_15, window_bounds = array<i64: 64, 64>}, {pipeline_mode = #tpu.pipeline_mode<synchronous>, transform_indices = @transform_16, window_bounds = array<i64: 1, 64>}, {pipeline_mode = #tpu.pipeline_mode<synchronous>, transform_indices = @transform_17, window_bounds = array<i64: 64, 32>}, {pipeline_mode = #tpu.pipeline_mode<synchronous>, transform_indices = @transform_18, window_bounds = array<i64: 1, 32>}, {pipeline_mode = #tpu.pipeline_mode<synchronous>, transform_indices = @transform_19, window_bounds = array<i64: 24, 32>}, {pipeline_mode = #tpu.pipeline_mode<synchronous>, transform_indices = @transform_20, window_bounds = array<i64: 1, 32>}, {pipeline_mode = #tpu.pipeline_mode<synchronous>, transform_indices = @transform_21, window_bounds = array<i64: 24, 32>}, {pipeline_mode = #tpu.pipeline_mode<synchronous>, transform_indices = @transform_22, window_bounds = array<i64: 128, 32>}, {pipeline_mode = #tpu.pipeline_mode<synchronous>, transform_indices = @transform_23, window_bounds = array<i64: 64, 128>}, {pipeline_mode = #tpu.pipeline_mode<synchronous>, transform_indices = @transform_24, window_bounds = array<i64: 1, 128>}, {pipeline_mode = #tpu.pipeline_mode<synchronous>, transform_indices = @transform_25, window_bounds = array<i64: 128, 64>}, {pipeline_mode = #tpu.pipeline_mode<synchronous>, transform_indices = @transform_26, window_bounds = array<i64: 1, 64>}, {pipeline_mode = #tpu.pipeline_mode<synchronous>, transform_indices = @transform_27, window_bounds = array<i64: 24, 64>}, {pipeline_mode = #tpu.pipeline_mode<synchronous>, transform_indices = @transform_28, window_bounds = array<i64: 1, 64>}, {pipeline_mode = #tpu.pipeline_mode<synchronous>, transform_indices = @transform_29, window_bounds = array<i64: 24, 64>}, {pipeline_mode = #tpu.pipeline_mode<synchronous>, transform_indices = @transform_30, window_bounds = array<i64: 128, 64>}, {transform_indices = @transform_31, window_bounds = array<i64: 128, 128>}, {transform_indices = @transform_32, window_bounds = array<i64: 128, 128>}]} {
    %c0_i32 = arith.constant 0 : i32
    %0 = arith.cmpi eq, %arg1, %c0_i32 : i32
    %1 = arith.extui %0 : i1 to i32
    %c0_i32_0 = arith.constant 0 : i32
    %2 = arith.cmpi ne, %1, %c0_i32_0 : i32
    scf.if %2 {
      %cst_16 = arith.constant 0.000000e+00 : f32
      %17 = vector.broadcast %cst_16 : f32 to vector<128x128xf32>
      %c0_17 = arith.constant 0 : index
      %c0_18 = arith.constant 0 : index
      %18 = vector.load %arg35[%c0_17, %c0_18] : memref<128x128xf32, #tpu.memory_space<vmem>>, vector<128x128xf32>
      tpu.vector_store %arg35[%c0_17, %c0_18], %17 {strides = array<i32>} : memref<128x128xf32, #tpu.memory_space<vmem>>, vector<128x128xf32>,
      %cst_19 = arith.constant 0.000000e+00 : f32
      %19 = vector.broadcast %cst_19 : f32 to vector<128x64xf32>
      %c0_20 = arith.constant 0 : index
      %c0_21 = arith.constant 0 : index
      %20 = vector.load %arg36[%c0_20, %c0_21] : memref<128x64xf32, #tpu.memory_space<vmem>>, vector<128x64xf32>
      tpu.vector_store %arg36[%c0_20, %c0_21], %19 {strides = array<i32>} : memref<128x64xf32, #tpu.memory_space<vmem>>, vector<128x64xf32>,
    } else {
    }
    %c0 = arith.constant 0 : index
    %c0_1 = arith.constant 0 : index
    %3 = vector.load %arg2[%c0, %c0_1] : memref<128x512xbf16, #tpu.memory_space<vmem>>, vector<128x512xbf16>
    %c0_2 = arith.constant 0 : index
    %c0_3 = arith.constant 0 : index
    %4 = vector.load %arg35[%c0_2, %c0_3] : memref<128x128xf32, #tpu.memory_space<vmem>>, vector<128x128xf32>
    %c0_4 = arith.constant 0 : index
    %c0_5 = arith.constant 0 : index
    %5 = vector.load %arg3[%c0_4, %c0_5] : memref<512x128xbf16, #tpu.memory_space<vmem>>, vector<512x128xbf16>
    %cst = arith.constant dense<0.000000e+00> : vector<128x128xf32>
    %6 = tpu.matmul %3, %5, %cst {dimension_numbers = #tpu.dot_dimension_numbers<[1], [0], [0], [1], [0, 0, 1, 1], [], []>} : vector<128x512xbf16>, vector<512x128xbf16>, vector<128x128xf32> -> vector<128x128xf32>
    %7 = arith.addf %4, %6 : vector<128x128xf32>
    %c0_6 = arith.constant 0 : index
    %c0_7 = arith.constant 0 : index
    %8 = vector.load %arg35[%c0_6, %c0_7] : memref<128x128xf32, #tpu.memory_space<vmem>>, vector<128x128xf32>
    tpu.vector_store %arg35[%c0_6, %c0_7], %7 {strides = array<i32>} : memref<128x128xf32, #tpu.memory_space<vmem>>, vector<128x128xf32>,
    %c0_8 = arith.constant 0 : index
    %c0_9 = arith.constant 0 : index
    %9 = vector.load %arg36[%c0_8, %c0_9] : memref<128x64xf32, #tpu.memory_space<vmem>>, vector<128x64xf32>
    %c0_10 = arith.constant 0 : index
    %c0_11 = arith.constant 0 : index
    %10 = vector.load %arg5[%c0_10, %c0_11] : memref<512x64xbf16, #tpu.memory_space<vmem>>, vector<512x64xbf16>
    %cst_12 = arith.constant dense<0.000000e+00> : vector<128x64xf32>
    %11 = tpu.matmul %3, %10, %cst_12 {dimension_numbers = #tpu.dot_dimension_numbers<[1], [0], [0], [1], [0, 0, 1, 1], [], []>} : vector<128x512xbf16>, vector<512x64xbf16>, vector<128x64xf32> -> vector<128x64xf32>
    %12 = arith.addf %9, %11 : vector<128x64xf32>
    %c0_13 = arith.constant 0 : index
    %c0_14 = arith.constant 0 : index
    %13 = vector.load %arg36[%c0_13, %c0_14] : memref<128x64xf32, #tpu.memory_space<vmem>>, vector<128x64xf32>
    tpu.vector_store %arg36[%c0_13, %c0_14], %12 {strides = array<i32>} : memref<128x64xf32, #tpu.memory_space<vmem>>, vector<128x64xf32>,
    %c3_i32 = arith.constant 3 : i32
    %14 = arith.cmpi eq, %arg1, %c3_i32 : i32
    %15 = arith.extui %14 : i1 to i32
    %c0_i32_15 = arith.constant 0 : i32
    %16 = arith.cmpi ne, %15, %c0_i32_15 : i32
    scf.if %16 {
      %c0_16 = arith.constant 0 : index
      %c0_17 = arith.constant 0 : index
      %17 = vector.load %arg35[%c0_16, %c0_17] : memref<128x128xf32, #tpu.memory_space<vmem>>, vector<128x128xf32>
      %c0_18 = arith.constant 0 : index
      %c0_19 = arith.constant 0 : index
      %18 = vector.load %arg4[%c0_18, %c0_19] : memref<1x128xf32, #tpu.memory_space<vmem>>, vector<1x128xf32>
      %19 = vector.broadcast %18 : vector<1x128xf32> to vector<128x128xf32>
      %20 = arith.addf %17, %19 : vector<128x128xf32>
      %c0_20 = arith.constant 0 : index
      %c0_21 = arith.constant 0 : index
      %21 = vector.load %arg33[%c0_20, %c0_21] : memref<128x128xf32, #tpu.memory_space<vmem>>, vector<128x128xf32>
      tpu.vector_store %arg33[%c0_20, %c0_21], %20 {strides = array<i32>} : memref<128x128xf32, #tpu.memory_space<vmem>>, vector<128x128xf32>,
      %c0_22 = arith.constant 0 : index
      %c0_23 = arith.constant 0 : index
      %22 = vector.load %arg36[%c0_22, %c0_23] : memref<128x64xf32, #tpu.memory_space<vmem>>, vector<128x64xf32>
      %c0_24 = arith.constant 0 : index
      %c0_25 = arith.constant 0 : index
      %23 = vector.load %arg6[%c0_24, %c0_25] : memref<1x64xf32, #tpu.memory_space<vmem>>, vector<1x64xf32>
      %24 = vector.broadcast %23 : vector<1x64xf32> to vector<128x64xf32>
      %25 = arith.addf %22, %24 : vector<128x64xf32>
      %cst_26 = arith.constant 0.000000e+00 : f32
      %26 = vector.broadcast %cst_26 : f32 to vector<128x64xf32>
      %27 = arith.maximumf %25, %26 : vector<128x64xf32>
      %c0_27 = arith.constant 0 : index
      %c0_28 = arith.constant 0 : index
      %28 = vector.load %arg7[%c0_27, %c0_28] : memref<64x64xf32, #tpu.memory_space<vmem>>, vector<64x64xf32>
      %cst_29 = arith.constant dense<0.000000e+00> : vector<128x64xf32>
      %29 = tpu.matmul %27, %28, %cst_29 {dimension_numbers = #tpu.dot_dimension_numbers<[1], [0], [0], [1], [0, 0, 1, 1], [], []>} : vector<128x64xf32>, vector<64x64xf32>, vector<128x64xf32> -> vector<128x64xf32>
      %c0_30 = arith.constant 0 : index
      %c0_31 = arith.constant 0 : index
      %30 = vector.load %arg8[%c0_30, %c0_31] : memref<1x64xf32, #tpu.memory_space<vmem>>, vector<1x64xf32>
      %31 = vector.broadcast %30 : vector<1x64xf32> to vector<128x64xf32>
      %32 = arith.addf %29, %31 : vector<128x64xf32>
      %cst_32 = arith.constant 0.000000e+00 : f32
      %33 = vector.broadcast %cst_32 : f32 to vector<128x64xf32>
      %34 = arith.maximumf %32, %33 : vector<128x64xf32>
      %c0_33 = arith.constant 0 : index
      %c0_34 = arith.constant 0 : index
      %35 = vector.load %arg9[%c0_33, %c0_34] : memref<64x32xf32, #tpu.memory_space<vmem>>, vector<64x32xf32>
      %cst_35 = arith.constant dense<0.000000e+00> : vector<128x32xf32>
      %36 = tpu.matmul %34, %35, %cst_35 {dimension_numbers = #tpu.dot_dimension_numbers<[1], [0], [0], [1], [0, 0, 1, 1], [], []>} : vector<128x64xf32>, vector<64x32xf32>, vector<128x32xf32> -> vector<128x32xf32>
      %c0_36 = arith.constant 0 : index
      %c0_37 = arith.constant 0 : index
      %37 = vector.load %arg10[%c0_36, %c0_37] : memref<1x32xf32, #tpu.memory_space<vmem>>, vector<1x32xf32>
      %38 = vector.broadcast %37 : vector<1x32xf32> to vector<128x32xf32>
      %39 = arith.addf %36, %38 : vector<128x32xf32>
      %c0_38 = arith.constant 0 : index
      %c0_39 = arith.constant 0 : index
      %40 = vector.load %arg11[%c0_38, %c0_39] : memref<32x16xf32, #tpu.memory_space<vmem>>, vector<32x16xf32>
      %cst_40 = arith.constant dense<0.000000e+00> : vector<128x16xf32>
      %41 = tpu.matmul %39, %40, %cst_40 {dimension_numbers = #tpu.dot_dimension_numbers<[1], [0], [0], [1], [0, 0, 1, 1], [], []>} : vector<128x32xf32>, vector<32x16xf32>, vector<128x16xf32> -> vector<128x16xf32>
      %c0_41 = arith.constant 0 : index
      %c0_42 = arith.constant 0 : index
      %42 = vector.load %arg12[%c0_41, %c0_42] : memref<1x16xf32, #tpu.memory_space<vmem>>, vector<1x16xf32>
      %43 = vector.broadcast %42 : vector<1x16xf32> to vector<128x16xf32>
      %44 = arith.addf %41, %43 : vector<128x16xf32>
      %c0_43 = arith.constant 0 : index
      %c0_44 = arith.constant 0 : index
      %45 = vector.load %arg15[%c0_43, %c0_44] : memref<24x16xf32, #tpu.memory_space<vmem>>, vector<24x16xf32>
      %cst_45 = arith.constant dense<0.000000e+00> : vector<128x24xf32>
      %46 = tpu.matmul %44, %45, %cst_45 {dimension_numbers = #tpu.dot_dimension_numbers<[1], [1], [0], [0], [0, 0, 1, 0], [], []>} : vector<128x16xf32>, vector<24x16xf32>, vector<128x24xf32> -> vector<128x24xf32>
      %c0_46 = arith.constant 0 : index
      %c0_47 = arith.constant 0 : index
      %47 = vector.load %arg13[%c0_46, %c0_47] : memref<24x16xf32, #tpu.memory_space<vmem>>, vector<24x16xf32>
      %cst_48 = arith.constant dense<0.000000e+00> : vector<128x16xf32>
      %48 = tpu.matmul %46, %47, %cst_48 {dimension_numbers = #tpu.dot_dimension_numbers<[1], [0], [0], [1], [0, 0, 1, 1], [], []>} : vector<128x24xf32>, vector<24x16xf32>, vector<128x16xf32> -> vector<128x16xf32>
      %c0_49 = arith.constant 0 : index
      %c0_50 = arith.constant 0 : index
      %49 = vector.load %arg14[%c0_49, %c0_50] : memref<1x16xf32, #tpu.memory_space<vmem>>, vector<1x16xf32>
      %50 = vector.broadcast %49 : vector<1x16xf32> to vector<128x16xf32>
      %51 = arith.addf %48, %50 : vector<128x16xf32>
      %c0_51 = arith.constant 0 : index
      %c0_52 = arith.constant 0 : index
      %52 = vector.load %arg16[%c0_51, %c0_52] : memref<128x16xf32, #tpu.memory_space<vmem>>, vector<128x16xf32>
      %cst_53 = arith.constant dense<0.000000e+00> : vector<128x128xf32>
      %53 = tpu.matmul %51, %52, %cst_53 {dimension_numbers = #tpu.dot_dimension_numbers<[1], [1], [0], [0], [0, 0, 1, 0], [], []>} : vector<128x16xf32>, vector<128x16xf32>, vector<128x128xf32> -> vector<128x128xf32>
      %c0_54 = arith.constant 0 : index
      %c0_55 = arith.constant 0 : index
      %54 = vector.load %arg17[%c0_54, %c0_55] : memref<64x64xf32, #tpu.memory_space<vmem>>, vector<64x64xf32>
      %cst_56 = arith.constant dense<0.000000e+00> : vector<128x64xf32>
      %55 = tpu.matmul %34, %54, %cst_56 {dimension_numbers = #tpu.dot_dimension_numbers<[1], [0], [0], [1], [0, 0, 1, 1], [], []>} : vector<128x64xf32>, vector<64x64xf32>, vector<128x64xf32> -> vector<128x64xf32>
      %c0_57 = arith.constant 0 : index
      %c0_58 = arith.constant 0 : index
      %56 = vector.load %arg18[%c0_57, %c0_58] : memref<1x64xf32, #tpu.memory_space<vmem>>, vector<1x64xf32>
      %57 = vector.broadcast %56 : vector<1x64xf32> to vector<128x64xf32>
      %58 = arith.addf %55, %57 : vector<128x64xf32>
      %c0_59 = arith.constant 0 : index
      %c0_60 = arith.constant 0 : index
      %59 = vector.load %arg19[%c0_59, %c0_60] : memref<64x32xf32, #tpu.memory_space<vmem>>, vector<64x32xf32>
      %cst_61 = arith.constant dense<0.000000e+00> : vector<128x32xf32>
      %60 = tpu.matmul %58, %59, %cst_61 {dimension_numbers = #tpu.dot_dimension_numbers<[1], [0], [0], [1], [0, 0, 1, 1], [], []>} : vector<128x64xf32>, vector<64x32xf32>, vector<128x32xf32> -> vector<128x32xf32>
      %c0_62 = arith.constant 0 : index
      %c0_63 = arith.constant 0 : index
      %61 = vector.load %arg20[%c0_62, %c0_63] : memref<1x32xf32, #tpu.memory_space<vmem>>, vector<1x32xf32>
      %62 = vector.broadcast %61 : vector<1x32xf32> to vector<128x32xf32>
      %63 = arith.addf %60, %62 : vector<128x32xf32>
      %c0_64 = arith.constant 0 : index
      %c0_65 = arith.constant 0 : index
      %64 = vector.load %arg23[%c0_64, %c0_65] : memref<24x32xf32, #tpu.memory_space<vmem>>, vector<24x32xf32>
      %cst_66 = arith.constant dense<0.000000e+00> : vector<128x24xf32>
      %65 = tpu.matmul %63, %64, %cst_66 {dimension_numbers = #tpu.dot_dimension_numbers<[1], [1], [0], [0], [0, 0, 1, 0], [], []>} : vector<128x32xf32>, vector<24x32xf32>, vector<128x24xf32> -> vector<128x24xf32>
      %c0_67 = arith.constant 0 : index
      %c0_68 = arith.constant 0 : index
      %66 = vector.load %arg21[%c0_67, %c0_68] : memref<24x32xf32, #tpu.memory_space<vmem>>, vector<24x32xf32>
      %cst_69 = arith.constant dense<0.000000e+00> : vector<128x32xf32>
      %67 = tpu.matmul %65, %66, %cst_69 {dimension_numbers = #tpu.dot_dimension_numbers<[1], [0], [0], [1], [0, 0, 1, 1], [], []>} : vector<128x24xf32>, vector<24x32xf32>, vector<128x32xf32> -> vector<128x32xf32>
      %c0_70 = arith.constant 0 : index
      %c0_71 = arith.constant 0 : index
      %68 = vector.load %arg22[%c0_70, %c0_71] : memref<1x32xf32, #tpu.memory_space<vmem>>, vector<1x32xf32>
      %69 = vector.broadcast %68 : vector<1x32xf32> to vector<128x32xf32>
      %70 = arith.addf %67, %69 : vector<128x32xf32>
      %c0_72 = arith.constant 0 : index
      %c0_73 = arith.constant 0 : index
      %71 = vector.load %arg24[%c0_72, %c0_73] : memref<128x32xf32, #tpu.memory_space<vmem>>, vector<128x32xf32>
      %cst_74 = arith.constant dense<0.000000e+00> : vector<128x128xf32>
      %72 = tpu.matmul %70, %71, %cst_74 {dimension_numbers = #tpu.dot_dimension_numbers<[1], [1], [0], [0], [0, 0, 1, 0], [], []>} : vector<128x32xf32>, vector<128x32xf32>, vector<128x128xf32> -> vector<128x128xf32>
      %73 = arith.maximumf %53, %72 : vector<128x128xf32>
      %c0_75 = arith.constant 0 : index
      %c0_76 = arith.constant 0 : index
      %74 = vector.load %arg25[%c0_75, %c0_76] : memref<64x128xf32, #tpu.memory_space<vmem>>, vector<64x128xf32>
      %cst_77 = arith.constant dense<0.000000e+00> : vector<128x128xf32>
      %75 = tpu.matmul %34, %74, %cst_77 {dimension_numbers = #tpu.dot_dimension_numbers<[1], [0], [0], [1], [0, 0, 1, 1], [], []>} : vector<128x64xf32>, vector<64x128xf32>, vector<128x128xf32> -> vector<128x128xf32>
      %c0_78 = arith.constant 0 : index
      %c0_79 = arith.constant 0 : index
      %76 = vector.load %arg26[%c0_78, %c0_79] : memref<1x128xf32, #tpu.memory_space<vmem>>, vector<1x128xf32>
      %77 = vector.broadcast %76 : vector<1x128xf32> to vector<128x128xf32>
      %78 = arith.addf %75, %77 : vector<128x128xf32>
      %c0_80 = arith.constant 0 : index
      %c0_81 = arith.constant 0 : index
      %79 = vector.load %arg27[%c0_80, %c0_81] : memref<128x64xf32, #tpu.memory_space<vmem>>, vector<128x64xf32>
      %cst_82 = arith.constant dense<0.000000e+00> : vector<128x64xf32>
      %80 = tpu.matmul %78, %79, %cst_82 {dimension_numbers = #tpu.dot_dimension_numbers<[1], [0], [0], [1], [0, 0, 1, 1], [], []>} : vector<128x128xf32>, vector<128x64xf32>, vector<128x64xf32> -> vector<128x64xf32>
      %c0_83 = arith.constant 0 : index
      %c0_84 = arith.constant 0 : index
      %81 = vector.load %arg28[%c0_83, %c0_84] : memref<1x64xf32, #tpu.memory_space<vmem>>, vector<1x64xf32>
      %82 = vector.broadcast %81 : vector<1x64xf32> to vector<128x64xf32>
      %83 = arith.addf %80, %82 : vector<128x64xf32>
      %c0_85 = arith.constant 0 : index
      %c0_86 = arith.constant 0 : index
      %84 = vector.load %arg31[%c0_85, %c0_86] : memref<24x64xf32, #tpu.memory_space<vmem>>, vector<24x64xf32>
      %cst_87 = arith.constant dense<0.000000e+00> : vector<128x24xf32>
      %85 = tpu.matmul %83, %84, %cst_87 {dimension_numbers = #tpu.dot_dimension_numbers<[1], [1], [0], [0], [0, 0, 1, 0], [], []>} : vector<128x64xf32>, vector<24x64xf32>, vector<128x24xf32> -> vector<128x24xf32>
      %c0_88 = arith.constant 0 : index
      %c0_89 = arith.constant 0 : index
      %86 = vector.load %arg29[%c0_88, %c0_89] : memref<24x64xf32, #tpu.memory_space<vmem>>, vector<24x64xf32>
      %cst_90 = arith.constant dense<0.000000e+00> : vector<128x64xf32>
      %87 = tpu.matmul %85, %86, %cst_90 {dimension_numbers = #tpu.dot_dimension_numbers<[1], [0], [0], [1], [0, 0, 1, 1], [], []>} : vector<128x24xf32>, vector<24x64xf32>, vector<128x64xf32> -> vector<128x64xf32>
      %c0_91 = arith.constant 0 : index
      %c0_92 = arith.constant 0 : index
      %88 = vector.load %arg30[%c0_91, %c0_92] : memref<1x64xf32, #tpu.memory_space<vmem>>, vector<1x64xf32>
      %89 = vector.broadcast %88 : vector<1x64xf32> to vector<128x64xf32>
      %90 = arith.addf %87, %89 : vector<128x64xf32>
      %c0_93 = arith.constant 0 : index
      %c0_94 = arith.constant 0 : index
      %91 = vector.load %arg32[%c0_93, %c0_94] : memref<128x64xf32, #tpu.memory_space<vmem>>, vector<128x64xf32>
      %cst_95 = arith.constant dense<0.000000e+00> : vector<128x128xf32>
      %92 = tpu.matmul %90, %91, %cst_95 {dimension_numbers = #tpu.dot_dimension_numbers<[1], [1], [0], [0], [0, 0, 1, 0], [], []>} : vector<128x64xf32>, vector<128x64xf32>, vector<128x128xf32> -> vector<128x128xf32>
      %93 = arith.maximumf %73, %92 : vector<128x128xf32>
      %c0_96 = arith.constant 0 : index
      %c0_97 = arith.constant 0 : index
      %94 = vector.load %arg34[%c0_96, %c0_97] : memref<128x128xf32, #tpu.memory_space<vmem>>, vector<128x128xf32>
      tpu.vector_store %arg34[%c0_96, %c0_97], %93 {strides = array<i32>} : memref<128x128xf32, #tpu.memory_space<vmem>>, vector<128x128xf32>,
    } else {
    }
    return
  }
  func.func @transform_0(%arg0: i32, %arg1: i32) -> (i32, i32) {
    %c0_i32 = arith.constant 0 : i32
    return %arg0, %arg1 : i32, i32
  }
  func.func @transform_1(%arg0: i32, %arg1: i32) -> (i32, i32) {
    %c0_i32 = arith.constant 0 : i32
    %c0_i32_0 = arith.constant 0 : i32
    return %arg1, %c0_i32 : i32, i32
  }
  func.func @transform_2(%arg0: i32, %arg1: i32) -> (i32, i32) {
    %c0_i32 = arith.constant 0 : i32
    %c0_i32_0 = arith.constant 0 : i32
    %c0_i32_1 = arith.constant 0 : i32
    return %c0_i32, %c0_i32_0 : i32, i32
  }
  func.func @transform_3(%arg0: i32, %arg1: i32) -> (i32, i32) {
    %c0_i32 = arith.constant 0 : i32
    %c0_i32_0 = arith.constant 0 : i32
    return %arg1, %c0_i32 : i32, i32
  }
  func.func @transform_4(%arg0: i32, %arg1: i32) -> (i32, i32) {
    %c0_i32 = arith.constant 0 : i32
    %c0_i32_0 = arith.constant 0 : i32
    %c0_i32_1 = arith.constant 0 : i32
    return %c0_i32, %c0_i32_0 : i32, i32
  }
  func.func @transform_5(%arg0: i32, %arg1: i32) -> (i32, i32) {
    %c0_i32 = arith.constant 0 : i32
    %c0_i32_0 = arith.constant 0 : i32
    %c0_i32_1 = arith.constant 0 : i32
    return %c0_i32, %c0_i32_0 : i32, i32
  }
  func.func @transform_6(%arg0: i32, %arg1: i32) -> (i32, i32) {
    %c0_i32 = arith.constant 0 : i32
    %c0_i32_0 = arith.constant 0 : i32
    %c0_i32_1 = arith.constant 0 : i32
    return %c0_i32, %c0_i32_0 : i32, i32
  }
  func.func @transform_7(%arg0: i32, %arg1: i32) -> (i32, i32) {
    %c0_i32 = arith.constant 0 : i32
    %c0_i32_0 = arith.constant 0 : i32
    %c0_i32_1 = arith.constant 0 : i32
    return %c0_i32, %c0_i32_0 : i32, i32
  }
  func.func @transform_8(%arg0: i32, %arg1: i32) -> (i32, i32) {
    %c0_i32 = arith.constant 0 : i32
    %c0_i32_0 = arith.constant 0 : i32
    %c0_i32_1 = arith.constant 0 : i32
    return %c0_i32, %c0_i32_0 : i32, i32
  }
  func.func @transform_9(%arg0: i32, %arg1: i32) -> (i32, i32) {
    %c0_i32 = arith.constant 0 : i32
    %c0_i32_0 = arith.constant 0 : i32
    %c0_i32_1 = arith.constant 0 : i32
    return %c0_i32, %c0_i32_0 : i32, i32
  }
  func.func @transform_10(%arg0: i32, %arg1: i32) -> (i32, i32) {
    %c0_i32 = arith.constant 0 : i32
    %c0_i32_0 = arith.constant 0 : i32
    %c0_i32_1 = arith.constant 0 : i32
    return %c0_i32, %c0_i32_0 : i32, i32
  }
  func.func @transform_11(%arg0: i32, %arg1: i32) -> (i32, i32) {
    %c0_i32 = arith.constant 0 : i32
    %c0_i32_0 = arith.constant 0 : i32
    %c0_i32_1 = arith.constant 0 : i32
    return %c0_i32, %c0_i32_0 : i32, i32
  }
  func.func @transform_12(%arg0: i32, %arg1: i32) -> (i32, i32) {
    %c0_i32 = arith.constant 0 : i32
    %c0_i32_0 = arith.constant 0 : i32
    %c0_i32_1 = arith.constant 0 : i32
    return %c0_i32, %c0_i32_0 : i32, i32
  }
  func.func @transform_13(%arg0: i32, %arg1: i32) -> (i32, i32) {
    %c0_i32 = arith.constant 0 : i32
    %c0_i32_0 = arith.constant 0 : i32
    %c0_i32_1 = arith.constant 0 : i32
    return %c0_i32, %c0_i32_0 : i32, i32
  }
  func.func @transform_14(%arg0: i32, %arg1: i32) -> (i32, i32) {
    %c0_i32 = arith.constant 0 : i32
    %c0_i32_0 = arith.constant 0 : i32
    %c0_i32_1 = arith.constant 0 : i32
    return %c0_i32, %c0_i32_0 : i32, i32
  }
  func.func @transform_15(%arg0: i32, %arg1: i32) -> (i32, i32) {
    %c0_i32 = arith.constant 0 : i32
    %c0_i32_0 = arith.constant 0 : i32
    %c0_i32_1 = arith.constant 0 : i32
    return %c0_i32, %c0_i32_0 : i32, i32
  }
  func.func @transform_16(%arg0: i32, %arg1: i32) -> (i32, i32) {
    %c0_i32 = arith.constant 0 : i32
    %c0_i32_0 = arith.constant 0 : i32
    %c0_i32_1 = arith.constant 0 : i32
    return %c0_i32, %c0_i32_0 : i32, i32
  }
  func.func @transform_17(%arg0: i32, %arg1: i32) -> (i32, i32) {
    %c0_i32 = arith.constant 0 : i32
    %c0_i32_0 = arith.constant 0 : i32
    %c0_i32_1 = arith.constant 0 : i32
    return %c0_i32, %c0_i32_0 : i32, i32
  }
  func.func @transform_18(%arg0: i32, %arg1: i32) -> (i32, i32) {
    %c0_i32 = arith.constant 0 : i32
    %c0_i32_0 = arith.constant 0 : i32
    %c0_i32_1 = arith.constant 0 : i32
    return %c0_i32, %c0_i32_0 : i32, i32
  }
  func.func @transform_19(%arg0: i32, %arg1: i32) -> (i32, i32) {
    %c0_i32 = arith.constant 0 : i32
    %c0_i32_0 = arith.constant 0 : i32
    %c0_i32_1 = arith.constant 0 : i32
    return %c0_i32, %c0_i32_0 : i32, i32
  }
  func.func @transform_20(%arg0: i32, %arg1: i32) -> (i32, i32) {
    %c0_i32 = arith.constant 0 : i32
    %c0_i32_0 = arith.constant 0 : i32
    %c0_i32_1 = arith.constant 0 : i32
    return %c0_i32, %c0_i32_0 : i32, i32
  }
  func.func @transform_21(%arg0: i32, %arg1: i32) -> (i32, i32) {
    %c0_i32 = arith.constant 0 : i32
    %c0_i32_0 = arith.constant 0 : i32
    %c0_i32_1 = arith.constant 0 : i32
    return %c0_i32, %c0_i32_0 : i32, i32
  }
  func.func @transform_22(%arg0: i32, %arg1: i32) -> (i32, i32) {
    %c0_i32 = arith.constant 0 : i32
    %c0_i32_0 = arith.constant 0 : i32
    %c0_i32_1 = arith.constant 0 : i32
    return %c0_i32, %c0_i32_0 : i32, i32
  }
  func.func @transform_23(%arg0: i32, %arg1: i32) -> (i32, i32) {
    %c0_i32 = arith.constant 0 : i32
    %c0_i32_0 = arith.constant 0 : i32
    %c0_i32_1 = arith.constant 0 : i32
    return %c0_i32, %c0_i32_0 : i32, i32
  }
  func.func @transform_24(%arg0: i32, %arg1: i32) -> (i32, i32) {
    %c0_i32 = arith.constant 0 : i32
    %c0_i32_0 = arith.constant 0 : i32
    %c0_i32_1 = arith.constant 0 : i32
    return %c0_i32, %c0_i32_0 : i32, i32
  }
  func.func @transform_25(%arg0: i32, %arg1: i32) -> (i32, i32) {
    %c0_i32 = arith.constant 0 : i32
    %c0_i32_0 = arith.constant 0 : i32
    %c0_i32_1 = arith.constant 0 : i32
    return %c0_i32, %c0_i32_0 : i32, i32
  }
  func.func @transform_26(%arg0: i32, %arg1: i32) -> (i32, i32) {
    %c0_i32 = arith.constant 0 : i32
    %c0_i32_0 = arith.constant 0 : i32
    %c0_i32_1 = arith.constant 0 : i32
    return %c0_i32, %c0_i32_0 : i32, i32
  }
  func.func @transform_27(%arg0: i32, %arg1: i32) -> (i32, i32) {
    %c0_i32 = arith.constant 0 : i32
    %c0_i32_0 = arith.constant 0 : i32
    %c0_i32_1 = arith.constant 0 : i32
    return %c0_i32, %c0_i32_0 : i32, i32
  }
  func.func @transform_28(%arg0: i32, %arg1: i32) -> (i32, i32) {
    %c0_i32 = arith.constant 0 : i32
    %c0_i32_0 = arith.constant 0 : i32
    %c0_i32_1 = arith.constant 0 : i32
    return %c0_i32, %c0_i32_0 : i32, i32
  }
  func.func @transform_29(%arg0: i32, %arg1: i32) -> (i32, i32) {
    %c0_i32 = arith.constant 0 : i32
    %c0_i32_0 = arith.constant 0 : i32
    %c0_i32_1 = arith.constant 0 : i32
    return %c0_i32, %c0_i32_0 : i32, i32
  }
  func.func @transform_30(%arg0: i32, %arg1: i32) -> (i32, i32) {
    %c0_i32 = arith.constant 0 : i32
    %c0_i32_0 = arith.constant 0 : i32
    %c0_i32_1 = arith.constant 0 : i32
    return %c0_i32, %c0_i32_0 : i32, i32
  }
  func.func @transform_31(%arg0: i32, %arg1: i32) -> (i32, i32) {
    %c0_i32 = arith.constant 0 : i32
    %c0_i32_0 = arith.constant 0 : i32
    return %arg0, %c0_i32 : i32, i32
  }
  func.func @transform_32(%arg0: i32, %arg1: i32) -> (i32, i32) {
    %c0_i32 = arith.constant 0 : i32
    %c0_i32_0 = arith.constant 0 : i32
    return %arg0, %c0_i32 : i32, i32
  }
}

</mosaic_0001>

<llo_original>
// kernel: mes_head_forward.2
$region0: #{mes_head_forward.2}
  #allocation0 [shape = 'u32[]', space=smem, size = 0x4, offset = 0x4, fixed_abs, tag = 'smem constant byte address 0x4 - core index']
  #allocation1 [shape = 'u32[144,128]{1,0:T(1,128)}', space=vmem, size = 0x12000, scoped, tag = 'internal scratch']
  %s0 = inlined_call_operand.hbm [shape: f32[24,32], index: 0, kind: input, shape index: {}]
  %s1 = inlined_call_operand.hbm [shape: f32[12,32], index: 1, kind: input, shape index: {}]
  %s2 = inlined_call_operand.vmem [shape: f32[32,16], index: 2, kind: input, shape index: {}]
  %s3 = inlined_call_operand.hbm [shape: f32[1,16], index: 3, kind: input, shape index: {}]
  %s4 = inlined_call_operand.hbm [shape: f32[32,32], index: 4, kind: input, shape index: {}]
  %s5 = inlined_call_operand.hbm [shape: f32[1,32], index: 5, kind: input, shape index: {}]
  %s6 = inlined_call_operand.hbm [shape: f32[32,64], index: 6, kind: input, shape index: {}]
  %s7 = inlined_call_operand.hbm [shape: f32[1,64], index: 7, kind: input, shape index: {}]
  %s8 = inlined_call_operand.vmem [shape: f32[24,16], index: 8, kind: output, shape index: {0}]
  %s9 = inlined_call_operand.vmem [shape: f32[12,16], index: 9, kind: output, shape index: {1}]
  %s10 = inlined_call_operand.vmem [shape: f32[24,32], index: 10, kind: output, shape index: {2}]
  %s11 = inlined_call_operand.vmem [shape: f32[12,32], index: 11, kind: output, shape index: {3}]
  %s12 = inlined_call_operand.vmem [shape: f32[24,64], index: 12, kind: output, shape index: {4}]
  %s13 = inlined_call_operand.vmem [shape: f32[12,64], index: 13, kind: output, shape index: {5}]
  %14 = xla_tuple %s8, %s9, %s10, %s11, %s12, %s13
  %s15 = sld [smem:[#allocation0]]
  $region110: #{mes_head_forward.2} parent=0
    _
  %s17 = ssub.s32 1, %s15
  %s18 = scalar_select 0, %s17, %s15
  $region1: #{mes_head_forward.2} parent=0
    #allocation2 [shape = 'u8[12288]{0}', space=vmem, size = 0x3000, scoped, tag = 'input window, operand 0, single buffered']
    #allocation3 [shape = 's32[1]{0}', space=sflag, size = 0x4, scoped, tag = 'scoped memory for mes_head_forward.2']
    #allocation4 [shape = 'u8[8192]{0}', space=vmem, size = 0x2000, scoped, tag = 'input window, operand 1, single buffered']
    #allocation5 [shape = 's32[1]{0}', space=sflag, size = 0x4, scoped, tag = 'scoped memory for mes_head_forward.2']
    #allocation6 [shape = 'u8[512]{0}', space=vmem, size = 0x400, scoped, tag = 'input window, operand 3, single buffered']
    #allocation7 [shape = 'u8[16384]{0}', space=vmem, size = 0x4000, scoped, tag = 'input window, operand 4, single buffered']
    #allocation8 [shape = 's32[1]{0}', space=sflag, size = 0x4, scoped, tag = 'scoped memory for mes_head_forward.2']
    #allocation9 [shape = 'u8[512]{0}', space=vmem, size = 0x400, scoped, tag = 'input window, operand 5, single buffered']
    #allocation10 [shape = 'u8[16384]{0}', space=vmem, size = 0x4000, scoped, tag = 'input window, operand 6, single buffered']
    #allocation11 [shape = 's32[1]{0}', space=sflag, size = 0x4, scoped, tag = 'scoped memory for mes_head_forward.2']
    #allocation12 [shape = 'u8[512]{0}', space=vmem, size = 0x400, scoped, tag = 'input window, operand 7, single buffered']
    %19 = vsyncpa [#allocation3], 0
    %20 = vsyncpa [#allocation5], 0
    %21 = vsyncpa [#allocation8], 0
    %22 = vsyncpa [#allocation11], 0
    // Predicated region
    $region2: #{mes_head_forward.2} parent=1 // pred_check
      _
    $region3: #{mes_head_forward.2} parent=1 // pred_check_branch
      %24 = sbr.rel (0) target = $region5
    $region4: #{mes_head_forward.2} parent=1 // pred_region
      %s26 = ssub.s32 384, 384
      %27 = vsyncadd [#allocation3], %s26
      %s28 = sshll.u32 [#allocation2], 4
      %s29 = int_to_ptr.vmem [resolvable:$true] %s28
      %34 = dma.hbm_to_vmem [thread:$0]  %s0, 384, %s29, [#allocation3], 128, 128, 8
    $region5: #{mes_head_forward.2} parent=1 // pred_fallthru
      _
    // Predicated region
    $region6: #{mes_head_forward.2} parent=1 // pred_check
      _
    $region7: #{mes_head_forward.2} parent=1 // pred_check_branch
      %36 = sbr.rel (0) target = $region9
    $region8: #{mes_head_forward.2} parent=1 // pred_region
      %s38 = ssub.s32 256, 256
      %39 = vsyncadd [#allocation5], %s38
      %s40 = sshll.u32 [#allocation4], 4
      %s41 = int_to_ptr.vmem [resolvable:$true] %s40
      %46 = dma.hbm_to_vmem [thread:$0]  %s1, 256, %s41, [#allocation5], 128, 128, 8
    $region9: #{mes_head_forward.2} parent=1 // pred_fallthru
      _
    // Predicated region
    $region10: #{mes_head_forward.2} parent=1 // pred_check
      _
    $region11: #{mes_head_forward.2} parent=1 // pred_check_branch
      %48 = sbr.rel (0) target = $region13
    $region12: #{mes_head_forward.2} parent=1 // pred_region
      _
    $region13: #{mes_head_forward.2} parent=1 // pred_fallthru
      _
    // Predicated region
    $region14: #{mes_head_forward.2} parent=1 // pred_check
      _
    $region15: #{mes_head_forward.2} parent=1 // pred_check_branch
      %50 = sbr.rel (0) target = $region17
    $region16: #{mes_head_forward.2} parent=1 // pred_region
      %s52 = ssub.s32 16, 16
      %53 = vsyncadd [#allocation5], %s52
      %s55 = sshll.u32 [#allocation6], 4
      %s56 = int_to_ptr.vmem [resolvable:$true] %s55
      %58 = dma.hbm_to_vmem [thread:$0]  %s3, 16, %s56, [#allocation5]
    $region17: #{mes_head_forward.2} parent=1 // pred_fallthru
      _
    // Predicated region
    $region18: #{mes_head_forward.2} parent=1 // pred_check
      _
    $region19: #{mes_head_forward.2} parent=1 // pred_check_branch
      %60 = sbr.rel (0) target = $region21
    $region20: #{mes_head_forward.2} parent=1 // pred_region
      %s62 = ssub.s32 512, 512
      %63 = vsyncadd [#allocation8], %s62
      %s64 = sshll.u32 [#allocation7], 4
      %s65 = int_to_ptr.vmem [resolvable:$true] %s64
      %70 = dma.hbm_to_vmem [thread:$0]  %s4, 512, %s65, [#allocation8], 128, 128, 8
    $region21: #{mes_head_forward.2} parent=1 // pred_fallthru
      _
    // Predicated region
    $region22: #{mes_head_forward.2} parent=1 // pred_check
      _
    $region23: #{mes_head_forward.2} parent=1 // pred_check_branch
      %72 = sbr.rel (0) target = $region25
    $region24: #{mes_head_forward.2} parent=1 // pred_region
      %s74 = ssub.s32 16, 16
      %75 = vsyncadd [#allocation8], %s74
      %s77 = sshll.u32 [#allocation9], 4
      %s78 = int_to_ptr.vmem [resolvable:$true] %s77
      %80 = dma.hbm_to_vmem [thread:$0]  %s5, 16, %s78, [#allocation8]
    $region25: #{mes_head_forward.2} parent=1 // pred_fallthru
      _
    // Predicated region
    $region26: #{mes_head_forward.2} parent=1 // pred_check
      _
    $region27: #{mes_head_forward.2} parent=1 // pred_check_branch
      %82 = sbr.rel (0) target = $region29
    $region28: #{mes_head_forward.2} parent=1 // pred_region
      %s84 = ssub.s32 512, 512
      %85 = vsyncadd [#allocation11], %s84
      %s86 = sshll.u32 [#allocation10], 4
      %s87 = int_to_ptr.vmem [resolvable:$true] %s86
      %92 = dma.hbm_to_vmem [thread:$0]  %s6, 512, %s87, [#allocation11], 128, 128, 8
    $region29: #{mes_head_forward.2} parent=1 // pred_fallthru
      _
    // Predicated region
    $region30: #{mes_head_forward.2} parent=1 // pred_check
      _
    $region31: #{mes_head_forward.2} parent=1 // pred_check_branch
      %94 = sbr.rel (0) target = $region33
    $region32: #{mes_head_forward.2} parent=1 // pred_region
      %s96 = ssub.s32 16, 16
      %97 = vsyncadd [#allocation11], %s96
      %s99 = sshll.u32 [#allocation12], 4
      %s100 = int_to_ptr.vmem [resolvable:$true] %s99
      %102 = dma.hbm_to_vmem [thread:$0]  %s7, 16, %s100, [#allocation11]
    $region33: #{mes_head_forward.2} parent=1 // pred_fallthru
      _
    // Predicated region
    $region34: #{mes_head_forward.2} parent=1 // pred_check
      _
    $region35: #{mes_head_forward.2} parent=1 // pred_check_branch
      %104 = sbr.rel (0) target = $region37
    $region36: #{mes_head_forward.2} parent=1 // pred_region
      %105 = dma.done [#allocation3], 384
    $region37: #{mes_head_forward.2} parent=1 // pred_fallthru
      _
    // Predicated region
    $region38: #{mes_head_forward.2} parent=1 // pred_check
      _
    $region39: #{mes_head_forward.2} parent=1 // pred_check_branch
      %107 = sbr.rel (0) target = $region41
    $region40: #{mes_head_forward.2} parent=1 // pred_region
      %108 = dma.done [#allocation5], 256
    $region41: #{mes_head_forward.2} parent=1 // pred_fallthru
      _
    // Predicated region
    $region42: #{mes_head_forward.2} parent=1 // pred_check
      _
    $region43: #{mes_head_forward.2} parent=1 // pred_check_branch
      %110 = sbr.rel (0) target = $region45
    $region44: #{mes_head_forward.2} parent=1 // pred_region
      %111 = dma.done [#allocation5], 16
    $region45: #{mes_head_forward.2} parent=1 // pred_fallthru
      _
    // Predicated region
    $region46: #{mes_head_forward.2} parent=1 // pred_check
      _
    $region47: #{mes_head_forward.2} parent=1 // pred_check_branch
      %113 = sbr.rel (0) target = $region49
    $region48: #{mes_head_forward.2} parent=1 // pred_region
      %114 = dma.done [#allocation8], 512
    $region49: #{mes_head_forward.2} parent=1 // pred_fallthru
      _
    // Predicated region
    $region50: #{mes_head_forward.2} parent=1 // pred_check
      _
    $region51: #{mes_head_forward.2} parent=1 // pred_check_branch
      %116 = sbr.rel (0) target = $region53
    $region52: #{mes_head_forward.2} parent=1 // pred_region
      %117 = dma.done [#allocation8], 16
    $region53: #{mes_head_forward.2} parent=1 // pred_fallthru
      _
    // Predicated region
    $region54: #{mes_head_forward.2} parent=1 // pred_check
      _
    $region55: #{mes_head_forward.2} parent=1 // pred_check_branch
      %119 = sbr.rel (0) target = $region57
    $region56: #{mes_head_forward.2} parent=1 // pred_region
      %120 = dma.done [#allocation11], 512
    $region57: #{mes_head_forward.2} parent=1 // pred_fallthru
      _
    // Predicated region
    $region58: #{mes_head_forward.2} parent=1 // pred_check
      _
    $region59: #{mes_head_forward.2} parent=1 // pred_check_branch
      %122 = sbr.rel (0) target = $region61
    $region60: #{mes_head_forward.2} parent=1 // pred_region
      %123 = dma.done [#allocation11], 16
    $region61: #{mes_head_forward.2} parent=1 // pred_fallthru
      _
    %v124 = vld [vmem:[#allocation2] sm:$0xff]
    %v125 = vld [vmem:[#allocation2 + $0x8] sm:$0xff]
    %v126 = vld [vmem:[#allocation2 + $0x10] sm:$0xff]
    %v127 = vld [vmem:[#allocation4] sm:$0xff]
    %v128 = vld [vmem:[#allocation4 + $0x8] sm:$0xf]
    %v129 = vld [vmem:[%s2] sm:$0xff]
    %v130 = vld [vmem:[%s2 + $0x8] sm:$0xff]
    %v131 = vld [vmem:[%s2 + $0x10] sm:$0xff]
    %v132 = vld [vmem:[%s2 + $0x18] sm:$0xff]
    %v133 = vld [vmem:[#allocation6] sm:$0x1]
    %v135 = vlaneseq
    %v136 = vshrl.u32 %v135, 7
    %v137 = vsub.s32 0, %v136
    %v138 = vrot.slane %v133, %v137
    %vm140 = vcmask 261120
    %v142 = vsel %vm140, %v124, 0
    %v145 = vsel %vm140, %v125, 0
    %v148 = vsel %vm140, %v126, 0
    %150 = vmatprep.subr.mxu0 0.0
    %151 = vmatpush1.msra.mxu0 %v129
    %152 = vmatprep.subr.mxu0 0.0
    %153 = vmatpush1.msra.mxu0 %v130
    %154 = vmatprep.subr.mxu0 0.0
    %155 = vmatpush1.msra.mxu0 %v131
    %156 = vmatprep.subr.mxu0 0.0
    %157 = vmatpush1.msra.mxu0 %v132
    %158 = vmatprep.subr.mxu0 0.0
    %159 = vmatpush1.msra.mxu0 0.0
    %160 = vmatprep.subr.mxu0 0.0
    %161 = vmatpush1.msra.mxu0 0.0
    %162 = vmatprep.subr.mxu0 0.0
    %163 = vmatpush1.msra.mxu0 0.0
    %164 = vmatprep.subr.mxu0 0.0
    %165 = vmatpush1.msra.mxu0 0.0
    %166 = vmatprep.subr.mxu0 0.0
    %167 = vmatpush1.msra.mxu0 0.0
    %168 = vmatprep.subr.mxu0 0.0
    %169 = vmatpush1.msra.mxu0 0.0
    %170 = vmatprep.subr.mxu0 0.0
    %171 = vmatpush1.msra.mxu0 0.0
    %172 = vmatprep.subr.mxu0 0.0
    %173 = vmatpush1.msra.mxu0 0.0
    %174 = vmatprep.subr.mxu0 0.0
    %175 = vmatpush1.msra.mxu0 0.0
    %176 = vmatprep.subr.mxu0 0.0
    %177 = vmatpush1.msra.mxu0 0.0
    %178 = vmatprep.subr.mxu0 0.0
    %179 = vmatpush1.msra.mxu0 0.0
    %180 = vmatprep.subr.mxu0 0.0
    %181 = vmatpush1.msra.mxu0 0.0
    %182 = vmatprep.subr.mxu0 0.0
    %183 = vmatpush1.msra.mxu0 0.0
    %184 = vmatprep.subr.mxu0 0.0
    %185 = vmatpush1.msra.mxu0 0.0
    %186 = vmatprep.subr.mxu0 0.0
    %187 = vmatpush1.msra.mxu0 0.0
    %188 = vmatprep.subr.mxu0 0.0
    %189 = vmatpush1.msra.mxu0 0.0
    %190 = vmatprep.subr.mxu0 0.0
    %191 = vmatpush1.msra.mxu0 0.0
    %192 = vmatprep.subr.mxu0 0.0
    %193 = vmatpush1.msra.mxu0 0.0
    %194 = vmatprep.subr.mxu0 0.0
    %195 = vmatpush1.msra.mxu0 0.0
    %196 = vmatprep.subr.mxu0 0.0
    %197 = vmatpush1.msra.mxu0 0.0
    %198 = vmatprep.subr.mxu0 0.0
    %199 = vmatpush1.msra.mxu0 0.0
    %200 = vmatprep.subr.mxu0 0.0
    %201 = vmatpush1.msra.mxu0 0.0
    %202 = vmatprep.subr.mxu0 0.0
    %203 = vmatpush1.msra.mxu0 0.0
    %204 = vmatprep.subr.mxu0 0.0
    %205 = vmatpush1.msra.mxu0 0.0
    %206 = vmatprep.subr.mxu0 0.0
    %207 = vmatpush1.msra.mxu0 0.0
    %208 = vmatprep.subr.mxu0 0.0
    %209 = vmatpush1.msra.mxu0 0.0
    %210 = vmatprep.subr.mxu0 0.0
    %211 = vmatpush1.msra.mxu0 0.0
    %212 = vmatprep.subr.mxu0 0.0
    %213 = vmatpush1.msra.mxu0 0.0
    %214 = vmatprep.mubr.f32.mxu0 0.0
    %215 = vmatmul.mubr.f32.gmra.mrb[0].mxu0 %v142
    %v216 = vpop.f32.mrb[0].mxu0
    %v217 = vadd.f32 %v138, %v216
    %v218 = vpop.f32.mrb[0].mxu0
    %219 = vmatprep.mubr.f32.mxu0 0.0
    %220 = vmatmul.mubr.f32.gmra.mrb[0].mxu0 %v145
    %v221 = vpop.f32.mrb[0].mxu0
    %v222 = vadd.f32 %v138, %v221
    %v223 = vpop.f32.mrb[0].mxu0
    %224 = vmatprep.mubr.f32.mxu0 0.0
    %225 = vmatmul.mubr.f32.gmra.mrb[0].mxu0 %v148
    %v226 = vpop.f32.mrb[0].mxu0
    %v227 = vadd.f32 %v138, %v226
    %v228 = vpop.f32.mrb[0].mxu0
    %229 = vdwg.mxu0
    %v230 = vmul.f32 %v217, %v217
    %v231 = vmul.f32 %v222, %v222
    %v232 = vmul.f32 %v227, %v227
    %vm233 = vcmask 130048
    %v234 = vsel %vm233, %v230, 0.0
    %235 = vadd.xlane.f32.xlu0 %v234
    %v236 = vpop.xlane.xlu0 %235
    %v237 = vsel %vm233, %v231, 0.0
    %238 = vadd.xlane.f32.xlu0 %v237
    %v239 = vpop.xlane.xlu0 %238
    %v240 = vsel %vm233, %v232, 0.0
    %241 = vadd.xlane.f32.xlu0 %v240
    %v242 = vpop.xlane.xlu0 %241
    %v243 = vmax.f32 %v236, 1e-24
    %v244 = vmax.f32 %v239, 1e-24
    %v245 = vmax.f32 %v242, 1e-24
    %v246 = vrsqrt.pop %v243
    %v247 = vrsqrt.pop %v244
    %v248 = vrsqrt.pop %v245
    %v249 = vmul.f32 %v217, %v246
    %v250 = vmul.f32 %v222, %v247
    %v251 = vmul.f32 %v227, %v248
    %252 = vst.msk [vmem:[%s8] sm:$0xff] %vm233, %v249
    %253 = vst.msk [vmem:[%s8 + $0x8] sm:$0xff] %vm233, %v250
    %254 = vst.msk [vmem:[%s8 + $0x10] sm:$0xff] %vm233, %v251
    %v256 = vsel %vm140, %v127, 0
    %v259 = vsel %vm140, %v128, 0
    %261 = vmatprep.subr.mxu0 0.0
    %262 = vmatpush1.msra.mxu0 %v129
    %263 = vmatprep.subr.mxu0 0.0
    %264 = vmatpush1.msra.mxu0 %v130
    %265 = vmatprep.subr.mxu0 0.0
    %266 = vmatpush1.msra.mxu0 %v131
    %267 = vmatprep.subr.mxu0 0.0
    %268 = vmatpush1.msra.mxu0 %v132
    %269 = vmatprep.subr.mxu0 0.0
    %270 = vmatpush1.msra.mxu0 0.0
    %271 = vmatprep.subr.mxu0 0.0
    %272 = vmatpush1.msra.mxu0 0.0
    %273 = vmatprep.subr.mxu0 0.0
    %274 = vmatpush1.msra.mxu0 0.0
    %275 = vmatprep.subr.mxu0 0.0
    %276 = vmatpush1.msra.mxu0 0.0
    %277 = vmatprep.subr.mxu0 0.0
    %278 = vmatpush1.msra.mxu0 0.0
    %279 = vmatprep.subr.mxu0 0.0
    %280 = vmatpush1.msra.mxu0 0.0
    %281 = vmatprep.subr.mxu0 0.0
    %282 = vmatpush1.msra.mxu0 0.0
    %283 = vmatprep.subr.mxu0 0.0
    %284 = vmatpush1.msra.mxu0 0.0
    %285 = vmatprep.subr.mxu0 0.0
    %286 = vmatpush1.msra.mxu0 0.0
    %287 = vmatprep.subr.mxu0 0.0
    %288 = vmatpush1.msra.mxu0 0.0
    %289 = vmatprep.subr.mxu0 0.0
    %290 = vmatpush1.msra.mxu0 0.0
    %291 = vmatprep.subr.mxu0 0.0
    %292 = vmatpush1.msra.mxu0 0.0
    %293 = vmatprep.subr.mxu0 0.0
    %294 = vmatpush1.msra.mxu0 0.0
    %295 = vmatprep.subr.mxu0 0.0
    %296 = vmatpush1.msra.mxu0 0.0
    %297 = vmatprep.subr.mxu0 0.0
    %298 = vmatpush1.msra.mxu0 0.0
    %299 = vmatprep.subr.mxu0 0.0
    %300 = vmatpush1.msra.mxu0 0.0
    %301 = vmatprep.subr.mxu0 0.0
    %302 = vmatpush1.msra.mxu0 0.0
    %303 = vmatprep.subr.mxu0 0.0
    %304 = vmatpush1.msra.mxu0 0.0
    %305 = vmatprep.subr.mxu0 0.0
    %306 = vmatpush1.msra.mxu0 0.0
    %307 = vmatprep.subr.mxu0 0.0
    %308 = vmatpush1.msra.mxu0 0.0
    %309 = vmatprep.subr.mxu0 0.0
    %310 = vmatpush1.msra.mxu0 0.0
    %311 = vmatprep.subr.mxu0 0.0
    %312 = vmatpush1.msra.mxu0 0.0
    %313 = vmatprep.subr.mxu0 0.0
    %314 = vmatpush1.msra.mxu0 0.0
    %315 = vmatprep.subr.mxu0 0.0
    %316 = vmatpush1.msra.mxu0 0.0
    %317 = vmatprep.subr.mxu0 0.0
    %318 = vmatpush1.msra.mxu0 0.0
    %319 = vmatprep.subr.mxu0 0.0
    %320 = vmatpush1.msra.mxu0 0.0
    %321 = vmatprep.subr.mxu0 0.0
    %322 = vmatpush1.msra.mxu0 0.0
    %323 = vmatprep.subr.mxu0 0.0
    %324 = vmatpush1.msra.mxu0 0.0
    %325 = vmatprep.mubr.f32.mxu0 0.0
    %326 = vmatmul.mubr.f32.gmra.mrb[0].mxu0 %v256
    %v327 = vpop.f32.mrb[0].mxu0
    %v328 = vadd.f32 %v138, %v327
    %v329 = vpop.f32.mrb[0].mxu0
    %330 = vmatprep.mubr.f32.mxu0 0.0
    %331 = vmatmul.mubr.f32.gmra.mrb[0].mxu0 %v259
    %v332 = vpop.f32.mrb[0].mxu0
    %v333 = vadd.f32 %v138, %v332
    %v334 = vpop.f32.mrb[0].mxu0
    %335 = vdwg.mxu0
    %336 = vst.msk [vmem:[%s9] sm:$0xff] %vm233, %v328
    %vm337 = vcmask 125952
    %338 = vst.msk [vmem:[%s9 + $0x8] sm:$0xf] %vm337, %v333
    %v339 = vld [vmem:[#allocation7] sm:$0xff]
    %v340 = vld [vmem:[#allocation7 + $0x8] sm:$0xff]
    %v341 = vld [vmem:[#allocation7 + $0x10] sm:$0xff]
    %v342 = vld [vmem:[#allocation7 + $0x18] sm:$0xff]
    %v343 = vld [vmem:[#allocation9] sm:$0x1]
    %v345 = vlaneseq
    %v346 = vshrl.u32 %v345, 7
    %v347 = vsub.s32 0, %v346
    %v348 = vrot.slane %v343, %v347
    %350 = vmatprep.subr.mxu0 0.0
    %351 = vmatpush1.msra.mxu0 %v339
    %352 = vmatprep.subr.mxu0 0.0
    %353 = vmatpush1.msra.mxu0 %v340
    %354 = vmatprep.subr.mxu0 0.0
    %355 = vmatpush1.msra.mxu0 %v341
    %356 = vmatprep.subr.mxu0 0.0
    %357 = vmatpush1.msra.mxu0 %v342
    %358 = vmatprep.subr.mxu0 0.0
    %359 = vmatpush1.msra.mxu0 0.0
    %360 = vmatprep.subr.mxu0 0.0
    %361 = vmatpush1.msra.mxu0 0.0
    %362 = vmatprep.subr.mxu0 0.0
    %363 = vmatpush1.msra.mxu0 0.0
    %364 = vmatprep.subr.mxu0 0.0
    %365 = vmatpush1.msra.mxu0 0.0
    %366 = vmatprep.subr.mxu0 0.0
    %367 = vmatpush1.msra.mxu0 0.0
    %368 = vmatprep.subr.mxu0 0.0
    %369 = vmatpush1.msra.mxu0 0.0
    %370 = vmatprep.subr.mxu0 0.0
    %371 = vmatpush1.msra.mxu0 0.0
    %372 = vmatprep.subr.mxu0 0.0
    %373 = vmatpush1.msra.mxu0 0.0
    %374 = vmatprep.subr.mxu0 0.0
    %375 = vmatpush1.msra.mxu0 0.0
    %376 = vmatprep.subr.mxu0 0.0
    %377 = vmatpush1.msra.mxu0 0.0
    %378 = vmatprep.subr.mxu0 0.0
    %379 = vmatpush1.msra.mxu0 0.0
    %380 = vmatprep.subr.mxu0 0.0
    %381 = vmatpush1.msra.mxu0 0.0
    %382 = vmatprep.subr.mxu0 0.0
    %383 = vmatpush1.msra.mxu0 0.0
    %384 = vmatprep.subr.mxu0 0.0
    %385 = vmatpush1.msra.mxu0 0.0
    %386 = vmatprep.subr.mxu0 0.0
    %387 = vmatpush1.msra.mxu0 0.0
    %388 = vmatprep.subr.mxu0 0.0
    %389 = vmatpush1.msra.mxu0 0.0
    %390 = vmatprep.subr.mxu0 0.0
    %391 = vmatpush1.msra.mxu0 0.0
    %392 = vmatprep.subr.mxu0 0.0
    %393 = vmatpush1.msra.mxu0 0.0
    %394 = vmatprep.subr.mxu0 0.0
    %395 = vmatpush1.msra.mxu0 0.0
    %396 = vmatprep.subr.mxu0 0.0
    %397 = vmatpush1.msra.mxu0 0.0
    %398 = vmatprep.subr.mxu0 0.0
    %399 = vmatpush1.msra.mxu0 0.0
    %400 = vmatprep.subr.mxu0 0.0
    %401 = vmatpush1.msra.mxu0 0.0
    %402 = vmatprep.subr.mxu0 0.0
    %403 = vmatpush1.msra.mxu0 0.0
    %404 = vmatprep.subr.mxu0 0.0
    %405 = vmatpush1.msra.mxu0 0.0
    %406 = vmatprep.subr.mxu0 0.0
    %407 = vmatpush1.msra.mxu0 0.0
    %408 = vmatprep.subr.mxu0 0.0
    %409 = vmatpush1.msra.mxu0 0.0
    %410 = vmatprep.subr.mxu0 0.0
    %411 = vmatpush1.msra.mxu0 0.0
    %412 = vmatprep.subr.mxu0 0.0
    %413 = vmatpush1.msra.mxu0 0.0
    %414 = vmatprep.mubr.f32.mxu0 0.0
    %415 = vmatmul.mubr.f32.gmra.mrb[0].mxu0 %v142
    %v416 = vpop.f32.mrb[0].mxu0
    %v417 = vadd.f32 %v348, %v416
    %v418 = vpop.f32.mrb[0].mxu0
    %419 = vmatprep.mubr.f32.mxu0 0.0
    %420 = vmatmul.mubr.f32.gmra.mrb[0].mxu0 %v145
    %v421 = vpop.f32.mrb[0].mxu0
    %v422 = vadd.f32 %v348, %v421
    %v423 = vpop.f32.mrb[0].mxu0
    %424 = vmatprep.mubr.f32.mxu0 0.0
    %425 = vmatmul.mubr.f32.gmra.mrb[0].mxu0 %v148
    %v426 = vpop.f32.mrb[0].mxu0
    %v427 = vadd.f32 %v348, %v426
    %v428 = vpop.f32.mrb[0].mxu0
    %429 = vdwg.mxu0
    %v430 = vmul.f32 %v417, %v417
    %v431 = vmul.f32 %v422, %v422
    %v432 = vmul.f32 %v427, %v427
    %v433 = vsel %vm140, %v430, 0.0
    %434 = vadd.xlane.f32.xlu0 %v433
    %v435 = vpop.xlane.xlu0 %434
    %v436 = vsel %vm140, %v431, 0.0
    %437 = vadd.xlane.f32.xlu0 %v436
    %v438 = vpop.xlane.xlu0 %437
    %v439 = vsel %vm140, %v432, 0.0
    %440 = vadd.xlane.f32.xlu0 %v439
    %v441 = vpop.xlane.xlu0 %440
    %v442 = vmax.f32 %v435, 1e-24
    %v443 = vmax.f32 %v438, 1e-24
    %v444 = vmax.f32 %v441, 1e-24
    %v445 = vrsqrt.pop %v442
    %v446 = vrsqrt.pop %v443
    %v447 = vrsqrt.pop %v444
    %v448 = vmul.f32 %v417, %v445
    %v449 = vmul.f32 %v422, %v446
    %v450 = vmul.f32 %v427, %v447
    %451 = vst.msk [vmem:[%s10] sm:$0xff] %vm140, %v448
    %452 = vst.msk [vmem:[%s10 + $0x8] sm:$0xff] %vm140, %v449
    %453 = vst.msk [vmem:[%s10 + $0x10] sm:$0xff] %vm140, %v450
    %454 = vmatprep.subr.mxu0 0.0
    %455 = vmatpush1.msra.mxu0 %v339
    %456 = vmatprep.subr.mxu0 0.0
    %457 = vmatpush1.msra.mxu0 %v340
    %458 = vmatprep.subr.mxu0 0.0
    %459 = vmatpush1.msra.mxu0 %v341
    %460 = vmatprep.subr.mxu0 0.0
    %461 = vmatpush1.msra.mxu0 %v342
    %462 = vmatprep.subr.mxu0 0.0
    %463 = vmatpush1.msra.mxu0 0.0
    %464 = vmatprep.subr.mxu0 0.0
    %465 = vmatpush1.msra.mxu0 0.0
    %466 = vmatprep.subr.mxu0 0.0
    %467 = vmatpush1.msra.mxu0 0.0
    %468 = vmatprep.subr.mxu0 0.0
    %469 = vmatpush1.msra.mxu0 0.0
    %470 = vmatprep.subr.mxu0 0.0
    %471 = vmatpush1.msra.mxu0 0.0
    %472 = vmatprep.subr.mxu0 0.0
    %473 = vmatpush1.msra.mxu0 0.0
    %474 = vmatprep.subr.mxu0 0.0
    %475 = vmatpush1.msra.mxu0 0.0
    %476 = vmatprep.subr.mxu0 0.0
    %477 = vmatpush1.msra.mxu0 0.0
    %478 = vmatprep.subr.mxu0 0.0
    %479 = vmatpush1.msra.mxu0 0.0
    %480 = vmatprep.subr.mxu0 0.0
    %481 = vmatpush1.msra.mxu0 0.0
    %482 = vmatprep.subr.mxu0 0.0
    %483 = vmatpush1.msra.mxu0 0.0
    %484 = vmatprep.subr.mxu0 0.0
    %485 = vmatpush1.msra.mxu0 0.0
    %486 = vmatprep.subr.mxu0 0.0
    %487 = vmatpush1.msra.mxu0 0.0
    %488 = vmatprep.subr.mxu0 0.0
    %489 = vmatpush1.msra.mxu0 0.0
    %490 = vmatprep.subr.mxu0 0.0
    %491 = vmatpush1.msra.mxu0 0.0
    %492 = vmatprep.subr.mxu0 0.0
    %493 = vmatpush1.msra.mxu0 0.0
    %494 = vmatprep.subr.mxu0 0.0
    %495 = vmatpush1.msra.mxu0 0.0
    %496 = vmatprep.subr.mxu0 0.0
    %497 = vmatpush1.msra.mxu0 0.0
    %498 = vmatprep.subr.mxu0 0.0
    %499 = vmatpush1.msra.mxu0 0.0
    %500 = vmatprep.subr.mxu0 0.0
    %501 = vmatpush1.msra.mxu0 0.0
    %502 = vmatprep.subr.mxu0 0.0
    %503 = vmatpush1.msra.mxu0 0.0
    %504 = vmatprep.subr.mxu0 0.0
    %505 = vmatpush1.msra.mxu0 0.0
    %506 = vmatprep.subr.mxu0 0.0
    %507 = vmatpush1.msra.mxu0 0.0
    %508 = vmatprep.subr.mxu0 0.0
    %509 = vmatpush1.msra.mxu0 0.0
    %510 = vmatprep.subr.mxu0 0.0
    %511 = vmatpush1.msra.mxu0 0.0
    %512 = vmatprep.subr.mxu0 0.0
    %513 = vmatpush1.msra.mxu0 0.0
    %514 = vmatprep.subr.mxu0 0.0
    %515 = vmatpush1.msra.mxu0 0.0
    %516 = vmatprep.subr.mxu0 0.0
    %517 = vmatpush1.msra.mxu0 0.0
    %518 = vmatprep.mubr.f32.mxu0 0.0
    %519 = vmatmul.mubr.f32.gmra.mrb[0].mxu0 %v256
    %v520 = vpop.f32.mrb[0].mxu0
    %v521 = vadd.f32 %v348, %v520
    %v522 = vpop.f32.mrb[0].mxu0
    %523 = vmatprep.mubr.f32.mxu0 0.0
    %524 = vmatmul.mubr.f32.gmra.mrb[0].mxu0 %v259
    %v525 = vpop.f32.mrb[0].mxu0
    %v526 = vadd.f32 %v348, %v525
    %v527 = vpop.f32.mrb[0].mxu0
    %528 = vdwg.mxu0
    %529 = vst.msk [vmem:[%s11] sm:$0xff] %vm140, %v521
    %vm530 = vcmask 257024
    %531 = vst.msk [vmem:[%s11 + $0x8] sm:$0xf] %vm530, %v526
    %v532 = vld [vmem:[#allocation10] sm:$0xff]
    %v533 = vld [vmem:[#allocation10 + $0x8] sm:$0xff]
    %v534 = vld [vmem:[#allocation10 + $0x10] sm:$0xff]
    %v535 = vld [vmem:[#allocation10 + $0x18] sm:$0xff]
    %v536 = vld [vmem:[#allocation12] sm:$0x1]
    %v538 = vlaneseq
    %v539 = vshrl.u32 %v538, 7
    %v540 = vsub.s32 0, %v539
    %v541 = vrot.slane %v536, %v540
    %543 = vmatprep.subr.mxu0 0.0
    %544 = vmatpush1.msra.mxu0 %v532
    %545 = vmatprep.subr.mxu0 0.0
    %546 = vmatpush1.msra.mxu0 %v533
    %547 = vmatprep.subr.mxu0 0.0
    %548 = vmatpush1.msra.mxu0 %v534
    %549 = vmatprep.subr.mxu0 0.0
    %550 = vmatpush1.msra.mxu0 %v535
    %551 = vmatprep.subr.mxu0 0.0
    %552 = vmatpush1.msra.mxu0 0.0
    %553 = vmatprep.subr.mxu0 0.0
    %554 = vmatpush1.msra.mxu0 0.0
    %555 = vmatprep.subr.mxu0 0.0
    %556 = vmatpush1.msra.mxu0 0.0
    %557 = vmatprep.subr.mxu0 0.0
    %558 = vmatpush1.msra.mxu0 0.0
    %559 = vmatprep.subr.mxu0 0.0
    %560 = vmatpush1.msra.mxu0 0.0
    %561 = vmatprep.subr.mxu0 0.0
    %562 = vmatpush1.msra.mxu0 0.0
    %563 = vmatprep.subr.mxu0 0.0
    %564 = vmatpush1.msra.mxu0 0.0
    %565 = vmatprep.subr.mxu0 0.0
    %566 = vmatpush1.msra.mxu0 0.0
    %567 = vmatprep.subr.mxu0 0.0
    %568 = vmatpush1.msra.mxu0 0.0
    %569 = vmatprep.subr.mxu0 0.0
    %570 = vmatpush1.msra.mxu0 0.0
    %571 = vmatprep.subr.mxu0 0.0
    %572 = vmatpush1.msra.mxu0 0.0
    %573 = vmatprep.subr.mxu0 0.0
    %574 = vmatpush1.msra.mxu0 0.0
    %575 = vmatprep.subr.mxu0 0.0
    %576 = vmatpush1.msra.mxu0 0.0
    %577 = vmatprep.subr.mxu0 0.0
    %578 = vmatpush1.msra.mxu0 0.0
    %579 = vmatprep.subr.mxu0 0.0
    %580 = vmatpush1.msra.mxu0 0.0
    %581 = vmatprep.subr.mxu0 0.0
    %582 = vmatpush1.msra.mxu0 0.0
    %583 = vmatprep.subr.mxu0 0.0
    %584 = vmatpush1.msra.mxu0 0.0
    %585 = vmatprep.subr.mxu0 0.0
    %586 = vmatpush1.msra.mxu0 0.0
    %587 = vmatprep.subr.mxu0 0.0
    %588 = vmatpush1.msra.mxu0 0.0
    %589 = vmatprep.subr.mxu0 0.0
    %590 = vmatpush1.msra.mxu0 0.0
    %591 = vmatprep.subr.mxu0 0.0
    %592 = vmatpush1.msra.mxu0 0.0
    %593 = vmatprep.subr.mxu0 0.0
    %594 = vmatpush1.msra.mxu0 0.0
    %595 = vmatprep.subr.mxu0 0.0
    %596 = vmatpush1.msra.mxu0 0.0
    %597 = vmatprep.subr.mxu0 0.0
    %598 = vmatpush1.msra.mxu0 0.0
    %599 = vmatprep.subr.mxu0 0.0
    %600 = vmatpush1.msra.mxu0 0.0
    %601 = vmatprep.subr.mxu0 0.0
    %602 = vmatpush1.msra.mxu0 0.0
    %603 = vmatprep.subr.mxu0 0.0
    %604 = vmatpush1.msra.mxu0 0.0
    %605 = vmatprep.subr.mxu0 0.0
    %606 = vmatpush1.msra.mxu0 0.0
    %607 = vmatprep.mubr.f32.mxu0 0.0
    %608 = vmatmul.mubr.f32.gmra.mrb[0].mxu0 %v142
    %v609 = vpop.f32.mrb[0].mxu0
    %v610 = vadd.f32 %v541, %v609
    %v611 = vpop.f32.mrb[0].mxu0
    %612 = vmatprep.mubr.f32.mxu0 0.0
    %613 = vmatmul.mubr.f32.gmra.mrb[0].mxu0 %v145
    %v614 = vpop.f32.mrb[0].mxu0
    %v615 = vadd.f32 %v541, %v614
    %v616 = vpop.f32.mrb[0].mxu0
    %617 = vmatprep.mubr.f32.mxu0 0.0
    %618 = vmatmul.mubr.f32.gmra.mrb[0].mxu0 %v148
    %v619 = vpop.f32.mrb[0].mxu0
    %v620 = vadd.f32 %v541, %v619
    %v621 = vpop.f32.mrb[0].mxu0
    %622 = vdwg.mxu0
    %v623 = vmul.f32 %v610, %v610
    %v624 = vmul.f32 %v615, %v615
    %v625 = vmul.f32 %v620, %v620
    %vm626 = vcmask 523264
    %v627 = vsel %vm626, %v623, 0.0
    %628 = vadd.xlane.f32.xlu0 %v627
    %v629 = vpop.xlane.xlu0 %628
    %v630 = vsel %vm626, %v624, 0.0
    %631 = vadd.xlane.f32.xlu0 %v630
    %v632 = vpop.xlane.xlu0 %631
    %v633 = vsel %vm626, %v625, 0.0
    %634 = vadd.xlane.f32.xlu0 %v633
    %v635 = vpop.xlane.xlu0 %634
    %v636 = vmax.f32 %v629, 1e-24
    %v637 = vmax.f32 %v632, 1e-24
    %v638 = vmax.f32 %v635, 1e-24
    %v639 = vrsqrt.pop %v636
    %v640 = vrsqrt.pop %v637
    %v641 = vrsqrt.pop %v638
    %v642 = vmul.f32 %v610, %v639
    %v643 = vmul.f32 %v615, %v640
    %v644 = vmul.f32 %v620, %v641
    %645 = vst.msk [vmem:[%s12] sm:$0xff] %vm626, %v642
    %646 = vst.msk [vmem:[%s12 + $0x8] sm:$0xff] %vm626, %v643
    %647 = vst.msk [vmem:[%s12 + $0x10] sm:$0xff] %vm626, %v644
    %648 = vmatprep.subr.mxu0 0.0
    %649 = vmatpush1.msra.mxu0 %v532
    %650 = vmatprep.subr.mxu0 0.0
    %651 = vmatpush1.msra.mxu0 %v533
    %652 = vmatprep.subr.mxu0 0.0
    %653 = vmatpush1.msra.mxu0 %v534
    %654 = vmatprep.subr.mxu0 0.0
    %655 = vmatpush1.msra.mxu0 %v535
    %656 = vmatprep.subr.mxu0 0.0
    %657 = vmatpush1.msra.mxu0 0.0
    %658 = vmatprep.subr.mxu0 0.0
    %659 = vmatpush1.msra.mxu0 0.0
    %660 = vmatprep.subr.mxu0 0.0
    %661 = vmatpush1.msra.mxu0 0.0
    %662 = vmatprep.subr.mxu0 0.0
    %663 = vmatpush1.msra.mxu0 0.0
    %664 = vmatprep.subr.mxu0 0.0
    %665 = vmatpush1.msra.mxu0 0.0
    %666 = vmatprep.subr.mxu0 0.0
    %667 = vmatpush1.msra.mxu0 0.0
    %668 = vmatprep.subr.mxu0 0.0
    %669 = vmatpush1.msra.mxu0 0.0
    %670 = vmatprep.subr.mxu0 0.0
    %671 = vmatpush1.msra.mxu0 0.0
    %672 = vmatprep.subr.mxu0 0.0
    %673 = vmatpush1.msra.mxu0 0.0
    %674 = vmatprep.subr.mxu0 0.0
    %675 = vmatpush1.msra.mxu0 0.0
    %676 = vmatprep.subr.mxu0 0.0
    %677 = vmatpush1.msra.mxu0 0.0
    %678 = vmatprep.subr.mxu0 0.0
    %679 = vmatpush1.msra.mxu0 0.0
    %680 = vmatprep.subr.mxu0 0.0
    %681 = vmatpush1.msra.mxu0 0.0
    %682 = vmatprep.subr.mxu0 0.0
    %683 = vmatpush1.msra.mxu0 0.0
    %684 = vmatprep.subr.mxu0 0.0
    %685 = vmatpush1.msra.mxu0 0.0
    %686 = vmatprep.subr.mxu0 0.0
    %687 = vmatpush1.msra.mxu0 0.0
    %688 = vmatprep.subr.mxu0 0.0
    %689 = vmatpush1.msra.mxu0 0.0
    %690 = vmatprep.subr.mxu0 0.0
    %691 = vmatpush1.msra.mxu0 0.0
    %692 = vmatprep.subr.mxu0 0.0
    %693 = vmatpush1.msra.mxu0 0.0
    %694 = vmatprep.subr.mxu0 0.0
    %695 = vmatpush1.msra.mxu0 0.0
    %696 = vmatprep.subr.mxu0 0.0
    %697 = vmatpush1.msra.mxu0 0.0
    %698 = vmatprep.subr.mxu0 0.0
    %699 = vmatpush1.msra.mxu0 0.0
    %700 = vmatprep.subr.mxu0 0.0
    %701 = vmatpush1.msra.mxu0 0.0
    %702 = vmatprep.subr.mxu0 0.0
    %703 = vmatpush1.msra.mxu0 0.0
    %704 = vmatprep.subr.mxu0 0.0
    %705 = vmatpush1.msra.mxu0 0.0
    %706 = vmatprep.subr.mxu0 0.0
    %707 = vmatpush1.msra.mxu0 0.0
    %708 = vmatprep.subr.mxu0 0.0
    %709 = vmatpush1.msra.mxu0 0.0
    %710 = vmatprep.subr.mxu0 0.0
    %711 = vmatpush1.msra.mxu0 0.0
    %712 = vmatprep.mubr.f32.mxu0 0.0
    %713 = vmatmul.mubr.f32.gmra.mrb[0].mxu0 %v256
    %v714 = vpop.f32.mrb[0].mxu0
    %v715 = vadd.f32 %v541, %v714
    %v716 = vpop.f32.mrb[0].mxu0
    %717 = vmatprep.mubr.f32.mxu0 0.0
    %718 = vmatmul.mubr.f32.gmra.mrb[0].mxu0 %v259
    %v719 = vpop.f32.mrb[0].mxu0
    %v720 = vadd.f32 %v541, %v719
    %v721 = vpop.f32.mrb[0].mxu0
    %722 = vdwg.mxu0
    %723 = vst.msk [vmem:[%s13] sm:$0xff] %vm626, %v715
    %vm724 = vcmask 519168
    %725 = vst.msk [vmem:[%s13 + $0x8] sm:$0xf] %vm724, %v720
    // Predicated region
    $region62: #{mes_head_forward.2} parent=1 // pred_check
      _
    $region63: #{mes_head_forward.2} parent=1 // pred_check_branch
      %727 = sbr.rel (0) target = $region65
    $region64: #{mes_head_forward.2} parent=1 // pred_region
      _
    $region65: #{mes_head_forward.2} parent=1 // pred_fallthru
      _
    // Predicated region
    $region66: #{mes_head_forward.2} parent=1 // pred_check
      _
    $region67: #{mes_head_forward.2} parent=1 // pred_check_branch
      %729 = sbr.rel (0) target = $region69
    $region68: #{mes_head_forward.2} parent=1 // pred_region
      _
    $region69: #{mes_head_forward.2} parent=1 // pred_fallthru
      _
    // Predicated region
    $region70: #{mes_head_forward.2} parent=1 // pred_check
      _
    $region71: #{mes_head_forward.2} parent=1 // pred_check_branch
      %731 = sbr.rel (0) target = $region73
    $region72: #{mes_head_forward.2} parent=1 // pred_region
      _
    $region73: #{mes_head_forward.2} parent=1 // pred_fallthru
      _
    // Predicated region
    $region74: #{mes_head_forward.2} parent=1 // pred_check
      _
    $region75: #{mes_head_forward.2} parent=1 // pred_check_branch
      %733 = sbr.rel (0) target = $region77
    $region76: #{mes_head_forward.2} parent=1 // pred_region
      _
    $region77: #{mes_head_forward.2} parent=1 // pred_fallthru
      _
    // Predicated region
    $region78: #{mes_head_forward.2} parent=1 // pred_check
      _
    $region79: #{mes_head_forward.2} parent=1 // pred_check_branch
      %735 = sbr.rel (0) target = $region81
    $region80: #{mes_head_forward.2} parent=1 // pred_region
      _
    $region81: #{mes_head_forward.2} parent=1 // pred_fallthru
      _
    // Predicated region
    $region82: #{mes_head_forward.2} parent=1 // pred_check
      _
    $region83: #{mes_head_forward.2} parent=1 // pred_check_branch
      %737 = sbr.rel (0) target = $region85
    $region84: #{mes_head_forward.2} parent=1 // pred_region
      _
    $region85: #{mes_head_forward.2} parent=1 // pred_fallthru
      _
    // Predicated region
    $region86: #{mes_head_forward.2} parent=1 // pred_check
      _
    $region87: #{mes_head_forward.2} parent=1 // pred_check_branch
      %739 = sbr.rel (0) target = $region89
    $region88: #{mes_head_forward.2} parent=1 // pred_region
      _
    $region89: #{mes_head_forward.2} parent=1 // pred_fallthru
      _
    // Predicated region
    $region90: #{mes_head_forward.2} parent=1 // pred_check
      _
    $region91: #{mes_head_forward.2} parent=1 // pred_check_branch
      %741 = sbr.rel (0) target = $region93
    $region92: #{mes_head_forward.2} parent=1 // pred_region
      _
    $region93: #{mes_head_forward.2} parent=1 // pred_fallthru
      _
    // Predicated region
    $region94: #{mes_head_forward.2} parent=1 // pred_check
      _
    $region95: #{mes_head_forward.2} parent=1 // pred_check_branch
      %743 = sbr.rel (0) target = $region97
    $region96: #{mes_head_forward.2} parent=1 // pred_region
      _
    $region97: #{mes_head_forward.2} parent=1 // pred_fallthru
      _
    // Predicated region
    $region98: #{mes_head_forward.2} parent=1 // pred_check
      _
    $region99: #{mes_head_forward.2} parent=1 // pred_check_branch
      %745 = sbr.rel (0) target = $region101
    $region100: #{mes_head_forward.2} parent=1 // pred_region
      _
    $region101: #{mes_head_forward.2} parent=1 // pred_fallthru
      _
    // Predicated region
    $region102: #{mes_head_forward.2} parent=1 // pred_check
      _
    $region103: #{mes_head_forward.2} parent=1 // pred_check_branch
      %747 = sbr.rel (0) target = $region105
    $region104: #{mes_head_forward.2} parent=1 // pred_region
      _
    $region105: #{mes_head_forward.2} parent=1 // pred_fallthru
      _
    // Predicated region
    $region106: #{mes_head_forward.2} parent=1 // pred_check
      _
    $region107: #{mes_head_forward.2} parent=1 // pred_check_branch
      %749 = sbr.rel (0) target = $region109
    $region108: #{mes_head_forward.2} parent=1 // pred_region
      _
    $region109: #{mes_head_forward.2} parent=1 // pred_fallthru
      _
    %750 = vsyncpa [#allocation3], 1
    %751 = vsyncpa [#allocation5], 1
    %752 = vsyncpa [#allocation8], 1
    %753 = vsyncpa [#allocation11], 1

// kernel: mes_head_forward.3
$region0: #{mes_head_forward.3}
  #allocation0 [shape = 'u32[]', space=smem, size = 0x4, offset = 0x4, fixed_abs, tag = 'smem constant byte address 0x4 - core index']
  #allocation1 [shape = 'u32[144,128]{1,0:T(1,128)}', space=vmem, size = 0x12000, scoped, tag = 'internal scratch']
  #allocation2 [shape = 'f32[128,128]{1,0:T(8,128)}', space=vmem, size = 0x10000, scoped, tag = 'scratch operand']
  #allocation3 [shape = 'f32[128,64]{1,0:T(8,128)}', space=vmem, size = 0x10000, scoped, tag = 'scratch operand']
  %s0 = inlined_call_operand.smem [shape: u32[33], index: -1, kind: input, shape index: {}]
  %s1 = sld [smem:[%s0]]
  %s2 = scalar_lea.smem %s0, 1
  %s3 = sld [smem:[%s2]]
  %s4 = scalar_lea.smem %s0, 2
  %s5 = sld [smem:[%s4]]
  %s6 = scalar_lea.smem %s0, 3
  %s7 = sld [smem:[%s6]]
  %s8 = scalar_lea.smem %s0, 4
  %s9 = sld [smem:[%s8]]
  %s10 = scalar_lea.smem %s0, 5
  %s11 = sld [smem:[%s10]]
  %s12 = scalar_lea.smem %s0, 6
  %s13 = sld [smem:[%s12]]
  %s14 = scalar_lea.smem %s0, 7
  %s15 = sld [smem:[%s14]]
  %s16 = scalar_lea.smem %s0, 8
  %s17 = sld [smem:[%s16]]
  %s18 = scalar_lea.smem %s0, 9
  %s19 = sld [smem:[%s18]]
  %s20 = scalar_lea.smem %s0, 10
  %s21 = sld [smem:[%s20]]
  %s22 = scalar_lea.smem %s0, 11
  %s23 = sld [smem:[%s22]]
  %s24 = scalar_lea.smem %s0, 12
  %s25 = sld [smem:[%s24]]
  %s26 = scalar_lea.smem %s0, 13
  %s27 = sld [smem:[%s26]]
  %s28 = scalar_lea.smem %s0, 14
  %s29 = sld [smem:[%s28]]
  %s30 = scalar_lea.smem %s0, 15
  %s31 = sld [smem:[%s30]]
  %s32 = scalar_lea.smem %s0, 16
  %s33 = sld [smem:[%s32]]
  %s34 = scalar_lea.smem %s0, 17
  %s35 = sld [smem:[%s34]]
  %s36 = scalar_lea.smem %s0, 18
  %s37 = sld [smem:[%s36]]
  %s38 = scalar_lea.smem %s0, 19
  %s39 = sld [smem:[%s38]]
  %s40 = scalar_lea.smem %s0, 20
  %s41 = sld [smem:[%s40]]
  %s42 = scalar_lea.smem %s0, 21
  %s43 = sld [smem:[%s42]]
  %s44 = scalar_lea.smem %s0, 22
  %s45 = sld [smem:[%s44]]
  %s46 = scalar_lea.smem %s0, 23
  %s47 = sld [smem:[%s46]]
  %s48 = scalar_lea.smem %s0, 24
  %s49 = sld [smem:[%s48]]
  %s50 = scalar_lea.smem %s0, 25
  %s51 = sld [smem:[%s50]]
  %s52 = scalar_lea.smem %s0, 26
  %s53 = sld [smem:[%s52]]
  %s54 = scalar_lea.smem %s0, 27
  %s55 = sld [smem:[%s54]]
  %s56 = scalar_lea.smem %s0, 28
  %s57 = sld [smem:[%s56]]
  %s58 = scalar_lea.smem %s0, 29
  %s59 = sld [smem:[%s58]]
  %s60 = scalar_lea.smem %s0, 30
  %s61 = sld [smem:[%s60]]
  %s62 = scalar_lea.smem %s0, 31
  %s63 = sld [smem:[%s62]]
  %s64 = scalar_lea.smem %s0, 32
  %s65 = sld [smem:[%s64]]
  %66 = xla_tuple %s63, %s65
  %s67 = sld [smem:[#allocation0]]
  $region196: #{mes_head_forward.3} parent=0
    _
  %s69 = ssub.s32 1, %s67
  %s70 = scalar_select 0, %s69, %s67
  $region1: #{mes_head_forward.3} parent=0
    #allocation4 [shape = 'u8[262144]{0}', space=vmem, size = 0x40000, scoped, tag = 'input window, operand 0']
    loop: start=0, step=1, limit=10
    $region2: #{mes_head_forward.3} parent=1 // loop_pre_header
      _
    $region3: #{mes_head_forward.3} parent=1 // loop_header
      %s72 = sphi 0, %s76
      %p73 = scmp.ge.s32.totalorder %s72, 10
      %s79 = sphi 0, %s91
      %s80 = sphi 0, %s87
      %s81 = sphi 0, %s79
      %s82 = sphi 0, %s80
      %s83 = sphi 0, %s81
      %s84 = sphi 0, %s82
      %s96 = sphi 0, %s98
      %s99 = sphi 0, %s96
      %s100 = sphi 0, %s99
      %s116 = sphi 0, %s100
      %s122 = sphi 0, %s124
      %s125 = sphi 0, %s122
      %s126 = sphi 0, %s125
      %s142 = sphi 0, %s126
      %s146 = sphi 0, %s146
      %s148 = sphi 0, %s146
      %s149 = sphi 0, %s148
      %s163 = sphi 0, %s149
      %s169 = sphi 0, %s171
      %s172 = sphi 0, %s169
      %s173 = sphi 0, %s172
      %s189 = sphi 0, %s173
      %s193 = sphi 0, %s193
      %s195 = sphi 0, %s193
      %s196 = sphi 0, %s195
      %s210 = sphi 0, %s196
      %s214 = sphi 0, %s214
      %s216 = sphi 0, %s214
      %s217 = sphi 0, %s216
      %s231 = sphi 0, %s217
      %s235 = sphi 0, %s235
      %s237 = sphi 0, %s235
      %s238 = sphi 0, %s237
      %s252 = sphi 0, %s238
      %s256 = sphi 0, %s256
      %s258 = sphi 0, %s256
      %s259 = sphi 0, %s258
      %s273 = sphi 0, %s259
      %s277 = sphi 0, %s277
      %s279 = sphi 0, %s277
      %s280 = sphi 0, %s279
      %s294 = sphi 0, %s280
      %s298 = sphi 0, %s298
      %s300 = sphi 0, %s298
      %s301 = sphi 0, %s300
      %s315 = sphi 0, %s301
      %s319 = sphi 0, %s319
      %s321 = sphi 0, %s319
      %s322 = sphi 0, %s321
      %s336 = sphi 0, %s322
      %s340 = sphi 0, %s340
      %s342 = sphi 0, %s340
      %s343 = sphi 0, %s342
      %s357 = sphi 0, %s343
      %s361 = sphi 0, %s361
      %s363 = sphi 0, %s361
      %s364 = sphi 0, %s363
      %s378 = sphi 0, %s364
      %s382 = sphi 0, %s382
      %s384 = sphi 0, %s382
      %s385 = sphi 0, %s384
      %s399 = sphi 0, %s385
      %s403 = sphi 0, %s403
      %s405 = sphi 0, %s403
      %s406 = sphi 0, %s405
      %s420 = sphi 0, %s406
      %s424 = sphi 0, %s424
      %s426 = sphi 0, %s424
      %s427 = sphi 0, %s426
      %s441 = sphi 0, %s427
      %s445 = sphi 0, %s445
      %s447 = sphi 0, %s445
      %s448 = sphi 0, %s447
      %s462 = sphi 0, %s448
      %s466 = sphi 0, %s466
      %s468 = sphi 0, %s466
      %s469 = sphi 0, %s468
      %s483 = sphi 0, %s469
      %s487 = sphi 0, %s487
      %s489 = sphi 0, %s487
      %s490 = sphi 0, %s489
      %s504 = sphi 0, %s490
      %s508 = sphi 0, %s508
      %s510 = sphi 0, %s508
      %s511 = sphi 0, %s510
      %s525 = sphi 0, %s511
      %s529 = sphi 0, %s529
      %s531 = sphi 0, %s529
      %s532 = sphi 0, %s531
      %s546 = sphi 0, %s532
      %s550 = sphi 0, %s550
      %s552 = sphi 0, %s550
      %s553 = sphi 0, %s552
      %s567 = sphi 0, %s553
      %s571 = sphi 0, %s571
      %s573 = sphi 0, %s571
      %s574 = sphi 0, %s573
      %s588 = sphi 0, %s574
      %s592 = sphi 0, %s592
      %s594 = sphi 0, %s592
      %s595 = sphi 0, %s594
      %s609 = sphi 0, %s595
      %s613 = sphi 0, %s613
      %s615 = sphi 0, %s613
      %s616 = sphi 0, %s615
      %s630 = sphi 0, %s616
      %s634 = sphi 0, %s634
      %s636 = sphi 0, %s634
      %s637 = sphi 0, %s636
      %s651 = sphi 0, %s637
      %s655 = sphi 0, %s655
      %s657 = sphi 0, %s655
      %s658 = sphi 0, %s657
      %s672 = sphi 0, %s658
      %s676 = sphi 0, %s676
      %s678 = sphi 0, %s676
      %s679 = sphi 0, %s678
      %s693 = sphi 0, %s679
      %s697 = sphi 0, %s697
      %s699 = sphi 0, %s697
      %s700 = sphi 0, %s699
      %s714 = sphi 0, %s700
      %s718 = sphi 0, %s718
      %s720 = sphi 0, %s718
      %s721 = sphi 0, %s720
      %s735 = sphi 0, %s721
      %s739 = sphi 0, %s739
      %s741 = sphi 0, %s739
      %s742 = sphi 0, %s741
      %s756 = sphi 0, %s742
      %s762 = sphi 0, %s764
      %s765 = sphi 0, %s762
      %s766 = sphi 0, %s765
      %s782 = sphi 0, %s766
      %s788 = sphi 0, %s790
      %s791 = sphi 0, %s788
      %s792 = sphi 0, %s791
      %s808 = sphi 0, %s792
    $region4: #{mes_head_forward.3} parent=1 // loop_header_branch
      %75 = sbr.rel (%p73) target = $region8
    $region5: #{mes_head_forward.3} parent=1 // loop_body
      %s77 = ssub.s32 %s72, 1
      %s78 = ssub.s32 %s72, 2
      %s85 = sadd.s32 1, %s80
      %p86 = scmp.ge.s32.totalorder %s85, 4
      %s87 = scalar_select %p86, 0, %s85
      %s88 = sadd.s32 1, %s79
      %s89 = scalar_select %p86, %s88, %s79
      %p90 = scmp.ge.s32.totalorder %s89, 2
      %s91 = scalar_select %p90, 0, %s89
      %s92 = ssub.s32 %s79, %s91
      %s93 = ssub.s32 %s80, %s87
      %s94 = sor.u32 %s92, %s93
      %p95 = scmp.eq.s32.totalorder %s94, 0
      %s97 = sadd.s32 %s96, 1
      %s98 = scalar_select %p95, %s96, %s97
      %p101 = pneg %p95
      %p102 = scmp.eq.s32.totalorder %s72, 7
      %p103 = por %p101, %p102
      %p104 = scmp.ne.s32.totalorder %s96, %s99
      %p105 = scmp.eq.s32.totalorder %s72, 0
      %p106 = por %p104, %p105
      %p107 = scmp.ne.s32.totalorder %s96, %s99
      %p108 = scmp.eq.s32.totalorder %s77, 7
      %p109 = por %p107, %p108
      %p110 = scmp.ne.s32.totalorder %s99, %s100
      %p111 = scmp.eq.s32.totalorder %s77, 0
      %p112 = por %p110, %p111
      %p113 = scmp.ne.s32.totalorder %s99, %s100
      %p114 = scmp.eq.s32.totalorder %s78, 7
      %p115 = por %p113, %p114
      %p117 = scmp.ne.s32.totalorder %s100, %s116
      %p118 = scmp.eq.s32.totalorder %s78, 0
      %p119 = por %p117, %p118
      %s120 = ssub.s32 %s80, %s87
      %p121 = scmp.eq.s32.totalorder %s120, 0
      %s123 = sadd.s32 %s122, 1
      %s124 = scalar_select %p121, %s122, %s123
      %p127 = pneg %p121
      %p128 = scmp.eq.s32.totalorder %s72, 7
      %p129 = por %p127, %p128
      %p130 = scmp.ne.s32.totalorder %s122, %s125
      %p131 = scmp.eq.s32.totalorder %s72, 0
      %p132 = por %p130, %p131
      %p133 = scmp.ne.s32.totalorder %s122, %s125
      %p134 = scmp.eq.s32.totalorder %s77, 7
      %p135 = por %p133, %p134
      %p136 = scmp.ne.s32.totalorder %s125, %s126
      %p137 = scmp.eq.s32.totalorder %s77, 0
      %p138 = por %p136, %p137
      %p139 = scmp.ne.s32.totalorder %s125, %s126
      %p140 = scmp.eq.s32.totalorder %s78, 7
      %p141 = por %p139, %p140
      %p143 = scmp.ne.s32.totalorder %s126, %s142
      %p144 = scmp.eq.s32.totalorder %s78, 0
      %p145 = por %p143, %p144
      %s147 = sadd.s32 %s146, 1
      %p150 = scmp.eq.s32.totalorder %s72, 7
      %p151 = scmp.ne.s32.totalorder %s146, %s148
      %p152 = scmp.eq.s32.totalorder %s72, 0
      %p153 = por %p151, %p152
      %p154 = scmp.ne.s32.totalorder %s146, %s148
      %p155 = scmp.eq.s32.totalorder %s77, 7
      %p156 = por %p154, %p155
      %p157 = scmp.ne.s32.totalorder %s148, %s149
      %p158 = scmp.eq.s32.totalorder %s77, 0
      %p159 = por %p157, %p158
      %p160 = scmp.ne.s32.totalorder %s148, %s149
      %p161 = scmp.eq.s32.totalorder %s78, 7
      %p162 = por %p160, %p161
      %p164 = scmp.ne.s32.totalorder %s149, %s163
      %p165 = scmp.eq.s32.totalorder %s78, 0
      %p166 = por %p164, %p165
      %s167 = ssub.s32 %s80, %s87
      %p168 = scmp.eq.s32.totalorder %s167, 0
      %s170 = sadd.s32 %s169, 1
      %s171 = scalar_select %p168, %s169, %s170
      %p174 = pneg %p168
      %p175 = scmp.eq.s32.totalorder %s72, 7
      %p176 = por %p174, %p175
      %p177 = scmp.ne.s32.totalorder %s169, %s172
      %p178 = scmp.eq.s32.totalorder %s72, 0
      %p179 = por %p177, %p178
      %p180 = scmp.ne.s32.totalorder %s169, %s172
      %p181 = scmp.eq.s32.totalorder %s77, 7
      %p182 = por %p180, %p181
      %p183 = scmp.ne.s32.totalorder %s172, %s173
      %p184 = scmp.eq.s32.totalorder %s77, 0
      %p185 = por %p183, %p184
      %p186 = scmp.ne.s32.totalorder %s172, %s173
      %p187 = scmp.eq.s32.totalorder %s78, 7
      %p188 = por %p186, %p187
      %p190 = scmp.ne.s32.totalorder %s173, %s189
      %p191 = scmp.eq.s32.totalorder %s78, 0
      %p192 = por %p190, %p191
      %s194 = sadd.s32 %s193, 1
      %p197 = scmp.eq.s32.totalorder %s72, 7
      %p198 = scmp.ne.s32.totalorder %s193, %s195
      %p199 = scmp.eq.s32.totalorder %s72, 0
      %p200 = por %p198, %p199
      %p201 = scmp.ne.s32.totalorder %s193, %s195
      %p202 = scmp.eq.s32.totalorder %s77, 7
      %p203 = por %p201, %p202
      %p204 = scmp.ne.s32.totalorder %s195, %s196
      %p205 = scmp.eq.s32.totalorder %s77, 0
      %p206 = por %p204, %p205
      %p207 = scmp.ne.s32.totalorder %s195, %s196
      %p208 = scmp.eq.s32.totalorder %s78, 7
      %p209 = por %p207, %p208
      %p211 = scmp.ne.s32.totalorder %s196, %s210
      %p212 = scmp.eq.s32.totalorder %s78, 0
      %p213 = por %p211, %p212
      %s215 = sadd.s32 %s214, 1
      %p218 = scmp.eq.s32.totalorder %s72, 7
      %p219 = scmp.ne.s32.totalorder %s214, %s216
      %p220 = scmp.eq.s32.totalorder %s72, 0
      %p221 = por %p219, %p220
      %p222 = scmp.ne.s32.totalorder %s214, %s216
      %p223 = scmp.eq.s32.totalorder %s77, 7
      %p224 = por %p222, %p223
      %p225 = scmp.ne.s32.totalorder %s216, %s217
      %p226 = scmp.eq.s32.totalorder %s77, 0
      %p227 = por %p225, %p226
      %p228 = scmp.ne.s32.totalorder %s216, %s217
      %p229 = scmp.eq.s32.totalorder %s78, 7
      %p230 = por %p228, %p229
      %p232 = scmp.ne.s32.totalorder %s217, %s231
      %p233 = scmp.eq.s32.totalorder %s78, 0
      %p234 = por %p232, %p233
      %s236 = sadd.s32 %s235, 1
      %p239 = scmp.eq.s32.totalorder %s72, 7
      %p240 = scmp.ne.s32.totalorder %s235, %s237
      %p241 = scmp.eq.s32.totalorder %s72, 0
      %p242 = por %p240, %p241
      %p243 = scmp.ne.s32.totalorder %s235, %s237
      %p244 = scmp.eq.s32.totalorder %s77, 7
      %p245 = por %p243, %p244
      %p246 = scmp.ne.s32.totalorder %s237, %s238
      %p247 = scmp.eq.s32.totalorder %s77, 0
      %p248 = por %p246, %p247
      %p249 = scmp.ne.s32.totalorder %s237, %s238
      %p250 = scmp.eq.s32.totalorder %s78, 7
      %p251 = por %p249, %p250
      %p253 = scmp.ne.s32.totalorder %s238, %s252
      %p254 = scmp.eq.s32.totalorder %s78, 0
      %p255 = por %p253, %p254
      %s257 = sadd.s32 %s256, 1
      %p260 = scmp.eq.s32.totalorder %s72, 7
      %p261 = scmp.ne.s32.totalorder %s256, %s258
      %p262 = scmp.eq.s32.totalorder %s72, 0
      %p263 = por %p261, %p262
      %p264 = scmp.ne.s32.totalorder %s256, %s258
      %p265 = scmp.eq.s32.totalorder %s77, 7
      %p266 = por %p264, %p265
      %p267 = scmp.ne.s32.totalorder %s258, %s259
      %p268 = scmp.eq.s32.totalorder %s77, 0
      %p269 = por %p267, %p268
      %p270 = scmp.ne.s32.totalorder %s258, %s259
      %p271 = scmp.eq.s32.totalorder %s78, 7
      %p272 = por %p270, %p271
      %p274 = scmp.ne.s32.totalorder %s259, %s273
      %p275 = scmp.eq.s32.totalorder %s78, 0
      %p276 = por %p274, %p275
      %s278 = sadd.s32 %s277, 1
      %p281 = scmp.eq.s32.totalorder %s72, 7
      %p282 = scmp.ne.s32.totalorder %s277, %s279
      %p283 = scmp.eq.s32.totalorder %s72, 0
      %p284 = por %p282, %p283
      %p285 = scmp.ne.s32.totalorder %s277, %s279
      %p286 = scmp.eq.s32.totalorder %s77, 7
      %p287 = por %p285, %p286
      %p288 = scmp.ne.s32.totalorder %s279, %s280
      %p289 = scmp.eq.s32.totalorder %s77, 0
      %p290 = por %p288, %p289
      %p291 = scmp.ne.s32.totalorder %s279, %s280
      %p292 = scmp.eq.s32.totalorder %s78, 7
      %p293 = por %p291, %p292
      %p295 = scmp.ne.s32.totalorder %s280, %s294
      %p296 = scmp.eq.s32.totalorder %s78, 0
      %p297 = por %p295, %p296
      %s299 = sadd.s32 %s298, 1
      %p302 = scmp.eq.s32.totalorder %s72, 7
      %p303 = scmp.ne.s32.totalorder %s298, %s300
      %p304 = scmp.eq.s32.totalorder %s72, 0
      %p305 = por %p303, %p304
      %p306 = scmp.ne.s32.totalorder %s298, %s300
      %p307 = scmp.eq.s32.totalorder %s77, 7
      %p308 = por %p306, %p307
      %p309 = scmp.ne.s32.totalorder %s300, %s301
      %p310 = scmp.eq.s32.totalorder %s77, 0
      %p311 = por %p309, %p310
      %p312 = scmp.ne.s32.totalorder %s300, %s301
      %p313 = scmp.eq.s32.totalorder %s78, 7
      %p314 = por %p312, %p313
      %p316 = scmp.ne.s32.totalorder %s301, %s315
      %p317 = scmp.eq.s32.totalorder %s78, 0
      %p318 = por %p316, %p317
      %s320 = sadd.s32 %s319, 1
      %p323 = scmp.eq.s32.totalorder %s72, 7
      %p324 = scmp.ne.s32.totalorder %s319, %s321
      %p325 = scmp.eq.s32.totalorder %s72, 0
      %p326 = por %p324, %p325
      %p327 = scmp.ne.s32.totalorder %s319, %s321
      %p328 = scmp.eq.s32.totalorder %s77, 7
      %p329 = por %p327, %p328
      %p330 = scmp.ne.s32.totalorder %s321, %s322
      %p331 = scmp.eq.s32.totalorder %s77, 0
      %p332 = por %p330, %p331
      %p333 = scmp.ne.s32.totalorder %s321, %s322
      %p334 = scmp.eq.s32.totalorder %s78, 7
      %p335 = por %p333, %p334
      %p337 = scmp.ne.s32.totalorder %s322, %s336
      %p338 = scmp.eq.s32.totalorder %s78, 0
      %p339 = por %p337, %p338
      %s341 = sadd.s32 %s340, 1
      %p344 = scmp.eq.s32.totalorder %s72, 7
      %p345 = scmp.ne.s32.totalorder %s340, %s342
      %p346 = scmp.eq.s32.totalorder %s72, 0
      %p347 = por %p345, %p346
      %p348 = scmp.ne.s32.totalorder %s340, %s342
      %p349 = scmp.eq.s32.totalorder %s77, 7
      %p350 = por %p348, %p349
      %p351 = scmp.ne.s32.totalorder %s342, %s343
      %p352 = scmp.eq.s32.totalorder %s77, 0
      %p353 = por %p351, %p352
      %p354 = scmp.ne.s32.totalorder %s342, %s343
      %p355 = scmp.eq.s32.totalorder %s78, 7
      %p356 = por %p354, %p355
      %p358 = scmp.ne.s32.totalorder %s343, %s357
      %p359 = scmp.eq.s32.totalorder %s78, 0
      %p360 = por %p358, %p359
      %s362 = sadd.s32 %s361, 1
      %p365 = scmp.eq.s32.totalorder %s72, 7
      %p366 = scmp.ne.s32.totalorder %s361, %s363
      %p367 = scmp.eq.s32.totalorder %s72, 0
      %p368 = por %p366, %p367
      %p369 = scmp.ne.s32.totalorder %s361, %s363
      %p370 = scmp.eq.s32.totalorder %s77, 7
      %p371 = por %p369, %p370
      %p372 = scmp.ne.s32.totalorder %s363, %s364
      %p373 = scmp.eq.s32.totalorder %s77, 0
      %p374 = por %p372, %p373
      %p375 = scmp.ne.s32.totalorder %s363, %s364
      %p376 = scmp.eq.s32.totalorder %s78, 7
      %p377 = por %p375, %p376
      %p379 = scmp.ne.s32.totalorder %s364, %s378
      %p380 = scmp.eq.s32.totalorder %s78, 0
      %p381 = por %p379, %p380
      %s383 = sadd.s32 %s382, 1
      %p386 = scmp.eq.s32.totalorder %s72, 7
      %p387 = scmp.ne.s32.totalorder %s382, %s384
      %p388 = scmp.eq.s32.totalorder %s72, 0
      %p389 = por %p387, %p388
      %p390 = scmp.ne.s32.totalorder %s382, %s384
      %p391 = scmp.eq.s32.totalorder %s77, 7
      %p392 = por %p390, %p391
      %p393 = scmp.ne.s32.totalorder %s384, %s385
      %p394 = scmp.eq.s32.totalorder %s77, 0
      %p395 = por %p393, %p394
      %p396 = scmp.ne.s32.totalorder %s384, %s385
      %p397 = scmp.eq.s32.totalorder %s78, 7
      %p398 = por %p396, %p397
      %p400 = scmp.ne.s32.totalorder %s385, %s399
      %p401 = scmp.eq.s32.totalorder %s78, 0
      %p402 = por %p400, %p401
      %s404 = sadd.s32 %s403, 1
      %p407 = scmp.eq.s32.totalorder %s72, 7
      %p408 = scmp.ne.s32.totalorder %s403, %s405
      %p409 = scmp.eq.s32.totalorder %s72, 0
      %p410 = por %p408, %p409
      %p411 = scmp.ne.s32.totalorder %s403, %s405
      %p412 = scmp.eq.s32.totalorder %s77, 7
      %p413 = por %p411, %p412
      %p414 = scmp.ne.s32.totalorder %s405, %s406
      %p415 = scmp.eq.s32.totalorder %s77, 0
      %p416 = por %p414, %p415
      %p417 = scmp.ne.s32.totalorder %s405, %s406
      %p418 = scmp.eq.s32.totalorder %s78, 7
      %p419 = por %p417, %p418
      %p421 = scmp.ne.s32.totalorder %s406, %s420
      %p422 = scmp.eq.s32.totalorder %s78, 0
      %p423 = por %p421, %p422
      %s425 = sadd.s32 %s424, 1
      %p428 = scmp.eq.s32.totalorder %s72, 7
      %p429 = scmp.ne.s32.totalorder %s424, %s426
      %p430 = scmp.eq.s32.totalorder %s72, 0
      %p431 = por %p429, %p430
      %p432 = scmp.ne.s32.totalorder %s424, %s426
      %p433 = scmp.eq.s32.totalorder %s77, 7
      %p434 = por %p432, %p433
      %p435 = scmp.ne.s32.totalorder %s426, %s427
      %p436 = scmp.eq.s32.totalorder %s77, 0
      %p437 = por %p435, %p436
      %p438 = scmp.ne.s32.totalorder %s426, %s427
      %p439 = scmp.eq.s32.totalorder %s78, 7
      %p440 = por %p438, %p439
      %p442 = scmp.ne.s32.totalorder %s427, %s441
      %p443 = scmp.eq.s32.totalorder %s78, 0
      %p444 = por %p442, %p443
      %s446 = sadd.s32 %s445, 1
      %p449 = scmp.eq.s32.totalorder %s72, 7
      %p450 = scmp.ne.s32.totalorder %s445, %s447
      %p451 = scmp.eq.s32.totalorder %s72, 0
      %p452 = por %p450, %p451
      %p453 = scmp.ne.s32.totalorder %s445, %s447
      %p454 = scmp.eq.s32.totalorder %s77, 7
      %p455 = por %p453, %p454
      %p456 = scmp.ne.s32.totalorder %s447, %s448
      %p457 = scmp.eq.s32.totalorder %s77, 0
      %p458 = por %p456, %p457
      %p459 = scmp.ne.s32.totalorder %s447, %s448
      %p460 = scmp.eq.s32.totalorder %s78, 7
      %p461 = por %p459, %p460
      %p463 = scmp.ne.s32.totalorder %s448, %s462
      %p464 = scmp.eq.s32.totalorder %s78, 0
      %p465 = por %p463, %p464
      %s467 = sadd.s32 %s466, 1
      %p470 = scmp.eq.s32.totalorder %s72, 7
      %p471 = scmp.ne.s32.totalorder %s466, %s468
      %p472 = scmp.eq.s32.totalorder %s72, 0
      %p473 = por %p471, %p472
      %p474 = scmp.ne.s32.totalorder %s466, %s468
      %p475 = scmp.eq.s32.totalorder %s77, 7
      %p476 = por %p474, %p475
      %p477 = scmp.ne.s32.totalorder %s468, %s469
      %p478 = scmp.eq.s32.totalorder %s77, 0
      %p479 = por %p477, %p478
      %p480 = scmp.ne.s32.totalorder %s468, %s469
      %p481 = scmp.eq.s32.totalorder %s78, 7
      %p482 = por %p480, %p481
      %p484 = scmp.ne.s32.totalorder %s469, %s483
      %p485 = scmp.eq.s32.totalorder %s78, 0
      %p486 = por %p484, %p485
      %s488 = sadd.s32 %s487, 1
      %p491 = scmp.eq.s32.totalorder %s72, 7
      %p492 = scmp.ne.s32.totalorder %s487, %s489
      %p493 = scmp.eq.s32.totalorder %s72, 0
      %p494 = por %p492, %p493
      %p495 = scmp.ne.s32.totalorder %s487, %s489
      %p496 = scmp.eq.s32.totalorder %s77, 7
      %p497 = por %p495, %p496
      %p498 = scmp.ne.s32.totalorder %s489, %s490
      %p499 = scmp.eq.s32.totalorder %s77, 0
      %p500 = por %p498, %p499
      %p501 = scmp.ne.s32.totalorder %s489, %s490
      %p502 = scmp.eq.s32.totalorder %s78, 7
      %p503 = por %p501, %p502
      %p505 = scmp.ne.s32.totalorder %s490, %s504
      %p506 = scmp.eq.s32.totalorder %s78, 0
      %p507 = por %p505, %p506
      %s509 = sadd.s32 %s508, 1
      %p512 = scmp.eq.s32.totalorder %s72, 7
      %p513 = scmp.ne.s32.totalorder %s508, %s510
      %p514 = scmp.eq.s32.totalorder %s72, 0
      %p515 = por %p513, %p514
      %p516 = scmp.ne.s32.totalorder %s508, %s510
      %p517 = scmp.eq.s32.totalorder %s77, 7
      %p518 = por %p516, %p517
      %p519 = scmp.ne.s32.totalorder %s510, %s511
      %p520 = scmp.eq.s32.totalorder %s77, 0
      %p521 = por %p519, %p520
      %p522 = scmp.ne.s32.totalorder %s510, %s511
      %p523 = scmp.eq.s32.totalorder %s78, 7
      %p524 = por %p522, %p523
      %p526 = scmp.ne.s32.totalorder %s511, %s525
      %p527 = scmp.eq.s32.totalorder %s78, 0
      %p528 = por %p526, %p527
      %s530 = sadd.s32 %s529, 1
      %p533 = scmp.eq.s32.totalorder %s72, 7
      %p534 = scmp.ne.s32.totalorder %s529, %s531
      %p535 = scmp.eq.s32.totalorder %s72, 0
      %p536 = por %p534, %p535
      %p537 = scmp.ne.s32.totalorder %s529, %s531
      %p538 = scmp.eq.s32.totalorder %s77, 7
      %p539 = por %p537, %p538
      %p540 = scmp.ne.s32.totalorder %s531, %s532
      %p541 = scmp.eq.s32.totalorder %s77, 0
      %p542 = por %p540, %p541
      %p543 = scmp.ne.s32.totalorder %s531, %s532
      %p544 = scmp.eq.s32.totalorder %s78, 7
      %p545 = por %p543, %p544
      %p547 = scmp.ne.s32.totalorder %s532, %s546
      %p548 = scmp.eq.s32.totalorder %s78, 0
      %p549 = por %p547, %p548
      %s551 = sadd.s32 %s550, 1
      %p554 = scmp.eq.s32.totalorder %s72, 7
      %p555 = scmp.ne.s32.totalorder %s550, %s552
      %p556 = scmp.eq.s32.totalorder %s72, 0
      %p557 = por %p555, %p556
      %p558 = scmp.ne.s32.totalorder %s550, %s552
      %p559 = scmp.eq.s32.totalorder %s77, 7
      %p560 = por %p558, %p559
      %p561 = scmp.ne.s32.totalorder %s552, %s553
      %p562 = scmp.eq.s32.totalorder %s77, 0
      %p563 = por %p561, %p562
      %p564 = scmp.ne.s32.totalorder %s552, %s553
      %p565 = scmp.eq.s32.totalorder %s78, 7
      %p566 = por %p564, %p565
      %p568 = scmp.ne.s32.totalorder %s553, %s567
      %p569 = scmp.eq.s32.totalorder %s78, 0
      %p570 = por %p568, %p569
      %s572 = sadd.s32 %s571, 1
      %p575 = scmp.eq.s32.totalorder %s72, 7
      %p576 = scmp.ne.s32.totalorder %s571, %s573
      %p577 = scmp.eq.s32.totalorder %s72, 0
      %p578 = por %p576, %p577
      %p579 = scmp.ne.s32.totalorder %s571, %s573
      %p580 = scmp.eq.s32.totalorder %s77, 7
      %p581 = por %p579, %p580
      %p582 = scmp.ne.s32.totalorder %s573, %s574
      %p583 = scmp.eq.s32.totalorder %s77, 0
      %p584 = por %p582, %p583
      %p585 = scmp.ne.s32.totalorder %s573, %s574
      %p586 = scmp.eq.s32.totalorder %s78, 7
      %p587 = por %p585, %p586
      %p589 = scmp.ne.s32.totalorder %s574, %s588
      %p590 = scmp.eq.s32.totalorder %s78, 0
      %p591 = por %p589, %p590
      %s593 = sadd.s32 %s592, 1
      %p596 = scmp.eq.s32.totalorder %s72, 7
      %p597 = scmp.ne.s32.totalorder %s592, %s594
      %p598 = scmp.eq.s32.totalorder %s72, 0
      %p599 = por %p597, %p598
      %p600 = scmp.ne.s32.totalorder %s592, %s594
      %p601 = scmp.eq.s32.totalorder %s77, 7
      %p602 = por %p600, %p601
      %p603 = scmp.ne.s32.totalorder %s594, %s595
      %p604 = scmp.eq.s32.totalorder %s77, 0
      %p605 = por %p603, %p604
      %p606 = scmp.ne.s32.totalorder %s594, %s595
      %p607 = scmp.eq.s32.totalorder %s78, 7
      %p608 = por %p606, %p607
      %p610 = scmp.ne.s32.totalorder %s595, %s609
      %p611 = scmp.eq.s32.totalorder %s78, 0
      %p612 = por %p610, %p611
      %s614 = sadd.s32 %s613, 1
      %p617 = scmp.eq.s32.totalorder %s72, 7
      %p618 = scmp.ne.s32.totalorder %s613, %s615
      %p619 = scmp.eq.s32.totalorder %s72, 0
      %p620 = por %p618, %p619
      %p621 = scmp.ne.s32.totalorder %s613, %s615
      %p622 = scmp.eq.s32.totalorder %s77, 7
      %p623 = por %p621, %p622
      %p624 = scmp.ne.s32.totalorder %s615, %s616
      %p625 = scmp.eq.s32.totalorder %s77, 0
      %p626 = por %p624, %p625
      %p627 = scmp.ne.s32.totalorder %s615, %s616
      %p628 = scmp.eq.s32.totalorder %s78, 7
      %p629 = por %p627, %p628
      %p631 = scmp.ne.s32.totalorder %s616, %s630
      %p632 = scmp.eq.s32.totalorder %s78, 0
      %p633 = por %p631, %p632
      %s635 = sadd.s32 %s634, 1
      %p638 = scmp.eq.s32.totalorder %s72, 7
      %p639 = scmp.ne.s32.totalorder %s634, %s636
      %p640 = scmp.eq.s32.totalorder %s72, 0
      %p641 = por %p639, %p640
      %p642 = scmp.ne.s32.totalorder %s634, %s636
      %p643 = scmp.eq.s32.totalorder %s77, 7
      %p644 = por %p642, %p643
      %p645 = scmp.ne.s32.totalorder %s636, %s637
      %p646 = scmp.eq.s32.totalorder %s77, 0
      %p647 = por %p645, %p646
      %p648 = scmp.ne.s32.totalorder %s636, %s637
      %p649 = scmp.eq.s32.totalorder %s78, 7
      %p650 = por %p648, %p649
      %p652 = scmp.ne.s32.totalorder %s637, %s651
      %p653 = scmp.eq.s32.totalorder %s78, 0
      %p654 = por %p652, %p653
      %s656 = sadd.s32 %s655, 1
      %p659 = scmp.eq.s32.totalorder %s72, 7
      %p660 = scmp.ne.s32.totalorder %s655, %s657
      %p661 = scmp.eq.s32.totalorder %s72, 0
      %p662 = por %p660, %p661
      %p663 = scmp.ne.s32.totalorder %s655, %s657
      %p664 = scmp.eq.s32.totalorder %s77, 7
      %p665 = por %p663, %p664
      %p666 = scmp.ne.s32.totalorder %s657, %s658
      %p667 = scmp.eq.s32.totalorder %s77, 0
      %p668 = por %p666, %p667
      %p669 = scmp.ne.s32.totalorder %s657, %s658
      %p670 = scmp.eq.s32.totalorder %s78, 7
      %p671 = por %p669, %p670
      %p673 = scmp.ne.s32.totalorder %s658, %s672
      %p674 = scmp.eq.s32.totalorder %s78, 0
      %p675 = por %p673, %p674
      %s677 = sadd.s32 %s676, 1
      %p680 = scmp.eq.s32.totalorder %s72, 7
      %p681 = scmp.ne.s32.totalorder %s676, %s678
      %p682 = scmp.eq.s32.totalorder %s72, 0
      %p683 = por %p681, %p682
      %p684 = scmp.ne.s32.totalorder %s676, %s678
      %p685 = scmp.eq.s32.totalorder %s77, 7
      %p686 = por %p684, %p685
      %p687 = scmp.ne.s32.totalorder %s678, %s679
      %p688 = scmp.eq.s32.totalorder %s77, 0
      %p689 = por %p687, %p688
      %p690 = scmp.ne.s32.totalorder %s678, %s679
      %p691 = scmp.eq.s32.totalorder %s78, 7
      %p692 = por %p690, %p691
      %p694 = scmp.ne.s32.totalorder %s679, %s693
      %p695 = scmp.eq.s32.totalorder %s78, 0
      %p696 = por %p694, %p695
      %s698 = sadd.s32 %s697, 1
      %p701 = scmp.eq.s32.totalorder %s72, 7
      %p702 = scmp.ne.s32.totalorder %s697, %s699
      %p703 = scmp.eq.s32.totalorder %s72, 0
      %p704 = por %p702, %p703
      %p705 = scmp.ne.s32.totalorder %s697, %s699
      %p706 = scmp.eq.s32.totalorder %s77, 7
      %p707 = por %p705, %p706
      %p708 = scmp.ne.s32.totalorder %s699, %s700
      %p709 = scmp.eq.s32.totalorder %s77, 0
      %p710 = por %p708, %p709
      %p711 = scmp.ne.s32.totalorder %s699, %s700
      %p712 = scmp.eq.s32.totalorder %s78, 7
      %p713 = por %p711, %p712
      %p715 = scmp.ne.s32.totalorder %s700, %s714
      %p716 = scmp.eq.s32.totalorder %s78, 0
      %p717 = por %p715, %p716
      %s719 = sadd.s32 %s718, 1
      %p722 = scmp.eq.s32.totalorder %s72, 7
      %p723 = scmp.ne.s32.totalorder %s718, %s720
      %p724 = scmp.eq.s32.totalorder %s72, 0
      %p725 = por %p723, %p724
      %p726 = scmp.ne.s32.totalorder %s718, %s720
      %p727 = scmp.eq.s32.totalorder %s77, 7
      %p728 = por %p726, %p727
      %p729 = scmp.ne.s32.totalorder %s720, %s721
      %p730 = scmp.eq.s32.totalorder %s77, 0
      %p731 = por %p729, %p730
      %p732 = scmp.ne.s32.totalorder %s720, %s721
      %p733 = scmp.eq.s32.totalorder %s78, 7
      %p734 = por %p732, %p733
      %p736 = scmp.ne.s32.totalorder %s721, %s735
      %p737 = scmp.eq.s32.totalorder %s78, 0
      %p738 = por %p736, %p737
      %s740 = sadd.s32 %s739, 1
      %p743 = scmp.eq.s32.totalorder %s72, 7
      %p744 = scmp.ne.s32.totalorder %s739, %s741
      %p745 = scmp.eq.s32.totalorder %s72, 0
      %p746 = por %p744, %p745
      %p747 = scmp.ne.s32.totalorder %s739, %s741
      %p748 = scmp.eq.s32.totalorder %s77, 7
      %p749 = por %p747, %p748
      %p750 = scmp.ne.s32.totalorder %s741, %s742
      %p751 = scmp.eq.s32.totalorder %s77, 0
      %p752 = por %p750, %p751
      %p753 = scmp.ne.s32.totalorder %s741, %s742
      %p754 = scmp.eq.s32.totalorder %s78, 7
      %p755 = por %p753, %p754
      %p757 = scmp.ne.s32.totalorder %s742, %s756
      %p758 = scmp.eq.s32.totalorder %s78, 0
      %p759 = por %p757, %p758
      %s760 = ssub.s32 %s79, %s91
      %p761 = scmp.eq.s32.totalorder %s760, 0
      %s763 = sadd.s32 %s762, 1
      %s764 = scalar_select %p761, %s762, %s763
      %p767 = pneg %p761
      %p768 = scmp.eq.s32.totalorder %s72, 7
      %p769 = por %p767, %p768
      %p770 = scmp.ne.s32.totalorder %s762, %s765
      %p771 = scmp.eq.s32.totalorder %s72, 0
      %p772 = por %p770, %p771
      %p773 = scmp.ne.s32.totalorder %s762, %s765
      %p774 = scmp.eq.s32.totalorder %s77, 7
      %p775 = por %p773, %p774
      %p776 = scmp.ne.s32.totalorder %s765, %s766
      %p777 = scmp.eq.s32.totalorder %s77, 0
      %p778 = por %p776, %p777
      %p779 = scmp.ne.s32.totalorder %s765, %s766
      %p780 = scmp.eq.s32.totalorder %s78, 7
      %p781 = por %p779, %p780
      %p783 = scmp.ne.s32.totalorder %s766, %s782
      %p784 = scmp.eq.s32.totalorder %s78, 0
      %p785 = por %p783, %p784
      %s786 = ssub.s32 %s79, %s91
      %p787 = scmp.eq.s32.totalorder %s786, 0
      %s789 = sadd.s32 %s788, 1
      %s790 = scalar_select %p787, %s788, %s789
      %p793 = pneg %p787
      %p794 = scmp.eq.s32.totalorder %s72, 7
      %p795 = por %p793, %p794
      %p796 = scmp.ne.s32.totalorder %s788, %s791
      %p797 = scmp.eq.s32.totalorder %s72, 0
      %p798 = por %p796, %p797
      %p799 = scmp.ne.s32.totalorder %s788, %s791
      %p800 = scmp.eq.s32.totalorder %s77, 7
      %p801 = por %p799, %p800
      %p802 = scmp.ne.s32.totalorder %s791, %s792
      %p803 = scmp.eq.s32.totalorder %s77, 0
      %p804 = por %p802, %p803
      %p805 = scmp.ne.s32.totalorder %s791, %s792
      %p806 = scmp.eq.s32.totalorder %s78, 7
      %p807 = por %p805, %p806
      %p809 = scmp.ne.s32.totalorder %s792, %s808
      %p810 = scmp.eq.s32.totalorder %s78, 0
      %p811 = por %p809, %p810
      %p812 = scmp.le.s32.totalorder 1, %s72
      %p813 = scmp.lt.s32.totalorder %s72, 9
      %p814 = pnand %p812, %p813
      %p815 = pneg %p814
      // Predicated region
      $region9: #{mes_head_forward.3} parent=5 // pred_check
        _
      $region10: #{mes_head_forward.3} parent=5 // pred_check_branch
        %817 = sbr.rel (%p814) target = $region12
      $region11: #{mes_head_forward.3} parent=5 // pred_region
        %s818 = ssub.s32 %s72, 1
        // Predicated region
        $region13: #{mes_head_forward.3} parent=11 // pred_check
          %p819 = pneg %p159
        $region14: #{mes_head_forward.3} parent=11 // pred_check_branch
          %821 = sbr.rel (%p819) target = $region16
        $region15: #{mes_head_forward.3} parent=11 // pred_region
          _
        $region16: #{mes_head_forward.3} parent=11 // pred_fallthru
          _
        // Predicated region
        $region17: #{mes_head_forward.3} parent=11 // pred_check
          %p822 = pneg %p206
        $region18: #{mes_head_forward.3} parent=11 // pred_check_branch
          %824 = sbr.rel (%p822) target = $region20
        $region19: #{mes_head_forward.3} parent=11 // pred_region
          _
        $region20: #{mes_head_forward.3} parent=11 // pred_fallthru
          _
        // Predicated region
        $region21: #{mes_head_forward.3} parent=11 // pred_check
          %p825 = pneg %p227
        $region22: #{mes_head_forward.3} parent=11 // pred_check_branch
          %827 = sbr.rel (%p825) target = $region24
        $region23: #{mes_head_forward.3} parent=11 // pred_region
          _
        $region24: #{mes_head_forward.3} parent=11 // pred_fallthru
          _
        // Predicated region
        $region25: #{mes_head_forward.3} parent=11 // pred_check
          %p828 = pneg %p248
        $region26: #{mes_head_forward.3} parent=11 // pred_check_branch
          %830 = sbr.rel (%p828) target = $region28
        $region27: #{mes_head_forward.3} parent=11 // pred_region
          _
        $region28: #{mes_head_forward.3} parent=11 // pred_fallthru
          _
        // Predicated region
        $region29: #{mes_head_forward.3} parent=11 // pred_check
          %p831 = pneg %p269
        $region30: #{mes_head_forward.3} parent=11 // pred_check_branch
          %833 = sbr.rel (%p831) target = $region32
        $region31: #{mes_head_forward.3} parent=11 // pred_region
          _
        $region32: #{mes_head_forward.3} parent=11 // pred_fallthru
          _
        // Predicated region
        $region33: #{mes_head_forward.3} parent=11 // pred_check
          %p834 = pneg %p290
        $region34: #{mes_head_forward.3} parent=11 // pred_check_branch
          %836 = sbr.rel (%p834) target = $region36
        $region35: #{mes_head_forward.3} parent=11 // pred_region
          _
        $region36: #{mes_head_forward.3} parent=11 // pred_fallthru
          _
        // Predicated region
        $region37: #{mes_head_forward.3} parent=11 // pred_check
          %p837 = pneg %p311
        $region38: #{mes_head_forward.3} parent=11 // pred_check_branch
          %839 = sbr.rel (%p837) target = $region40
        $region39: #{mes_head_forward.3} parent=11 // pred_region
          _
        $region40: #{mes_head_forward.3} parent=11 // pred_fallthru
          _
        // Predicated region
        $region41: #{mes_head_forward.3} parent=11 // pred_check
          %p840 = pneg %p332
        $region42: #{mes_head_forward.3} parent=11 // pred_check_branch
          %842 = sbr.rel (%p840) target = $region44
        $region43: #{mes_head_forward.3} parent=11 // pred_region
          _
        $region44: #{mes_head_forward.3} parent=11 // pred_fallthru
          _
        // Predicated region
        $region45: #{mes_head_forward.3} parent=11 // pred_check
          %p843 = pneg %p353
        $region46: #{mes_head_forward.3} parent=11 // pred_check_branch
          %845 = sbr.rel (%p843) target = $region48
        $region47: #{mes_head_forward.3} parent=11 // pred_region
          _
        $region48: #{mes_head_forward.3} parent=11 // pred_fallthru
          _
        // Predicated region
        $region49: #{mes_head_forward.3} parent=11 // pred_check
          %p846 = pneg %p374
        $region50: #{mes_head_forward.3} parent=11 // pred_check_branch
          %848 = sbr.rel (%p846) target = $region52
        $region51: #{mes_head_forward.3} parent=11 // pred_region
          _
        $region52: #{mes_head_forward.3} parent=11 // pred_fallthru
          _
        // Predicated region
        $region53: #{mes_head_forward.3} parent=11 // pred_check
          %p849 = pneg %p395
        $region54: #{mes_head_forward.3} parent=11 // pred_check_branch
          %851 = sbr.rel (%p849) target = $region56
        $region55: #{mes_head_forward.3} parent=11 // pred_region
          _
        $region56: #{mes_head_forward.3} parent=11 // pred_fallthru
          _
        // Predicated region
        $region57: #{mes_head_forward.3} parent=11 // pred_check
          %p852 = pneg %p416
        $region58: #{mes_head_forward.3} parent=11 // pred_check_branch
          %854 = sbr.rel (%p852) target = $region60
        $region59: #{mes_head_forward.3} parent=11 // pred_region
          _
        $region60: #{mes_head_forward.3} parent=11 // pred_fallthru
          _
        // Predicated region
        $region61: #{mes_head_forward.3} parent=11 // pred_check
          %p855 = pneg %p437
        $region62: #{mes_head_forward.3} parent=11 // pred_check_branch
          %857 = sbr.rel (%p855) target = $region64
        $region63: #{mes_head_forward.3} parent=11 // pred_region
          _
        $region64: #{mes_head_forward.3} parent=11 // pred_fallthru
          _
        // Predicated region
        $region65: #{mes_head_forward.3} parent=11 // pred_check
          %p858 = pneg %p458
        $region66: #{mes_head_forward.3} parent=11 // pred_check_branch
          %860 = sbr.rel (%p858) target = $region68
        $region67: #{mes_head_forward.3} parent=11 // pred_region
          _
        $region68: #{mes_head_forward.3} parent=11 // pred_fallthru
          _
        // Predicated region
        $region69: #{mes_head_forward.3} parent=11 // pred_check
          %p861 = pneg %p479
        $region70: #{mes_head_forward.3} parent=11 // pred_check_branch
          %863 = sbr.rel (%p861) target = $region72
        $region71: #{mes_head_forward.3} parent=11 // pred_region
          _
        $region72: #{mes_head_forward.3} parent=11 // pred_fallthru
          _
        // Predicated region
        $region73: #{mes_head_forward.3} parent=11 // pred_check
          %p864 = pneg %p500
        $region74: #{mes_head_forward.3} parent=11 // pred_check_branch
          %866 = sbr.rel (%p864) target = $region76
        $region75: #{mes_head_forward.3} parent=11 // pred_region
          _
        $region76: #{mes_head_forward.3} parent=11 // pred_fallthru
          _
        // Predicated region
        $region77: #{mes_head_forward.3} parent=11 // pred_check
          %p867 = pneg %p521
        $region78: #{mes_head_forward.3} parent=11 // pred_check_branch
          %869 = sbr.rel (%p867) target = $region80
        $region79: #{mes_head_forward.3} parent=11 // pred_region
          _
        $region80: #{mes_head_forward.3} parent=11 // pred_fallthru
          _
        // Predicated region
        $region81: #{mes_head_forward.3} parent=11 // pred_check
          %p870 = pneg %p542
        $region82: #{mes_head_forward.3} parent=11 // pred_check_branch
          %872 = sbr.rel (%p870) target = $region84
        $region83: #{mes_head_forward.3} parent=11 // pred_region
          _
        $region84: #{mes_head_forward.3} parent=11 // pred_fallthru
          _
        // Predicated region
        $region85: #{mes_head_forward.3} parent=11 // pred_check
          %p873 = pneg %p563
        $region86: #{mes_head_forward.3} parent=11 // pred_check_branch
          %875 = sbr.rel (%p873) target = $region88
        $region87: #{mes_head_forward.3} parent=11 // pred_region
          _
        $region88: #{mes_head_forward.3} parent=11 // pred_fallthru
          _
        // Predicated region
        $region89: #{mes_head_forward.3} parent=11 // pred_check
          %p876 = pneg %p584
        $region90: #{mes_head_forward.3} parent=11 // pred_check_branch
          %878 = sbr.rel (%p876) target = $region92
        $region91: #{mes_head_forward.3} parent=11 // pred_region
          _
        $region92: #{mes_head_forward.3} parent=11 // pred_fallthru
          _
        // Predicated region
        $region93: #{mes_head_forward.3} parent=11 // pred_check
          %p879 = pneg %p605
        $region94: #{mes_head_forward.3} parent=11 // pred_check_branch
          %881 = sbr.rel (%p879) target = $region96
        $region95: #{mes_head_forward.3} parent=11 // pred_region
          _
        $region96: #{mes_head_forward.3} parent=11 // pred_fallthru
          _
        // Predicated region
        $region97: #{mes_head_forward.3} parent=11 // pred_check
          %p882 = pneg %p626
        $region98: #{mes_head_forward.3} parent=11 // pred_check_branch
          %884 = sbr.rel (%p882) target = $region100
        $region99: #{mes_head_forward.3} parent=11 // pred_region
          _
        $region100: #{mes_head_forward.3} parent=11 // pred_fallthru
          _
        // Predicated region
        $region101: #{mes_head_forward.3} parent=11 // pred_check
          %p885 = pneg %p647
        $region102: #{mes_head_forward.3} parent=11 // pred_check_branch
          %887 = sbr.rel (%p885) target = $region104
        $region103: #{mes_head_forward.3} parent=11 // pred_region
          _
        $region104: #{mes_head_forward.3} parent=11 // pred_fallthru
          _
        // Predicated region
        $region105: #{mes_head_forward.3} parent=11 // pred_check
          %p888 = pneg %p668
        $region106: #{mes_head_forward.3} parent=11 // pred_check_branch
          %890 = sbr.rel (%p888) target = $region108
        $region107: #{mes_head_forward.3} parent=11 // pred_region
          _
        $region108: #{mes_head_forward.3} parent=11 // pred_fallthru
          _
        // Predicated region
        $region109: #{mes_head_forward.3} parent=11 // pred_check
          %p891 = pneg %p689
        $region110: #{mes_head_forward.3} parent=11 // pred_check_branch
          %893 = sbr.rel (%p891) target = $region112
        $region111: #{mes_head_forward.3} parent=11 // pred_region
          _
        $region112: #{mes_head_forward.3} parent=11 // pred_fallthru
          _
        // Predicated region
        $region113: #{mes_head_forward.3} parent=11 // pred_check
          %p894 = pneg %p710
        $region114: #{mes_head_forward.3} parent=11 // pred_check_branch
          %896 = sbr.rel (%p894) target = $region116
        $region115: #{mes_head_forward.3} parent=11 // pred_region
          _
        $region116: #{mes_head_forward.3} parent=11 // pred_fallthru
          _
        // Predicated region
        $region117: #{mes_head_forward.3} parent=11 // pred_check
          %p897 = pneg %p731
        $region118: #{mes_head_forward.3} parent=11 // pred_check_branch
          %899 = sbr.rel (%p897) target = $region120
        $region119: #{mes_head_forward.3} parent=11 // pred_region
          _
        $region120: #{mes_head_forward.3} parent=11 // pred_fallthru
          _
        // Predicated region
        $region121: #{mes_head_forward.3} parent=11 // pred_check
          %p900 = pneg %p752
        $region122: #{mes_head_forward.3} parent=11 // pred_check_branch
          %902 = sbr.rel (%p900) target = $region124
        $region123: #{mes_head_forward.3} parent=11 // pred_region
          _
        $region124: #{mes_head_forward.3} parent=11 // pred_fallthru
          _
      $region12: #{mes_head_forward.3} parent=5 // pred_fallthru
        _
      %p903 = scmp.lt.s32.totalorder %s72, 8
      // Predicated region
      $region125: #{mes_head_forward.3} parent=5 // pred_check
        %p904 = pneg %p903
      $region126: #{mes_head_forward.3} parent=5 // pred_check_branch
        %906 = sbr.rel (%p904) target = $region128
      $region127: #{mes_head_forward.3} parent=5 // pred_region
        // Predicated region
        $region129: #{mes_head_forward.3} parent=127 // pred_check
          %p907 = pneg %p106
        $region130: #{mes_head_forward.3} parent=127 // pred_check_branch
          %909 = sbr.rel (%p907) target = $region132
        $region131: #{mes_head_forward.3} parent=127 // pred_region
          %s910 = sand.u32 %s96, 1
          %s911 = sand.u32 %s96, 1
          %s912 = smul.addr %s911, 256
          %s913 = scalar_lea.vmem [#allocation4], %s912
          %s914 = smul.u32 16, %s79
          %s915 = smul.u32 4, %s80
          %s916 = smul.addr %s914, 16
          %s917 = sadd.s32 %s915, %s916
          %s918 = smul.addr %s917, 4
          %s919 = scalar_lea.vmem %s1, %s918
          // Predicated region
          $region133: #{mes_head_forward.3} parent=131 // pred_check
            _
          $region134: #{mes_head_forward.3} parent=131 // pred_check_branch
            %921 = sbr.rel (0) target = $region136
          $region135: #{mes_head_forward.3} parent=131 // pred_region
            // Predicated region
            $region137: #{mes_head_forward.3} parent=135 // pred_check
              _
            $region138: #{mes_head_forward.3} parent=135 // pred_check_branch
              %923 = sbr.rel (0) target = $region140
            $region139: #{mes_head_forward.3} parent=135 // pred_region
              loop: start=0, step=1, limit=1
              $region141: #{mes_head_forward.3} parent=139 // loop_pre_header
                _
              $region142: #{mes_head_forward.3} parent=139 // loop_header
                %s925 = sphi 0, %s929
                %p926 = scmp.ge.s32.totalorder %s925, 1
                %s930 = sphi %s919, %s919
                %s931 = sphi %s913, %s913
              $region143: #{mes_head_forward.3} parent=139 // loop_header_branch
                %928 = sbr.rel (%p926) target = $region147
              $region144: #{mes_head_forward.3} parent=139 // loop_body
                %v932 = vld [vmem:[%s930] sm:$0xff]
                %933 = vst [vmem:[%s931] sm:$0xff] %v932
                %v934 = vld [vmem:[%s930 + $0x8] sm:$0xff]
                %935 = vst [vmem:[%s931 + $0x8] sm:$0xff] %v934
                %v936 = vld [vmem:[%s930 + $0x40] sm:$0xff]
                %937 = vst [vmem:[%s931 + $0x10] sm:$0xff] %v936
                %v938 = vld [vmem:[%s930 + $0x48] sm:$0xff]
                %939 = vst [vmem:[%s931 + $0x18] sm:$0xff] %v938
                %v940 = vld [vmem:[%s930 + $0x80] sm:$0xff]
                %941 = vst [vmem:[%s931 + $0x20] sm:$0xff] %v940
                %v942 = vld [vmem:[%s930 + $0x88] sm:$0xff]
                %943 = vst [vmem:[%s931 + $0x28] sm:$0xff] %v942
                %v944 = vld [vmem:[%s930 + $0xc0] sm:$0xff]
                %945 = vst [vmem:[%s931 + $0x30] sm:$0xff] %v944
                %v946 = vld [vmem:[%s930 + $0xc8] sm:$0xff]
                %947 = vst [vmem:[%s931 + $0x38] sm:$0xff] %v946
                %v948 = vld [vmem:[%s930 + $0x100] sm:$0xff]
                %949 = vst [vmem:[%s931 + $0x40] sm:$0xff] %v948
                %v950 = vld [vmem:[%s930 + $0x108] sm:$0xff]
                %951 = vst [vmem:[%s931 + $0x48] sm:$0xff] %v950
                %v952 = vld [vmem:[%s930 + $0x140] sm:$0xff]
                %953 = vst [vmem:[%s931 + $0x50] sm:$0xff] %v952
                %v954 = vld [vmem:[%s930 + $0x148] sm:$0xff]
                %955 = vst [vmem:[%s931 + $0x58] sm:$0xff] %v954
                %v956 = vld [vmem:[%s930 + $0x180] sm:$0xff]
                %957 = vst [vmem:[%s931 + $0x60] sm:$0xff] %v956
                %v958 = vld [vmem:[%s930 + $0x188] sm:$0xff]
                %959 = vst [vmem:[%s931 + $0x68] sm:$0xff] %v958
                %v960 = vld [vmem:[%s930 + $0x1c0] sm:$0xff]
                %961 = vst [vmem:[%s931 + $0x70] sm:$0xff] %v960
                %v962 = vld [vmem:[%s930 + $0x1c8] sm:$0xff]
                %963 = vst [vmem:[%s931 + $0x78] sm:$0xff] %v962
                %v964 = vld [vmem:[%s930 + $0x200] sm:$0xff]
                %965 = vst [vmem:[%s931 + $0x80] sm:$0xff] %v964
                %v966 = vld [vmem:[%s930 + $0x208] sm:$0xff]
                %967 = vst [vmem:[%s931 + $0x88] sm:$0xff] %v966
                %v968 = vld [vmem:[%s930 + $0x240] sm:$0xff]
                %969 = vst [vmem:[%s931 + $0x90] sm:$0xff] %v968
                %v970 = vld [vmem:[%s930 + $0x248] sm:$0xff]
                %971 = vst [vmem:[%s931 + $0x98] sm:$0xff] %v970
                %v972 = vld [vmem:[%s930 + $0x280] sm:$0xff]
                %973 = vst [vmem:[%s931 + $0xa0] sm:$0xff] %v972
                %v974 = vld [vmem:[%s930 + $0x288] sm:$0xff]
                %975 = vst [vmem:[%s931 + $0xa8] sm:$0xff] %v974
                %v976 = vld [vmem:[%s930 + $0x2c0] sm:$0xff]
                %977 = vst [vmem:[%s931 + $0xb0] sm:$0xff] %v976
                %v978 = vld [vmem:[%s930 + $0x2c8] sm:$0xff]
                %979 = vst [vmem:[%s931 + $0xb8] sm:$0xff] %v978
                %v980 = vld [vmem:[%s930 + $0x300] sm:$0xff]
                %981 = vst [vmem:[%s931 + $0xc0] sm:$0xff] %v980
                %v982 = vld [vmem:[%s930 + $0x308] sm:$0xff]
                %983 = vst [vmem:[%s931 + $0xc8] sm:$0xff] %v982
                %v984 = vld [vmem:[%s930 + $0x340] sm:$0xff]
                %985 = vst [vmem:[%s931 + $0xd0] sm:$0xff] %v984
                %v986 = vld [vmem:[%s930 + $0x348] sm:$0xff]
                %987 = vst [vmem:[%s931 + $0xd8] sm:$0xff] %v986
                %v988 = vld [vmem:[%s930 + $0x380] sm:$0xff]
                %989 = vst [vmem:[%s931 + $0xe0] sm:$0xff] %v988
                %v990 = vld [vmem:[%s930 + $0x388] sm:$0xff]
                %991 = vst [vmem:[%s931 + $0xe8] sm:$0xff] %v990
                %v992 = vld [vmem:[%s930 + $0x3c0] sm:$0xff]
                %993 = vst [vmem:[%s931 + $0xf0] sm:$0xff] %v992
                %v994 = vld [vmem:[%s930 + $0x3c8] sm:$0xff]
                %995 = vst [vmem:[%s931 + $0xf8] sm:$0xff] %v994
              $region145: #{mes_head_forward.3} parent=139 // loop_footer
                %s929 = sadd.s32 1, %s925
              $region146: #{mes_head_forward.3} parent=139 // loop_footer_branch
                %924 = sbr.rel target = $region142
              $region147: #{mes_head_forward.3} parent=139 // loop_exit
                _
            $region140: #{mes_head_forward.3} parent=135 // pred_fallthru
              _
            // Predicated region
            $region148: #{mes_head_forward.3} parent=135 // pred_check
              _
            $region149: #{mes_head_forward.3} parent=135 // pred_check_branch
              %997 = sbr.rel target = $region151
            $region150: #{mes_head_forward.3} parent=135 // pred_region
              _
            $region151: #{mes_head_forward.3} parent=135 // pred_fallthru
              _
          $region136: #{mes_head_forward.3} parent=131 // pred_fallthru
            _
          %998 = vnop
        $region132: #{mes_head_forward.3} parent=127 // pred_fallthru
          _
        // Predicated region
        $region152: #{mes_head_forward.3} parent=127 // pred_check
          %p999 = pneg %p132
        $region153: #{mes_head_forward.3} parent=127 // pred_check_branch
          %1001 = sbr.rel (%p999) target = $region155
        $region154: #{mes_head_forward.3} parent=127 // pred_region
          %s1002 = smul.u32 64, %s80
          %p1003 = scmp.lt.s32.totalorder %s1002, 255
          %s1004 = scalar_select %p1003, %s1002, 255
          %s1005 = smul.addr %s1004, 4
          %s1006 = scalar_lea.vmem %s3, %s1005
          %s1007 = smul.u32 64, %s80
        $region155: #{mes_head_forward.3} parent=127 // pred_fallthru
          _
        // Predicated region
        $region156: #{mes_head_forward.3} parent=127 // pred_check
          %p1008 = pneg %p179
        $region157: #{mes_head_forward.3} parent=127 // pred_check_branch
          %1010 = sbr.rel (%p1008) target = $region159
        $region158: #{mes_head_forward.3} parent=127 // pred_region
          %s1011 = smul.u32 64, %s80
          %p1012 = scmp.lt.s32.totalorder %s1011, 255
          %s1013 = scalar_select %p1012, %s1011, 255
          %s1014 = smul.addr %s1013, 4
          %s1015 = scalar_lea.vmem %s7, %s1014
          %s1016 = smul.u32 64, %s80
        $region159: #{mes_head_forward.3} parent=127 // pred_fallthru
          _
      $region128: #{mes_head_forward.3} parent=5 // pred_fallthru
        _
      %p1017 = scmp.le.s32.totalorder 1, %s72
      %p1018 = scmp.lt.s32.totalorder %s72, 9
      %p1019 = pnand %p1017, %p1018
      %p1020 = pneg %p1019
      // Predicated region
      $region160: #{mes_head_forward.3} parent=5 // pred_check
        _
      $region161: #{mes_head_forward.3} parent=5 // pred_check_branch
        %1022 = sbr.rel (%p1019) target = $region163
      $region162: #{mes_head_forward.3} parent=5 // pred_region
        %s1023 = ssub.s32 %s72, 1
        %s1024 = sand.u32 %s99, 1
        %s1025 = sand.u32 %s99, 1
        %s1026 = smul.addr %s1025, 256
        %s1027 = scalar_lea.vmem [#allocation4], %s1026
        // Predicated region
        $region164: #{mes_head_forward.3} parent=162 // pred_check
          %p1028 = pneg %p112
        $region165: #{mes_head_forward.3} parent=162 // pred_check_branch
          %1030 = sbr.rel (%p1028) target = $region167
        $region166: #{mes_head_forward.3} parent=162 // pred_region
          _
        $region167: #{mes_head_forward.3} parent=162 // pred_fallthru
          _
        %s1031 = sand.u32 %s99, 1
        %s1032 = sand.u32 %s99, 1
        %s1033 = smul.addr %s1032, 256
        %s1034 = scalar_lea.vmem [#allocation4], %s1033
        %p1035 = pneg %p112
        %p1036 = pneg %p109
        %s1037 = smul.u32 64, %s82
        %p1038 = scmp.lt.s32.totalorder %s1037, 255
        %s1039 = scalar_select %p1038, %s1037, 255
        %s1040 = smul.addr %s1039, 4
        %s1041 = scalar_lea.vmem %s3, %s1040
        %p1042 = pneg %p138
        %p1043 = pneg %p135
        %p1044 = pneg %p159
        %p1045 = pneg %p156
        %s1046 = smul.u32 64, %s82
        %p1047 = scmp.lt.s32.totalorder %s1046, 255
        %s1048 = scalar_select %p1047, %s1046, 255
        %s1049 = smul.addr %s1048, 4
        %s1050 = scalar_lea.vmem %s7, %s1049
        %p1051 = pneg %p185
        %p1052 = pneg %p182
        %p1053 = pneg %p206
        %p1054 = pneg %p203
        %p1055 = pneg %p227
        %p1056 = pneg %p224
        %p1057 = pneg %p248
        %p1058 = pneg %p245
        %p1059 = pneg %p269
        %p1060 = pneg %p266
        %p1061 = pneg %p290
        %p1062 = pneg %p287
        %p1063 = pneg %p311
        %p1064 = pneg %p308
        %p1065 = pneg %p332
        %p1066 = pneg %p329
        %p1067 = pneg %p353
        %p1068 = pneg %p350
        %p1069 = pneg %p374
        %p1070 = pneg %p371
        %p1071 = pneg %p395
        %p1072 = pneg %p392
        %p1073 = pneg %p416
        %p1074 = pneg %p413
        %p1075 = pneg %p437
        %p1076 = pneg %p434
        %p1077 = pneg %p458
        %p1078 = pneg %p455
        %p1079 = pneg %p479
        %p1080 = pneg %p476
        %p1081 = pneg %p500
        %p1082 = pneg %p497
        %p1083 = pneg %p521
        %p1084 = pneg %p518
        %p1085 = pneg %p542
        %p1086 = pneg %p539
        %p1087 = pneg %p563
        %p1088 = pneg %p560
        %p1089 = pneg %p584
        %p1090 = pneg %p581
        %p1091 = pneg %p605
        %p1092 = pneg %p602
        %p1093 = pneg %p626
        %p1094 = pneg %p623
        %p1095 = pneg %p647
        %p1096 = pneg %p644
        %p1097 = pneg %p668
        %p1098 = pneg %p665
        %p1099 = pneg %p689
        %p1100 = pneg %p686
        %p1101 = pneg %p710
        %p1102 = pneg %p707
        %p1103 = pneg %p731
        %p1104 = pneg %p728
        %p1105 = pneg %p752
        %p1106 = pneg %p749
        %p1107 = pneg %p778
        %p1108 = pneg %p775
        %s1109 = smul.u32 16, %s81
        %p1110 = scmp.lt.s32.totalorder %s1109, 31
        %s1111 = scalar_select %p1110, %s1109, 31
        %s1112 = smul.addr %s1111, 8
        %s1113 = scalar_lea.vmem %s63, %s1112
        %p1114 = pneg %p804
        %p1115 = pneg %p801
        %s1116 = smul.u32 16, %s81
        %p1117 = scmp.lt.s32.totalorder %s1116, 31
        %s1118 = scalar_select %p1117, %s1116, 31
        %s1119 = smul.addr %s1118, 8
        %s1120 = scalar_lea.vmem %s65, %s1119
        %s1121 = smul.u32 16, %s81
        %s1122 = smul.u32 4, %s82
        %s1123 = smul.u32 64, %s82
        %p1124 = scmp.lt.s32.totalorder %s1123, 255
        %s1125 = scalar_select %p1124, %s1123, 255
        %s1126 = smul.addr %s1125, 4
        %s1127 = scalar_lea.vmem %s3, %s1126
        %s1128 = smul.u32 64, %s82
        %s1129 = smul.u32 64, %s82
        %p1130 = scmp.lt.s32.totalorder %s1129, 255
        %s1131 = scalar_select %p1130, %s1129, 255
        %s1132 = smul.addr %s1131, 4
        %s1133 = scalar_lea.vmem %s7, %s1132
        %s1134 = smul.u32 64, %s82
        %s1135 = smul.u32 16, %s81
        %p1136 = scmp.lt.s32.totalorder %s1135, 31
        %s1137 = scalar_select %p1136, %s1135, 31
        %s1138 = smul.addr %s1137, 8
        %s1139 = scalar_lea.vmem %s63, %s1138
        %s1140 = smul.u32 16, %s81
        %s1141 = smul.u32 16, %s81
        %p1142 = scmp.lt.s32.totalorder %s1141, 31
        %s1143 = scalar_select %p1142, %s1141, 31
        %s1144 = smul.addr %s1143, 8
        %s1145 = scalar_lea.vmem %s65, %s1144
        %s1146 = smul.u32 16, %s81
        %p1148 = scmp.eq.s32.totalorder %s82, 0
        // Predicated region
        $region168: #{mes_head_forward.3} parent=162 // pred_check
          %p1149 = pneg %p1148
        $region169: #{mes_head_forward.3} parent=162 // pred_check_branch
          %1151 = sbr.rel (%p1149) target = $region171
        $region170: #{mes_head_forward.3} parent=162 // pred_region
          %1152 = vst [vmem:[#allocation2] sm:$0xff] 0.0
          %1153 = vst [vmem:[#allocation2 + $0x8] sm:$0xff] 0.0
          %1154 = vst [vmem:[#allocation2 + $0x10] sm:$0xff] 0.0
          %1155 = vst [vmem:[#allocation2 + $0x18] sm:$0xff] 0.0
          %1156 = vst [vmem:[#allocation2 + $0x20] sm:$0xff] 0.0
          %1157 = vst [vmem:[#allocation2 + $0x28] sm:$0xff] 0.0
          %1158 = vst [vmem:[#allocation2 + $0x30] sm:$0xff] 0.0
          %1159 = vst [vmem:[#allocation2 + $0x38] sm:$0xff] 0.0
          %1160 = vst [vmem:[#allocation2 + $0x40] sm:$0xff] 0.0
          %1161 = vst [vmem:[#allocation2 + $0x48] sm:$0xff] 0.0
          %1162 = vst [vmem:[#allocation2 + $0x50] sm:$0xff] 0.0
          %1163 = vst [vmem:[#allocation2 + $0x58] sm:$0xff] 0.0
          %1164 = vst [vmem:[#allocation2 + $0x60] sm:$0xff] 0.0
          %1165 = vst [vmem:[#allocation2 + $0x68] sm:$0xff] 0.0
          %1166 = vst [vmem:[#allocation2 + $0x70] sm:$0xff] 0.0
          %1167 = vst [vmem:[#allocation2 + $0x78] sm:$0xff] 0.0
          %vm1168 = vcmask 523264
          %1169 = vst.msk [vmem:[#allocation3] sm:$0xff] %vm1168, 0.0
          %1170 = vst.msk [vmem:[#allocation3 + $0x8] sm:$0xff] %vm1168, 0.0
          %1171 = vst.msk [vmem:[#allocation3 + $0x10] sm:$0xff] %vm1168, 0.0
          %1172 = vst.msk [vmem:[#allocation3 + $0x18] sm:$0xff] %vm1168, 0.0
          %1173 = vst.msk [vmem:[#allocation3 + $0x20] sm:$0xff] %vm1168, 0.0
          %1174 = vst.msk [vmem:[#allocation3 + $0x28] sm:$0xff] %vm1168, 0.0
          %1175 = vst.msk [vmem:[#allocation3 + $0x30] sm:$0xff] %vm1168, 0.0
          %1176 = vst.msk [vmem:[#allocation3 + $0x38] sm:$0xff] %vm1168, 0.0
          %1177 = vst.msk [vmem:[#allocation3 + $0x40] sm:$0xff] %vm1168, 0.0
          %1178 = vst.msk [vmem:[#allocation3 + $0x48] sm:$0xff] %vm1168, 0.0
          %1179 = vst.msk [vmem:[#allocation3 + $0x50] sm:$0xff] %vm1168, 0.0
          %1180 = vst.msk [vmem:[#allocation3 + $0x58] sm:$0xff] %vm1168, 0.0
          %1181 = vst.msk [vmem:[#allocation3 + $0x60] sm:$0xff] %vm1168, 0.0
          %1182 = vst.msk [vmem:[#allocation3 + $0x68] sm:$0xff] %vm1168, 0.0
          %1183 = vst.msk [vmem:[#allocation3 + $0x70] sm:$0xff] %vm1168, 0.0
          %1184 = vst.msk [vmem:[#allocation3 + $0x78] sm:$0xff] %vm1168, 0.0
        $region171: #{mes_head_forward.3} parent=162 // pred_fallthru
          _
        %v1185 = vld [vmem:[%s1027] sm:$0xff]
        %v1186 = vld [vmem:[%s1027 + $0x8] sm:$0xff]
        %v1187 = vld [vmem:[%s1027 + $0x10] sm:$0xff]
        %v1188 = vld [vmem:[%s1027 + $0x18] sm:$0xff]
        %v1189 = vld [vmem:[%s1027 + $0x20] sm:$0xff]
        %v1190 = vld [vmem:[%s1027 + $0x28] sm:$0xff]
        %v1191 = vld [vmem:[%s1027 + $0x30] sm:$0xff]
        %v1192 = vld [vmem:[%s1027 + $0x38] sm:$0xff]
        %v1193 = vld [vmem:[%s1027 + $0x40] sm:$0xff]
        %v1194 = vld [vmem:[%s1027 + $0x48] sm:$0xff]
        %v1195 = vld [vmem:[%s1027 + $0x50] sm:$0xff]
        %v1196 = vld [vmem:[%s1027 + $0x58] sm:$0xff]
        %v1197 = vld [vmem:[%s1027 + $0x60] sm:$0xff]
        %v1198 = vld [vmem:[%s1027 + $0x68] sm:$0xff]
        %v1199 = vld [vmem:[%s1027 + $0x70] sm:$0xff]
        %v1200 = vld [vmem:[%s1027 + $0x78] sm:$0xff]
        %v1201 = vld [vmem:[%s1027 + $0x80] sm:$0xff]
        %v1202 = vld [vmem:[%s1027 + $0x88] sm:$0xff]
        %v1203 = vld [vmem:[%s1027 + $0x90] sm:$0xff]
        %v1204 = vld [vmem:[%s1027 + $0x98] sm:$0xff]
        %v1205 = vld [vmem:[%s1027 + $0xa0] sm:$0xff]
        %v1206 = vld [vmem:[%s1027 + $0xa8] sm:$0xff]
        %v1207 = vld [vmem:[%s1027 + $0xb0] sm:$0xff]
        %v1208 = vld [vmem:[%s1027 + $0xb8] sm:$0xff]
        %v1209 = vld [vmem:[%s1027 + $0xc0] sm:$0xff]
        %v1210 = vld [vmem:[%s1027 + $0xc8] sm:$0xff]
        %v1211 = vld [vmem:[%s1027 + $0xd0] sm:$0xff]
        %v1212 = vld [vmem:[%s1027 + $0xd8] sm:$0xff]
        %v1213 = vld [vmem:[%s1027 + $0xe0] sm:$0xff]
        %v1214 = vld [vmem:[%s1027 + $0xe8] sm:$0xff]
        %v1215 = vld [vmem:[%s1027 + $0xf0] sm:$0xff]
        %v1216 = vld [vmem:[%s1027 + $0xf8] sm:$0xff]
        %v1217 = vld [vmem:[#allocation2] sm:$0xff]
        %v1218 = vld [vmem:[#allocation2 + $0x8] sm:$0xff]
        %v1219 = vld [vmem:[#allocation2 + $0x10] sm:$0xff]
        %v1220 = vld [vmem:[#allocation2 + $0x18] sm:$0xff]
        %v1221 = vld [vmem:[#allocation2 + $0x20] sm:$0xff]
        %v1222 = vld [vmem:[#allocation2 + $0x28] sm:$0xff]
        %v1223 = vld [vmem:[#allocation2 + $0x30] sm:$0xff]
        %v1224 = vld [vmem:[#allocation2 + $0x38] sm:$0xff]
        %v1225 = vld [vmem:[#allocation2 + $0x40] sm:$0xff]
        %v1226 = vld [vmem:[#allocation2 + $0x48] sm:$0xff]
        %v1227 = vld [vmem:[#allocation2 + $0x50] sm:$0xff]
        %v1228 = vld [vmem:[#allocation2 + $0x58] sm:$0xff]
        %v1229 = vld [vmem:[#allocation2 + $0x60] sm:$0xff]
        %v1230 = vld [vmem:[#allocation2 + $0x68] sm:$0xff]
        %v1231 = vld [vmem:[#allocation2 + $0x70] sm:$0xff]
        %v1232 = vld [vmem:[#allocation2 + $0x78] sm:$0xff]
        %v1233 = vld [vmem:[%s1127] sm:$0xf]
        %v1234 = vld [vmem:[%s1127 + $0x4] sm:$0xf]
        %v1235 = vld [vmem:[%s1127 + $0x8] sm:$0xf]
        %v1236 = vld [vmem:[%s1127 + $0xc] sm:$0xf]
        %v1237 = vld [vmem:[%s1127 + $0x10] sm:$0xf]
        %v1238 = vld [vmem:[%s1127 + $0x14] sm:$0xf]
        %v1239 = vld [vmem:[%s1127 + $0x18] sm:$0xf]
        %v1240 = vld [vmem:[%s1127 + $0x1c] sm:$0xf]
        %v1241 = vld [vmem:[%s1127 + $0x20] sm:$0xf]
        %v1242 = vld [vmem:[%s1127 + $0x24] sm:$0xf]
        %v1243 = vld [vmem:[%s1127 + $0x28] sm:$0xf]
        %v1244 = vld [vmem:[%s1127 + $0x2c] sm:$0xf]
        %v1245 = vld [vmem:[%s1127 + $0x30] sm:$0xf]
        %v1246 = vld [vmem:[%s1127 + $0x34] sm:$0xf]
        %v1247 = vld [vmem:[%s1127 + $0x38] sm:$0xf]
        %v1248 = vld [vmem:[%s1127 + $0x3c] sm:$0xf]
        %v1249 = vld [vmem:[%s1127 + $0x40] sm:$0xf]
        %v1250 = vld [vmem:[%s1127 + $0x44] sm:$0xf]
        %v1251 = vld [vmem:[%s1127 + $0x48] sm:$0xf]
        %v1252 = vld [vmem:[%s1127 + $0x4c] sm:$0xf]
        %v1253 = vld [vmem:[%s1127 + $0x50] sm:$0xf]
        %v1254 = vld [vmem:[%s1127 + $0x54] sm:$0xf]
        %v1255 = vld [vmem:[%s1127 + $0x58] sm:$0xf]
        %v1256 = vld [vmem:[%s1127 + $0x5c] sm:$0xf]
        %v1257 = vld [vmem:[%s1127 + $0x60] sm:$0xf]
        %v1258 = vld [vmem:[%s1127 + $0x64] sm:$0xf]
        %v1259 = vld [vmem:[%s1127 + $0x68] sm:$0xf]
        %v1260 = vld [vmem:[%s1127 + $0x6c] sm:$0xf]
        %v1261 = vld [vmem:[%s1127 + $0x70] sm:$0xf]
        %v1262 = vld [vmem:[%s1127 + $0x74] sm:$0xf]
        %v1263 = vld [vmem:[%s1127 + $0x78] sm:$0xf]
        %v1264 = vld [vmem:[%s1127 + $0x7c] sm:$0xf]
        %v1265 = vld [vmem:[%s1127 + $0x80] sm:$0xf]
        %v1266 = vld [vmem:[%s1127 + $0x84] sm:$0xf]
        %v1267 = vld [vmem:[%s1127 + $0x88] sm:$0xf]
        %v1268 = vld [vmem:[%s1127 + $0x8c] sm:$0xf]
        %v1269 = vld [vmem:[%s1127 + $0x90] sm:$0xf]
        %v1270 = vld [vmem:[%s1127 + $0x94] sm:$0xf]
        %v1271 = vld [vmem:[%s1127 + $0x98] sm:$0xf]
        %v1272 = vld [vmem:[%s1127 + $0x9c] sm:$0xf]
        %v1273 = vld [vmem:[%s1127 + $0xa0] sm:$0xf]
        %v1274 = vld [vmem:[%s1127 + $0xa4] sm:$0xf]
        %v1275 = vld [vmem:[%s1127 + $0xa8] sm:$0xf]
        %v1276 = vld [vmem:[%s1127 + $0xac] sm:$0xf]
        %v1277 = vld [vmem:[%s1127 + $0xb0] sm:$0xf]
        %v1278 = vld [vmem:[%s1127 + $0xb4] sm:$0xf]
        %v1279 = vld [vmem:[%s1127 + $0xb8] sm:$0xf]
        %v1280 = vld [vmem:[%s1127 + $0xbc] sm:$0xf]
        %v1281 = vld [vmem:[%s1127 + $0xc0] sm:$0xf]
        %v1282 = vld [vmem:[%s1127 + $0xc4] sm:$0xf]
        %v1283 = vld [vmem:[%s1127 + $0xc8] sm:$0xf]
        %v1284 = vld [vmem:[%s1127 + $0xcc] sm:$0xf]
        %v1285 = vld [vmem:[%s1127 + $0xd0] sm:$0xf]
        %v1286 = vld [vmem:[%s1127 + $0xd4] sm:$0xf]
        %v1287 = vld [vmem:[%s1127 + $0xd8] sm:$0xf]
        %v1288 = vld [vmem:[%s1127 + $0xdc] sm:$0xf]
        %v1289 = vld [vmem:[%s1127 + $0xe0] sm:$0xf]
        %v1290 = vld [vmem:[%s1127 + $0xe4] sm:$0xf]
        %v1291 = vld [vmem:[%s1127 + $0xe8] sm:$0xf]
        %v1292 = vld [vmem:[%s1127 + $0xec] sm:$0xf]
        %v1293 = vld [vmem:[%s1127 + $0xf0] sm:$0xf]
        %v1294 = vld [vmem:[%s1127 + $0xf4] sm:$0xf]
        %v1295 = vld [vmem:[%s1127 + $0xf8] sm:$0xf]
        %v1296 = vld [vmem:[%s1127 + $0xfc] sm:$0xf]
        %v1329 = vunpack.c.l.b16 %v1185
        %v1330 = vunpack.c.h.b16 %v1185
        %v1331 = vunpack.c.l.b16 %v1186
        %v1332 = vunpack.c.h.b16 %v1186
        %v1333 = vunpack.c.l.b16 %v1187
        %v1334 = vunpack.c.h.b16 %v1187
        %v1335 = vunpack.c.l.b16 %v1188
        %v1336 = vunpack.c.h.b16 %v1188
        %v1337 = vunpack.c.l.b16 %v1189
        %v1338 = vunpack.c.h.b16 %v1189
        %v1339 = vunpack.c.l.b16 %v1190
        %v1340 = vunpack.c.h.b16 %v1190
        %v1341 = vunpack.c.l.b16 %v1191
        %v1342 = vunpack.c.h.b16 %v1191
        %v1343 = vunpack.c.l.b16 %v1192
        %v1344 = vunpack.c.h.b16 %v1192
        %v1345 = vunpack.c.l.b16 %v1193
        %v1346 = vunpack.c.h.b16 %v1193
        %v1347 = vunpack.c.l.b16 %v1194
        %v1348 = vunpack.c.h.b16 %v1194
        %v1349 = vunpack.c.l.b16 %v1195
        %v1350 = vunpack.c.h.b16 %v1195
        %v1351 = vunpack.c.l.b16 %v1196
        %v1352 = vunpack.c.h.b16 %v1196
        %v1353 = vunpack.c.l.b16 %v1197
        %v1354 = vunpack.c.h.b16 %v1197
        %v1355 = vunpack.c.l.b16 %v1198
        %v1356 = vunpack.c.h.b16 %v1198
        %v1357 = vunpack.c.l.b16 %v1199
        %v1358 = vunpack.c.h.b16 %v1199
        %v1359 = vunpack.c.l.b16 %v1200
        %v1360 = vunpack.c.h.b16 %v1200
        %v1361 = vunpack.c.l.b16 %v1201
        %v1362 = vunpack.c.h.b16 %v1201
        %v1363 = vunpack.c.l.b16 %v1202
        %v1364 = vunpack.c.h.b16 %v1202
        %v1365 = vunpack.c.l.b16 %v1203
        %v1366 = vunpack.c.h.b16 %v1203
        %v1367 = vunpack.c.l.b16 %v1204
        %v1368 = vunpack.c.h.b16 %v1204
        %v1369 = vunpack.c.l.b16 %v1205
        %v1370 = vunpack.c.h.b16 %v1205
        %v1371 = vunpack.c.l.b16 %v1206
        %v1372 = vunpack.c.h.b16 %v1206
        %v1373 = vunpack.c.l.b16 %v1207
        %v1374 = vunpack.c.h.b16 %v1207
        %v1375 = vunpack.c.l.b16 %v1208
        %v1376 = vunpack.c.h.b16 %v1208
        %v1377 = vunpack.c.l.b16 %v1209
        %v1378 = vunpack.c.h.b16 %v1209
        %v1379 = vunpack.c.l.b16 %v1210
        %v1380 = vunpack.c.h.b16 %v1210
        %v1381 = vunpack.c.l.b16 %v1211
        %v1382 = vunpack.c.h.b16 %v1211
        %v1383 = vunpack.c.l.b16 %v1212
        %v1384 = vunpack.c.h.b16 %v1212
        %v1385 = vunpack.c.l.b16 %v1213
        %v1386 = vunpack.c.h.b16 %v1213
        %v1387 = vunpack.c.l.b16 %v1214
        %v1388 = vunpack.c.h.b16 %v1214
        %v1389 = vunpack.c.l.b16 %v1215
        %v1390 = vunpack.c.h.b16 %v1215
        %v1391 = vunpack.c.l.b16 %v1216
        %v1392 = vunpack.c.h.b16 %v1216
        %v1393 = vpack.c.b16 %v1333, %v1329
        %v1394 = vpack.c.b16 %v1334, %v1330
        %v1395 = vpack.c.b16 %v1335, %v1331
        %v1396 = vpack.c.b16 %v1336, %v1332
        %v1397 = vpack.c.b16 %v1341, %v1337
        %v1398 = vpack.c.b16 %v1342, %v1338
        %v1399 = vpack.c.b16 %v1343, %v1339
        %v1400 = vpack.c.b16 %v1344, %v1340
        %v1401 = vpack.c.b16 %v1349, %v1345
        %v1402 = vpack.c.b16 %v1350, %v1346
        %v1403 = vpack.c.b16 %v1351, %v1347
        %v1404 = vpack.c.b16 %v1352, %v1348
        %v1405 = vpack.c.b16 %v1357, %v1353
        %v1406 = vpack.c.b16 %v1358, %v1354
        %v1407 = vpack.c.b16 %v1359, %v1355
        %v1408 = vpack.c.b16 %v1360, %v1356
        %v1409 = vpack.c.b16 %v1365, %v1361
        %v1410 = vpack.c.b16 %v1366, %v1362
        %v1411 = vpack.c.b16 %v1367, %v1363
        %v1412 = vpack.c.b16 %v1368, %v1364
        %v1413 = vpack.c.b16 %v1373, %v1369
        %v1414 = vpack.c.b16 %v1374, %v1370
        %v1415 = vpack.c.b16 %v1375, %v1371
        %v1416 = vpack.c.b16 %v1376, %v1372
        %v1417 = vpack.c.b16 %v1381, %v1377
        %v1418 = vpack.c.b16 %v1382, %v1378
        %v1419 = vpack.c.b16 %v1383, %v1379
        %v1420 = vpack.c.b16 %v1384, %v1380
        %v1421 = vpack.c.b16 %v1389, %v1385
        %v1422 = vpack.c.b16 %v1390, %v1386
        %v1423 = vpack.c.b16 %v1391, %v1387
        %v1424 = vpack.c.b16 %v1392, %v1388
        %v1521 = vunpack.c.l.b16 %v1233
        %v1522 = vunpack.c.l.b16 %v1234
        %v1523 = vunpack.c.l.b16 %v1235
        %v1524 = vunpack.c.l.b16 %v1236
        %v1525 = vunpack.c.l.b16 %v1237
        %v1526 = vunpack.c.l.b16 %v1238
        %v1527 = vunpack.c.l.b16 %v1239
        %v1528 = vunpack.c.l.b16 %v1240
        %v1529 = vunpack.c.l.b16 %v1241
        %v1530 = vunpack.c.l.b16 %v1242
        %v1531 = vunpack.c.l.b16 %v1243
        %v1532 = vunpack.c.l.b16 %v1244
        %v1533 = vunpack.c.l.b16 %v1245
        %v1534 = vunpack.c.l.b16 %v1246
        %v1535 = vunpack.c.l.b16 %v1247
        %v1536 = vunpack.c.l.b16 %v1248
        %v1537 = vunpack.c.l.b16 %v1249
        %v1538 = vunpack.c.l.b16 %v1250
        %v1539 = vunpack.c.l.b16 %v1251
        %v1540 = vunpack.c.l.b16 %v1252
        %v1541 = vunpack.c.l.b16 %v1253
        %v1542 = vunpack.c.l.b16 %v1254
        %v1543 = vunpack.c.l.b16 %v1255
        %v1544 = vunpack.c.l.b16 %v1256
        %v1545 = vunpack.c.l.b16 %v1257
        %v1546 = vunpack.c.l.b16 %v1258
        %v1547 = vunpack.c.l.b16 %v1259
        %v1548 = vunpack.c.l.b16 %v1260
        %v1549 = vunpack.c.l.b16 %v1261
        %v1550 = vunpack.c.l.b16 %v1262
        %v1551 = vunpack.c.l.b16 %v1263
        %v1552 = vunpack.c.l.b16 %v1264
        %v1553 = vunpack.c.l.b16 %v1265
        %v1554 = vunpack.c.l.b16 %v1266
        %v1555 = vunpack.c.l.b16 %v1267
        %v1556 = vunpack.c.l.b16 %v1268
        %v1557 = vunpack.c.l.b16 %v1269
        %v1558 = vunpack.c.l.b16 %v1270
        %v1559 = vunpack.c.l.b16 %v1271
        %v1560 = vunpack.c.l.b16 %v1272
        %v1561 = vunpack.c.l.b16 %v1273
        %v1562 = vunpack.c.l.b16 %v1274
        %v1563 = vunpack.c.l.b16 %v1275
        %v1564 = vunpack.c.l.b16 %v1276
        %v1565 = vunpack.c.l.b16 %v1277
        %v1566 = vunpack.c.l.b16 %v1278
        %v1567 = vunpack.c.l.b16 %v1279
        %v1568 = vunpack.c.l.b16 %v1280
        %v1569 = vunpack.c.l.b16 %v1281
        %v1570 = vunpack.c.l.b16 %v1282
        %v1571 = vunpack.c.l.b16 %v1283
        %v1572 = vunpack.c.l.b16 %v1284
        %v1573 = vunpack.c.l.b16 %v1285
        %v1574 = vunpack.c.l.b16 %v1286
        %v1575 = vunpack.c.l.b16 %v1287
        %v1576 = vunpack.c.l.b16 %v1288
        %v1577 = vunpack.c.l.b16 %v1289
        %v1578 = vunpack.c.l.b16 %v1290
        %v1579 = vunpack.c.l.b16 %v1291
        %v1580 = vunpack.c.l.b16 %v1292
        %v1581 = vunpack.c.l.b16 %v1293
        %v1582 = vunpack.c.l.b16 %v1294
        %v1583 = vunpack.c.l.b16 %v1295
        %v1584 = vunpack.c.l.b16 %v1296
        %v1585 = vpack.c.b16 %v1522, %v1521
        %v1586 = vpack.c.b16 %v1524, %v1523
        %v1587 = vpack.c.b16 %v1526, %v1525
        %v1588 = vpack.c.b16 %v1528, %v1527
        %v1589 = vpack.c.b16 %v1530, %v1529
        %v1590 = vpack.c.b16 %v1532, %v1531
        %v1591 = vpack.c.b16 %v1534, %v1533
        %v1592 = vpack.c.b16 %v1536, %v1535
        %v1593 = vpack.c.b16 %v1538, %v1537
        %v1594 = vpack.c.b16 %v1540, %v1539
        %v1595 = vpack.c.b16 %v1542, %v1541
        %v1596 = vpack.c.b16 %v1544, %v1543
        %v1597 = vpack.c.b16 %v1546, %v1545
        %v1598 = vpack.c.b16 %v1548, %v1547
        %v1599 = vpack.c.b16 %v1550, %v1549
        %v1600 = vpack.c.b16 %v1552, %v1551
        %v1601 = vpack.c.b16 %v1554, %v1553
        %v1602 = vpack.c.b16 %v1556, %v1555
        %v1603 = vpack.c.b16 %v1558, %v1557
        %v1604 = vpack.c.b16 %v1560, %v1559
        %v1605 = vpack.c.b16 %v1562, %v1561
        %v1606 = vpack.c.b16 %v1564, %v1563
        %v1607 = vpack.c.b16 %v1566, %v1565
        %v1608 = vpack.c.b16 %v1568, %v1567
        %v1609 = vpack.c.b16 %v1570, %v1569
        %v1610 = vpack.c.b16 %v1572, %v1571
        %v1611 = vpack.c.b16 %v1574, %v1573
        %v1612 = vpack.c.b16 %v1576, %v1575
        %v1613 = vpack.c.b16 %v1578, %v1577
        %v1614 = vpack.c.b16 %v1580, %v1579
        %v1615 = vpack.c.b16 %v1582, %v1581
        %v1616 = vpack.c.b16 %v1584, %v1583
        %1649 = vmatprep.subr.bf16.mxu0 0
        %1650 = vmatpush1.bf16.msra.mxu0 %v1585
        %1651 = vmatprep.subr.bf16.mxu0 0
        %1652 = vmatpush1.bf16.msra.mxu0 %v1586
        %1653 = vmatprep.subr.bf16.mxu0 0
        %1654 = vmatpush1.bf16.msra.mxu0 %v1587
        %1655 = vmatprep.subr.bf16.mxu0 0
        %1656 = vmatpush1.bf16.msra.mxu0 %v1588
        %1657 = vmatprep.subr.bf16.mxu0 0
        %1658 = vmatpush1.bf16.msra.mxu0 %v1589
        %1659 = vmatprep.subr.bf16.mxu0 0
        %1660 = vmatpush1.bf16.msra.mxu0 %v1590
        %1661 = vmatprep.subr.bf16.mxu0 0
        %1662 = vmatpush1.bf16.msra.mxu0 %v1591
        %1663 = vmatprep.subr.bf16.mxu0 0
        %1664 = vmatpush1.bf16.msra.mxu0 %v1592
        %1665 = vmatprep.subr.bf16.mxu0 0
        %1666 = vmatpush1.bf16.msra.mxu0 %v1593
        %1667 = vmatprep.subr.bf16.mxu0 0
        %1668 = vmatpush1.bf16.msra.mxu0 %v1594
        %1669 = vmatprep.subr.bf16.mxu0 0
        %1670 = vmatpush1.bf16.msra.mxu0 %v1595
        %1671 = vmatprep.subr.bf16.mxu0 0
        %1672 = vmatpush1.bf16.msra.mxu0 %v1596
        %1673 = vmatprep.subr.bf16.mxu0 0
        %1674 = vmatpush1.bf16.msra.mxu0 %v1597
        %1675 = vmatprep.subr.bf16.mxu0 0
        %1676 = vmatpush1.bf16.msra.mxu0 %v1598
        %1677 = vmatprep.subr.bf16.mxu0 0
        %1678 = vmatpush1.bf16.msra.mxu0 %v1599
        %1679 = vmatprep.subr.bf16.mxu0 0
        %1680 = vmatpush1.bf16.msra.mxu0 %v1600
        %1681 = vmatprep.mubr.bf16.mxu0 %v1394
        %1682 = vmatmul.mubr.bf16.gmra.mrb[0].mxu0 %v1393
        %v1683 = vpop.f32.mrb[0].mxu0
        %v1684 = vadd.f32 0.0, %v1683
        %v1685 = vpop.f32.mrb[0].mxu0
        %v1686 = vpop.f32.mrb[0].mxu0
        %v1687 = vadd.f32 0.0, %v1686
        %v1688 = vpop.f32.mrb[0].mxu0
        %1689 = vmatprep.mubr.bf16.mxu0 %v1398
        %1690 = vmatmul.mubr.bf16.gmra.mrb[0].mxu0 %v1397
        %v1691 = vpop.f32.mrb[0].mxu0
        %v1692 = vadd.f32 0.0, %v1691
        %v1693 = vpop.f32.mrb[0].mxu0
        %v1694 = vpop.f32.mrb[0].mxu0
        %v1695 = vadd.f32 0.0, %v1694
        %v1696 = vpop.f32.mrb[0].mxu0
        %1697 = vmatprep.mubr.bf16.mxu0 %v1402
        %1698 = vmatmul.mubr.bf16.gmra.mrb[0].mxu0 %v1401
        %v1699 = vpop.f32.mrb[0].mxu0
        %v1700 = vadd.f32 0.0, %v1699
        %v1701 = vpop.f32.mrb[0].mxu0
        %v1702 = vpop.f32.mrb[0].mxu0
        %v1703 = vadd.f32 0.0, %v1702
        %v1704 = vpop.f32.mrb[0].mxu0
        %1705 = vmatprep.mubr.bf16.mxu0 %v1406
        %1706 = vmatmul.mubr.bf16.gmra.mrb[0].mxu0 %v1405
        %v1707 = vpop.f32.mrb[0].mxu0
        %v1708 = vadd.f32 0.0, %v1707
        %v1709 = vpop.f32.mrb[0].mxu0
        %v1710 = vpop.f32.mrb[0].mxu0
        %v1711 = vadd.f32 0.0, %v1710
        %v1712 = vpop.f32.mrb[0].mxu0
        %1713 = vmatprep.mubr.bf16.mxu0 %v1410
        %1714 = vmatmul.mubr.bf16.gmra.mrb[0].mxu0 %v1409
        %v1715 = vpop.f32.mrb[0].mxu0
        %v1716 = vadd.f32 0.0, %v1715
        %v1717 = vpop.f32.mrb[0].mxu0
        %v1718 = vpop.f32.mrb[0].mxu0
        %v1719 = vadd.f32 0.0, %v1718
        %v1720 = vpop.f32.mrb[0].mxu0
        %1721 = vmatprep.mubr.bf16.mxu0 %v1414
        %1722 = vmatmul.mubr.bf16.gmra.mrb[0].mxu0 %v1413
        %v1723 = vpop.f32.mrb[0].mxu0
        %v1724 = vadd.f32 0.0, %v1723
        %v1725 = vpop.f32.mrb[0].mxu0
        %v1726 = vpop.f32.mrb[0].mxu0
        %v1727 = vadd.f32 0.0, %v1726
        %v1728 = vpop.f32.mrb[0].mxu0
        %1729 = vmatprep.mubr.bf16.mxu0 %v1418
        %1730 = vmatmul.mubr.bf16.gmra.mrb[0].mxu0 %v1417
        %v1731 = vpop.f32.mrb[0].mxu0
        %v1732 = vadd.f32 0.0, %v1731
        %v1733 = vpop.f32.mrb[0].mxu0
        %v1734 = vpop.f32.mrb[0].mxu0
        %v1735 = vadd.f32 0.0, %v1734
        %v1736 = vpop.f32.mrb[0].mxu0
        %1737 = vmatprep.mubr.bf16.mxu0 %v1422
        %1738 = vmatmul.mubr.bf16.gmra.mrb[0].mxu0 %v1421
        %v1739 = vpop.f32.mrb[0].mxu0
        %v1740 = vadd.f32 0.0, %v1739
        %v1741 = vpop.f32.mrb[0].mxu0
        %v1742 = vpop.f32.mrb[0].mxu0
        %v1743 = vadd.f32 0.0, %v1742
        %v1744 = vpop.f32.mrb[0].mxu0
        %1745 = vdwg.mxu0
        %1746 = vmatprep.subr.bf16.mxu0 0
        %1747 = vmatpush1.bf16.msra.mxu0 %v1601
        %1748 = vmatprep.subr.bf16.mxu0 0
        %1749 = vmatpush1.bf16.msra.mxu0 %v1602
        %1750 = vmatprep.subr.bf16.mxu0 0
        %1751 = vmatpush1.bf16.msra.mxu0 %v1603
        %1752 = vmatprep.subr.bf16.mxu0 0
        %1753 = vmatpush1.bf16.msra.mxu0 %v1604
        %1754 = vmatprep.subr.bf16.mxu0 0
        %1755 = vmatpush1.bf16.msra.mxu0 %v1605
        %1756 = vmatprep.subr.bf16.mxu0 0
        %1757 = vmatpush1.bf16.msra.mxu0 %v1606
        %1758 = vmatprep.subr.bf16.mxu0 0
        %1759 = vmatpush1.bf16.msra.mxu0 %v1607
        %1760 = vmatprep.subr.bf16.mxu0 0
        %1761 = vmatpush1.bf16.msra.mxu0 %v1608
        %1762 = vmatprep.subr.bf16.mxu0 0
        %1763 = vmatpush1.bf16.msra.mxu0 %v1609
        %1764 = vmatprep.subr.bf16.mxu0 0
        %1765 = vmatpush1.bf16.msra.mxu0 %v1610
        %1766 = vmatprep.subr.bf16.mxu0 0
        %1767 = vmatpush1.bf16.msra.mxu0 %v1611
        %1768 = vmatprep.subr.bf16.mxu0 0
        %1769 = vmatpush1.bf16.msra.mxu0 %v1612
        %1770 = vmatprep.subr.bf16.mxu0 0
        %1771 = vmatpush1.bf16.msra.mxu0 %v1613
        %1772 = vmatprep.subr.bf16.mxu0 0
        %1773 = vmatpush1.bf16.msra.mxu0 %v1614
        %1774 = vmatprep.subr.bf16.mxu0 0
        %1775 = vmatpush1.bf16.msra.mxu0 %v1615
        %1776 = vmatprep.subr.bf16.mxu0 0
        %1777 = vmatpush1.bf16.msra.mxu0 %v1616
        %1778 = vmatprep.mubr.bf16.mxu0 %v1396
        %1779 = vmatmul.mubr.bf16.gmra.mrb[0].mxu0 %v1395
        %v1780 = vpop.f32.mrb[0].mxu0
        %v1781 = vadd.f32 %v1684, %v1780
        %v1782 = vpop.f32.mrb[0].mxu0
        %v1783 = vpop.f32.mrb[0].mxu0
        %v1784 = vadd.f32 %v1687, %v1783
        %v1785 = vpop.f32.mrb[0].mxu0
        %1786 = vmatprep.mubr.bf16.mxu0 %v1400
        %1787 = vmatmul.mubr.bf16.gmra.mrb[0].mxu0 %v1399
        %v1788 = vpop.f32.mrb[0].mxu0
        %v1789 = vadd.f32 %v1692, %v1788
        %v1790 = vpop.f32.mrb[0].mxu0
        %v1791 = vpop.f32.mrb[0].mxu0
        %v1792 = vadd.f32 %v1695, %v1791
        %v1793 = vpop.f32.mrb[0].mxu0
        %1794 = vmatprep.mubr.bf16.mxu0 %v1404
        %1795 = vmatmul.mubr.bf16.gmra.mrb[0].mxu0 %v1403
        %v1796 = vpop.f32.mrb[0].mxu0
        %v1797 = vadd.f32 %v1700, %v1796
        %v1798 = vpop.f32.mrb[0].mxu0
        %v1799 = vpop.f32.mrb[0].mxu0
        %v1800 = vadd.f32 %v1703, %v1799
        %v1801 = vpop.f32.mrb[0].mxu0
        %1802 = vmatprep.mubr.bf16.mxu0 %v1408
        %1803 = vmatmul.mubr.bf16.gmra.mrb[0].mxu0 %v1407
        %v1804 = vpop.f32.mrb[0].mxu0
        %v1805 = vadd.f32 %v1708, %v1804
        %v1806 = vpop.f32.mrb[0].mxu0
        %v1807 = vpop.f32.mrb[0].mxu0
        %v1808 = vadd.f32 %v1711, %v1807
        %v1809 = vpop.f32.mrb[0].mxu0
        %1810 = vmatprep.mubr.bf16.mxu0 %v1412
        %1811 = vmatmul.mubr.bf16.gmra.mrb[0].mxu0 %v1411
        %v1812 = vpop.f32.mrb[0].mxu0
        %v1813 = vadd.f32 %v1716, %v1812
        %v1814 = vpop.f32.mrb[0].mxu0
        %v1815 = vpop.f32.mrb[0].mxu0
        %v1816 = vadd.f32 %v1719, %v1815
        %v1817 = vpop.f32.mrb[0].mxu0
        %1818 = vmatprep.mubr.bf16.mxu0 %v1416
        %1819 = vmatmul.mubr.bf16.gmra.mrb[0].mxu0 %v1415
        %v1820 = vpop.f32.mrb[0].mxu0
        %v1821 = vadd.f32 %v1724, %v1820
        %v1822 = vpop.f32.mrb[0].mxu0
        %v1823 = vpop.f32.mrb[0].mxu0
        %v1824 = vadd.f32 %v1727, %v1823
        %v1825 = vpop.f32.mrb[0].mxu0
        %1826 = vmatprep.mubr.bf16.mxu0 %v1420
        %1827 = vmatmul.mubr.bf16.gmra.mrb[0].mxu0 %v1419
        %v1828 = vpop.f32.mrb[0].mxu0
        %v1829 = vadd.f32 %v1732, %v1828
        %v1830 = vpop.f32.mrb[0].mxu0
        %v1831 = vpop.f32.mrb[0].mxu0
        %v1832 = vadd.f32 %v1735, %v1831
        %v1833 = vpop.f32.mrb[0].mxu0
        %1834 = vmatprep.mubr.bf16.mxu0 %v1424
        %1835 = vmatmul.mubr.bf16.gmra.mrb[0].mxu0 %v1423
        %v1836 = vpop.f32.mrb[0].mxu0
        %v1837 = vadd.f32 %v1740, %v1836
        %v1838 = vpop.f32.mrb[0].mxu0
        %v1839 = vpop.f32.mrb[0].mxu0
        %v1840 = vadd.f32 %v1743, %v1839
        %v1841 = vpop.f32.mrb[0].mxu0
        %1842 = vdwg.mxu0
        %v1843 = vadd.f32 %v1217, %v1781
        %v1844 = vadd.f32 %v1218, %v1784
        %v1845 = vadd.f32 %v1219, %v1789
        %v1846 = vadd.f32 %v1220, %v1792
        %v1847 = vadd.f32 %v1221, %v1797
        %v1848 = vadd.f32 %v1222, %v1800
        %v1849 = vadd.f32 %v1223, %v1805
        %v1850 = vadd.f32 %v1224, %v1808
        %v1851 = vadd.f32 %v1225, %v1813
        %v1852 = vadd.f32 %v1226, %v1816
        %v1853 = vadd.f32 %v1227, %v1821
        %v1854 = vadd.f32 %v1228, %v1824
        %v1855 = vadd.f32 %v1229, %v1829
        %v1856 = vadd.f32 %v1230, %v1832
        %v1857 = vadd.f32 %v1231, %v1837
        %v1858 = vadd.f32 %v1232, %v1840
        %1859 = vst [vmem:[#allocation2] sm:$0xff] %v1843
        %1860 = vst [vmem:[#allocation2 + $0x8] sm:$0xff] %v1844
        %1861 = vst [vmem:[#allocation2 + $0x10] sm:$0xff] %v1845
        %1862 = vst [vmem:[#allocation2 + $0x18] sm:$0xff] %v1846
        %1863 = vst [vmem:[#allocation2 + $0x20] sm:$0xff] %v1847
        %1864 = vst [vmem:[#allocation2 + $0x28] sm:$0xff] %v1848
        %1865 = vst [vmem:[#allocation2 + $0x30] sm:$0xff] %v1849
        %1866 = vst [vmem:[#allocation2 + $0x38] sm:$0xff] %v1850
        %1867 = vst [vmem:[#allocation2 + $0x40] sm:$0xff] %v1851
        %1868 = vst [vmem:[#allocation2 + $0x48] sm:$0xff] %v1852
        %1869 = vst [vmem:[#allocation2 + $0x50] sm:$0xff] %v1853
        %1870 = vst [vmem:[#allocation2 + $0x58] sm:$0xff] %v1854
        %1871 = vst [vmem:[#allocation2 + $0x60] sm:$0xff] %v1855
        %1872 = vst [vmem:[#allocation2 + $0x68] sm:$0xff] %v1856
        %1873 = vst [vmem:[#allocation2 + $0x70] sm:$0xff] %v1857
        %1874 = vst [vmem:[#allocation2 + $0x78] sm:$0xff] %v1858
        %v1875 = vld [vmem:[#allocation3] sm:$0xff]
        %v1876 = vld [vmem:[#allocation3 + $0x8] sm:$0xff]
        %v1877 = vld [vmem:[#allocation3 + $0x10] sm:$0xff]
        %v1878 = vld [vmem:[#allocation3 + $0x18] sm:$0xff]
        %v1879 = vld [vmem:[#allocation3 + $0x20] sm:$0xff]
        %v1880 = vld [vmem:[#allocation3 + $0x28] sm:$0xff]
        %v1881 = vld [vmem:[#allocation3 + $0x30] sm:$0xff]
        %v1882 = vld [vmem:[#allocation3 + $0x38] sm:$0xff]
        %v1883 = vld [vmem:[#allocation3 + $0x40] sm:$0xff]
        %v1884 = vld [vmem:[#allocation3 + $0x48] sm:$0xff]
        %v1885 = vld [vmem:[#allocation3 + $0x50] sm:$0xff]
        %v1886 = vld [vmem:[#allocation3 + $0x58] sm:$0xff]
        %v1887 = vld [vmem:[#allocation3 + $0x60] sm:$0xff]
        %v1888 = vld [vmem:[#allocation3 + $0x68] sm:$0xff]
        %v1889 = vld [vmem:[#allocation3 + $0x70] sm:$0xff]
        %v1890 = vld [vmem:[#allocation3 + $0x78] sm:$0xff]
        %v1891 = vld [vmem:[%s1133] sm:$0xf]
        %v1892 = vld [vmem:[%s1133 + $0x4] sm:$0xf]
        %v1893 = vld [vmem:[%s1133 + $0x8] sm:$0xf]
        %v1894 = vld [vmem:[%s1133 + $0xc] sm:$0xf]
        %v1895 = vld [vmem:[%s1133 + $0x10] sm:$0xf]
        %v1896 = vld [vmem:[%s1133 + $0x14] sm:$0xf]
        %v1897 = vld [vmem:[%s1133 + $0x18] sm:$0xf]
        %v1898 = vld [vmem:[%s1133 + $0x1c] sm:$0xf]
        %v1899 = vld [vmem:[%s1133 + $0x20] sm:$0xf]
        %v1900 = vld [vmem:[%s1133 + $0x24] sm:$0xf]
        %v1901 = vld [vmem:[%s1133 + $0x28] sm:$0xf]
        %v1902 = vld [vmem:[%s1133 + $0x2c] sm:$0xf]
        %v1903 = vld [vmem:[%s1133 + $0x30] sm:$0xf]
        %v1904 = vld [vmem:[%s1133 + $0x34] sm:$0xf]
        %v1905 = vld [vmem:[%s1133 + $0x38] sm:$0xf]
        %v1906 = vld [vmem:[%s1133 + $0x3c] sm:$0xf]
        %v1907 = vld [vmem:[%s1133 + $0x40] sm:$0xf]
        %v1908 = vld [vmem:[%s1133 + $0x44] sm:$0xf]
        %v1909 = vld [vmem:[%s1133 + $0x48] sm:$0xf]
        %v1910 = vld [vmem:[%s1133 + $0x4c] sm:$0xf]
        %v1911 = vld [vmem:[%s1133 + $0x50] sm:$0xf]
        %v1912 = vld [vmem:[%s1133 + $0x54] sm:$0xf]
        %v1913 = vld [vmem:[%s1133 + $0x58] sm:$0xf]
        %v1914 = vld [vmem:[%s1133 + $0x5c] sm:$0xf]
        %v1915 = vld [vmem:[%s1133 + $0x60] sm:$0xf]
        %v1916 = vld [vmem:[%s1133 + $0x64] sm:$0xf]
        %v1917 = vld [vmem:[%s1133 + $0x68] sm:$0xf]
        %v1918 = vld [vmem:[%s1133 + $0x6c] sm:$0xf]
        %v1919 = vld [vmem:[%s1133 + $0x70] sm:$0xf]
        %v1920 = vld [vmem:[%s1133 + $0x74] sm:$0xf]
        %v1921 = vld [vmem:[%s1133 + $0x78] sm:$0xf]
        %v1922 = vld [vmem:[%s1133 + $0x7c] sm:$0xf]
        %v1923 = vld [vmem:[%s1133 + $0x80] sm:$0xf]
        %v1924 = vld [vmem:[%s1133 + $0x84] sm:$0xf]
        %v1925 = vld [vmem:[%s1133 + $0x88] sm:$0xf]
        %v1926 = vld [vmem:[%s1133 + $0x8c] sm:$0xf]
        %v1927 = vld [vmem:[%s1133 + $0x90] sm:$0xf]
        %v1928 = vld [vmem:[%s1133 + $0x94] sm:$0xf]
        %v1929 = vld [vmem:[%s1133 + $0x98] sm:$0xf]
        %v1930 = vld [vmem:[%s1133 + $0x9c] sm:$0xf]
        %v1931 = vld [vmem:[%s1133 + $0xa0] sm:$0xf]
        %v1932 = vld [vmem:[%s1133 + $0xa4] sm:$0xf]
        %v1933 = vld [vmem:[%s1133 + $0xa8] sm:$0xf]
        %v1934 = vld [vmem:[%s1133 + $0xac] sm:$0xf]
        %v1935 = vld [vmem:[%s1133 + $0xb0] sm:$0xf]
        %v1936 = vld [vmem:[%s1133 + $0xb4] sm:$0xf]
        %v1937 = vld [vmem:[%s1133 + $0xb8] sm:$0xf]
        %v1938 = vld [vmem:[%s1133 + $0xbc] sm:$0xf]
        %v1939 = vld [vmem:[%s1133 + $0xc0] sm:$0xf]
        %v1940 = vld [vmem:[%s1133 + $0xc4] sm:$0xf]
        %v1941 = vld [vmem:[%s1133 + $0xc8] sm:$0xf]
        %v1942 = vld [vmem:[%s1133 + $0xcc] sm:$0xf]
        %v1943 = vld [vmem:[%s1133 + $0xd0] sm:$0xf]
        %v1944 = vld [vmem:[%s1133 + $0xd4] sm:$0xf]
        %v1945 = vld [vmem:[%s1133 + $0xd8] sm:$0xf]
        %v1946 = vld [vmem:[%s1133 + $0xdc] sm:$0xf]
        %v1947 = vld [vmem:[%s1133 + $0xe0] sm:$0xf]
        %v1948 = vld [vmem:[%s1133 + $0xe4] sm:$0xf]
        %v1949 = vld [vmem:[%s1133 + $0xe8] sm:$0xf]
        %v1950 = vld [vmem:[%s1133 + $0xec] sm:$0xf]
        %v1951 = vld [vmem:[%s1133 + $0xf0] sm:$0xf]
        %v1952 = vld [vmem:[%s1133 + $0xf4] sm:$0xf]
        %v1953 = vld [vmem:[%s1133 + $0xf8] sm:$0xf]
        %v1954 = vld [vmem:[%s1133 + $0xfc] sm:$0xf]
        %v2019 = vunpack.c.l.b16 %v1891
        %v2020 = vunpack.c.l.b16 %v1892
        %v2021 = vunpack.c.l.b16 %v1893
        %v2022 = vunpack.c.l.b16 %v1894
        %v2023 = vunpack.c.l.b16 %v1895
        %v2024 = vunpack.c.l.b16 %v1896
        %v2025 = vunpack.c.l.b16 %v1897
        %v2026 = vunpack.c.l.b16 %v1898
        %v2027 = vunpack.c.l.b16 %v1899
        %v2028 = vunpack.c.l.b16 %v1900
        %v2029 = vunpack.c.l.b16 %v1901
        %v2030 = vunpack.c.l.b16 %v1902
        %v2031 = vunpack.c.l.b16 %v1903
        %v2032 = vunpack.c.l.b16 %v1904
        %v2033 = vunpack.c.l.b16 %v1905
        %v2034 = vunpack.c.l.b16 %v1906
        %v2035 = vunpack.c.l.b16 %v1907
        %v2036 = vunpack.c.l.b16 %v1908
        %v2037 = vunpack.c.l.b16 %v1909
        %v2038 = vunpack.c.l.b16 %v1910
        %v2039 = vunpack.c.l.b16 %v1911
        %v2040 = vunpack.c.l.b16 %v1912
        %v2041 = vunpack.c.l.b16 %v1913
        %v2042 = vunpack.c.l.b16 %v1914
        %v2043 = vunpack.c.l.b16 %v1915
        %v2044 = vunpack.c.l.b16 %v1916
        %v2045 = vunpack.c.l.b16 %v1917
        %v2046 = vunpack.c.l.b16 %v1918
        %v2047 = vunpack.c.l.b16 %v1919
        %v2048 = vunpack.c.l.b16 %v1920
        %v2049 = vunpack.c.l.b16 %v1921
        %v2050 = vunpack.c.l.b16 %v1922
        %v2051 = vunpack.c.l.b16 %v1923
        %v2052 = vunpack.c.l.b16 %v1924
        %v2053 = vunpack.c.l.b16 %v1925
        %v2054 = vunpack.c.l.b16 %v1926
        %v2055 = vunpack.c.l.b16 %v1927
        %v2056 = vunpack.c.l.b16 %v1928
        %v2057 = vunpack.c.l.b16 %v1929
        %v2058 = vunpack.c.l.b16 %v1930
        %v2059 = vunpack.c.l.b16 %v1931
        %v2060 = vunpack.c.l.b16 %v1932
        %v2061 = vunpack.c.l.b16 %v1933
        %v2062 = vunpack.c.l.b16 %v1934
        %v2063 = vunpack.c.l.b16 %v1935
        %v2064 = vunpack.c.l.b16 %v1936
        %v2065 = vunpack.c.l.b16 %v1937
        %v2066 = vunpack.c.l.b16 %v1938
        %v2067 = vunpack.c.l.b16 %v1939
        %v2068 = vunpack.c.l.b16 %v1940
        %v2069 = vunpack.c.l.b16 %v1941
        %v2070 = vunpack.c.l.b16 %v1942
        %v2071 = vunpack.c.l.b16 %v1943
        %v2072 = vunpack.c.l.b16 %v1944
        %v2073 = vunpack.c.l.b16 %v1945
        %v2074 = vunpack.c.l.b16 %v1946
        %v2075 = vunpack.c.l.b16 %v1947
        %v2076 = vunpack.c.l.b16 %v1948
        %v2077 = vunpack.c.l.b16 %v1949
        %v2078 = vunpack.c.l.b16 %v1950
        %v2079 = vunpack.c.l.b16 %v1951
        %v2080 = vunpack.c.l.b16 %v1952
        %v2081 = vunpack.c.l.b16 %v1953
        %v2082 = vunpack.c.l.b16 %v1954
        %v2083 = vpack.c.b16 %v2020, %v2019
        %v2084 = vpack.c.b16 %v2022, %v2021
        %v2085 = vpack.c.b16 %v2024, %v2023
        %v2086 = vpack.c.b16 %v2026, %v2025
        %v2087 = vpack.c.b16 %v2028, %v2027
        %v2088 = vpack.c.b16 %v2030, %v2029
        %v2089 = vpack.c.b16 %v2032, %v2031
        %v2090 = vpack.c.b16 %v2034, %v2033
        %v2091 = vpack.c.b16 %v2036, %v2035
        %v2092 = vpack.c.b16 %v2038, %v2037
        %v2093 = vpack.c.b16 %v2040, %v2039
        %v2094 = vpack.c.b16 %v2042, %v2041
        %v2095 = vpack.c.b16 %v2044, %v2043
        %v2096 = vpack.c.b16 %v2046, %v2045
        %v2097 = vpack.c.b16 %v2048, %v2047
        %v2098 = vpack.c.b16 %v2050, %v2049
        %v2099 = vpack.c.b16 %v2052, %v2051
        %v2100 = vpack.c.b16 %v2054, %v2053
        %v2101 = vpack.c.b16 %v2056, %v2055
        %v2102 = vpack.c.b16 %v2058, %v2057
        %v2103 = vpack.c.b16 %v2060, %v2059
        %v2104 = vpack.c.b16 %v2062, %v2061
        %v2105 = vpack.c.b16 %v2064, %v2063
        %v2106 = vpack.c.b16 %v2066, %v2065
        %v2107 = vpack.c.b16 %v2068, %v2067
        %v2108 = vpack.c.b16 %v2070, %v2069
        %v2109 = vpack.c.b16 %v2072, %v2071
        %v2110 = vpack.c.b16 %v2074, %v2073
        %v2111 = vpack.c.b16 %v2076, %v2075
        %v2112 = vpack.c.b16 %v2078, %v2077
        %v2113 = vpack.c.b16 %v2080, %v2079
        %v2114 = vpack.c.b16 %v2082, %v2081
        %2147 = vmatprep.subr.bf16.mxu0 0
        %2148 = vmatpush1.bf16.msra.mxu0 %v2083
        %2149 = vmatprep.subr.bf16.mxu0 0
        %2150 = vmatpush1.bf16.msra.mxu0 %v2084
        %2151 = vmatprep.subr.bf16.mxu0 0
        %2152 = vmatpush1.bf16.msra.mxu0 %v2085
        %2153 = vmatprep.subr.bf16.mxu0 0
        %2154 = vmatpush1.bf16.msra.mxu0 %v2086
        %2155 = vmatprep.subr.bf16.mxu0 0
        %2156 = vmatpush1.bf16.msra.mxu0 %v2087
        %2157 = vmatprep.subr.bf16.mxu0 0
        %2158 = vmatpush1.bf16.msra.mxu0 %v2088
        %2159 = vmatprep.subr.bf16.mxu0 0
        %2160 = vmatpush1.bf16.msra.mxu0 %v2089
        %2161 = vmatprep.subr.bf16.mxu0 0
        %2162 = vmatpush1.bf16.msra.mxu0 %v2090
        %2163 = vmatprep.subr.bf16.mxu0 0
        %2164 = vmatpush1.bf16.msra.mxu0 %v2091
        %2165 = vmatprep.subr.bf16.mxu0 0
        %2166 = vmatpush1.bf16.msra.mxu0 %v2092
        %2167 = vmatprep.subr.bf16.mxu0 0
        %2168 = vmatpush1.bf16.msra.mxu0 %v2093
        %2169 = vmatprep.subr.bf16.mxu0 0
        %2170 = vmatpush1.bf16.msra.mxu0 %v2094
        %2171 = vmatprep.subr.bf16.mxu0 0
        %2172 = vmatpush1.bf16.msra.mxu0 %v2095
        %2173 = vmatprep.subr.bf16.mxu0 0
        %2174 = vmatpush1.bf16.msra.mxu0 %v2096
        %2175 = vmatprep.subr.bf16.mxu0 0
        %2176 = vmatpush1.bf16.msra.mxu0 %v2097
        %2177 = vmatprep.subr.bf16.mxu0 0
        %2178 = vmatpush1.bf16.msra.mxu0 %v2098
        %2179 = vmatprep.mubr.bf16.mxu0 %v1394
        %2180 = vmatmul.mubr.bf16.gmra.mrb[0].mxu0 %v1393
        %v2181 = vpop.f32.mrb[0].mxu0
        %v2182 = vadd.f32 0.0, %v2181
        %v2183 = vpop.f32.mrb[0].mxu0
        %v2184 = vpop.f32.mrb[0].mxu0
        %v2185 = vadd.f32 0.0, %v2184
        %v2186 = vpop.f32.mrb[0].mxu0
        %2187 = vmatprep.mubr.bf16.mxu0 %v1398
        %2188 = vmatmul.mubr.bf16.gmra.mrb[0].mxu0 %v1397
        %v2189 = vpop.f32.mrb[0].mxu0
        %v2190 = vadd.f32 0.0, %v2189
        %v2191 = vpop.f32.mrb[0].mxu0
        %v2192 = vpop.f32.mrb[0].mxu0
        %v2193 = vadd.f32 0.0, %v2192
        %v2194 = vpop.f32.mrb[0].mxu0
        %2195 = vmatprep.mubr.bf16.mxu0 %v1402
        %2196 = vmatmul.mubr.bf16.gmra.mrb[0].mxu0 %v1401
        %v2197 = vpop.f32.mrb[0].mxu0
        %v2198 = vadd.f32 0.0, %v2197
        %v2199 = vpop.f32.mrb[0].mxu0
        %v2200 = vpop.f32.mrb[0].mxu0
        %v2201 = vadd.f32 0.0, %v2200
        %v2202 = vpop.f32.mrb[0].mxu0
        %2203 = vmatprep.mubr.bf16.mxu0 %v1406
        %2204 = vmatmul.mubr.bf16.gmra.mrb[0].mxu0 %v1405
        %v2205 = vpop.f32.mrb[0].mxu0
        %v2206 = vadd.f32 0.0, %v2205
        %v2207 = vpop.f32.mrb[0].mxu0
        %v2208 = vpop.f32.mrb[0].mxu0
        %v2209 = vadd.f32 0.0, %v2208
        %v2210 = vpop.f32.mrb[0].mxu0
        %2211 = vmatprep.mubr.bf16.mxu0 %v1410
        %2212 = vmatmul.mubr.bf16.gmra.mrb[0].mxu0 %v1409
        %v2213 = vpop.f32.mrb[0].mxu0
        %v2214 = vadd.f32 0.0, %v2213
        %v2215 = vpop.f32.mrb[0].mxu0
        %v2216 = vpop.f32.mrb[0].mxu0
        %v2217 = vadd.f32 0.0, %v2216
        %v2218 = vpop.f32.mrb[0].mxu0
        %2219 = vmatprep.mubr.bf16.mxu0 %v1414
        %2220 = vmatmul.mubr.bf16.gmra.mrb[0].mxu0 %v1413
        %v2221 = vpop.f32.mrb[0].mxu0
        %v2222 = vadd.f32 0.0, %v2221
        %v2223 = vpop.f32.mrb[0].mxu0
        %v2224 = vpop.f32.mrb[0].mxu0
        %v2225 = vadd.f32 0.0, %v2224
        %v2226 = vpop.f32.mrb[0].mxu0
        %2227 = vmatprep.mubr.bf16.mxu0 %v1418
        %2228 = vmatmul.mubr.bf16.gmra.mrb[0].mxu0 %v1417
        %v2229 = vpop.f32.mrb[0].mxu0
        %v2230 = vadd.f32 0.0, %v2229
        %v2231 = vpop.f32.mrb[0].mxu0
        %v2232 = vpop.f32.mrb[0].mxu0
        %v2233 = vadd.f32 0.0, %v2232
        %v2234 = vpop.f32.mrb[0].mxu0
        %2235 = vmatprep.mubr.bf16.mxu0 %v1422
        %2236 = vmatmul.mubr.bf16.gmra.mrb[0].mxu0 %v1421
        %v2237 = vpop.f32.mrb[0].mxu0
        %v2238 = vadd.f32 0.0, %v2237
        %v2239 = vpop.f32.mrb[0].mxu0
        %v2240 = vpop.f32.mrb[0].mxu0
        %v2241 = vadd.f32 0.0, %v2240
        %v2242 = vpop.f32.mrb[0].mxu0
        %2243 = vdwg.mxu0
        %2244 = vmatprep.subr.bf16.mxu0 0
        %2245 = vmatpush1.bf16.msra.mxu0 %v2099
        %2246 = vmatprep.subr.bf16.mxu0 0
        %2247 = vmatpush1.bf16.msra.mxu0 %v2100
        %2248 = vmatprep.subr.bf16.mxu0 0
        %2249 = vmatpush1.bf16.msra.mxu0 %v2101
        %2250 = vmatprep.subr.bf16.mxu0 0
        %2251 = vmatpush1.bf16.msra.mxu0 %v2102
        %2252 = vmatprep.subr.bf16.mxu0 0
        %2253 = vmatpush1.bf16.msra.mxu0 %v2103
        %2254 = vmatprep.subr.bf16.mxu0 0
        %2255 = vmatpush1.bf16.msra.mxu0 %v2104
        %2256 = vmatprep.subr.bf16.mxu0 0
        %2257 = vmatpush1.bf16.msra.mxu0 %v2105
        %2258 = vmatprep.subr.bf16.mxu0 0
        %2259 = vmatpush1.bf16.msra.mxu0 %v2106
        %2260 = vmatprep.subr.bf16.mxu0 0
        %2261 = vmatpush1.bf16.msra.mxu0 %v2107
        %2262 = vmatprep.subr.bf16.mxu0 0
        %2263 = vmatpush1.bf16.msra.mxu0 %v2108
        %2264 = vmatprep.subr.bf16.mxu0 0
        %2265 = vmatpush1.bf16.msra.mxu0 %v2109
        %2266 = vmatprep.subr.bf16.mxu0 0
        %2267 = vmatpush1.bf16.msra.mxu0 %v2110
        %2268 = vmatprep.subr.bf16.mxu0 0
        %2269 = vmatpush1.bf16.msra.mxu0 %v2111
        %2270 = vmatprep.subr.bf16.mxu0 0
        %2271 = vmatpush1.bf16.msra.mxu0 %v2112
        %2272 = vmatprep.subr.bf16.mxu0 0
        %2273 = vmatpush1.bf16.msra.mxu0 %v2113
        %2274 = vmatprep.subr.bf16.mxu0 0
        %2275 = vmatpush1.bf16.msra.mxu0 %v2114
        %2276 = vmatprep.mubr.bf16.mxu0 %v1396
        %2277 = vmatmul.mubr.bf16.gmra.mrb[0].mxu0 %v1395
        %v2278 = vpop.f32.mrb[0].mxu0
        %v2279 = vadd.f32 %v2182, %v2278
        %v2280 = vpop.f32.mrb[0].mxu0
        %v2281 = vpop.f32.mrb[0].mxu0
        %v2282 = vadd.f32 %v2185, %v2281
        %v2283 = vpop.f32.mrb[0].mxu0
        %2284 = vmatprep.mubr.bf16.mxu0 %v1400
        %2285 = vmatmul.mubr.bf16.gmra.mrb[0].mxu0 %v1399
        %v2286 = vpop.f32.mrb[0].mxu0
        %v2287 = vadd.f32 %v2190, %v2286
        %v2288 = vpop.f32.mrb[0].mxu0
        %v2289 = vpop.f32.mrb[0].mxu0
        %v2290 = vadd.f32 %v2193, %v2289
        %v2291 = vpop.f32.mrb[0].mxu0
        %2292 = vmatprep.mubr.bf16.mxu0 %v1404
        %2293 = vmatmul.mubr.bf16.gmra.mrb[0].mxu0 %v1403
        %v2294 = vpop.f32.mrb[0].mxu0
        %v2295 = vadd.f32 %v2198, %v2294
        %v2296 = vpop.f32.mrb[0].mxu0
        %v2297 = vpop.f32.mrb[0].mxu0
        %v2298 = vadd.f32 %v2201, %v2297
        %v2299 = vpop.f32.mrb[0].mxu0
        %2300 = vmatprep.mubr.bf16.mxu0 %v1408
        %2301 = vmatmul.mubr.bf16.gmra.mrb[0].mxu0 %v1407
        %v2302 = vpop.f32.mrb[0].mxu0
        %v2303 = vadd.f32 %v2206, %v2302
        %v2304 = vpop.f32.mrb[0].mxu0
        %v2305 = vpop.f32.mrb[0].mxu0
        %v2306 = vadd.f32 %v2209, %v2305
        %v2307 = vpop.f32.mrb[0].mxu0
        %2308 = vmatprep.mubr.bf16.mxu0 %v1412
        %2309 = vmatmul.mubr.bf16.gmra.mrb[0].mxu0 %v1411
        %v2310 = vpop.f32.mrb[0].mxu0
        %v2311 = vadd.f32 %v2214, %v2310
        %v2312 = vpop.f32.mrb[0].mxu0
        %v2313 = vpop.f32.mrb[0].mxu0
        %v2314 = vadd.f32 %v2217, %v2313
        %v2315 = vpop.f32.mrb[0].mxu0
        %2316 = vmatprep.mubr.bf16.mxu0 %v1416
        %2317 = vmatmul.mubr.bf16.gmra.mrb[0].mxu0 %v1415
        %v2318 = vpop.f32.mrb[0].mxu0
        %v2319 = vadd.f32 %v2222, %v2318
        %v2320 = vpop.f32.mrb[0].mxu0
        %v2321 = vpop.f32.mrb[0].mxu0
        %v2322 = vadd.f32 %v2225, %v2321
        %v2323 = vpop.f32.mrb[0].mxu0
        %2324 = vmatprep.mubr.bf16.mxu0 %v1420
        %2325 = vmatmul.mubr.bf16.gmra.mrb[0].mxu0 %v1419
        %v2326 = vpop.f32.mrb[0].mxu0
        %v2327 = vadd.f32 %v2230, %v2326
        %v2328 = vpop.f32.mrb[0].mxu0
        %v2329 = vpop.f32.mrb[0].mxu0
        %v2330 = vadd.f32 %v2233, %v2329
        %v2331 = vpop.f32.mrb[0].mxu0
        %2332 = vmatprep.mubr.bf16.mxu0 %v1424
        %2333 = vmatmul.mubr.bf16.gmra.mrb[0].mxu0 %v1423
        %v2334 = vpop.f32.mrb[0].mxu0
        %v2335 = vadd.f32 %v2238, %v2334
        %v2336 = vpop.f32.mrb[0].mxu0
        %v2337 = vpop.f32.mrb[0].mxu0
        %v2338 = vadd.f32 %v2241, %v2337
        %v2339 = vpop.f32.mrb[0].mxu0
        %2340 = vdwg.mxu0
        %v2341 = vadd.f32 %v1875, %v2279
        %v2342 = vadd.f32 %v1876, %v2282
        %v2343 = vadd.f32 %v1877, %v2287
        %v2344 = vadd.f32 %v1878, %v2290
        %v2345 = vadd.f32 %v1879, %v2295
        %v2346 = vadd.f32 %v1880, %v2298
        %v2347 = vadd.f32 %v1881, %v2303
        %v2348 = vadd.f32 %v1882, %v2306
        %v2349 = vadd.f32 %v1883, %v2311
        %v2350 = vadd.f32 %v1884, %v2314
        %v2351 = vadd.f32 %v1885, %v2319
        %v2352 = vadd.f32 %v1886, %v2322
        %v2353 = vadd.f32 %v1887, %v2327
        %v2354 = vadd.f32 %v1888, %v2330
        %v2355 = vadd.f32 %v1889, %v2335
        %v2356 = vadd.f32 %v1890, %v2338
        %vm2357 = vcmask 523264
        %2358 = vst.msk [vmem:[#allocation3] sm:$0xff] %vm2357, %v2341
        %2359 = vst.msk [vmem:[#allocation3 + $0x8] sm:$0xff] %vm2357, %v2342
        %2360 = vst.msk [vmem:[#allocation3 + $0x10] sm:$0xff] %vm2357, %v2343
        %2361 = vst.msk [vmem:[#allocation3 + $0x18] sm:$0xff] %vm2357, %v2344
        %2362 = vst.msk [vmem:[#allocation3 + $0x20] sm:$0xff] %vm2357, %v2345
        %2363 = vst.msk [vmem:[#allocation3 + $0x28] sm:$0xff] %vm2357, %v2346
        %2364 = vst.msk [vmem:[#allocation3 + $0x30] sm:$0xff] %vm2357, %v2347
        %2365 = vst.msk [vmem:[#allocation3 + $0x38] sm:$0xff] %vm2357, %v2348
        %2366 = vst.msk [vmem:[#allocation3 + $0x40] sm:$0xff] %vm2357, %v2349
        %2367 = vst.msk [vmem:[#allocation3 + $0x48] sm:$0xff] %vm2357, %v2350
        %2368 = vst.msk [vmem:[#allocation3 + $0x50] sm:$0xff] %vm2357, %v2351
        %2369 = vst.msk [vmem:[#allocation3 + $0x58] sm:$0xff] %vm2357, %v2352
        %2370 = vst.msk [vmem:[#allocation3 + $0x60] sm:$0xff] %vm2357, %v2353
        %2371 = vst.msk [vmem:[#allocation3 + $0x68] sm:$0xff] %vm2357, %v2354
        %2372 = vst.msk [vmem:[#allocation3 + $0x70] sm:$0xff] %vm2357, %v2355
        %2373 = vst.msk [vmem:[#allocation3 + $0x78] sm:$0xff] %vm2357, %v2356
        %p2374 = scmp.eq.s32.totalorder %s82, 3
        // Predicated region
        $region172: #{mes_head_forward.3} parent=162 // pred_check
          %p2375 = pneg %p2374
        $region173: #{mes_head_forward.3} parent=162 // pred_check_branch
          %2377 = sbr.rel (%p2375) target = $region175
        $region174: #{mes_head_forward.3} parent=162 // pred_region
          %v2378 = vld [vmem:[#allocation2] sm:$0xff]
          %v2379 = vld [vmem:[#allocation2 + $0x8] sm:$0xff]
          %v2380 = vld [vmem:[#allocation2 + $0x10] sm:$0xff]
          %v2381 = vld [vmem:[#allocation2 + $0x18] sm:$0xff]
          %v2382 = vld [vmem:[#allocation2 + $0x20] sm:$0xff]
          %v2383 = vld [vmem:[#allocation2 + $0x28] sm:$0xff]
          %v2384 = vld [vmem:[#allocation2 + $0x30] sm:$0xff]
          %v2385 = vld [vmem:[#allocation2 + $0x38] sm:$0xff]
          %v2386 = vld [vmem:[#allocation2 + $0x40] sm:$0xff]
          %v2387 = vld [vmem:[#allocation2 + $0x48] sm:$0xff]
          %v2388 = vld [vmem:[#allocation2 + $0x50] sm:$0xff]
          %v2389 = vld [vmem:[#allocation2 + $0x58] sm:$0xff]
          %v2390 = vld [vmem:[#allocation2 + $0x60] sm:$0xff]
          %v2391 = vld [vmem:[#allocation2 + $0x68] sm:$0xff]
          %v2392 = vld [vmem:[#allocation2 + $0x70] sm:$0xff]
          %v2393 = vld [vmem:[#allocation2 + $0x78] sm:$0xff]
          %v2394 = vld [vmem:[%s5] sm:$0x1]
          %v2396 = vlaneseq
          %v2397 = vshrl.u32 %v2396, 7
          %v2398 = vsub.s32 0, %v2397
          %v2399 = vrot.slane %v2394, %v2398
          %v2401 = vadd.f32 %v2378, %v2399
          %v2402 = vadd.f32 %v2379, %v2399
          %v2403 = vadd.f32 %v2380, %v2399
          %v2404 = vadd.f32 %v2381, %v2399
          %v2405 = vadd.f32 %v2382, %v2399
          %v2406 = vadd.f32 %v2383, %v2399
          %v2407 = vadd.f32 %v2384, %v2399
          %v2408 = vadd.f32 %v2385, %v2399
          %v2409 = vadd.f32 %v2386, %v2399
          %v2410 = vadd.f32 %v2387, %v2399
          %v2411 = vadd.f32 %v2388, %v2399
          %v2412 = vadd.f32 %v2389, %v2399
          %v2413 = vadd.f32 %v2390, %v2399
          %v2414 = vadd.f32 %v2391, %v2399
          %v2415 = vadd.f32 %v2392, %v2399
          %v2416 = vadd.f32 %v2393, %v2399
          %2417 = vst [vmem:[%s1139] sm:$0xff] %v2401
          %2418 = vst [vmem:[%s1139 + $0x8] sm:$0xff] %v2402
          %2419 = vst [vmem:[%s1139 + $0x10] sm:$0xff] %v2403
          %2420 = vst [vmem:[%s1139 + $0x18] sm:$0xff] %v2404
          %2421 = vst [vmem:[%s1139 + $0x20] sm:$0xff] %v2405
          %2422 = vst [vmem:[%s1139 + $0x28] sm:$0xff] %v2406
          %2423 = vst [vmem:[%s1139 + $0x30] sm:$0xff] %v2407
          %2424 = vst [vmem:[%s1139 + $0x38] sm:$0xff] %v2408
          %2425 = vst [vmem:[%s1139 + $0x40] sm:$0xff] %v2409
          %2426 = vst [vmem:[%s1139 + $0x48] sm:$0xff] %v2410
          %2427 = vst [vmem:[%s1139 + $0x50] sm:$0xff] %v2411
          %2428 = vst [vmem:[%s1139 + $0x58] sm:$0xff] %v2412
          %2429 = vst [vmem:[%s1139 + $0x60] sm:$0xff] %v2413
          %2430 = vst [vmem:[%s1139 + $0x68] sm:$0xff] %v2414
          %2431 = vst [vmem:[%s1139 + $0x70] sm:$0xff] %v2415
          %2432 = vst [vmem:[%s1139 + $0x78] sm:$0xff] %v2416
          %v2433 = vld [vmem:[#allocation3] sm:$0xff]
          %v2434 = vld [vmem:[#allocation3 + $0x8] sm:$0xff]
          %v2435 = vld [vmem:[#allocation3 + $0x10] sm:$0xff]
          %v2436 = vld [vmem:[#allocation3 + $0x18] sm:$0xff]
          %v2437 = vld [vmem:[#allocation3 + $0x20] sm:$0xff]
          %v2438 = vld [vmem:[#allocation3 + $0x28] sm:$0xff]
          %v2439 = vld [vmem:[#allocation3 + $0x30] sm:$0xff]
          %v2440 = vld [vmem:[#allocation3 + $0x38] sm:$0xff]
          %v2441 = vld [vmem:[#allocation3 + $0x40] sm:$0xff]
          %v2442 = vld [vmem:[#allocation3 + $0x48] sm:$0xff]
          %v2443 = vld [vmem:[#allocation3 + $0x50] sm:$0xff]
          %v2444 = vld [vmem:[#allocation3 + $0x58] sm:$0xff]
          %v2445 = vld [vmem:[#allocation3 + $0x60] sm:$0xff]
          %v2446 = vld [vmem:[#allocation3 + $0x68] sm:$0xff]
          %v2447 = vld [vmem:[#allocation3 + $0x70] sm:$0xff]
          %v2448 = vld [vmem:[#allocation3 + $0x78] sm:$0xff]
          %v2449 = vld [vmem:[%s9] sm:$0x1]
          %v2451 = vlaneseq
          %v2452 = vshrl.u32 %v2451, 7
          %v2453 = vsub.s32 0, %v2452
          %v2454 = vrot.slane %v2449, %v2453
          %v2456 = vadd.f32 %v2433, %v2454
          %v2457 = vadd.f32 %v2434, %v2454
          %v2458 = vadd.f32 %v2435, %v2454
          %v2459 = vadd.f32 %v2436, %v2454
          %v2460 = vadd.f32 %v2437, %v2454
          %v2461 = vadd.f32 %v2438, %v2454
          %v2462 = vadd.f32 %v2439, %v2454
          %v2463 = vadd.f32 %v2440, %v2454
          %v2464 = vadd.f32 %v2441, %v2454
          %v2465 = vadd.f32 %v2442, %v2454
          %v2466 = vadd.f32 %v2443, %v2454
          %v2467 = vadd.f32 %v2444, %v2454
          %v2468 = vadd.f32 %v2445, %v2454
          %v2469 = vadd.f32 %v2446, %v2454
          %v2470 = vadd.f32 %v2447, %v2454
          %v2471 = vadd.f32 %v2448, %v2454
          %v2472 = vmax.f32 %v2456, 0.0
          %v2473 = vmax.f32 %v2457, 0.0
          %v2474 = vmax.f32 %v2458, 0.0
          %v2475 = vmax.f32 %v2459, 0.0
          %v2476 = vmax.f32 %v2460, 0.0
          %v2477 = vmax.f32 %v2461, 0.0
          %v2478 = vmax.f32 %v2462, 0.0
          %v2479 = vmax.f32 %v2463, 0.0
          %v2480 = vmax.f32 %v2464, 0.0
          %v2481 = vmax.f32 %v2465, 0.0
          %v2482 = vmax.f32 %v2466, 0.0
          %v2483 = vmax.f32 %v2467, 0.0
          %v2484 = vmax.f32 %v2468, 0.0
          %v2485 = vmax.f32 %v2469, 0.0
          %v2486 = vmax.f32 %v2470, 0.0
          %v2487 = vmax.f32 %v2471, 0.0
          %v2488 = vld [vmem:[%s11] sm:$0xff]
          %v2489 = vld [vmem:[%s11 + $0x8] sm:$0xff]
          %v2490 = vld [vmem:[%s11 + $0x10] sm:$0xff]
          %v2491 = vld [vmem:[%s11 + $0x18] sm:$0xff]
          %v2492 = vld [vmem:[%s11 + $0x20] sm:$0xff]
          %v2493 = vld [vmem:[%s11 + $0x28] sm:$0xff]
          %v2494 = vld [vmem:[%s11 + $0x30] sm:$0xff]
          %v2495 = vld [vmem:[%s11 + $0x38] sm:$0xff]
          %v2496 = vld [vmem:[%s13] sm:$0x1]
          %v2498 = vlaneseq
          %v2499 = vshrl.u32 %v2498, 7
          %v2500 = vsub.s32 0, %v2499
          %v2501 = vrot.slane %v2496, %v2500
          %v2504 = vsel %vm2357, %v2472, 0
          %v2507 = vsel %vm2357, %v2473, 0
          %v2510 = vsel %vm2357, %v2474, 0
          %v2513 = vsel %vm2357, %v2475, 0
          %v2516 = vsel %vm2357, %v2476, 0
          %v2519 = vsel %vm2357, %v2477, 0
          %v2522 = vsel %vm2357, %v2478, 0
          %v2525 = vsel %vm2357, %v2479, 0
          %v2528 = vsel %vm2357, %v2480, 0
          %v2531 = vsel %vm2357, %v2481, 0
          %v2534 = vsel %vm2357, %v2482, 0
          %v2537 = vsel %vm2357, %v2483, 0
          %v2540 = vsel %vm2357, %v2484, 0
          %v2543 = vsel %vm2357, %v2485, 0
          %v2546 = vsel %vm2357, %v2486, 0
          %v2549 = vsel %vm2357, %v2487, 0
          %2551 = vmatprep.subr.mxu0 0.0
          %2552 = vmatpush1.msra.mxu0 %v2488
          %2553 = vmatprep.subr.mxu0 0.0
          %2554 = vmatpush1.msra.mxu0 %v2489
          %2555 = vmatprep.subr.mxu0 0.0
          %2556 = vmatpush1.msra.mxu0 %v2490
          %2557 = vmatprep.subr.mxu0 0.0
          %2558 = vmatpush1.msra.mxu0 %v2491
          %2559 = vmatprep.subr.mxu0 0.0
          %2560 = vmatpush1.msra.mxu0 %v2492
          %2561 = vmatprep.subr.mxu0 0.0
          %2562 = vmatpush1.msra.mxu0 %v2493
          %2563 = vmatprep.subr.mxu0 0.0
          %2564 = vmatpush1.msra.mxu0 %v2494
          %2565 = vmatprep.subr.mxu0 0.0
          %2566 = vmatpush1.msra.mxu0 %v2495
          %2567 = vmatprep.subr.mxu0 0.0
          %2568 = vmatpush1.msra.mxu0 0.0
          %2569 = vmatprep.subr.mxu0 0.0
          %2570 = vmatpush1.msra.mxu0 0.0
          %2571 = vmatprep.subr.mxu0 0.0
          %2572 = vmatpush1.msra.mxu0 0.0
          %2573 = vmatprep.subr.mxu0 0.0
          %2574 = vmatpush1.msra.mxu0 0.0
          %2575 = vmatprep.subr.mxu0 0.0
          %2576 = vmatpush1.msra.mxu0 0.0
          %2577 = vmatprep.subr.mxu0 0.0
          %2578 = vmatpush1.msra.mxu0 0.0
          %2579 = vmatprep.subr.mxu0 0.0
          %2580 = vmatpush1.msra.mxu0 0.0
          %2581 = vmatprep.subr.mxu0 0.0
          %2582 = vmatpush1.msra.mxu0 0.0
          %2583 = vmatprep.subr.mxu0 0.0
          %2584 = vmatpush1.msra.mxu0 0.0
          %2585 = vmatprep.subr.mxu0 0.0
          %2586 = vmatpush1.msra.mxu0 0.0
          %2587 = vmatprep.subr.mxu0 0.0
          %2588 = vmatpush1.msra.mxu0 0.0
          %2589 = vmatprep.subr.mxu0 0.0
          %2590 = vmatpush1.msra.mxu0 0.0
          %2591 = vmatprep.subr.mxu0 0.0
          %2592 = vmatpush1.msra.mxu0 0.0
          %2593 = vmatprep.subr.mxu0 0.0
          %2594 = vmatpush1.msra.mxu0 0.0
          %2595 = vmatprep.subr.mxu0 0.0
          %2596 = vmatpush1.msra.mxu0 0.0
          %2597 = vmatprep.subr.mxu0 0.0
          %2598 = vmatpush1.msra.mxu0 0.0
          %2599 = vmatprep.subr.mxu0 0.0
          %2600 = vmatpush1.msra.mxu0 0.0
          %2601 = vmatprep.subr.mxu0 0.0
          %2602 = vmatpush1.msra.mxu0 0.0
          %2603 = vmatprep.subr.mxu0 0.0
          %2604 = vmatpush1.msra.mxu0 0.0
          %2605 = vmatprep.subr.mxu0 0.0
          %2606 = vmatpush1.msra.mxu0 0.0
          %2607 = vmatprep.subr.mxu0 0.0
          %2608 = vmatpush1.msra.mxu0 0.0
          %2609 = vmatprep.subr.mxu0 0.0
          %2610 = vmatpush1.msra.mxu0 0.0
          %2611 = vmatprep.subr.mxu0 0.0
          %2612 = vmatpush1.msra.mxu0 0.0
          %2613 = vmatprep.subr.mxu0 0.0
          %2614 = vmatpush1.msra.mxu0 0.0
          %2615 = vmatprep.mubr.f32.mxu0 0.0
          %2616 = vmatmul.mubr.f32.gmra.mrb[0].mxu0 %v2504
          %v2617 = vpop.f32.mrb[0].mxu0
          %v2618 = vadd.f32 %v2501, %v2617
          %v2619 = vpop.f32.mrb[0].mxu0
          %2620 = vmatprep.mubr.f32.mxu0 0.0
          %2621 = vmatmul.mubr.f32.gmra.mrb[0].mxu0 %v2507
          %v2622 = vpop.f32.mrb[0].mxu0
          %v2623 = vadd.f32 %v2501, %v2622
          %v2624 = vpop.f32.mrb[0].mxu0
          %2625 = vmatprep.mubr.f32.mxu0 0.0
          %2626 = vmatmul.mubr.f32.gmra.mrb[0].mxu0 %v2510
          %v2627 = vpop.f32.mrb[0].mxu0
          %v2628 = vadd.f32 %v2501, %v2627
          %v2629 = vpop.f32.mrb[0].mxu0
          %2630 = vmatprep.mubr.f32.mxu0 0.0
          %2631 = vmatmul.mubr.f32.gmra.mrb[0].mxu0 %v2513
          %v2632 = vpop.f32.mrb[0].mxu0
          %v2633 = vadd.f32 %v2501, %v2632
          %v2634 = vpop.f32.mrb[0].mxu0
          %2635 = vmatprep.mubr.f32.mxu0 0.0
          %2636 = vmatmul.mubr.f32.gmra.mrb[0].mxu0 %v2516
          %v2637 = vpop.f32.mrb[0].mxu0
          %v2638 = vadd.f32 %v2501, %v2637
          %v2639 = vpop.f32.mrb[0].mxu0
          %2640 = vmatprep.mubr.f32.mxu0 0.0
          %2641 = vmatmul.mubr.f32.gmra.mrb[0].mxu0 %v2519
          %v2642 = vpop.f32.mrb[0].mxu0
          %v2643 = vadd.f32 %v2501, %v2642
          %v2644 = vpop.f32.mrb[0].mxu0
          %2645 = vmatprep.mubr.f32.mxu0 0.0
          %2646 = vmatmul.mubr.f32.gmra.mrb[0].mxu0 %v2522
          %v2647 = vpop.f32.mrb[0].mxu0
          %v2648 = vadd.f32 %v2501, %v2647
          %v2649 = vpop.f32.mrb[0].mxu0
          %2650 = vmatprep.mubr.f32.mxu0 0.0
          %2651 = vmatmul.mubr.f32.gmra.mrb[0].mxu0 %v2525
          %v2652 = vpop.f32.mrb[0].mxu0
          %v2653 = vadd.f32 %v2501, %v2652
          %v2654 = vpop.f32.mrb[0].mxu0
          %2655 = vmatprep.mubr.f32.mxu0 0.0
          %2656 = vmatmul.mubr.f32.gmra.mrb[0].mxu0 %v2528
          %v2657 = vpop.f32.mrb[0].mxu0
          %v2658 = vadd.f32 %v2501, %v2657
          %v2659 = vpop.f32.mrb[0].mxu0
          %2660 = vmatprep.mubr.f32.mxu0 0.0
          %2661 = vmatmul.mubr.f32.gmra.mrb[0].mxu0 %v2531
          %v2662 = vpop.f32.mrb[0].mxu0
          %v2663 = vadd.f32 %v2501, %v2662
          %v2664 = vpop.f32.mrb[0].mxu0
          %2665 = vmatprep.mubr.f32.mxu0 0.0
          %2666 = vmatmul.mubr.f32.gmra.mrb[0].mxu0 %v2534
          %v2667 = vpop.f32.mrb[0].mxu0
          %v2668 = vadd.f32 %v2501, %v2667
          %v2669 = vpop.f32.mrb[0].mxu0
          %2670 = vmatprep.mubr.f32.mxu0 0.0
          %2671 = vmatmul.mubr.f32.gmra.mrb[0].mxu0 %v2537
          %v2672 = vpop.f32.mrb[0].mxu0
          %v2673 = vadd.f32 %v2501, %v2672
          %v2674 = vpop.f32.mrb[0].mxu0
          %2675 = vmatprep.mubr.f32.mxu0 0.0
          %2676 = vmatmul.mubr.f32.gmra.mrb[0].mxu0 %v2540
          %v2677 = vpop.f32.mrb[0].mxu0
          %v2678 = vadd.f32 %v2501, %v2677
          %v2679 = vpop.f32.mrb[0].mxu0
          %2680 = vmatprep.mubr.f32.mxu0 0.0
          %2681 = vmatmul.mubr.f32.gmra.mrb[0].mxu0 %v2543
          %v2682 = vpop.f32.mrb[0].mxu0
          %v2683 = vadd.f32 %v2501, %v2682
          %v2684 = vpop.f32.mrb[0].mxu0
          %2685 = vmatprep.mubr.f32.mxu0 0.0
          %2686 = vmatmul.mubr.f32.gmra.mrb[0].mxu0 %v2546
          %v2687 = vpop.f32.mrb[0].mxu0
          %v2688 = vadd.f32 %v2501, %v2687
          %v2689 = vpop.f32.mrb[0].mxu0
          %2690 = vmatprep.mubr.f32.mxu0 0.0
          %2691 = vmatmul.mubr.f32.gmra.mrb[0].mxu0 %v2549
          %v2692 = vpop.f32.mrb[0].mxu0
          %v2693 = vadd.f32 %v2501, %v2692
          %v2694 = vpop.f32.mrb[0].mxu0
          %2695 = vdwg.mxu0
          %v2696 = vmax.f32 %v2618, 0.0
          %v2697 = vmax.f32 %v2623, 0.0
          %v2698 = vmax.f32 %v2628, 0.0
          %v2699 = vmax.f32 %v2633, 0.0
          %v2700 = vmax.f32 %v2638, 0.0
          %v2701 = vmax.f32 %v2643, 0.0
          %v2702 = vmax.f32 %v2648, 0.0
          %v2703 = vmax.f32 %v2653, 0.0
          %v2704 = vmax.f32 %v2658, 0.0
          %v2705 = vmax.f32 %v2663, 0.0
          %v2706 = vmax.f32 %v2668, 0.0
          %v2707 = vmax.f32 %v2673, 0.0
          %v2708 = vmax.f32 %v2678, 0.0
          %v2709 = vmax.f32 %v2683, 0.0
          %v2710 = vmax.f32 %v2688, 0.0
          %v2711 = vmax.f32 %v2693, 0.0
          %v2712 = vld [vmem:[%s15] sm:$0xff]
          %v2713 = vld [vmem:[%s15 + $0x8] sm:$0xff]
          %v2714 = vld [vmem:[%s15 + $0x10] sm:$0xff]
          %v2715 = vld [vmem:[%s15 + $0x18] sm:$0xff]
          %v2716 = vld [vmem:[%s15 + $0x20] sm:$0xff]
          %v2717 = vld [vmem:[%s15 + $0x28] sm:$0xff]
          %v2718 = vld [vmem:[%s15 + $0x30] sm:$0xff]
          %v2719 = vld [vmem:[%s15 + $0x38] sm:$0xff]
          %v2720 = vld [vmem:[%s17] sm:$0x1]
          %v2722 = vlaneseq
          %v2723 = vshrl.u32 %v2722, 7
          %v2724 = vsub.s32 0, %v2723
          %v2725 = vrot.slane %v2720, %v2724
          %v2728 = vsel %vm2357, %v2696, 0
          %v2731 = vsel %vm2357, %v2697, 0
          %v2734 = vsel %vm2357, %v2698, 0
          %v2737 = vsel %vm2357, %v2699, 0
          %v2740 = vsel %vm2357, %v2700, 0
          %v2743 = vsel %vm2357, %v2701, 0
          %v2746 = vsel %vm2357, %v2702, 0
          %v2749 = vsel %vm2357, %v2703, 0
          %v2752 = vsel %vm2357, %v2704, 0
          %v2755 = vsel %vm2357, %v2705, 0
          %v2758 = vsel %vm2357, %v2706, 0
          %v2761 = vsel %vm2357, %v2707, 0
          %v2764 = vsel %vm2357, %v2708, 0
          %v2767 = vsel %vm2357, %v2709, 0
          %v2770 = vsel %vm2357, %v2710, 0
          %v2773 = vsel %vm2357, %v2711, 0
          %2775 = vmatprep.subr.mxu0 0.0
          %2776 = vmatpush1.msra.mxu0 %v2712
          %2777 = vmatprep.subr.mxu0 0.0
          %2778 = vmatpush1.msra.mxu0 %v2713
          %2779 = vmatprep.subr.mxu0 0.0
          %2780 = vmatpush1.msra.mxu0 %v2714
          %2781 = vmatprep.subr.mxu0 0.0
          %2782 = vmatpush1.msra.mxu0 %v2715
          %2783 = vmatprep.subr.mxu0 0.0
          %2784 = vmatpush1.msra.mxu0 %v2716
          %2785 = vmatprep.subr.mxu0 0.0
          %2786 = vmatpush1.msra.mxu0 %v2717
          %2787 = vmatprep.subr.mxu0 0.0
          %2788 = vmatpush1.msra.mxu0 %v2718
          %2789 = vmatprep.subr.mxu0 0.0
          %2790 = vmatpush1.msra.mxu0 %v2719
          %2791 = vmatprep.subr.mxu0 0.0
          %2792 = vmatpush1.msra.mxu0 0.0
          %2793 = vmatprep.subr.mxu0 0.0
          %2794 = vmatpush1.msra.mxu0 0.0
          %2795 = vmatprep.subr.mxu0 0.0
          %2796 = vmatpush1.msra.mxu0 0.0
          %2797 = vmatprep.subr.mxu0 0.0
          %2798 = vmatpush1.msra.mxu0 0.0
          %2799 = vmatprep.subr.mxu0 0.0
          %2800 = vmatpush1.msra.mxu0 0.0
          %2801 = vmatprep.subr.mxu0 0.0
          %2802 = vmatpush1.msra.mxu0 0.0
          %2803 = vmatprep.subr.mxu0 0.0
          %2804 = vmatpush1.msra.mxu0 0.0
          %2805 = vmatprep.subr.mxu0 0.0
          %2806 = vmatpush1.msra.mxu0 0.0
          %2807 = vmatprep.subr.mxu0 0.0
          %2808 = vmatpush1.msra.mxu0 0.0
          %2809 = vmatprep.subr.mxu0 0.0
          %2810 = vmatpush1.msra.mxu0 0.0
          %2811 = vmatprep.subr.mxu0 0.0
          %2812 = vmatpush1.msra.mxu0 0.0
          %2813 = vmatprep.subr.mxu0 0.0
          %2814 = vmatpush1.msra.mxu0 0.0
          %2815 = vmatprep.subr.mxu0 0.0
          %2816 = vmatpush1.msra.mxu0 0.0
          %2817 = vmatprep.subr.mxu0 0.0
          %2818 = vmatpush1.msra.mxu0 0.0
          %2819 = vmatprep.subr.mxu0 0.0
          %2820 = vmatpush1.msra.mxu0 0.0
          %2821 = vmatprep.subr.mxu0 0.0
          %2822 = vmatpush1.msra.mxu0 0.0
          %2823 = vmatprep.subr.mxu0 0.0
          %2824 = vmatpush1.msra.mxu0 0.0
          %2825 = vmatprep.subr.mxu0 0.0
          %2826 = vmatpush1.msra.mxu0 0.0
          %2827 = vmatprep.subr.mxu0 0.0
          %2828 = vmatpush1.msra.mxu0 0.0
          %2829 = vmatprep.subr.mxu0 0.0
          %2830 = vmatpush1.msra.mxu0 0.0
          %2831 = vmatprep.subr.mxu0 0.0
          %2832 = vmatpush1.msra.mxu0 0.0
          %2833 = vmatprep.subr.mxu0 0.0
          %2834 = vmatpush1.msra.mxu0 0.0
          %2835 = vmatprep.subr.mxu0 0.0
          %2836 = vmatpush1.msra.mxu0 0.0
          %2837 = vmatprep.subr.mxu0 0.0
          %2838 = vmatpush1.msra.mxu0 0.0
          %2839 = vmatprep.mubr.f32.mxu0 0.0
          %2840 = vmatmul.mubr.f32.gmra.mrb[0].mxu0 %v2728
          %v2841 = vpop.f32.mrb[0].mxu0
          %v2842 = vadd.f32 %v2725, %v2841
          %v2843 = vpop.f32.mrb[0].mxu0
          %2844 = vmatprep.mubr.f32.mxu0 0.0
          %2845 = vmatmul.mubr.f32.gmra.mrb[0].mxu0 %v2731
          %v2846 = vpop.f32.mrb[0].mxu0
          %v2847 = vadd.f32 %v2725, %v2846
          %v2848 = vpop.f32.mrb[0].mxu0
          %2849 = vmatprep.mubr.f32.mxu0 0.0
          %2850 = vmatmul.mubr.f32.gmra.mrb[0].mxu0 %v2734
          %v2851 = vpop.f32.mrb[0].mxu0
          %v2852 = vadd.f32 %v2725, %v2851
          %v2853 = vpop.f32.mrb[0].mxu0
          %2854 = vmatprep.mubr.f32.mxu0 0.0
          %2855 = vmatmul.mubr.f32.gmra.mrb[0].mxu0 %v2737
          %v2856 = vpop.f32.mrb[0].mxu0
          %v2857 = vadd.f32 %v2725, %v2856
          %v2858 = vpop.f32.mrb[0].mxu0
          %2859 = vmatprep.mubr.f32.mxu0 0.0
          %2860 = vmatmul.mubr.f32.gmra.mrb[0].mxu0 %v2740
          %v2861 = vpop.f32.mrb[0].mxu0
          %v2862 = vadd.f32 %v2725, %v2861
          %v2863 = vpop.f32.mrb[0].mxu0
          %2864 = vmatprep.mubr.f32.mxu0 0.0
          %2865 = vmatmul.mubr.f32.gmra.mrb[0].mxu0 %v2743
          %v2866 = vpop.f32.mrb[0].mxu0
          %v2867 = vadd.f32 %v2725, %v2866
          %v2868 = vpop.f32.mrb[0].mxu0
          %2869 = vmatprep.mubr.f32.mxu0 0.0
          %2870 = vmatmul.mubr.f32.gmra.mrb[0].mxu0 %v2746
          %v2871 = vpop.f32.mrb[0].mxu0
          %v2872 = vadd.f32 %v2725, %v2871
          %v2873 = vpop.f32.mrb[0].mxu0
          %2874 = vmatprep.mubr.f32.mxu0 0.0
          %2875 = vmatmul.mubr.f32.gmra.mrb[0].mxu0 %v2749
          %v2876 = vpop.f32.mrb[0].mxu0
          %v2877 = vadd.f32 %v2725, %v2876
          %v2878 = vpop.f32.mrb[0].mxu0
          %2879 = vmatprep.mubr.f32.mxu0 0.0
          %2880 = vmatmul.mubr.f32.gmra.mrb[0].mxu0 %v2752
          %v2881 = vpop.f32.mrb[0].mxu0
          %v2882 = vadd.f32 %v2725, %v2881
          %v2883 = vpop.f32.mrb[0].mxu0
          %2884 = vmatprep.mubr.f32.mxu0 0.0
          %2885 = vmatmul.mubr.f32.gmra.mrb[0].mxu0 %v2755
          %v2886 = vpop.f32.mrb[0].mxu0
          %v2887 = vadd.f32 %v2725, %v2886
          %v2888 = vpop.f32.mrb[0].mxu0
          %2889 = vmatprep.mubr.f32.mxu0 0.0
          %2890 = vmatmul.mubr.f32.gmra.mrb[0].mxu0 %v2758
          %v2891 = vpop.f32.mrb[0].mxu0
          %v2892 = vadd.f32 %v2725, %v2891
          %v2893 = vpop.f32.mrb[0].mxu0
          %2894 = vmatprep.mubr.f32.mxu0 0.0
          %2895 = vmatmul.mubr.f32.gmra.mrb[0].mxu0 %v2761
          %v2896 = vpop.f32.mrb[0].mxu0
          %v2897 = vadd.f32 %v2725, %v2896
          %v2898 = vpop.f32.mrb[0].mxu0
          %2899 = vmatprep.mubr.f32.mxu0 0.0
          %2900 = vmatmul.mubr.f32.gmra.mrb[0].mxu0 %v2764
          %v2901 = vpop.f32.mrb[0].mxu0
          %v2902 = vadd.f32 %v2725, %v2901
          %v2903 = vpop.f32.mrb[0].mxu0
          %2904 = vmatprep.mubr.f32.mxu0 0.0
          %2905 = vmatmul.mubr.f32.gmra.mrb[0].mxu0 %v2767
          %v2906 = vpop.f32.mrb[0].mxu0
          %v2907 = vadd.f32 %v2725, %v2906
          %v2908 = vpop.f32.mrb[0].mxu0
          %2909 = vmatprep.mubr.f32.mxu0 0.0
          %2910 = vmatmul.mubr.f32.gmra.mrb[0].mxu0 %v2770
          %v2911 = vpop.f32.mrb[0].mxu0
          %v2912 = vadd.f32 %v2725, %v2911
          %v2913 = vpop.f32.mrb[0].mxu0
          %2914 = vmatprep.mubr.f32.mxu0 0.0
          %2915 = vmatmul.mubr.f32.gmra.mrb[0].mxu0 %v2773
          %v2916 = vpop.f32.mrb[0].mxu0
          %v2917 = vadd.f32 %v2725, %v2916
          %v2918 = vpop.f32.mrb[0].mxu0
          %2919 = vdwg.mxu0
          %v2920 = vld [vmem:[%s19] sm:$0xff]
          %v2921 = vld [vmem:[%s19 + $0x8] sm:$0xff]
          %v2922 = vld [vmem:[%s19 + $0x10] sm:$0xff]
          %v2923 = vld [vmem:[%s19 + $0x18] sm:$0xff]
          %v2924 = vld [vmem:[%s21] sm:$0x1]
          %v2926 = vlaneseq
          %v2927 = vshrl.u32 %v2926, 7
          %v2928 = vsub.s32 0, %v2927
          %v2929 = vrot.slane %v2924, %v2928
          %vm2931 = vcmask 261120
          %v2933 = vsel %vm2931, %v2842, 0
          %v2936 = vsel %vm2931, %v2847, 0
          %v2939 = vsel %vm2931, %v2852, 0
          %v2942 = vsel %vm2931, %v2857, 0
          %v2945 = vsel %vm2931, %v2862, 0
          %v2948 = vsel %vm2931, %v2867, 0
          %v2951 = vsel %vm2931, %v2872, 0
          %v2954 = vsel %vm2931, %v2877, 0
          %v2957 = vsel %vm2931, %v2882, 0
          %v2960 = vsel %vm2931, %v2887, 0
          %v2963 = vsel %vm2931, %v2892, 0
          %v2966 = vsel %vm2931, %v2897, 0
          %v2969 = vsel %vm2931, %v2902, 0
          %v2972 = vsel %vm2931, %v2907, 0
          %v2975 = vsel %vm2931, %v2912, 0
          %v2978 = vsel %vm2931, %v2917, 0
          %2980 = vmatprep.subr.mxu0 0.0
          %2981 = vmatpush1.msra.mxu0 %v2920
          %2982 = vmatprep.subr.mxu0 0.0
          %2983 = vmatpush1.msra.mxu0 %v2921
          %2984 = vmatprep.subr.mxu0 0.0
          %2985 = vmatpush1.msra.mxu0 %v2922
          %2986 = vmatprep.subr.mxu0 0.0
          %2987 = vmatpush1.msra.mxu0 %v2923
          %2988 = vmatprep.subr.mxu0 0.0
          %2989 = vmatpush1.msra.mxu0 0.0
          %2990 = vmatprep.subr.mxu0 0.0
          %2991 = vmatpush1.msra.mxu0 0.0
          %2992 = vmatprep.subr.mxu0 0.0
          %2993 = vmatpush1.msra.mxu0 0.0
          %2994 = vmatprep.subr.mxu0 0.0
          %2995 = vmatpush1.msra.mxu0 0.0
          %2996 = vmatprep.subr.mxu0 0.0
          %2997 = vmatpush1.msra.mxu0 0.0
          %2998 = vmatprep.subr.mxu0 0.0
          %2999 = vmatpush1.msra.mxu0 0.0
          %3000 = vmatprep.subr.mxu0 0.0
          %3001 = vmatpush1.msra.mxu0 0.0
          %3002 = vmatprep.subr.mxu0 0.0
          %3003 = vmatpush1.msra.mxu0 0.0
          %3004 = vmatprep.subr.mxu0 0.0
          %3005 = vmatpush1.msra.mxu0 0.0
          %3006 = vmatprep.subr.mxu0 0.0
          %3007 = vmatpush1.msra.mxu0 0.0
          %3008 = vmatprep.subr.mxu0 0.0
          %3009 = vmatpush1.msra.mxu0 0.0
          %3010 = vmatprep.subr.mxu0 0.0
          %3011 = vmatpush1.msra.mxu0 0.0
          %3012 = vmatprep.subr.mxu0 0.0
          %3013 = vmatpush1.msra.mxu0 0.0
          %3014 = vmatprep.subr.mxu0 0.0
          %3015 = vmatpush1.msra.mxu0 0.0
          %3016 = vmatprep.subr.mxu0 0.0
          %3017 = vmatpush1.msra.mxu0 0.0
          %3018 = vmatprep.subr.mxu0 0.0
          %3019 = vmatpush1.msra.mxu0 0.0
          %3020 = vmatprep.subr.mxu0 0.0
          %3021 = vmatpush1.msra.mxu0 0.0
          %3022 = vmatprep.subr.mxu0 0.0
          %3023 = vmatpush1.msra.mxu0 0.0
          %3024 = vmatprep.subr.mxu0 0.0
          %3025 = vmatpush1.msra.mxu0 0.0
          %3026 = vmatprep.subr.mxu0 0.0
          %3027 = vmatpush1.msra.mxu0 0.0
          %3028 = vmatprep.subr.mxu0 0.0
          %3029 = vmatpush1.msra.mxu0 0.0
          %3030 = vmatprep.subr.mxu0 0.0
          %3031 = vmatpush1.msra.mxu0 0.0
          %3032 = vmatprep.subr.mxu0 0.0
          %3033 = vmatpush1.msra.mxu0 0.0
          %3034 = vmatprep.subr.mxu0 0.0
          %3035 = vmatpush1.msra.mxu0 0.0
          %3036 = vmatprep.subr.mxu0 0.0
          %3037 = vmatpush1.msra.mxu0 0.0
          %3038 = vmatprep.subr.mxu0 0.0
          %3039 = vmatpush1.msra.mxu0 0.0
          %3040 = vmatprep.subr.mxu0 0.0
          %3041 = vmatpush1.msra.mxu0 0.0
          %3042 = vmatprep.subr.mxu0 0.0
          %3043 = vmatpush1.msra.mxu0 0.0
          %3044 = vmatprep.mubr.f32.mxu0 0.0
          %3045 = vmatmul.mubr.f32.gmra.mrb[0].mxu0 %v2933
          %v3046 = vpop.f32.mrb[0].mxu0
          %v3047 = vadd.f32 %v2929, %v3046
          %v3048 = vpop.f32.mrb[0].mxu0
          %3049 = vmatprep.mubr.f32.mxu0 0.0
          %3050 = vmatmul.mubr.f32.gmra.mrb[0].mxu0 %v2936
          %v3051 = vpop.f32.mrb[0].mxu0
          %v3052 = vadd.f32 %v2929, %v3051
          %v3053 = vpop.f32.mrb[0].mxu0
          %3054 = vmatprep.mubr.f32.mxu0 0.0
          %3055 = vmatmul.mubr.f32.gmra.mrb[0].mxu0 %v2939
          %v3056 = vpop.f32.mrb[0].mxu0
          %v3057 = vadd.f32 %v2929, %v3056
          %v3058 = vpop.f32.mrb[0].mxu0
          %3059 = vmatprep.mubr.f32.mxu0 0.0
          %3060 = vmatmul.mubr.f32.gmra.mrb[0].mxu0 %v2942
          %v3061 = vpop.f32.mrb[0].mxu0
          %v3062 = vadd.f32 %v2929, %v3061
          %v3063 = vpop.f32.mrb[0].mxu0
          %3064 = vmatprep.mubr.f32.mxu0 0.0
          %3065 = vmatmul.mubr.f32.gmra.mrb[0].mxu0 %v2945
          %v3066 = vpop.f32.mrb[0].mxu0
          %v3067 = vadd.f32 %v2929, %v3066
          %v3068 = vpop.f32.mrb[0].mxu0
          %3069 = vmatprep.mubr.f32.mxu0 0.0
          %3070 = vmatmul.mubr.f32.gmra.mrb[0].mxu0 %v2948
          %v3071 = vpop.f32.mrb[0].mxu0
          %v3072 = vadd.f32 %v2929, %v3071
          %v3073 = vpop.f32.mrb[0].mxu0
          %3074 = vmatprep.mubr.f32.mxu0 0.0
          %3075 = vmatmul.mubr.f32.gmra.mrb[0].mxu0 %v2951
          %v3076 = vpop.f32.mrb[0].mxu0
          %v3077 = vadd.f32 %v2929, %v3076
          %v3078 = vpop.f32.mrb[0].mxu0
          %3079 = vmatprep.mubr.f32.mxu0 0.0
          %3080 = vmatmul.mubr.f32.gmra.mrb[0].mxu0 %v2954
          %v3081 = vpop.f32.mrb[0].mxu0
          %v3082 = vadd.f32 %v2929, %v3081
          %v3083 = vpop.f32.mrb[0].mxu0
          %3084 = vmatprep.mubr.f32.mxu0 0.0
          %3085 = vmatmul.mubr.f32.gmra.mrb[0].mxu0 %v2957
          %v3086 = vpop.f32.mrb[0].mxu0
          %v3087 = vadd.f32 %v2929, %v3086
          %v3088 = vpop.f32.mrb[0].mxu0
          %3089 = vmatprep.mubr.f32.mxu0 0.0
          %3090 = vmatmul.mubr.f32.gmra.mrb[0].mxu0 %v2960
          %v3091 = vpop.f32.mrb[0].mxu0
          %v3092 = vadd.f32 %v2929, %v3091
          %v3093 = vpop.f32.mrb[0].mxu0
          %3094 = vmatprep.mubr.f32.mxu0 0.0
          %3095 = vmatmul.mubr.f32.gmra.mrb[0].mxu0 %v2963
          %v3096 = vpop.f32.mrb[0].mxu0
          %v3097 = vadd.f32 %v2929, %v3096
          %v3098 = vpop.f32.mrb[0].mxu0
          %3099 = vmatprep.mubr.f32.mxu0 0.0
          %3100 = vmatmul.mubr.f32.gmra.mrb[0].mxu0 %v2966
          %v3101 = vpop.f32.mrb[0].mxu0
          %v3102 = vadd.f32 %v2929, %v3101
          %v3103 = vpop.f32.mrb[0].mxu0
          %3104 = vmatprep.mubr.f32.mxu0 0.0
          %3105 = vmatmul.mubr.f32.gmra.mrb[0].mxu0 %v2969
          %v3106 = vpop.f32.mrb[0].mxu0
          %v3107 = vadd.f32 %v2929, %v3106
          %v3108 = vpop.f32.mrb[0].mxu0
          %3109 = vmatprep.mubr.f32.mxu0 0.0
          %3110 = vmatmul.mubr.f32.gmra.mrb[0].mxu0 %v2972
          %v3111 = vpop.f32.mrb[0].mxu0
          %v3112 = vadd.f32 %v2929, %v3111
          %v3113 = vpop.f32.mrb[0].mxu0
          %3114 = vmatprep.mubr.f32.mxu0 0.0
          %3115 = vmatmul.mubr.f32.gmra.mrb[0].mxu0 %v2975
          %v3116 = vpop.f32.mrb[0].mxu0
          %v3117 = vadd.f32 %v2929, %v3116
          %v3118 = vpop.f32.mrb[0].mxu0
          %3119 = vmatprep.mubr.f32.mxu0 0.0
          %3120 = vmatmul.mubr.f32.gmra.mrb[0].mxu0 %v2978
          %v3121 = vpop.f32.mrb[0].mxu0
          %v3122 = vadd.f32 %v2929, %v3121
          %v3123 = vpop.f32.mrb[0].mxu0
          %3124 = vdwg.mxu0
          %v3125 = vld [vmem:[%s27] sm:$0xff]
          %v3126 = vld [vmem:[%s27 + $0x8] sm:$0xff]
          %v3127 = vld [vmem:[%s27 + $0x10] sm:$0xff]
          %vm3128 = vcmask 130048
          %v3130 = vsel %vm3128, %v3047, 0
          %v3133 = vsel %vm3128, %v3052, 0
          %v3136 = vsel %vm3128, %v3057, 0
          %v3139 = vsel %vm3128, %v3062, 0
          %v3142 = vsel %vm3128, %v3067, 0
          %v3145 = vsel %vm3128, %v3072, 0
          %v3148 = vsel %vm3128, %v3077, 0
          %v3151 = vsel %vm3128, %v3082, 0
          %v3154 = vsel %vm3128, %v3087, 0
          %v3157 = vsel %vm3128, %v3092, 0
          %v3160 = vsel %vm3128, %v3097, 0
          %v3163 = vsel %vm3128, %v3102, 0
          %v3166 = vsel %vm3128, %v3107, 0
          %v3169 = vsel %vm3128, %v3112, 0
          %v3172 = vsel %vm3128, %v3117, 0
          %v3175 = vsel %vm3128, %v3122, 0
          %v3178 = vsel %vm3128, %v3125, 0
          %v3181 = vsel %vm3128, %v3126, 0
          %v3184 = vsel %vm3128, %v3127, 0
          %3186 = vmatprep.subr.mxu0 0.0
          %3187 = vmatpush1.xpose.msra.mxu0 %v3178
          %3188 = vmatprep.subr.mxu0 0.0
          %3189 = vmatpush1.xpose.msra.mxu0 %v3181
          %3190 = vmatprep.subr.mxu0 0.0
          %3191 = vmatpush1.xpose.msra.mxu0 %v3184
          %3192 = vmatprep.subr.mxu0 0.0
          %3193 = vmatpush1.xpose.msra.mxu0 0.0
          %3194 = vmatprep.subr.mxu0 0.0
          %3195 = vmatpush1.xpose.msra.mxu0 0.0
          %3196 = vmatprep.subr.mxu0 0.0
          %3197 = vmatpush1.xpose.msra.mxu0 0.0
          %3198 = vmatprep.subr.mxu0 0.0
          %3199 = vmatpush1.xpose.msra.mxu0 0.0
          %3200 = vmatprep.subr.mxu0 0.0
          %3201 = vmatpush1.xpose.msra.mxu0 0.0
          %3202 = vmatprep.subr.mxu0 0.0
          %3203 = vmatpush1.xpose.msra.mxu0 0.0
          %3204 = vmatprep.subr.mxu0 0.0
          %3205 = vmatpush1.xpose.msra.mxu0 0.0
          %3206 = vmatprep.subr.mxu0 0.0
          %3207 = vmatpush1.xpose.msra.mxu0 0.0
          %3208 = vmatprep.subr.mxu0 0.0
          %3209 = vmatpush1.xpose.msra.mxu0 0.0
          %3210 = vmatprep.subr.mxu0 0.0
          %3211 = vmatpush1.xpose.msra.mxu0 0.0
          %3212 = vmatprep.subr.mxu0 0.0
          %3213 = vmatpush1.xpose.msra.mxu0 0.0
          %3214 = vmatprep.subr.mxu0 0.0
          %3215 = vmatpush1.xpose.msra.mxu0 0.0
          %3216 = vmatprep.subr.mxu0 0.0
          %3217 = vmatpush1.xpose.msra.mxu0 0.0
          %3218 = vmatprep.subr.mxu0 0.0
          %3219 = vmatpush1.xpose.msra.mxu0 0.0
          %3220 = vmatprep.subr.mxu0 0.0
          %3221 = vmatpush1.xpose.msra.mxu0 0.0
          %3222 = vmatprep.subr.mxu0 0.0
          %3223 = vmatpush1.xpose.msra.mxu0 0.0
          %3224 = vmatprep.subr.mxu0 0.0
          %3225 = vmatpush1.xpose.msra.mxu0 0.0
          %3226 = vmatprep.subr.mxu0 0.0
          %3227 = vmatpush1.xpose.msra.mxu0 0.0
          %3228 = vmatprep.subr.mxu0 0.0
          %3229 = vmatpush1.xpose.msra.mxu0 0.0
          %3230 = vmatprep.subr.mxu0 0.0
          %3231 = vmatpush1.xpose.msra.mxu0 0.0
          %3232 = vmatprep.subr.mxu0 0.0
          %3233 = vmatpush1.xpose.msra.mxu0 0.0
          %3234 = vmatprep.subr.mxu0 0.0
          %3235 = vmatpush1.xpose.msra.mxu0 0.0
          %3236 = vmatprep.subr.mxu0 0.0
          %3237 = vmatpush1.xpose.msra.mxu0 0.0
          %3238 = vmatprep.subr.mxu0 0.0
          %3239 = vmatpush1.xpose.msra.mxu0 0.0
          %3240 = vmatprep.subr.mxu0 0.0
          %3241 = vmatpush1.xpose.msra.mxu0 0.0
          %3242 = vmatprep.subr.mxu0 0.0
          %3243 = vmatpush1.xpose.msra.mxu0 0.0
          %3244 = vmatprep.subr.mxu0 0.0
          %3245 = vmatpush1.xpose.msra.mxu0 0.0
          %3246 = vmatprep.subr.mxu0 0.0
          %3247 = vmatpush1.xpose.msra.mxu0 0.0
          %3248 = vmatprep.subr.mxu0 0.0
          %3249 = vmatpush1.xpose.msra.mxu0 0.0
          %3250 = vmatprep.mubr.f32.mxu0 0.0
          %3251 = vmatmul.mubr.f32.gmra.mrb[0].mxu0 %v3130
          %v3252 = vpop.f32.mrb[0].mxu0
          %v3253 = vadd.f32 0.0, %v3252
          %v3254 = vpop.f32.mrb[0].mxu0
          %3255 = vmatprep.mubr.f32.mxu0 0.0
          %3256 = vmatmul.mubr.f32.gmra.mrb[0].mxu0 %v3133
          %v3257 = vpop.f32.mrb[0].mxu0
          %v3258 = vadd.f32 0.0, %v3257
          %v3259 = vpop.f32.mrb[0].mxu0
          %3260 = vmatprep.mubr.f32.mxu0 0.0
          %3261 = vmatmul.mubr.f32.gmra.mrb[0].mxu0 %v3136
          %v3262 = vpop.f32.mrb[0].mxu0
          %v3263 = vadd.f32 0.0, %v3262
          %v3264 = vpop.f32.mrb[0].mxu0
          %3265 = vmatprep.mubr.f32.mxu0 0.0
          %3266 = vmatmul.mubr.f32.gmra.mrb[0].mxu0 %v3139
          %v3267 = vpop.f32.mrb[0].mxu0
          %v3268 = vadd.f32 0.0, %v3267
          %v3269 = vpop.f32.mrb[0].mxu0
          %3270 = vmatprep.mubr.f32.mxu0 0.0
          %3271 = vmatmul.mubr.f32.gmra.mrb[0].mxu0 %v3142
          %v3272 = vpop.f32.mrb[0].mxu0
          %v3273 = vadd.f32 0.0, %v3272
          %v3274 = vpop.f32.mrb[0].mxu0
          %3275 = vmatprep.mubr.f32.mxu0 0.0
          %3276 = vmatmul.mubr.f32.gmra.mrb[0].mxu0 %v3145
          %v3277 = vpop.f32.mrb[0].mxu0
          %v3278 = vadd.f32 0.0, %v3277
          %v3279 = vpop.f32.mrb[0].mxu0
          %3280 = vmatprep.mubr.f32.mxu0 0.0
          %3281 = vmatmul.mubr.f32.gmra.mrb[0].mxu0 %v3148
          %v3282 = vpop.f32.mrb[0].mxu0
          %v3283 = vadd.f32 0.0, %v3282
          %v3284 = vpop.f32.mrb[0].mxu0
          %3285 = vmatprep.mubr.f32.mxu0 0.0
          %3286 = vmatmul.mubr.f32.gmra.mrb[0].mxu0 %v3151
          %v3287 = vpop.f32.mrb[0].mxu0
          %v3288 = vadd.f32 0.0, %v3287
          %v3289 = vpop.f32.mrb[0].mxu0
          %3290 = vmatprep.mubr.f32.mxu0 0.0
          %3291 = vmatmul.mubr.f32.gmra.mrb[0].mxu0 %v3154
          %v3292 = vpop.f32.mrb[0].mxu0
          %v3293 = vadd.f32 0.0, %v3292
          %v3294 = vpop.f32.mrb[0].mxu0
          %3295 = vmatprep.mubr.f32.mxu0 0.0
          %3296 = vmatmul.mubr.f32.gmra.mrb[0].mxu0 %v3157
          %v3297 = vpop.f32.mrb[0].mxu0
          %v3298 = vadd.f32 0.0, %v3297
          %v3299 = vpop.f32.mrb[0].mxu0
          %3300 = vmatprep.mubr.f32.mxu0 0.0
          %3301 = vmatmul.mubr.f32.gmra.mrb[0].mxu0 %v3160
          %v3302 = vpop.f32.mrb[0].mxu0
          %v3303 = vadd.f32 0.0, %v3302
          %v3304 = vpop.f32.mrb[0].mxu0
          %3305 = vmatprep.mubr.f32.mxu0 0.0
          %3306 = vmatmul.mubr.f32.gmra.mrb[0].mxu0 %v3163
          %v3307 = vpop.f32.mrb[0].mxu0
          %v3308 = vadd.f32 0.0, %v3307
          %v3309 = vpop.f32.mrb[0].mxu0
          %3310 = vmatprep.mubr.f32.mxu0 0.0
          %3311 = vmatmul.mubr.f32.gmra.mrb[0].mxu0 %v3166
          %v3312 = vpop.f32.mrb[0].mxu0
          %v3313 = vadd.f32 0.0, %v3312
          %v3314 = vpop.f32.mrb[0].mxu0
          %3315 = vmatprep.mubr.f32.mxu0 0.0
          %3316 = vmatmul.mubr.f32.gmra.mrb[0].mxu0 %v3169
          %v3317 = vpop.f32.mrb[0].mxu0
          %v3318 = vadd.f32 0.0, %v3317
          %v3319 = vpop.f32.mrb[0].mxu0
          %3320 = vmatprep.mubr.f32.mxu0 0.0
          %3321 = vmatmul.mubr.f32.gmra.mrb[0].mxu0 %v3172
          %v3322 = vpop.f32.mrb[0].mxu0
          %v3323 = vadd.f32 0.0, %v3322
          %v3324 = vpop.f32.mrb[0].mxu0
          %3325 = vmatprep.mubr.f32.mxu0 0.0
          %3326 = vmatmul.mubr.f32.gmra.mrb[0].mxu0 %v3175
          %v3327 = vpop.f32.mrb[0].mxu0
          %v3328 = vadd.f32 0.0, %v3327
          %v3329 = vpop.f32.mrb[0].mxu0
          %3330 = vdwg.mxu0
          %v3331 = vld [vmem:[%s23] sm:$0xff]
          %v3332 = vld [vmem:[%s23 + $0x8] sm:$0xff]
          %v3333 = vld [vmem:[%s23 + $0x10] sm:$0xff]
          %v3334 = vld [vmem:[%s25] sm:$0x1]
          %v3336 = vlaneseq
          %v3337 = vshrl.u32 %v3336, 7
          %v3338 = vsub.s32 0, %v3337
          %v3339 = vrot.slane %v3334, %v3338
          %vm3341 = vcmask 195584
          %v3343 = vsel %vm3341, %v3253, 0
          %v3346 = vsel %vm3341, %v3258, 0
          %v3349 = vsel %vm3341, %v3263, 0
          %v3352 = vsel %vm3341, %v3268, 0
          %v3355 = vsel %vm3341, %v3273, 0
          %v3358 = vsel %vm3341, %v3278, 0
          %v3361 = vsel %vm3341, %v3283, 0
          %v3364 = vsel %vm3341, %v3288, 0
          %v3367 = vsel %vm3341, %v3293, 0
          %v3370 = vsel %vm3341, %v3298, 0
          %v3373 = vsel %vm3341, %v3303, 0
          %v3376 = vsel %vm3341, %v3308, 0
          %v3379 = vsel %vm3341, %v3313, 0
          %v3382 = vsel %vm3341, %v3318, 0
          %v3385 = vsel %vm3341, %v3323, 0
          %v3388 = vsel %vm3341, %v3328, 0
          %3390 = vmatprep.subr.mxu0 0.0
          %3391 = vmatpush1.msra.mxu0 %v3331
          %3392 = vmatprep.subr.mxu0 0.0
          %3393 = vmatpush1.msra.mxu0 %v3332
          %3394 = vmatprep.subr.mxu0 0.0
          %3395 = vmatpush1.msra.mxu0 %v3333
          %3396 = vmatprep.subr.mxu0 0.0
          %3397 = vmatpush1.msra.mxu0 0.0
          %3398 = vmatprep.subr.mxu0 0.0
          %3399 = vmatpush1.msra.mxu0 0.0
          %3400 = vmatprep.subr.mxu0 0.0
          %3401 = vmatpush1.msra.mxu0 0.0
          %3402 = vmatprep.subr.mxu0 0.0
          %3403 = vmatpush1.msra.mxu0 0.0
          %3404 = vmatprep.subr.mxu0 0.0
          %3405 = vmatpush1.msra.mxu0 0.0
          %3406 = vmatprep.subr.mxu0 0.0
          %3407 = vmatpush1.msra.mxu0 0.0
          %3408 = vmatprep.subr.mxu0 0.0
          %3409 = vmatpush1.msra.mxu0 0.0
          %3410 = vmatprep.subr.mxu0 0.0
          %3411 = vmatpush1.msra.mxu0 0.0
          %3412 = vmatprep.subr.mxu0 0.0
          %3413 = vmatpush1.msra.mxu0 0.0
          %3414 = vmatprep.subr.mxu0 0.0
          %3415 = vmatpush1.msra.mxu0 0.0
          %3416 = vmatprep.subr.mxu0 0.0
          %3417 = vmatpush1.msra.mxu0 0.0
          %3418 = vmatprep.subr.mxu0 0.0
          %3419 = vmatpush1.msra.mxu0 0.0
          %3420 = vmatprep.subr.mxu0 0.0
          %3421 = vmatpush1.msra.mxu0 0.0
          %3422 = vmatprep.subr.mxu0 0.0
          %3423 = vmatpush1.msra.mxu0 0.0
          %3424 = vmatprep.subr.mxu0 0.0
          %3425 = vmatpush1.msra.mxu0 0.0
          %3426 = vmatprep.subr.mxu0 0.0
          %3427 = vmatpush1.msra.mxu0 0.0
          %3428 = vmatprep.subr.mxu0 0.0
          %3429 = vmatpush1.msra.mxu0 0.0
          %3430 = vmatprep.subr.mxu0 0.0
          %3431 = vmatpush1.msra.mxu0 0.0
          %3432 = vmatprep.subr.mxu0 0.0
          %3433 = vmatpush1.msra.mxu0 0.0
          %3434 = vmatprep.subr.mxu0 0.0
          %3435 = vmatpush1.msra.mxu0 0.0
          %3436 = vmatprep.subr.mxu0 0.0
          %3437 = vmatpush1.msra.mxu0 0.0
          %3438 = vmatprep.subr.mxu0 0.0
          %3439 = vmatpush1.msra.mxu0 0.0
          %3440 = vmatprep.subr.mxu0 0.0
          %3441 = vmatpush1.msra.mxu0 0.0
          %3442 = vmatprep.subr.mxu0 0.0
          %3443 = vmatpush1.msra.mxu0 0.0
          %3444 = vmatprep.subr.mxu0 0.0
          %3445 = vmatpush1.msra.mxu0 0.0
          %3446 = vmatprep.subr.mxu0 0.0
          %3447 = vmatpush1.msra.mxu0 0.0
          %3448 = vmatprep.subr.mxu0 0.0
          %3449 = vmatpush1.msra.mxu0 0.0
          %3450 = vmatprep.subr.mxu0 0.0
          %3451 = vmatpush1.msra.mxu0 0.0
          %3452 = vmatprep.subr.mxu0 0.0
          %3453 = vmatpush1.msra.mxu0 0.0
          %3454 = vmatprep.mubr.f32.mxu0 0.0
          %3455 = vmatmul.mubr.f32.gmra.mrb[0].mxu0 %v3343
          %v3456 = vpop.f32.mrb[0].mxu0
          %v3457 = vadd.f32 %v3339, %v3456
          %v3458 = vpop.f32.mrb[0].mxu0
          %3459 = vmatprep.mubr.f32.mxu0 0.0
          %3460 = vmatmul.mubr.f32.gmra.mrb[0].mxu0 %v3346
          %v3461 = vpop.f32.mrb[0].mxu0
          %v3462 = vadd.f32 %v3339, %v3461
          %v3463 = vpop.f32.mrb[0].mxu0
          %3464 = vmatprep.mubr.f32.mxu0 0.0
          %3465 = vmatmul.mubr.f32.gmra.mrb[0].mxu0 %v3349
          %v3466 = vpop.f32.mrb[0].mxu0
          %v3467 = vadd.f32 %v3339, %v3466
          %v3468 = vpop.f32.mrb[0].mxu0
          %3469 = vmatprep.mubr.f32.mxu0 0.0
          %3470 = vmatmul.mubr.f32.gmra.mrb[0].mxu0 %v3352
          %v3471 = vpop.f32.mrb[0].mxu0
          %v3472 = vadd.f32 %v3339, %v3471
          %v3473 = vpop.f32.mrb[0].mxu0
          %3474 = vmatprep.mubr.f32.mxu0 0.0
          %3475 = vmatmul.mubr.f32.gmra.mrb[0].mxu0 %v3355
          %v3476 = vpop.f32.mrb[0].mxu0
          %v3477 = vadd.f32 %v3339, %v3476
          %v3478 = vpop.f32.mrb[0].mxu0
          %3479 = vmatprep.mubr.f32.mxu0 0.0
          %3480 = vmatmul.mubr.f32.gmra.mrb[0].mxu0 %v3358
          %v3481 = vpop.f32.mrb[0].mxu0
          %v3482 = vadd.f32 %v3339, %v3481
          %v3483 = vpop.f32.mrb[0].mxu0
          %3484 = vmatprep.mubr.f32.mxu0 0.0
          %3485 = vmatmul.mubr.f32.gmra.mrb[0].mxu0 %v3361
          %v3486 = vpop.f32.mrb[0].mxu0
          %v3487 = vadd.f32 %v3339, %v3486
          %v3488 = vpop.f32.mrb[0].mxu0
          %3489 = vmatprep.mubr.f32.mxu0 0.0
          %3490 = vmatmul.mubr.f32.gmra.mrb[0].mxu0 %v3364
          %v3491 = vpop.f32.mrb[0].mxu0
          %v3492 = vadd.f32 %v3339, %v3491
          %v3493 = vpop.f32.mrb[0].mxu0
          %3494 = vmatprep.mubr.f32.mxu0 0.0
          %3495 = vmatmul.mubr.f32.gmra.mrb[0].mxu0 %v3367
          %v3496 = vpop.f32.mrb[0].mxu0
          %v3497 = vadd.f32 %v3339, %v3496
          %v3498 = vpop.f32.mrb[0].mxu0
          %3499 = vmatprep.mubr.f32.mxu0 0.0
          %3500 = vmatmul.mubr.f32.gmra.mrb[0].mxu0 %v3370
          %v3501 = vpop.f32.mrb[0].mxu0
          %v3502 = vadd.f32 %v3339, %v3501
          %v3503 = vpop.f32.mrb[0].mxu0
          %3504 = vmatprep.mubr.f32.mxu0 0.0
          %3505 = vmatmul.mubr.f32.gmra.mrb[0].mxu0 %v3373
          %v3506 = vpop.f32.mrb[0].mxu0
          %v3507 = vadd.f32 %v3339, %v3506
          %v3508 = vpop.f32.mrb[0].mxu0
          %3509 = vmatprep.mubr.f32.mxu0 0.0
          %3510 = vmatmul.mubr.f32.gmra.mrb[0].mxu0 %v3376
          %v3511 = vpop.f32.mrb[0].mxu0
          %v3512 = vadd.f32 %v3339, %v3511
          %v3513 = vpop.f32.mrb[0].mxu0
          %3514 = vmatprep.mubr.f32.mxu0 0.0
          %3515 = vmatmul.mubr.f32.gmra.mrb[0].mxu0 %v3379
          %v3516 = vpop.f32.mrb[0].mxu0
          %v3517 = vadd.f32 %v3339, %v3516
          %v3518 = vpop.f32.mrb[0].mxu0
          %3519 = vmatprep.mubr.f32.mxu0 0.0
          %3520 = vmatmul.mubr.f32.gmra.mrb[0].mxu0 %v3382
          %v3521 = vpop.f32.mrb[0].mxu0
          %v3522 = vadd.f32 %v3339, %v3521
          %v3523 = vpop.f32.mrb[0].mxu0
          %3524 = vmatprep.mubr.f32.mxu0 0.0
          %3525 = vmatmul.mubr.f32.gmra.mrb[0].mxu0 %v3385
          %v3526 = vpop.f32.mrb[0].mxu0
          %v3527 = vadd.f32 %v3339, %v3526
          %v3528 = vpop.f32.mrb[0].mxu0
          %3529 = vmatprep.mubr.f32.mxu0 0.0
          %3530 = vmatmul.mubr.f32.gmra.mrb[0].mxu0 %v3388
          %v3531 = vpop.f32.mrb[0].mxu0
          %v3532 = vadd.f32 %v3339, %v3531
          %v3533 = vpop.f32.mrb[0].mxu0
          %3534 = vdwg.mxu0
          %v3535 = vld [vmem:[%s29] sm:$0xff]
          %v3536 = vld [vmem:[%s29 + $0x8] sm:$0xff]
          %v3537 = vld [vmem:[%s29 + $0x10] sm:$0xff]
          %v3538 = vld [vmem:[%s29 + $0x18] sm:$0xff]
          %v3539 = vld [vmem:[%s29 + $0x20] sm:$0xff]
          %v3540 = vld [vmem:[%s29 + $0x28] sm:$0xff]
          %v3541 = vld [vmem:[%s29 + $0x30] sm:$0xff]
          %v3542 = vld [vmem:[%s29 + $0x38] sm:$0xff]
          %v3543 = vld [vmem:[%s29 + $0x40] sm:$0xff]
          %v3544 = vld [vmem:[%s29 + $0x48] sm:$0xff]
          %v3545 = vld [vmem:[%s29 + $0x50] sm:$0xff]
          %v3546 = vld [vmem:[%s29 + $0x58] sm:$0xff]
          %v3547 = vld [vmem:[%s29 + $0x60] sm:$0xff]
          %v3548 = vld [vmem:[%s29 + $0x68] sm:$0xff]
          %v3549 = vld [vmem:[%s29 + $0x70] sm:$0xff]
          %v3550 = vld [vmem:[%s29 + $0x78] sm:$0xff]
          %v3552 = vsel %vm3128, %v3457, 0
          %v3555 = vsel %vm3128, %v3462, 0
          %v3558 = vsel %vm3128, %v3467, 0
          %v3561 = vsel %vm3128, %v3472, 0
          %v3564 = vsel %vm3128, %v3477, 0
          %v3567 = vsel %vm3128, %v3482, 0
          %v3570 = vsel %vm3128, %v3487, 0
          %v3573 = vsel %vm3128, %v3492, 0
          %v3576 = vsel %vm3128, %v3497, 0
          %v3579 = vsel %vm3128, %v3502, 0
          %v3582 = vsel %vm3128, %v3507, 0
          %v3585 = vsel %vm3128, %v3512, 0
          %v3588 = vsel %vm3128, %v3517, 0
          %v3591 = vsel %vm3128, %v3522, 0
          %v3594 = vsel %vm3128, %v3527, 0
          %v3597 = vsel %vm3128, %v3532, 0
          %v3600 = vsel %vm3128, %v3535, 0
          %v3603 = vsel %vm3128, %v3536, 0
          %v3606 = vsel %vm3128, %v3537, 0
          %v3609 = vsel %vm3128, %v3538, 0
          %v3612 = vsel %vm3128, %v3539, 0
          %v3615 = vsel %vm3128, %v3540, 0
          %v3618 = vsel %vm3128, %v3541, 0
          %v3621 = vsel %vm3128, %v3542, 0
          %v3624 = vsel %vm3128, %v3543, 0
          %v3627 = vsel %vm3128, %v3544, 0
          %v3630 = vsel %vm3128, %v3545, 0
          %v3633 = vsel %vm3128, %v3546, 0
          %v3636 = vsel %vm3128, %v3547, 0
          %v3639 = vsel %vm3128, %v3548, 0
          %v3642 = vsel %vm3128, %v3549, 0
          %v3645 = vsel %vm3128, %v3550, 0
          %3647 = vmatprep.subr.mxu0 0.0
          %3648 = vmatpush1.xpose.msra.mxu0 %v3600
          %3649 = vmatprep.subr.mxu0 0.0
          %3650 = vmatpush1.xpose.msra.mxu0 %v3603
          %3651 = vmatprep.subr.mxu0 0.0
          %3652 = vmatpush1.xpose.msra.mxu0 %v3606
          %3653 = vmatprep.subr.mxu0 0.0
          %3654 = vmatpush1.xpose.msra.mxu0 %v3609
          %3655 = vmatprep.subr.mxu0 0.0
          %3656 = vmatpush1.xpose.msra.mxu0 %v3612
          %3657 = vmatprep.subr.mxu0 0.0
          %3658 = vmatpush1.xpose.msra.mxu0 %v3615
          %3659 = vmatprep.subr.mxu0 0.0
          %3660 = vmatpush1.xpose.msra.mxu0 %v3618
          %3661 = vmatprep.subr.mxu0 0.0
          %3662 = vmatpush1.xpose.msra.mxu0 %v3621
          %3663 = vmatprep.subr.mxu0 0.0
          %3664 = vmatpush1.xpose.msra.mxu0 %v3624
          %3665 = vmatprep.subr.mxu0 0.0
          %3666 = vmatpush1.xpose.msra.mxu0 %v3627
          %3667 = vmatprep.subr.mxu0 0.0
          %3668 = vmatpush1.xpose.msra.mxu0 %v3630
          %3669 = vmatprep.subr.mxu0 0.0
          %3670 = vmatpush1.xpose.msra.mxu0 %v3633
          %3671 = vmatprep.subr.mxu0 0.0
          %3672 = vmatpush1.xpose.msra.mxu0 %v3636
          %3673 = vmatprep.subr.mxu0 0.0
          %3674 = vmatpush1.xpose.msra.mxu0 %v3639
          %3675 = vmatprep.subr.mxu0 0.0
          %3676 = vmatpush1.xpose.msra.mxu0 %v3642
          %3677 = vmatprep.subr.mxu0 0.0
          %3678 = vmatpush1.xpose.msra.mxu0 %v3645
          %3679 = vmatprep.subr.mxu0 0.0
          %3680 = vmatpush1.xpose.msra.mxu0 0.0
          %3681 = vmatprep.subr.mxu0 0.0
          %3682 = vmatpush1.xpose.msra.mxu0 0.0
          %3683 = vmatprep.subr.mxu0 0.0
          %3684 = vmatpush1.xpose.msra.mxu0 0.0
          %3685 = vmatprep.subr.mxu0 0.0
          %3686 = vmatpush1.xpose.msra.mxu0 0.0
          %3687 = vmatprep.subr.mxu0 0.0
          %3688 = vmatpush1.xpose.msra.mxu0 0.0
          %3689 = vmatprep.subr.mxu0 0.0
          %3690 = vmatpush1.xpose.msra.mxu0 0.0
          %3691 = vmatprep.subr.mxu0 0.0
          %3692 = vmatpush1.xpose.msra.mxu0 0.0
          %3693 = vmatprep.subr.mxu0 0.0
          %3694 = vmatpush1.xpose.msra.mxu0 0.0
          %3695 = vmatprep.subr.mxu0 0.0
          %3696 = vmatpush1.xpose.msra.mxu0 0.0
          %3697 = vmatprep.subr.mxu0 0.0
          %3698 = vmatpush1.xpose.msra.mxu0 0.0
          %3699 = vmatprep.subr.mxu0 0.0
          %3700 = vmatpush1.xpose.msra.mxu0 0.0
          %3701 = vmatprep.subr.mxu0 0.0
          %3702 = vmatpush1.xpose.msra.mxu0 0.0
          %3703 = vmatprep.subr.mxu0 0.0
          %3704 = vmatpush1.xpose.msra.mxu0 0.0
          %3705 = vmatprep.subr.mxu0 0.0
          %3706 = vmatpush1.xpose.msra.mxu0 0.0
          %3707 = vmatprep.subr.mxu0 0.0
          %3708 = vmatpush1.xpose.msra.mxu0 0.0
          %3709 = vmatprep.subr.mxu0 0.0
          %3710 = vmatpush1.xpose.msra.mxu0 0.0
          %3711 = vmatprep.mubr.f32.mxu0 0.0
          %3712 = vmatmul.mubr.f32.gmra.mrb[0].mxu0 %v3552
          %v3713 = vpop.f32.mrb[0].mxu0
          %v3714 = vadd.f32 0.0, %v3713
          %v3715 = vpop.f32.mrb[0].mxu0
          %3716 = vmatprep.mubr.f32.mxu0 0.0
          %3717 = vmatmul.mubr.f32.gmra.mrb[0].mxu0 %v3555
          %v3718 = vpop.f32.mrb[0].mxu0
          %v3719 = vadd.f32 0.0, %v3718
          %v3720 = vpop.f32.mrb[0].mxu0
          %3721 = vmatprep.mubr.f32.mxu0 0.0
          %3722 = vmatmul.mubr.f32.gmra.mrb[0].mxu0 %v3558
          %v3723 = vpop.f32.mrb[0].mxu0
          %v3724 = vadd.f32 0.0, %v3723
          %v3725 = vpop.f32.mrb[0].mxu0
          %3726 = vmatprep.mubr.f32.mxu0 0.0
          %3727 = vmatmul.mubr.f32.gmra.mrb[0].mxu0 %v3561
          %v3728 = vpop.f32.mrb[0].mxu0
          %v3729 = vadd.f32 0.0, %v3728
          %v3730 = vpop.f32.mrb[0].mxu0
          %3731 = vmatprep.mubr.f32.mxu0 0.0
          %3732 = vmatmul.mubr.f32.gmra.mrb[0].mxu0 %v3564
          %v3733 = vpop.f32.mrb[0].mxu0
          %v3734 = vadd.f32 0.0, %v3733
          %v3735 = vpop.f32.mrb[0].mxu0
          %3736 = vmatprep.mubr.f32.mxu0 0.0
          %3737 = vmatmul.mubr.f32.gmra.mrb[0].mxu0 %v3567
          %v3738 = vpop.f32.mrb[0].mxu0
          %v3739 = vadd.f32 0.0, %v3738
          %v3740 = vpop.f32.mrb[0].mxu0
          %3741 = vmatprep.mubr.f32.mxu0 0.0
          %3742 = vmatmul.mubr.f32.gmra.mrb[0].mxu0 %v3570
          %v3743 = vpop.f32.mrb[0].mxu0
          %v3744 = vadd.f32 0.0, %v3743
          %v3745 = vpop.f32.mrb[0].mxu0
          %3746 = vmatprep.mubr.f32.mxu0 0.0
          %3747 = vmatmul.mubr.f32.gmra.mrb[0].mxu0 %v3573
          %v3748 = vpop.f32.mrb[0].mxu0
          %v3749 = vadd.f32 0.0, %v3748
          %v3750 = vpop.f32.mrb[0].mxu0
          %3751 = vmatprep.mubr.f32.mxu0 0.0
          %3752 = vmatmul.mubr.f32.gmra.mrb[0].mxu0 %v3576
          %v3753 = vpop.f32.mrb[0].mxu0
          %v3754 = vadd.f32 0.0, %v3753
          %v3755 = vpop.f32.mrb[0].mxu0
          %3756 = vmatprep.mubr.f32.mxu0 0.0
          %3757 = vmatmul.mubr.f32.gmra.mrb[0].mxu0 %v3579
          %v3758 = vpop.f32.mrb[0].mxu0
          %v3759 = vadd.f32 0.0, %v3758
          %v3760 = vpop.f32.mrb[0].mxu0
          %3761 = vmatprep.mubr.f32.mxu0 0.0
          %3762 = vmatmul.mubr.f32.gmra.mrb[0].mxu0 %v3582
          %v3763 = vpop.f32.mrb[0].mxu0
          %v3764 = vadd.f32 0.0, %v3763
          %v3765 = vpop.f32.mrb[0].mxu0
          %3766 = vmatprep.mubr.f32.mxu0 0.0
          %3767 = vmatmul.mubr.f32.gmra.mrb[0].mxu0 %v3585
          %v3768 = vpop.f32.mrb[0].mxu0
          %v3769 = vadd.f32 0.0, %v3768
          %v3770 = vpop.f32.mrb[0].mxu0
          %3771 = vmatprep.mubr.f32.mxu0 0.0
          %3772 = vmatmul.mubr.f32.gmra.mrb[0].mxu0 %v3588
          %v3773 = vpop.f32.mrb[0].mxu0
          %v3774 = vadd.f32 0.0, %v3773
          %v3775 = vpop.f32.mrb[0].mxu0
          %3776 = vmatprep.mubr.f32.mxu0 0.0
          %3777 = vmatmul.mubr.f32.gmra.mrb[0].mxu0 %v3591
          %v3778 = vpop.f32.mrb[0].mxu0
          %v3779 = vadd.f32 0.0, %v3778
          %v3780 = vpop.f32.mrb[0].mxu0
          %3781 = vmatprep.mubr.f32.mxu0 0.0
          %3782 = vmatmul.mubr.f32.gmra.mrb[0].mxu0 %v3594
          %v3783 = vpop.f32.mrb[0].mxu0
          %v3784 = vadd.f32 0.0, %v3783
          %v3785 = vpop.f32.mrb[0].mxu0
          %3786 = vmatprep.mubr.f32.mxu0 0.0
          %3787 = vmatmul.mubr.f32.gmra.mrb[0].mxu0 %v3597
          %v3788 = vpop.f32.mrb[0].mxu0
          %v3789 = vadd.f32 0.0, %v3788
          %v3790 = vpop.f32.mrb[0].mxu0
          %3791 = vdwg.mxu0
          %v3792 = vld [vmem:[%s31] sm:$0xff]
          %v3793 = vld [vmem:[%s31 + $0x8] sm:$0xff]
          %v3794 = vld [vmem:[%s31 + $0x10] sm:$0xff]
          %v3795 = vld [vmem:[%s31 + $0x18] sm:$0xff]
          %v3796 = vld [vmem:[%s31 + $0x20] sm:$0xff]
          %v3797 = vld [vmem:[%s31 + $0x28] sm:$0xff]
          %v3798 = vld [vmem:[%s31 + $0x30] sm:$0xff]
          %v3799 = vld [vmem:[%s31 + $0x38] sm:$0xff]
          %v3800 = vld [vmem:[%s33] sm:$0x1]
          %v3802 = vlaneseq
          %v3803 = vshrl.u32 %v3802, 7
          %v3804 = vsub.s32 0, %v3803
          %v3805 = vrot.slane %v3800, %v3804
          %3807 = vmatprep.subr.mxu0 0.0
          %3808 = vmatpush1.msra.mxu0 %v3792
          %3809 = vmatprep.subr.mxu0 0.0
          %3810 = vmatpush1.msra.mxu0 %v3793
          %3811 = vmatprep.subr.mxu0 0.0
          %3812 = vmatpush1.msra.mxu0 %v3794
          %3813 = vmatprep.subr.mxu0 0.0
          %3814 = vmatpush1.msra.mxu0 %v3795
          %3815 = vmatprep.subr.mxu0 0.0
          %3816 = vmatpush1.msra.mxu0 %v3796
          %3817 = vmatprep.subr.mxu0 0.0
          %3818 = vmatpush1.msra.mxu0 %v3797
          %3819 = vmatprep.subr.mxu0 0.0
          %3820 = vmatpush1.msra.mxu0 %v3798
          %3821 = vmatprep.subr.mxu0 0.0
          %3822 = vmatpush1.msra.mxu0 %v3799
          %3823 = vmatprep.subr.mxu0 0.0
          %3824 = vmatpush1.msra.mxu0 0.0
          %3825 = vmatprep.subr.mxu0 0.0
          %3826 = vmatpush1.msra.mxu0 0.0
          %3827 = vmatprep.subr.mxu0 0.0
          %3828 = vmatpush1.msra.mxu0 0.0
          %3829 = vmatprep.subr.mxu0 0.0
          %3830 = vmatpush1.msra.mxu0 0.0
          %3831 = vmatprep.subr.mxu0 0.0
          %3832 = vmatpush1.msra.mxu0 0.0
          %3833 = vmatprep.subr.mxu0 0.0
          %3834 = vmatpush1.msra.mxu0 0.0
          %3835 = vmatprep.subr.mxu0 0.0
          %3836 = vmatpush1.msra.mxu0 0.0
          %3837 = vmatprep.subr.mxu0 0.0
          %3838 = vmatpush1.msra.mxu0 0.0
          %3839 = vmatprep.subr.mxu0 0.0
          %3840 = vmatpush1.msra.mxu0 0.0
          %3841 = vmatprep.subr.mxu0 0.0
          %3842 = vmatpush1.msra.mxu0 0.0
          %3843 = vmatprep.subr.mxu0 0.0
          %3844 = vmatpush1.msra.mxu0 0.0
          %3845 = vmatprep.subr.mxu0 0.0
          %3846 = vmatpush1.msra.mxu0 0.0
          %3847 = vmatprep.subr.mxu0 0.0
          %3848 = vmatpush1.msra.mxu0 0.0
          %3849 = vmatprep.subr.mxu0 0.0
          %3850 = vmatpush1.msra.mxu0 0.0
          %3851 = vmatprep.subr.mxu0 0.0
          %3852 = vmatpush1.msra.mxu0 0.0
          %3853 = vmatprep.subr.mxu0 0.0
          %3854 = vmatpush1.msra.mxu0 0.0
          %3855 = vmatprep.subr.mxu0 0.0
          %3856 = vmatpush1.msra.mxu0 0.0
          %3857 = vmatprep.subr.mxu0 0.0
          %3858 = vmatpush1.msra.mxu0 0.0
          %3859 = vmatprep.subr.mxu0 0.0
          %3860 = vmatpush1.msra.mxu0 0.0
          %3861 = vmatprep.subr.mxu0 0.0
          %3862 = vmatpush1.msra.mxu0 0.0
          %3863 = vmatprep.subr.mxu0 0.0
          %3864 = vmatpush1.msra.mxu0 0.0
          %3865 = vmatprep.subr.mxu0 0.0
          %3866 = vmatpush1.msra.mxu0 0.0
          %3867 = vmatprep.subr.mxu0 0.0
          %3868 = vmatpush1.msra.mxu0 0.0
          %3869 = vmatprep.subr.mxu0 0.0
          %3870 = vmatpush1.msra.mxu0 0.0
          %3871 = vmatprep.mubr.f32.mxu0 0.0
          %3872 = vmatmul.mubr.f32.gmra.mrb[0].mxu0 %v2728
          %v3873 = vpop.f32.mrb[0].mxu0
          %v3874 = vadd.f32 %v3805, %v3873
          %v3875 = vpop.f32.mrb[0].mxu0
          %3876 = vmatprep.mubr.f32.mxu0 0.0
          %3877 = vmatmul.mubr.f32.gmra.mrb[0].mxu0 %v2731
          %v3878 = vpop.f32.mrb[0].mxu0
          %v3879 = vadd.f32 %v3805, %v3878
          %v3880 = vpop.f32.mrb[0].mxu0
          %3881 = vmatprep.mubr.f32.mxu0 0.0
          %3882 = vmatmul.mubr.f32.gmra.mrb[0].mxu0 %v2734
          %v3883 = vpop.f32.mrb[0].mxu0
          %v3884 = vadd.f32 %v3805, %v3883
          %v3885 = vpop.f32.mrb[0].mxu0
          %3886 = vmatprep.mubr.f32.mxu0 0.0
          %3887 = vmatmul.mubr.f32.gmra.mrb[0].mxu0 %v2737
          %v3888 = vpop.f32.mrb[0].mxu0
          %v3889 = vadd.f32 %v3805, %v3888
          %v3890 = vpop.f32.mrb[0].mxu0
          %3891 = vmatprep.mubr.f32.mxu0 0.0
          %3892 = vmatmul.mubr.f32.gmra.mrb[0].mxu0 %v2740
          %v3893 = vpop.f32.mrb[0].mxu0
          %v3894 = vadd.f32 %v3805, %v3893
          %v3895 = vpop.f32.mrb[0].mxu0
          %3896 = vmatprep.mubr.f32.mxu0 0.0
          %3897 = vmatmul.mubr.f32.gmra.mrb[0].mxu0 %v2743
          %v3898 = vpop.f32.mrb[0].mxu0
          %v3899 = vadd.f32 %v3805, %v3898
          %v3900 = vpop.f32.mrb[0].mxu0
          %3901 = vmatprep.mubr.f32.mxu0 0.0
          %3902 = vmatmul.mubr.f32.gmra.mrb[0].mxu0 %v2746
          %v3903 = vpop.f32.mrb[0].mxu0
          %v3904 = vadd.f32 %v3805, %v3903
          %v3905 = vpop.f32.mrb[0].mxu0
          %3906 = vmatprep.mubr.f32.mxu0 0.0
          %3907 = vmatmul.mubr.f32.gmra.mrb[0].mxu0 %v2749
          %v3908 = vpop.f32.mrb[0].mxu0
          %v3909 = vadd.f32 %v3805, %v3908
          %v3910 = vpop.f32.mrb[0].mxu0
          %3911 = vmatprep.mubr.f32.mxu0 0.0
          %3912 = vmatmul.mubr.f32.gmra.mrb[0].mxu0 %v2752
          %v3913 = vpop.f32.mrb[0].mxu0
          %v3914 = vadd.f32 %v3805, %v3913
          %v3915 = vpop.f32.mrb[0].mxu0
          %3916 = vmatprep.mubr.f32.mxu0 0.0
          %3917 = vmatmul.mubr.f32.gmra.mrb[0].mxu0 %v2755
          %v3918 = vpop.f32.mrb[0].mxu0
          %v3919 = vadd.f32 %v3805, %v3918
          %v3920 = vpop.f32.mrb[0].mxu0
          %3921 = vmatprep.mubr.f32.mxu0 0.0
          %3922 = vmatmul.mubr.f32.gmra.mrb[0].mxu0 %v2758
          %v3923 = vpop.f32.mrb[0].mxu0
          %v3924 = vadd.f32 %v3805, %v3923
          %v3925 = vpop.f32.mrb[0].mxu0
          %3926 = vmatprep.mubr.f32.mxu0 0.0
          %3927 = vmatmul.mubr.f32.gmra.mrb[0].mxu0 %v2761
          %v3928 = vpop.f32.mrb[0].mxu0
          %v3929 = vadd.f32 %v3805, %v3928
          %v3930 = vpop.f32.mrb[0].mxu0
          %3931 = vmatprep.mubr.f32.mxu0 0.0
          %3932 = vmatmul.mubr.f32.gmra.mrb[0].mxu0 %v2764
          %v3933 = vpop.f32.mrb[0].mxu0
          %v3934 = vadd.f32 %v3805, %v3933
          %v3935 = vpop.f32.mrb[0].mxu0
          %3936 = vmatprep.mubr.f32.mxu0 0.0
          %3937 = vmatmul.mubr.f32.gmra.mrb[0].mxu0 %v2767
          %v3938 = vpop.f32.mrb[0].mxu0
          %v3939 = vadd.f32 %v3805, %v3938
          %v3940 = vpop.f32.mrb[0].mxu0
          %3941 = vmatprep.mubr.f32.mxu0 0.0
          %3942 = vmatmul.mubr.f32.gmra.mrb[0].mxu0 %v2770
          %v3943 = vpop.f32.mrb[0].mxu0
          %v3944 = vadd.f32 %v3805, %v3943
          %v3945 = vpop.f32.mrb[0].mxu0
          %3946 = vmatprep.mubr.f32.mxu0 0.0
          %3947 = vmatmul.mubr.f32.gmra.mrb[0].mxu0 %v2773
          %v3948 = vpop.f32.mrb[0].mxu0
          %v3949 = vadd.f32 %v3805, %v3948
          %v3950 = vpop.f32.mrb[0].mxu0
          %3951 = vdwg.mxu0
          %v3952 = vld [vmem:[%s35] sm:$0xff]
          %v3953 = vld [vmem:[%s35 + $0x8] sm:$0xff]
          %v3954 = vld [vmem:[%s35 + $0x10] sm:$0xff]
          %v3955 = vld [vmem:[%s35 + $0x18] sm:$0xff]
          %v3956 = vld [vmem:[%s35 + $0x20] sm:$0xff]
          %v3957 = vld [vmem:[%s35 + $0x28] sm:$0xff]
          %v3958 = vld [vmem:[%s35 + $0x30] sm:$0xff]
          %v3959 = vld [vmem:[%s35 + $0x38] sm:$0xff]
          %v3960 = vld [vmem:[%s37] sm:$0x1]
          %v3962 = vlaneseq
          %v3963 = vshrl.u32 %v3962, 7
          %v3964 = vsub.s32 0, %v3963
          %v3965 = vrot.slane %v3960, %v3964
          %v3968 = vsel %vm2357, %v3874, 0
          %v3971 = vsel %vm2357, %v3879, 0
          %v3974 = vsel %vm2357, %v3884, 0
          %v3977 = vsel %vm2357, %v3889, 0
          %v3980 = vsel %vm2357, %v3894, 0
          %v3983 = vsel %vm2357, %v3899, 0
          %v3986 = vsel %vm2357, %v3904, 0
          %v3989 = vsel %vm2357, %v3909, 0
          %v3992 = vsel %vm2357, %v3914, 0
          %v3995 = vsel %vm2357, %v3919, 0
          %v3998 = vsel %vm2357, %v3924, 0
          %v4001 = vsel %vm2357, %v3929, 0
          %v4004 = vsel %vm2357, %v3934, 0
          %v4007 = vsel %vm2357, %v3939, 0
          %v4010 = vsel %vm2357, %v3944, 0
          %v4013 = vsel %vm2357, %v3949, 0
          %4015 = vmatprep.subr.mxu0 0.0
          %4016 = vmatpush1.msra.mxu0 %v3952
          %4017 = vmatprep.subr.mxu0 0.0
          %4018 = vmatpush1.msra.mxu0 %v3953
          %4019 = vmatprep.subr.mxu0 0.0
          %4020 = vmatpush1.msra.mxu0 %v3954
          %4021 = vmatprep.subr.mxu0 0.0
          %4022 = vmatpush1.msra.mxu0 %v3955
          %4023 = vmatprep.subr.mxu0 0.0
          %4024 = vmatpush1.msra.mxu0 %v3956
          %4025 = vmatprep.subr.mxu0 0.0
          %4026 = vmatpush1.msra.mxu0 %v3957
          %4027 = vmatprep.subr.mxu0 0.0
          %4028 = vmatpush1.msra.mxu0 %v3958
          %4029 = vmatprep.subr.mxu0 0.0
          %4030 = vmatpush1.msra.mxu0 %v3959
          %4031 = vmatprep.subr.mxu0 0.0
          %4032 = vmatpush1.msra.mxu0 0.0
          %4033 = vmatprep.subr.mxu0 0.0
          %4034 = vmatpush1.msra.mxu0 0.0
          %4035 = vmatprep.subr.mxu0 0.0
          %4036 = vmatpush1.msra.mxu0 0.0
          %4037 = vmatprep.subr.mxu0 0.0
          %4038 = vmatpush1.msra.mxu0 0.0
          %4039 = vmatprep.subr.mxu0 0.0
          %4040 = vmatpush1.msra.mxu0 0.0
          %4041 = vmatprep.subr.mxu0 0.0
          %4042 = vmatpush1.msra.mxu0 0.0
          %4043 = vmatprep.subr.mxu0 0.0
          %4044 = vmatpush1.msra.mxu0 0.0
          %4045 = vmatprep.subr.mxu0 0.0
          %4046 = vmatpush1.msra.mxu0 0.0
          %4047 = vmatprep.subr.mxu0 0.0
          %4048 = vmatpush1.msra.mxu0 0.0
          %4049 = vmatprep.subr.mxu0 0.0
          %4050 = vmatpush1.msra.mxu0 0.0
          %4051 = vmatprep.subr.mxu0 0.0
          %4052 = vmatpush1.msra.mxu0 0.0
          %4053 = vmatprep.subr.mxu0 0.0
          %4054 = vmatpush1.msra.mxu0 0.0
          %4055 = vmatprep.subr.mxu0 0.0
          %4056 = vmatpush1.msra.mxu0 0.0
          %4057 = vmatprep.subr.mxu0 0.0
          %4058 = vmatpush1.msra.mxu0 0.0
          %4059 = vmatprep.subr.mxu0 0.0
          %4060 = vmatpush1.msra.mxu0 0.0
          %4061 = vmatprep.subr.mxu0 0.0
          %4062 = vmatpush1.msra.mxu0 0.0
          %4063 = vmatprep.subr.mxu0 0.0
          %4064 = vmatpush1.msra.mxu0 0.0
          %4065 = vmatprep.subr.mxu0 0.0
          %4066 = vmatpush1.msra.mxu0 0.0
          %4067 = vmatprep.subr.mxu0 0.0
          %4068 = vmatpush1.msra.mxu0 0.0
          %4069 = vmatprep.subr.mxu0 0.0
          %4070 = vmatpush1.msra.mxu0 0.0
          %4071 = vmatprep.subr.mxu0 0.0
          %4072 = vmatpush1.msra.mxu0 0.0
          %4073 = vmatprep.subr.mxu0 0.0
          %4074 = vmatpush1.msra.mxu0 0.0
          %4075 = vmatprep.subr.mxu0 0.0
          %4076 = vmatpush1.msra.mxu0 0.0
          %4077 = vmatprep.subr.mxu0 0.0
          %4078 = vmatpush1.msra.mxu0 0.0
          %4079 = vmatprep.mubr.f32.mxu0 0.0
          %4080 = vmatmul.mubr.f32.gmra.mrb[0].mxu0 %v3968
          %v4081 = vpop.f32.mrb[0].mxu0
          %v4082 = vadd.f32 %v3965, %v4081
          %v4083 = vpop.f32.mrb[0].mxu0
          %4084 = vmatprep.mubr.f32.mxu0 0.0
          %4085 = vmatmul.mubr.f32.gmra.mrb[0].mxu0 %v3971
          %v4086 = vpop.f32.mrb[0].mxu0
          %v4087 = vadd.f32 %v3965, %v4086
          %v4088 = vpop.f32.mrb[0].mxu0
          %4089 = vmatprep.mubr.f32.mxu0 0.0
          %4090 = vmatmul.mubr.f32.gmra.mrb[0].mxu0 %v3974
          %v4091 = vpop.f32.mrb[0].mxu0
          %v4092 = vadd.f32 %v3965, %v4091
          %v4093 = vpop.f32.mrb[0].mxu0
          %4094 = vmatprep.mubr.f32.mxu0 0.0
          %4095 = vmatmul.mubr.f32.gmra.mrb[0].mxu0 %v3977
          %v4096 = vpop.f32.mrb[0].mxu0
          %v4097 = vadd.f32 %v3965, %v4096
          %v4098 = vpop.f32.mrb[0].mxu0
          %4099 = vmatprep.mubr.f32.mxu0 0.0
          %4100 = vmatmul.mubr.f32.gmra.mrb[0].mxu0 %v3980
          %v4101 = vpop.f32.mrb[0].mxu0
          %v4102 = vadd.f32 %v3965, %v4101
          %v4103 = vpop.f32.mrb[0].mxu0
          %4104 = vmatprep.mubr.f32.mxu0 0.0
          %4105 = vmatmul.mubr.f32.gmra.mrb[0].mxu0 %v3983
          %v4106 = vpop.f32.mrb[0].mxu0
          %v4107 = vadd.f32 %v3965, %v4106
          %v4108 = vpop.f32.mrb[0].mxu0
          %4109 = vmatprep.mubr.f32.mxu0 0.0
          %4110 = vmatmul.mubr.f32.gmra.mrb[0].mxu0 %v3986
          %v4111 = vpop.f32.mrb[0].mxu0
          %v4112 = vadd.f32 %v3965, %v4111
          %v4113 = vpop.f32.mrb[0].mxu0
          %4114 = vmatprep.mubr.f32.mxu0 0.0
          %4115 = vmatmul.mubr.f32.gmra.mrb[0].mxu0 %v3989
          %v4116 = vpop.f32.mrb[0].mxu0
          %v4117 = vadd.f32 %v3965, %v4116
          %v4118 = vpop.f32.mrb[0].mxu0
          %4119 = vmatprep.mubr.f32.mxu0 0.0
          %4120 = vmatmul.mubr.f32.gmra.mrb[0].mxu0 %v3992
          %v4121 = vpop.f32.mrb[0].mxu0
          %v4122 = vadd.f32 %v3965, %v4121
          %v4123 = vpop.f32.mrb[0].mxu0
          %4124 = vmatprep.mubr.f32.mxu0 0.0
          %4125 = vmatmul.mubr.f32.gmra.mrb[0].mxu0 %v3995
          %v4126 = vpop.f32.mrb[0].mxu0
          %v4127 = vadd.f32 %v3965, %v4126
          %v4128 = vpop.f32.mrb[0].mxu0
          %4129 = vmatprep.mubr.f32.mxu0 0.0
          %4130 = vmatmul.mubr.f32.gmra.mrb[0].mxu0 %v3998
          %v4131 = vpop.f32.mrb[0].mxu0
          %v4132 = vadd.f32 %v3965, %v4131
          %v4133 = vpop.f32.mrb[0].mxu0
          %4134 = vmatprep.mubr.f32.mxu0 0.0
          %4135 = vmatmul.mubr.f32.gmra.mrb[0].mxu0 %v4001
          %v4136 = vpop.f32.mrb[0].mxu0
          %v4137 = vadd.f32 %v3965, %v4136
          %v4138 = vpop.f32.mrb[0].mxu0
          %4139 = vmatprep.mubr.f32.mxu0 0.0
          %4140 = vmatmul.mubr.f32.gmra.mrb[0].mxu0 %v4004
          %v4141 = vpop.f32.mrb[0].mxu0
          %v4142 = vadd.f32 %v3965, %v4141
          %v4143 = vpop.f32.mrb[0].mxu0
          %4144 = vmatprep.mubr.f32.mxu0 0.0
          %4145 = vmatmul.mubr.f32.gmra.mrb[0].mxu0 %v4007
          %v4146 = vpop.f32.mrb[0].mxu0
          %v4147 = vadd.f32 %v3965, %v4146
          %v4148 = vpop.f32.mrb[0].mxu0
          %4149 = vmatprep.mubr.f32.mxu0 0.0
          %4150 = vmatmul.mubr.f32.gmra.mrb[0].mxu0 %v4010
          %v4151 = vpop.f32.mrb[0].mxu0
          %v4152 = vadd.f32 %v3965, %v4151
          %v4153 = vpop.f32.mrb[0].mxu0
          %4154 = vmatprep.mubr.f32.mxu0 0.0
          %4155 = vmatmul.mubr.f32.gmra.mrb[0].mxu0 %v4013
          %v4156 = vpop.f32.mrb[0].mxu0
          %v4157 = vadd.f32 %v3965, %v4156
          %v4158 = vpop.f32.mrb[0].mxu0
          %4159 = vdwg.mxu0
          %v4160 = vld [vmem:[%s43] sm:$0xff]
          %v4161 = vld [vmem:[%s43 + $0x8] sm:$0xff]
          %v4162 = vld [vmem:[%s43 + $0x10] sm:$0xff]
          %v4164 = vsel %vm2931, %v4082, 0
          %v4167 = vsel %vm2931, %v4087, 0
          %v4170 = vsel %vm2931, %v4092, 0
          %v4173 = vsel %vm2931, %v4097, 0
          %v4176 = vsel %vm2931, %v4102, 0
          %v4179 = vsel %vm2931, %v4107, 0
          %v4182 = vsel %vm2931, %v4112, 0
          %v4185 = vsel %vm2931, %v4117, 0
          %v4188 = vsel %vm2931, %v4122, 0
          %v4191 = vsel %vm2931, %v4127, 0
          %v4194 = vsel %vm2931, %v4132, 0
          %v4197 = vsel %vm2931, %v4137, 0
          %v4200 = vsel %vm2931, %v4142, 0
          %v4203 = vsel %vm2931, %v4147, 0
          %v4206 = vsel %vm2931, %v4152, 0
          %v4209 = vsel %vm2931, %v4157, 0
          %v4212 = vsel %vm2931, %v4160, 0
          %v4215 = vsel %vm2931, %v4161, 0
          %v4218 = vsel %vm2931, %v4162, 0
          %4220 = vmatprep.subr.mxu0 0.0
          %4221 = vmatpush1.xpose.msra.mxu0 %v4212
          %4222 = vmatprep.subr.mxu0 0.0
          %4223 = vmatpush1.xpose.msra.mxu0 %v4215
          %4224 = vmatprep.subr.mxu0 0.0
          %4225 = vmatpush1.xpose.msra.mxu0 %v4218
          %4226 = vmatprep.subr.mxu0 0.0
          %4227 = vmatpush1.xpose.msra.mxu0 0.0
          %4228 = vmatprep.subr.mxu0 0.0
          %4229 = vmatpush1.xpose.msra.mxu0 0.0
          %4230 = vmatprep.subr.mxu0 0.0
          %4231 = vmatpush1.xpose.msra.mxu0 0.0
          %4232 = vmatprep.subr.mxu0 0.0
          %4233 = vmatpush1.xpose.msra.mxu0 0.0
          %4234 = vmatprep.subr.mxu0 0.0
          %4235 = vmatpush1.xpose.msra.mxu0 0.0
          %4236 = vmatprep.subr.mxu0 0.0
          %4237 = vmatpush1.xpose.msra.mxu0 0.0
          %4238 = vmatprep.subr.mxu0 0.0
          %4239 = vmatpush1.xpose.msra.mxu0 0.0
          %4240 = vmatprep.subr.mxu0 0.0
          %4241 = vmatpush1.xpose.msra.mxu0 0.0
          %4242 = vmatprep.subr.mxu0 0.0
          %4243 = vmatpush1.xpose.msra.mxu0 0.0
          %4244 = vmatprep.subr.mxu0 0.0
          %4245 = vmatpush1.xpose.msra.mxu0 0.0
          %4246 = vmatprep.subr.mxu0 0.0
          %4247 = vmatpush1.xpose.msra.mxu0 0.0
          %4248 = vmatprep.subr.mxu0 0.0
          %4249 = vmatpush1.xpose.msra.mxu0 0.0
          %4250 = vmatprep.subr.mxu0 0.0
          %4251 = vmatpush1.xpose.msra.mxu0 0.0
          %4252 = vmatprep.subr.mxu0 0.0
          %4253 = vmatpush1.xpose.msra.mxu0 0.0
          %4254 = vmatprep.subr.mxu0 0.0
          %4255 = vmatpush1.xpose.msra.mxu0 0.0
          %4256 = vmatprep.subr.mxu0 0.0
          %4257 = vmatpush1.xpose.msra.mxu0 0.0
          %4258 = vmatprep.subr.mxu0 0.0
          %4259 = vmatpush1.xpose.msra.mxu0 0.0
          %4260 = vmatprep.subr.mxu0 0.0
          %4261 = vmatpush1.xpose.msra.mxu0 0.0
          %4262 = vmatprep.subr.mxu0 0.0
          %4263 = vmatpush1.xpose.msra.mxu0 0.0
          %4264 = vmatprep.subr.mxu0 0.0
          %4265 = vmatpush1.xpose.msra.mxu0 0.0
          %4266 = vmatprep.subr.mxu0 0.0
          %4267 = vmatpush1.xpose.msra.mxu0 0.0
          %4268 = vmatprep.subr.mxu0 0.0
          %4269 = vmatpush1.xpose.msra.mxu0 0.0
          %4270 = vmatprep.subr.mxu0 0.0
          %4271 = vmatpush1.xpose.msra.mxu0 0.0
          %4272 = vmatprep.subr.mxu0 0.0
          %4273 = vmatpush1.xpose.msra.mxu0 0.0
          %4274 = vmatprep.subr.mxu0 0.0
          %4275 = vmatpush1.xpose.msra.mxu0 0.0
          %4276 = vmatprep.subr.mxu0 0.0
          %4277 = vmatpush1.xpose.msra.mxu0 0.0
          %4278 = vmatprep.subr.mxu0 0.0
          %4279 = vmatpush1.xpose.msra.mxu0 0.0
          %4280 = vmatprep.subr.mxu0 0.0
          %4281 = vmatpush1.xpose.msra.mxu0 0.0
          %4282 = vmatprep.subr.mxu0 0.0
          %4283 = vmatpush1.xpose.msra.mxu0 0.0
          %4284 = vmatprep.mubr.f32.mxu0 0.0
          %4285 = vmatmul.mubr.f32.gmra.mrb[0].mxu0 %v4164
          %v4286 = vpop.f32.mrb[0].mxu0
          %v4287 = vadd.f32 0.0, %v4286
          %v4288 = vpop.f32.mrb[0].mxu0
          %4289 = vmatprep.mubr.f32.mxu0 0.0
          %4290 = vmatmul.mubr.f32.gmra.mrb[0].mxu0 %v4167
          %v4291 = vpop.f32.mrb[0].mxu0
          %v4292 = vadd.f32 0.0, %v4291
          %v4293 = vpop.f32.mrb[0].mxu0
          %4294 = vmatprep.mubr.f32.mxu0 0.0
          %4295 = vmatmul.mubr.f32.gmra.mrb[0].mxu0 %v4170
          %v4296 = vpop.f32.mrb[0].mxu0
          %v4297 = vadd.f32 0.0, %v4296
          %v4298 = vpop.f32.mrb[0].mxu0
          %4299 = vmatprep.mubr.f32.mxu0 0.0
          %4300 = vmatmul.mubr.f32.gmra.mrb[0].mxu0 %v4173
          %v4301 = vpop.f32.mrb[0].mxu0
          %v4302 = vadd.f32 0.0, %v4301
          %v4303 = vpop.f32.mrb[0].mxu0
          %4304 = vmatprep.mubr.f32.mxu0 0.0
          %4305 = vmatmul.mubr.f32.gmra.mrb[0].mxu0 %v4176
          %v4306 = vpop.f32.mrb[0].mxu0
          %v4307 = vadd.f32 0.0, %v4306
          %v4308 = vpop.f32.mrb[0].mxu0
          %4309 = vmatprep.mubr.f32.mxu0 0.0
          %4310 = vmatmul.mubr.f32.gmra.mrb[0].mxu0 %v4179
          %v4311 = vpop.f32.mrb[0].mxu0
          %v4312 = vadd.f32 0.0, %v4311
          %v4313 = vpop.f32.mrb[0].mxu0
          %4314 = vmatprep.mubr.f32.mxu0 0.0
          %4315 = vmatmul.mubr.f32.gmra.mrb[0].mxu0 %v4182
          %v4316 = vpop.f32.mrb[0].mxu0
          %v4317 = vadd.f32 0.0, %v4316
          %v4318 = vpop.f32.mrb[0].mxu0
          %4319 = vmatprep.mubr.f32.mxu0 0.0
          %4320 = vmatmul.mubr.f32.gmra.mrb[0].mxu0 %v4185
          %v4321 = vpop.f32.mrb[0].mxu0
          %v4322 = vadd.f32 0.0, %v4321
          %v4323 = vpop.f32.mrb[0].mxu0
          %4324 = vmatprep.mubr.f32.mxu0 0.0
          %4325 = vmatmul.mubr.f32.gmra.mrb[0].mxu0 %v4188
          %v4326 = vpop.f32.mrb[0].mxu0
          %v4327 = vadd.f32 0.0, %v4326
          %v4328 = vpop.f32.mrb[0].mxu0
          %4329 = vmatprep.mubr.f32.mxu0 0.0
          %4330 = vmatmul.mubr.f32.gmra.mrb[0].mxu0 %v4191
          %v4331 = vpop.f32.mrb[0].mxu0
          %v4332 = vadd.f32 0.0, %v4331
          %v4333 = vpop.f32.mrb[0].mxu0
          %4334 = vmatprep.mubr.f32.mxu0 0.0
          %4335 = vmatmul.mubr.f32.gmra.mrb[0].mxu0 %v4194
          %v4336 = vpop.f32.mrb[0].mxu0
          %v4337 = vadd.f32 0.0, %v4336
          %v4338 = vpop.f32.mrb[0].mxu0
          %4339 = vmatprep.mubr.f32.mxu0 0.0
          %4340 = vmatmul.mubr.f32.gmra.mrb[0].mxu0 %v4197
          %v4341 = vpop.f32.mrb[0].mxu0
          %v4342 = vadd.f32 0.0, %v4341
          %v4343 = vpop.f32.mrb[0].mxu0
          %4344 = vmatprep.mubr.f32.mxu0 0.0
          %4345 = vmatmul.mubr.f32.gmra.mrb[0].mxu0 %v4200
          %v4346 = vpop.f32.mrb[0].mxu0
          %v4347 = vadd.f32 0.0, %v4346
          %v4348 = vpop.f32.mrb[0].mxu0
          %4349 = vmatprep.mubr.f32.mxu0 0.0
          %4350 = vmatmul.mubr.f32.gmra.mrb[0].mxu0 %v4203
          %v4351 = vpop.f32.mrb[0].mxu0
          %v4352 = vadd.f32 0.0, %v4351
          %v4353 = vpop.f32.mrb[0].mxu0
          %4354 = vmatprep.mubr.f32.mxu0 0.0
          %4355 = vmatmul.mubr.f32.gmra.mrb[0].mxu0 %v4206
          %v4356 = vpop.f32.mrb[0].mxu0
          %v4357 = vadd.f32 0.0, %v4356
          %v4358 = vpop.f32.mrb[0].mxu0
          %4359 = vmatprep.mubr.f32.mxu0 0.0
          %4360 = vmatmul.mubr.f32.gmra.mrb[0].mxu0 %v4209
          %v4361 = vpop.f32.mrb[0].mxu0
          %v4362 = vadd.f32 0.0, %v4361
          %v4363 = vpop.f32.mrb[0].mxu0
          %4364 = vdwg.mxu0
          %v4365 = vld [vmem:[%s39] sm:$0xff]
          %v4366 = vld [vmem:[%s39 + $0x8] sm:$0xff]
          %v4367 = vld [vmem:[%s39 + $0x10] sm:$0xff]
          %v4368 = vld [vmem:[%s41] sm:$0x1]
          %v4370 = vlaneseq
          %v4371 = vshrl.u32 %v4370, 7
          %v4372 = vsub.s32 0, %v4371
          %v4373 = vrot.slane %v4368, %v4372
          %v4376 = vsel %vm3341, %v4287, 0
          %v4379 = vsel %vm3341, %v4292, 0
          %v4382 = vsel %vm3341, %v4297, 0
          %v4385 = vsel %vm3341, %v4302, 0
          %v4388 = vsel %vm3341, %v4307, 0
          %v4391 = vsel %vm3341, %v4312, 0
          %v4394 = vsel %vm3341, %v4317, 0
          %v4397 = vsel %vm3341, %v4322, 0
          %v4400 = vsel %vm3341, %v4327, 0
          %v4403 = vsel %vm3341, %v4332, 0
          %v4406 = vsel %vm3341, %v4337, 0
          %v4409 = vsel %vm3341, %v4342, 0
          %v4412 = vsel %vm3341, %v4347, 0
          %v4415 = vsel %vm3341, %v4352, 0
          %v4418 = vsel %vm3341, %v4357, 0
          %v4421 = vsel %vm3341, %v4362, 0
          %4423 = vmatprep.subr.mxu0 0.0
          %4424 = vmatpush1.msra.mxu0 %v4365
          %4425 = vmatprep.subr.mxu0 0.0
          %4426 = vmatpush1.msra.mxu0 %v4366
          %4427 = vmatprep.subr.mxu0 0.0
          %4428 = vmatpush1.msra.mxu0 %v4367
          %4429 = vmatprep.subr.mxu0 0.0
          %4430 = vmatpush1.msra.mxu0 0.0
          %4431 = vmatprep.subr.mxu0 0.0
          %4432 = vmatpush1.msra.mxu0 0.0
          %4433 = vmatprep.subr.mxu0 0.0
          %4434 = vmatpush1.msra.mxu0 0.0
          %4435 = vmatprep.subr.mxu0 0.0
          %4436 = vmatpush1.msra.mxu0 0.0
          %4437 = vmatprep.subr.mxu0 0.0
          %4438 = vmatpush1.msra.mxu0 0.0
          %4439 = vmatprep.subr.mxu0 0.0
          %4440 = vmatpush1.msra.mxu0 0.0
          %4441 = vmatprep.subr.mxu0 0.0
          %4442 = vmatpush1.msra.mxu0 0.0
          %4443 = vmatprep.subr.mxu0 0.0
          %4444 = vmatpush1.msra.mxu0 0.0
          %4445 = vmatprep.subr.mxu0 0.0
          %4446 = vmatpush1.msra.mxu0 0.0
          %4447 = vmatprep.subr.mxu0 0.0
          %4448 = vmatpush1.msra.mxu0 0.0
          %4449 = vmatprep.subr.mxu0 0.0
          %4450 = vmatpush1.msra.mxu0 0.0
          %4451 = vmatprep.subr.mxu0 0.0
          %4452 = vmatpush1.msra.mxu0 0.0
          %4453 = vmatprep.subr.mxu0 0.0
          %4454 = vmatpush1.msra.mxu0 0.0
          %4455 = vmatprep.subr.mxu0 0.0
          %4456 = vmatpush1.msra.mxu0 0.0
          %4457 = vmatprep.subr.mxu0 0.0
          %4458 = vmatpush1.msra.mxu0 0.0
          %4459 = vmatprep.subr.mxu0 0.0
          %4460 = vmatpush1.msra.mxu0 0.0
          %4461 = vmatprep.subr.mxu0 0.0
          %4462 = vmatpush1.msra.mxu0 0.0
          %4463 = vmatprep.subr.mxu0 0.0
          %4464 = vmatpush1.msra.mxu0 0.0
          %4465 = vmatprep.subr.mxu0 0.0
          %4466 = vmatpush1.msra.mxu0 0.0
          %4467 = vmatprep.subr.mxu0 0.0
          %4468 = vmatpush1.msra.mxu0 0.0
          %4469 = vmatprep.subr.mxu0 0.0
          %4470 = vmatpush1.msra.mxu0 0.0
          %4471 = vmatprep.subr.mxu0 0.0
          %4472 = vmatpush1.msra.mxu0 0.0
          %4473 = vmatprep.subr.mxu0 0.0
          %4474 = vmatpush1.msra.mxu0 0.0
          %4475 = vmatprep.subr.mxu0 0.0
          %4476 = vmatpush1.msra.mxu0 0.0
          %4477 = vmatprep.subr.mxu0 0.0
          %4478 = vmatpush1.msra.mxu0 0.0
          %4479 = vmatprep.subr.mxu0 0.0
          %4480 = vmatpush1.msra.mxu0 0.0
          %4481 = vmatprep.subr.mxu0 0.0
          %4482 = vmatpush1.msra.mxu0 0.0
          %4483 = vmatprep.subr.mxu0 0.0
          %4484 = vmatpush1.msra.mxu0 0.0
          %4485 = vmatprep.subr.mxu0 0.0
          %4486 = vmatpush1.msra.mxu0 0.0
          %4487 = vmatprep.mubr.f32.mxu0 0.0
          %4488 = vmatmul.mubr.f32.gmra.mrb[0].mxu0 %v4376
          %v4489 = vpop.f32.mrb[0].mxu0
          %v4490 = vadd.f32 %v4373, %v4489
          %v4491 = vpop.f32.mrb[0].mxu0
          %4492 = vmatprep.mubr.f32.mxu0 0.0
          %4493 = vmatmul.mubr.f32.gmra.mrb[0].mxu0 %v4379
          %v4494 = vpop.f32.mrb[0].mxu0
          %v4495 = vadd.f32 %v4373, %v4494
          %v4496 = vpop.f32.mrb[0].mxu0
          %4497 = vmatprep.mubr.f32.mxu0 0.0
          %4498 = vmatmul.mubr.f32.gmra.mrb[0].mxu0 %v4382
          %v4499 = vpop.f32.mrb[0].mxu0
          %v4500 = vadd.f32 %v4373, %v4499
          %v4501 = vpop.f32.mrb[0].mxu0
          %4502 = vmatprep.mubr.f32.mxu0 0.0
          %4503 = vmatmul.mubr.f32.gmra.mrb[0].mxu0 %v4385
          %v4504 = vpop.f32.mrb[0].mxu0
          %v4505 = vadd.f32 %v4373, %v4504
          %v4506 = vpop.f32.mrb[0].mxu0
          %4507 = vmatprep.mubr.f32.mxu0 0.0
          %4508 = vmatmul.mubr.f32.gmra.mrb[0].mxu0 %v4388
          %v4509 = vpop.f32.mrb[0].mxu0
          %v4510 = vadd.f32 %v4373, %v4509
          %v4511 = vpop.f32.mrb[0].mxu0
          %4512 = vmatprep.mubr.f32.mxu0 0.0
          %4513 = vmatmul.mubr.f32.gmra.mrb[0].mxu0 %v4391
          %v4514 = vpop.f32.mrb[0].mxu0
          %v4515 = vadd.f32 %v4373, %v4514
          %v4516 = vpop.f32.mrb[0].mxu0
          %4517 = vmatprep.mubr.f32.mxu0 0.0
          %4518 = vmatmul.mubr.f32.gmra.mrb[0].mxu0 %v4394
          %v4519 = vpop.f32.mrb[0].mxu0
          %v4520 = vadd.f32 %v4373, %v4519
          %v4521 = vpop.f32.mrb[0].mxu0
          %4522 = vmatprep.mubr.f32.mxu0 0.0
          %4523 = vmatmul.mubr.f32.gmra.mrb[0].mxu0 %v4397
          %v4524 = vpop.f32.mrb[0].mxu0
          %v4525 = vadd.f32 %v4373, %v4524
          %v4526 = vpop.f32.mrb[0].mxu0
          %4527 = vmatprep.mubr.f32.mxu0 0.0
          %4528 = vmatmul.mubr.f32.gmra.mrb[0].mxu0 %v4400
          %v4529 = vpop.f32.mrb[0].mxu0
          %v4530 = vadd.f32 %v4373, %v4529
          %v4531 = vpop.f32.mrb[0].mxu0
          %4532 = vmatprep.mubr.f32.mxu0 0.0
          %4533 = vmatmul.mubr.f32.gmra.mrb[0].mxu0 %v4403
          %v4534 = vpop.f32.mrb[0].mxu0
          %v4535 = vadd.f32 %v4373, %v4534
          %v4536 = vpop.f32.mrb[0].mxu0
          %4537 = vmatprep.mubr.f32.mxu0 0.0
          %4538 = vmatmul.mubr.f32.gmra.mrb[0].mxu0 %v4406
          %v4539 = vpop.f32.mrb[0].mxu0
          %v4540 = vadd.f32 %v4373, %v4539
          %v4541 = vpop.f32.mrb[0].mxu0
          %4542 = vmatprep.mubr.f32.mxu0 0.0
          %4543 = vmatmul.mubr.f32.gmra.mrb[0].mxu0 %v4409
          %v4544 = vpop.f32.mrb[0].mxu0
          %v4545 = vadd.f32 %v4373, %v4544
          %v4546 = vpop.f32.mrb[0].mxu0
          %4547 = vmatprep.mubr.f32.mxu0 0.0
          %4548 = vmatmul.mubr.f32.gmra.mrb[0].mxu0 %v4412
          %v4549 = vpop.f32.mrb[0].mxu0
          %v4550 = vadd.f32 %v4373, %v4549
          %v4551 = vpop.f32.mrb[0].mxu0
          %4552 = vmatprep.mubr.f32.mxu0 0.0
          %4553 = vmatmul.mubr.f32.gmra.mrb[0].mxu0 %v4415
          %v4554 = vpop.f32.mrb[0].mxu0
          %v4555 = vadd.f32 %v4373, %v4554
          %v4556 = vpop.f32.mrb[0].mxu0
          %4557 = vmatprep.mubr.f32.mxu0 0.0
          %4558 = vmatmul.mubr.f32.gmra.mrb[0].mxu0 %v4418
          %v4559 = vpop.f32.mrb[0].mxu0
          %v4560 = vadd.f32 %v4373, %v4559
          %v4561 = vpop.f32.mrb[0].mxu0
          %4562 = vmatprep.mubr.f32.mxu0 0.0
          %4563 = vmatmul.mubr.f32.gmra.mrb[0].mxu0 %v4421
          %v4564 = vpop.f32.mrb[0].mxu0
          %v4565 = vadd.f32 %v4373, %v4564
          %v4566 = vpop.f32.mrb[0].mxu0
          %4567 = vdwg.mxu0
          %v4568 = vld [vmem:[%s45] sm:$0xff]
          %v4569 = vld [vmem:[%s45 + $0x8] sm:$0xff]
          %v4570 = vld [vmem:[%s45 + $0x10] sm:$0xff]
          %v4571 = vld [vmem:[%s45 + $0x18] sm:$0xff]
          %v4572 = vld [vmem:[%s45 + $0x20] sm:$0xff]
          %v4573 = vld [vmem:[%s45 + $0x28] sm:$0xff]
          %v4574 = vld [vmem:[%s45 + $0x30] sm:$0xff]
          %v4575 = vld [vmem:[%s45 + $0x38] sm:$0xff]
          %v4576 = vld [vmem:[%s45 + $0x40] sm:$0xff]
          %v4577 = vld [vmem:[%s45 + $0x48] sm:$0xff]
          %v4578 = vld [vmem:[%s45 + $0x50] sm:$0xff]
          %v4579 = vld [vmem:[%s45 + $0x58] sm:$0xff]
          %v4580 = vld [vmem:[%s45 + $0x60] sm:$0xff]
          %v4581 = vld [vmem:[%s45 + $0x68] sm:$0xff]
          %v4582 = vld [vmem:[%s45 + $0x70] sm:$0xff]
          %v4583 = vld [vmem:[%s45 + $0x78] sm:$0xff]
          %v4585 = vsel %vm2931, %v4490, 0
          %v4588 = vsel %vm2931, %v4495, 0
          %v4591 = vsel %vm2931, %v4500, 0
          %v4594 = vsel %vm2931, %v4505, 0
          %v4597 = vsel %vm2931, %v4510, 0
          %v4600 = vsel %vm2931, %v4515, 0
          %v4603 = vsel %vm2931, %v4520, 0
          %v4606 = vsel %vm2931, %v4525, 0
          %v4609 = vsel %vm2931, %v4530, 0
          %v4612 = vsel %vm2931, %v4535, 0
          %v4615 = vsel %vm2931, %v4540, 0
          %v4618 = vsel %vm2931, %v4545, 0
          %v4621 = vsel %vm2931, %v4550, 0
          %v4624 = vsel %vm2931, %v4555, 0
          %v4627 = vsel %vm2931, %v4560, 0
          %v4630 = vsel %vm2931, %v4565, 0
          %v4633 = vsel %vm2931, %v4568, 0
          %v4636 = vsel %vm2931, %v4569, 0
          %v4639 = vsel %vm2931, %v4570, 0
          %v4642 = vsel %vm2931, %v4571, 0
          %v4645 = vsel %vm2931, %v4572, 0
          %v4648 = vsel %vm2931, %v4573, 0
          %v4651 = vsel %vm2931, %v4574, 0
          %v4654 = vsel %vm2931, %v4575, 0
          %v4657 = vsel %vm2931, %v4576, 0
          %v4660 = vsel %vm2931, %v4577, 0
          %v4663 = vsel %vm2931, %v4578, 0
          %v4666 = vsel %vm2931, %v4579, 0
          %v4669 = vsel %vm2931, %v4580, 0
          %v4672 = vsel %vm2931, %v4581, 0
          %v4675 = vsel %vm2931, %v4582, 0
          %v4678 = vsel %vm2931, %v4583, 0
          %4680 = vmatprep.subr.mxu0 0.0
          %4681 = vmatpush1.xpose.msra.mxu0 %v4633
          %4682 = vmatprep.subr.mxu0 0.0
          %4683 = vmatpush1.xpose.msra.mxu0 %v4636
          %4684 = vmatprep.subr.mxu0 0.0
          %4685 = vmatpush1.xpose.msra.mxu0 %v4639
          %4686 = vmatprep.subr.mxu0 0.0
          %4687 = vmatpush1.xpose.msra.mxu0 %v4642
          %4688 = vmatprep.subr.mxu0 0.0
          %4689 = vmatpush1.xpose.msra.mxu0 %v4645
          %4690 = vmatprep.subr.mxu0 0.0
          %4691 = vmatpush1.xpose.msra.mxu0 %v4648
          %4692 = vmatprep.subr.mxu0 0.0
          %4693 = vmatpush1.xpose.msra.mxu0 %v4651
          %4694 = vmatprep.subr.mxu0 0.0
          %4695 = vmatpush1.xpose.msra.mxu0 %v4654
          %4696 = vmatprep.subr.mxu0 0.0
          %4697 = vmatpush1.xpose.msra.mxu0 %v4657
          %4698 = vmatprep.subr.mxu0 0.0
          %4699 = vmatpush1.xpose.msra.mxu0 %v4660
          %4700 = vmatprep.subr.mxu0 0.0
          %4701 = vmatpush1.xpose.msra.mxu0 %v4663
          %4702 = vmatprep.subr.mxu0 0.0
          %4703 = vmatpush1.xpose.msra.mxu0 %v4666
          %4704 = vmatprep.subr.mxu0 0.0
          %4705 = vmatpush1.xpose.msra.mxu0 %v4669
          %4706 = vmatprep.subr.mxu0 0.0
          %4707 = vmatpush1.xpose.msra.mxu0 %v4672
          %4708 = vmatprep.subr.mxu0 0.0
          %4709 = vmatpush1.xpose.msra.mxu0 %v4675
          %4710 = vmatprep.subr.mxu0 0.0
          %4711 = vmatpush1.xpose.msra.mxu0 %v4678
          %4712 = vmatprep.subr.mxu0 0.0
          %4713 = vmatpush1.xpose.msra.mxu0 0.0
          %4714 = vmatprep.subr.mxu0 0.0
          %4715 = vmatpush1.xpose.msra.mxu0 0.0
          %4716 = vmatprep.subr.mxu0 0.0
          %4717 = vmatpush1.xpose.msra.mxu0 0.0
          %4718 = vmatprep.subr.mxu0 0.0
          %4719 = vmatpush1.xpose.msra.mxu0 0.0
          %4720 = vmatprep.subr.mxu0 0.0
          %4721 = vmatpush1.xpose.msra.mxu0 0.0
          %4722 = vmatprep.subr.mxu0 0.0
          %4723 = vmatpush1.xpose.msra.mxu0 0.0
          %4724 = vmatprep.subr.mxu0 0.0
          %4725 = vmatpush1.xpose.msra.mxu0 0.0
          %4726 = vmatprep.subr.mxu0 0.0
          %4727 = vmatpush1.xpose.msra.mxu0 0.0
          %4728 = vmatprep.subr.mxu0 0.0
          %4729 = vmatpush1.xpose.msra.mxu0 0.0
          %4730 = vmatprep.subr.mxu0 0.0
          %4731 = vmatpush1.xpose.msra.mxu0 0.0
          %4732 = vmatprep.subr.mxu0 0.0
          %4733 = vmatpush1.xpose.msra.mxu0 0.0
          %4734 = vmatprep.subr.mxu0 0.0
          %4735 = vmatpush1.xpose.msra.mxu0 0.0
          %4736 = vmatprep.subr.mxu0 0.0
          %4737 = vmatpush1.xpose.msra.mxu0 0.0
          %4738 = vmatprep.subr.mxu0 0.0
          %4739 = vmatpush1.xpose.msra.mxu0 0.0
          %4740 = vmatprep.subr.mxu0 0.0
          %4741 = vmatpush1.xpose.msra.mxu0 0.0
          %4742 = vmatprep.subr.mxu0 0.0
          %4743 = vmatpush1.xpose.msra.mxu0 0.0
          %4744 = vmatprep.mubr.f32.mxu0 0.0
          %4745 = vmatmul.mubr.f32.gmra.mrb[0].mxu0 %v4585
          %v4746 = vpop.f32.mrb[0].mxu0
          %v4747 = vadd.f32 0.0, %v4746
          %v4748 = vpop.f32.mrb[0].mxu0
          %4749 = vmatprep.mubr.f32.mxu0 0.0
          %4750 = vmatmul.mubr.f32.gmra.mrb[0].mxu0 %v4588
          %v4751 = vpop.f32.mrb[0].mxu0
          %v4752 = vadd.f32 0.0, %v4751
          %v4753 = vpop.f32.mrb[0].mxu0
          %4754 = vmatprep.mubr.f32.mxu0 0.0
          %4755 = vmatmul.mubr.f32.gmra.mrb[0].mxu0 %v4591
          %v4756 = vpop.f32.mrb[0].mxu0
          %v4757 = vadd.f32 0.0, %v4756
          %v4758 = vpop.f32.mrb[0].mxu0
          %4759 = vmatprep.mubr.f32.mxu0 0.0
          %4760 = vmatmul.mubr.f32.gmra.mrb[0].mxu0 %v4594
          %v4761 = vpop.f32.mrb[0].mxu0
          %v4762 = vadd.f32 0.0, %v4761
          %v4763 = vpop.f32.mrb[0].mxu0
          %4764 = vmatprep.mubr.f32.mxu0 0.0
          %4765 = vmatmul.mubr.f32.gmra.mrb[0].mxu0 %v4597
          %v4766 = vpop.f32.mrb[0].mxu0
          %v4767 = vadd.f32 0.0, %v4766
          %v4768 = vpop.f32.mrb[0].mxu0
          %4769 = vmatprep.mubr.f32.mxu0 0.0
          %4770 = vmatmul.mubr.f32.gmra.mrb[0].mxu0 %v4600
          %v4771 = vpop.f32.mrb[0].mxu0
          %v4772 = vadd.f32 0.0, %v4771
          %v4773 = vpop.f32.mrb[0].mxu0
          %4774 = vmatprep.mubr.f32.mxu0 0.0
          %4775 = vmatmul.mubr.f32.gmra.mrb[0].mxu0 %v4603
          %v4776 = vpop.f32.mrb[0].mxu0
          %v4777 = vadd.f32 0.0, %v4776
          %v4778 = vpop.f32.mrb[0].mxu0
          %4779 = vmatprep.mubr.f32.mxu0 0.0
          %4780 = vmatmul.mubr.f32.gmra.mrb[0].mxu0 %v4606
          %v4781 = vpop.f32.mrb[0].mxu0
          %v4782 = vadd.f32 0.0, %v4781
          %v4783 = vpop.f32.mrb[0].mxu0
          %4784 = vmatprep.mubr.f32.mxu0 0.0
          %4785 = vmatmul.mubr.f32.gmra.mrb[0].mxu0 %v4609
          %v4786 = vpop.f32.mrb[0].mxu0
          %v4787 = vadd.f32 0.0, %v4786
          %v4788 = vpop.f32.mrb[0].mxu0
          %4789 = vmatprep.mubr.f32.mxu0 0.0
          %4790 = vmatmul.mubr.f32.gmra.mrb[0].mxu0 %v4612
          %v4791 = vpop.f32.mrb[0].mxu0
          %v4792 = vadd.f32 0.0, %v4791
          %v4793 = vpop.f32.mrb[0].mxu0
          %4794 = vmatprep.mubr.f32.mxu0 0.0
          %4795 = vmatmul.mubr.f32.gmra.mrb[0].mxu0 %v4615
          %v4796 = vpop.f32.mrb[0].mxu0
          %v4797 = vadd.f32 0.0, %v4796
          %v4798 = vpop.f32.mrb[0].mxu0
          %4799 = vmatprep.mubr.f32.mxu0 0.0
          %4800 = vmatmul.mubr.f32.gmra.mrb[0].mxu0 %v4618
          %v4801 = vpop.f32.mrb[0].mxu0
          %v4802 = vadd.f32 0.0, %v4801
          %v4803 = vpop.f32.mrb[0].mxu0
          %4804 = vmatprep.mubr.f32.mxu0 0.0
          %4805 = vmatmul.mubr.f32.gmra.mrb[0].mxu0 %v4621
          %v4806 = vpop.f32.mrb[0].mxu0
          %v4807 = vadd.f32 0.0, %v4806
          %v4808 = vpop.f32.mrb[0].mxu0
          %4809 = vmatprep.mubr.f32.mxu0 0.0
          %4810 = vmatmul.mubr.f32.gmra.mrb[0].mxu0 %v4624
          %v4811 = vpop.f32.mrb[0].mxu0
          %v4812 = vadd.f32 0.0, %v4811
          %v4813 = vpop.f32.mrb[0].mxu0
          %4814 = vmatprep.mubr.f32.mxu0 0.0
          %4815 = vmatmul.mubr.f32.gmra.mrb[0].mxu0 %v4627
          %v4816 = vpop.f32.mrb[0].mxu0
          %v4817 = vadd.f32 0.0, %v4816
          %v4818 = vpop.f32.mrb[0].mxu0
          %4819 = vmatprep.mubr.f32.mxu0 0.0
          %4820 = vmatmul.mubr.f32.gmra.mrb[0].mxu0 %v4630
          %v4821 = vpop.f32.mrb[0].mxu0
          %v4822 = vadd.f32 0.0, %v4821
          %v4823 = vpop.f32.mrb[0].mxu0
          %4824 = vdwg.mxu0
          %v4825 = vmax.f32 %v3714, %v4747
          %v4826 = vmax.f32 %v3719, %v4752
          %v4827 = vmax.f32 %v3724, %v4757
          %v4828 = vmax.f32 %v3729, %v4762
          %v4829 = vmax.f32 %v3734, %v4767
          %v4830 = vmax.f32 %v3739, %v4772
          %v4831 = vmax.f32 %v3744, %v4777
          %v4832 = vmax.f32 %v3749, %v4782
          %v4833 = vmax.f32 %v3754, %v4787
          %v4834 = vmax.f32 %v3759, %v4792
          %v4835 = vmax.f32 %v3764, %v4797
          %v4836 = vmax.f32 %v3769, %v4802
          %v4837 = vmax.f32 %v3774, %v4807
          %v4838 = vmax.f32 %v3779, %v4812
          %v4839 = vmax.f32 %v3784, %v4817
          %v4840 = vmax.f32 %v3789, %v4822
          %v4841 = vld [vmem:[%s47] sm:$0xff]
          %v4842 = vld [vmem:[%s47 + $0x8] sm:$0xff]
          %v4843 = vld [vmem:[%s47 + $0x10] sm:$0xff]
          %v4844 = vld [vmem:[%s47 + $0x18] sm:$0xff]
          %v4845 = vld [vmem:[%s47 + $0x20] sm:$0xff]
          %v4846 = vld [vmem:[%s47 + $0x28] sm:$0xff]
          %v4847 = vld [vmem:[%s47 + $0x30] sm:$0xff]
          %v4848 = vld [vmem:[%s47 + $0x38] sm:$0xff]
          %v4849 = vld [vmem:[%s49] sm:$0x1]
          %v4851 = vlaneseq
          %v4852 = vshrl.u32 %v4851, 7
          %v4853 = vsub.s32 0, %v4852
          %v4854 = vrot.slane %v4849, %v4853
          %4856 = vmatprep.subr.mxu0 0.0
          %4857 = vmatpush1.msra.mxu0 %v4841
          %4858 = vmatprep.subr.mxu0 0.0
          %4859 = vmatpush1.msra.mxu0 %v4842
          %4860 = vmatprep.subr.mxu0 0.0
          %4861 = vmatpush1.msra.mxu0 %v4843
          %4862 = vmatprep.subr.mxu0 0.0
          %4863 = vmatpush1.msra.mxu0 %v4844
          %4864 = vmatprep.subr.mxu0 0.0
          %4865 = vmatpush1.msra.mxu0 %v4845
          %4866 = vmatprep.subr.mxu0 0.0
          %4867 = vmatpush1.msra.mxu0 %v4846
          %4868 = vmatprep.subr.mxu0 0.0
          %4869 = vmatpush1.msra.mxu0 %v4847
          %4870 = vmatprep.subr.mxu0 0.0
          %4871 = vmatpush1.msra.mxu0 %v4848
          %4872 = vmatprep.subr.mxu0 0.0
          %4873 = vmatpush1.msra.mxu0 0.0
          %4874 = vmatprep.subr.mxu0 0.0
          %4875 = vmatpush1.msra.mxu0 0.0
          %4876 = vmatprep.subr.mxu0 0.0
          %4877 = vmatpush1.msra.mxu0 0.0
          %4878 = vmatprep.subr.mxu0 0.0
          %4879 = vmatpush1.msra.mxu0 0.0
          %4880 = vmatprep.subr.mxu0 0.0
          %4881 = vmatpush1.msra.mxu0 0.0
          %4882 = vmatprep.subr.mxu0 0.0
          %4883 = vmatpush1.msra.mxu0 0.0
          %4884 = vmatprep.subr.mxu0 0.0
          %4885 = vmatpush1.msra.mxu0 0.0
          %4886 = vmatprep.subr.mxu0 0.0
          %4887 = vmatpush1.msra.mxu0 0.0
          %4888 = vmatprep.subr.mxu0 0.0
          %4889 = vmatpush1.msra.mxu0 0.0
          %4890 = vmatprep.subr.mxu0 0.0
          %4891 = vmatpush1.msra.mxu0 0.0
          %4892 = vmatprep.subr.mxu0 0.0
          %4893 = vmatpush1.msra.mxu0 0.0
          %4894 = vmatprep.subr.mxu0 0.0
          %4895 = vmatpush1.msra.mxu0 0.0
          %4896 = vmatprep.subr.mxu0 0.0
          %4897 = vmatpush1.msra.mxu0 0.0
          %4898 = vmatprep.subr.mxu0 0.0
          %4899 = vmatpush1.msra.mxu0 0.0
          %4900 = vmatprep.subr.mxu0 0.0
          %4901 = vmatpush1.msra.mxu0 0.0
          %4902 = vmatprep.subr.mxu0 0.0
          %4903 = vmatpush1.msra.mxu0 0.0
          %4904 = vmatprep.subr.mxu0 0.0
          %4905 = vmatpush1.msra.mxu0 0.0
          %4906 = vmatprep.subr.mxu0 0.0
          %4907 = vmatpush1.msra.mxu0 0.0
          %4908 = vmatprep.subr.mxu0 0.0
          %4909 = vmatpush1.msra.mxu0 0.0
          %4910 = vmatprep.subr.mxu0 0.0
          %4911 = vmatpush1.msra.mxu0 0.0
          %4912 = vmatprep.subr.mxu0 0.0
          %4913 = vmatpush1.msra.mxu0 0.0
          %4914 = vmatprep.subr.mxu0 0.0
          %4915 = vmatpush1.msra.mxu0 0.0
          %4916 = vmatprep.subr.mxu0 0.0
          %4917 = vmatpush1.msra.mxu0 0.0
          %4918 = vmatprep.subr.mxu0 0.0
          %4919 = vmatpush1.msra.mxu0 0.0
          %4920 = vmatprep.mubr.f32.mxu0 0.0
          %4921 = vmatmul.mubr.f32.gmra.mrb[0].mxu0 %v2728
          %v4922 = vpop.f32.mrb[0].mxu0
          %v4923 = vadd.f32 %v4854, %v4922
          %v4924 = vpop.f32.mrb[0].mxu0
          %4925 = vmatprep.mubr.f32.mxu0 0.0
          %4926 = vmatmul.mubr.f32.gmra.mrb[0].mxu0 %v2731
          %v4927 = vpop.f32.mrb[0].mxu0
          %v4928 = vadd.f32 %v4854, %v4927
          %v4929 = vpop.f32.mrb[0].mxu0
          %4930 = vmatprep.mubr.f32.mxu0 0.0
          %4931 = vmatmul.mubr.f32.gmra.mrb[0].mxu0 %v2734
          %v4932 = vpop.f32.mrb[0].mxu0
          %v4933 = vadd.f32 %v4854, %v4932
          %v4934 = vpop.f32.mrb[0].mxu0
          %4935 = vmatprep.mubr.f32.mxu0 0.0
          %4936 = vmatmul.mubr.f32.gmra.mrb[0].mxu0 %v2737
          %v4937 = vpop.f32.mrb[0].mxu0
          %v4938 = vadd.f32 %v4854, %v4937
          %v4939 = vpop.f32.mrb[0].mxu0
          %4940 = vmatprep.mubr.f32.mxu0 0.0
          %4941 = vmatmul.mubr.f32.gmra.mrb[0].mxu0 %v2740
          %v4942 = vpop.f32.mrb[0].mxu0
          %v4943 = vadd.f32 %v4854, %v4942
          %v4944 = vpop.f32.mrb[0].mxu0
          %4945 = vmatprep.mubr.f32.mxu0 0.0
          %4946 = vmatmul.mubr.f32.gmra.mrb[0].mxu0 %v2743
          %v4947 = vpop.f32.mrb[0].mxu0
          %v4948 = vadd.f32 %v4854, %v4947
          %v4949 = vpop.f32.mrb[0].mxu0
          %4950 = vmatprep.mubr.f32.mxu0 0.0
          %4951 = vmatmul.mubr.f32.gmra.mrb[0].mxu0 %v2746
          %v4952 = vpop.f32.mrb[0].mxu0
          %v4953 = vadd.f32 %v4854, %v4952
          %v4954 = vpop.f32.mrb[0].mxu0
          %4955 = vmatprep.mubr.f32.mxu0 0.0
          %4956 = vmatmul.mubr.f32.gmra.mrb[0].mxu0 %v2749
          %v4957 = vpop.f32.mrb[0].mxu0
          %v4958 = vadd.f32 %v4854, %v4957
          %v4959 = vpop.f32.mrb[0].mxu0
          %4960 = vmatprep.mubr.f32.mxu0 0.0
          %4961 = vmatmul.mubr.f32.gmra.mrb[0].mxu0 %v2752
          %v4962 = vpop.f32.mrb[0].mxu0
          %v4963 = vadd.f32 %v4854, %v4962
          %v4964 = vpop.f32.mrb[0].mxu0
          %4965 = vmatprep.mubr.f32.mxu0 0.0
          %4966 = vmatmul.mubr.f32.gmra.mrb[0].mxu0 %v2755
          %v4967 = vpop.f32.mrb[0].mxu0
          %v4968 = vadd.f32 %v4854, %v4967
          %v4969 = vpop.f32.mrb[0].mxu0
          %4970 = vmatprep.mubr.f32.mxu0 0.0
          %4971 = vmatmul.mubr.f32.gmra.mrb[0].mxu0 %v2758
          %v4972 = vpop.f32.mrb[0].mxu0
          %v4973 = vadd.f32 %v4854, %v4972
          %v4974 = vpop.f32.mrb[0].mxu0
          %4975 = vmatprep.mubr.f32.mxu0 0.0
          %4976 = vmatmul.mubr.f32.gmra.mrb[0].mxu0 %v2761
          %v4977 = vpop.f32.mrb[0].mxu0
          %v4978 = vadd.f32 %v4854, %v4977
          %v4979 = vpop.f32.mrb[0].mxu0
          %4980 = vmatprep.mubr.f32.mxu0 0.0
          %4981 = vmatmul.mubr.f32.gmra.mrb[0].mxu0 %v2764
          %v4982 = vpop.f32.mrb[0].mxu0
          %v4983 = vadd.f32 %v4854, %v4982
          %v4984 = vpop.f32.mrb[0].mxu0
          %4985 = vmatprep.mubr.f32.mxu0 0.0
          %4986 = vmatmul.mubr.f32.gmra.mrb[0].mxu0 %v2767
          %v4987 = vpop.f32.mrb[0].mxu0
          %v4988 = vadd.f32 %v4854, %v4987
          %v4989 = vpop.f32.mrb[0].mxu0
          %4990 = vmatprep.mubr.f32.mxu0 0.0
          %4991 = vmatmul.mubr.f32.gmra.mrb[0].mxu0 %v2770
          %v4992 = vpop.f32.mrb[0].mxu0
          %v4993 = vadd.f32 %v4854, %v4992
          %v4994 = vpop.f32.mrb[0].mxu0
          %4995 = vmatprep.mubr.f32.mxu0 0.0
          %4996 = vmatmul.mubr.f32.gmra.mrb[0].mxu0 %v2773
          %v4997 = vpop.f32.mrb[0].mxu0
          %v4998 = vadd.f32 %v4854, %v4997
          %v4999 = vpop.f32.mrb[0].mxu0
          %5000 = vdwg.mxu0
          %v5001 = vld [vmem:[%s51] sm:$0xff]
          %v5002 = vld [vmem:[%s51 + $0x8] sm:$0xff]
          %v5003 = vld [vmem:[%s51 + $0x10] sm:$0xff]
          %v5004 = vld [vmem:[%s51 + $0x18] sm:$0xff]
          %v5005 = vld [vmem:[%s51 + $0x20] sm:$0xff]
          %v5006 = vld [vmem:[%s51 + $0x28] sm:$0xff]
          %v5007 = vld [vmem:[%s51 + $0x30] sm:$0xff]
          %v5008 = vld [vmem:[%s51 + $0x38] sm:$0xff]
          %v5009 = vld [vmem:[%s51 + $0x40] sm:$0xff]
          %v5010 = vld [vmem:[%s51 + $0x48] sm:$0xff]
          %v5011 = vld [vmem:[%s51 + $0x50] sm:$0xff]
          %v5012 = vld [vmem:[%s51 + $0x58] sm:$0xff]
          %v5013 = vld [vmem:[%s51 + $0x60] sm:$0xff]
          %v5014 = vld [vmem:[%s51 + $0x68] sm:$0xff]
          %v5015 = vld [vmem:[%s51 + $0x70] sm:$0xff]
          %v5016 = vld [vmem:[%s51 + $0x78] sm:$0xff]
          %v5017 = vld [vmem:[%s53] sm:$0x1]
          %v5019 = vlaneseq
          %v5020 = vshrl.u32 %v5019, 7
          %v5021 = vsub.s32 0, %v5020
          %v5022 = vrot.slane %v5017, %v5021
          %5024 = vmatprep.subr.mxu0 0.0
          %5025 = vmatpush1.msra.mxu0 %v5001
          %5026 = vmatprep.subr.mxu0 0.0
          %5027 = vmatpush1.msra.mxu0 %v5002
          %5028 = vmatprep.subr.mxu0 0.0
          %5029 = vmatpush1.msra.mxu0 %v5003
          %5030 = vmatprep.subr.mxu0 0.0
          %5031 = vmatpush1.msra.mxu0 %v5004
          %5032 = vmatprep.subr.mxu0 0.0
          %5033 = vmatpush1.msra.mxu0 %v5005
          %5034 = vmatprep.subr.mxu0 0.0
          %5035 = vmatpush1.msra.mxu0 %v5006
          %5036 = vmatprep.subr.mxu0 0.0
          %5037 = vmatpush1.msra.mxu0 %v5007
          %5038 = vmatprep.subr.mxu0 0.0
          %5039 = vmatpush1.msra.mxu0 %v5008
          %5040 = vmatprep.subr.mxu0 0.0
          %5041 = vmatpush1.msra.mxu0 %v5009
          %5042 = vmatprep.subr.mxu0 0.0
          %5043 = vmatpush1.msra.mxu0 %v5010
          %5044 = vmatprep.subr.mxu0 0.0
          %5045 = vmatpush1.msra.mxu0 %v5011
          %5046 = vmatprep.subr.mxu0 0.0
          %5047 = vmatpush1.msra.mxu0 %v5012
          %5048 = vmatprep.subr.mxu0 0.0
          %5049 = vmatpush1.msra.mxu0 %v5013
          %5050 = vmatprep.subr.mxu0 0.0
          %5051 = vmatpush1.msra.mxu0 %v5014
          %5052 = vmatprep.subr.mxu0 0.0
          %5053 = vmatpush1.msra.mxu0 %v5015
          %5054 = vmatprep.subr.mxu0 0.0
          %5055 = vmatpush1.msra.mxu0 %v5016
          %5056 = vmatprep.subr.mxu0 0.0
          %5057 = vmatpush1.msra.mxu0 0.0
          %5058 = vmatprep.subr.mxu0 0.0
          %5059 = vmatpush1.msra.mxu0 0.0
          %5060 = vmatprep.subr.mxu0 0.0
          %5061 = vmatpush1.msra.mxu0 0.0
          %5062 = vmatprep.subr.mxu0 0.0
          %5063 = vmatpush1.msra.mxu0 0.0
          %5064 = vmatprep.subr.mxu0 0.0
          %5065 = vmatpush1.msra.mxu0 0.0
          %5066 = vmatprep.subr.mxu0 0.0
          %5067 = vmatpush1.msra.mxu0 0.0
          %5068 = vmatprep.subr.mxu0 0.0
          %5069 = vmatpush1.msra.mxu0 0.0
          %5070 = vmatprep.subr.mxu0 0.0
          %5071 = vmatpush1.msra.mxu0 0.0
          %5072 = vmatprep.subr.mxu0 0.0
          %5073 = vmatpush1.msra.mxu0 0.0
          %5074 = vmatprep.subr.mxu0 0.0
          %5075 = vmatpush1.msra.mxu0 0.0
          %5076 = vmatprep.subr.mxu0 0.0
          %5077 = vmatpush1.msra.mxu0 0.0
          %5078 = vmatprep.subr.mxu0 0.0
          %5079 = vmatpush1.msra.mxu0 0.0
          %5080 = vmatprep.subr.mxu0 0.0
          %5081 = vmatpush1.msra.mxu0 0.0
          %5082 = vmatprep.subr.mxu0 0.0
          %5083 = vmatpush1.msra.mxu0 0.0
          %5084 = vmatprep.subr.mxu0 0.0
          %5085 = vmatpush1.msra.mxu0 0.0
          %5086 = vmatprep.subr.mxu0 0.0
          %5087 = vmatpush1.msra.mxu0 0.0
          %5088 = vmatprep.mubr.f32.mxu0 0.0
          %5089 = vmatmul.mubr.f32.gmra.mrb[0].mxu0 %v4923
          %v5090 = vpop.f32.mrb[0].mxu0
          %v5091 = vadd.f32 %v5022, %v5090
          %v5092 = vpop.f32.mrb[0].mxu0
          %5093 = vmatprep.mubr.f32.mxu0 0.0
          %5094 = vmatmul.mubr.f32.gmra.mrb[0].mxu0 %v4928
          %v5095 = vpop.f32.mrb[0].mxu0
          %v5096 = vadd.f32 %v5022, %v5095
          %v5097 = vpop.f32.mrb[0].mxu0
          %5098 = vmatprep.mubr.f32.mxu0 0.0
          %5099 = vmatmul.mubr.f32.gmra.mrb[0].mxu0 %v4933
          %v5100 = vpop.f32.mrb[0].mxu0
          %v5101 = vadd.f32 %v5022, %v5100
          %v5102 = vpop.f32.mrb[0].mxu0
          %5103 = vmatprep.mubr.f32.mxu0 0.0
          %5104 = vmatmul.mubr.f32.gmra.mrb[0].mxu0 %v4938
          %v5105 = vpop.f32.mrb[0].mxu0
          %v5106 = vadd.f32 %v5022, %v5105
          %v5107 = vpop.f32.mrb[0].mxu0
          %5108 = vmatprep.mubr.f32.mxu0 0.0
          %5109 = vmatmul.mubr.f32.gmra.mrb[0].mxu0 %v4943
          %v5110 = vpop.f32.mrb[0].mxu0
          %v5111 = vadd.f32 %v5022, %v5110
          %v5112 = vpop.f32.mrb[0].mxu0
          %5113 = vmatprep.mubr.f32.mxu0 0.0
          %5114 = vmatmul.mubr.f32.gmra.mrb[0].mxu0 %v4948
          %v5115 = vpop.f32.mrb[0].mxu0
          %v5116 = vadd.f32 %v5022, %v5115
          %v5117 = vpop.f32.mrb[0].mxu0
          %5118 = vmatprep.mubr.f32.mxu0 0.0
          %5119 = vmatmul.mubr.f32.gmra.mrb[0].mxu0 %v4953
          %v5120 = vpop.f32.mrb[0].mxu0
          %v5121 = vadd.f32 %v5022, %v5120
          %v5122 = vpop.f32.mrb[0].mxu0
          %5123 = vmatprep.mubr.f32.mxu0 0.0
          %5124 = vmatmul.mubr.f32.gmra.mrb[0].mxu0 %v4958
          %v5125 = vpop.f32.mrb[0].mxu0
          %v5126 = vadd.f32 %v5022, %v5125
          %v5127 = vpop.f32.mrb[0].mxu0
          %5128 = vmatprep.mubr.f32.mxu0 0.0
          %5129 = vmatmul.mubr.f32.gmra.mrb[0].mxu0 %v4963
          %v5130 = vpop.f32.mrb[0].mxu0
          %v5131 = vadd.f32 %v5022, %v5130
          %v5132 = vpop.f32.mrb[0].mxu0
          %5133 = vmatprep.mubr.f32.mxu0 0.0
          %5134 = vmatmul.mubr.f32.gmra.mrb[0].mxu0 %v4968
          %v5135 = vpop.f32.mrb[0].mxu0
          %v5136 = vadd.f32 %v5022, %v5135
          %v5137 = vpop.f32.mrb[0].mxu0
          %5138 = vmatprep.mubr.f32.mxu0 0.0
          %5139 = vmatmul.mubr.f32.gmra.mrb[0].mxu0 %v4973
          %v5140 = vpop.f32.mrb[0].mxu0
          %v5141 = vadd.f32 %v5022, %v5140
          %v5142 = vpop.f32.mrb[0].mxu0
          %5143 = vmatprep.mubr.f32.mxu0 0.0
          %5144 = vmatmul.mubr.f32.gmra.mrb[0].mxu0 %v4978
          %v5145 = vpop.f32.mrb[0].mxu0
          %v5146 = vadd.f32 %v5022, %v5145
          %v5147 = vpop.f32.mrb[0].mxu0
          %5148 = vmatprep.mubr.f32.mxu0 0.0
          %5149 = vmatmul.mubr.f32.gmra.mrb[0].mxu0 %v4983
          %v5150 = vpop.f32.mrb[0].mxu0
          %v5151 = vadd.f32 %v5022, %v5150
          %v5152 = vpop.f32.mrb[0].mxu0
          %5153 = vmatprep.mubr.f32.mxu0 0.0
          %5154 = vmatmul.mubr.f32.gmra.mrb[0].mxu0 %v4988
          %v5155 = vpop.f32.mrb[0].mxu0
          %v5156 = vadd.f32 %v5022, %v5155
          %v5157 = vpop.f32.mrb[0].mxu0
          %5158 = vmatprep.mubr.f32.mxu0 0.0
          %5159 = vmatmul.mubr.f32.gmra.mrb[0].mxu0 %v4993
          %v5160 = vpop.f32.mrb[0].mxu0
          %v5161 = vadd.f32 %v5022, %v5160
          %v5162 = vpop.f32.mrb[0].mxu0
          %5163 = vmatprep.mubr.f32.mxu0 0.0
          %5164 = vmatmul.mubr.f32.gmra.mrb[0].mxu0 %v4998
          %v5165 = vpop.f32.mrb[0].mxu0
          %v5166 = vadd.f32 %v5022, %v5165
          %v5167 = vpop.f32.mrb[0].mxu0
          %5168 = vdwg.mxu0
          %v5169 = vld [vmem:[%s59] sm:$0xff]
          %v5170 = vld [vmem:[%s59 + $0x8] sm:$0xff]
          %v5171 = vld [vmem:[%s59 + $0x10] sm:$0xff]
          %v5173 = vsel %vm2357, %v5091, 0
          %v5176 = vsel %vm2357, %v5096, 0
          %v5179 = vsel %vm2357, %v5101, 0
          %v5182 = vsel %vm2357, %v5106, 0
          %v5185 = vsel %vm2357, %v5111, 0
          %v5188 = vsel %vm2357, %v5116, 0
          %v5191 = vsel %vm2357, %v5121, 0
          %v5194 = vsel %vm2357, %v5126, 0
          %v5197 = vsel %vm2357, %v5131, 0
          %v5200 = vsel %vm2357, %v5136, 0
          %v5203 = vsel %vm2357, %v5141, 0
          %v5206 = vsel %vm2357, %v5146, 0
          %v5209 = vsel %vm2357, %v5151, 0
          %v5212 = vsel %vm2357, %v5156, 0
          %v5215 = vsel %vm2357, %v5161, 0
          %v5218 = vsel %vm2357, %v5166, 0
          %v5221 = vsel %vm2357, %v5169, 0
          %v5224 = vsel %vm2357, %v5170, 0
          %v5227 = vsel %vm2357, %v5171, 0
          %5229 = vmatprep.subr.mxu0 0.0
          %5230 = vmatpush1.xpose.msra.mxu0 %v5221
          %5231 = vmatprep.subr.mxu0 0.0
          %5232 = vmatpush1.xpose.msra.mxu0 %v5224
          %5233 = vmatprep.subr.mxu0 0.0
          %5234 = vmatpush1.xpose.msra.mxu0 %v5227
          %5235 = vmatprep.subr.mxu0 0.0
          %5236 = vmatpush1.xpose.msra.mxu0 0.0
          %5237 = vmatprep.subr.mxu0 0.0
          %5238 = vmatpush1.xpose.msra.mxu0 0.0
          %5239 = vmatprep.subr.mxu0 0.0
          %5240 = vmatpush1.xpose.msra.mxu0 0.0
          %5241 = vmatprep.subr.mxu0 0.0
          %5242 = vmatpush1.xpose.msra.mxu0 0.0
          %5243 = vmatprep.subr.mxu0 0.0
          %5244 = vmatpush1.xpose.msra.mxu0 0.0
          %5245 = vmatprep.subr.mxu0 0.0
          %5246 = vmatpush1.xpose.msra.mxu0 0.0
          %5247 = vmatprep.subr.mxu0 0.0
          %5248 = vmatpush1.xpose.msra.mxu0 0.0
          %5249 = vmatprep.subr.mxu0 0.0
          %5250 = vmatpush1.xpose.msra.mxu0 0.0
          %5251 = vmatprep.subr.mxu0 0.0
          %5252 = vmatpush1.xpose.msra.mxu0 0.0
          %5253 = vmatprep.subr.mxu0 0.0
          %5254 = vmatpush1.xpose.msra.mxu0 0.0
          %5255 = vmatprep.subr.mxu0 0.0
          %5256 = vmatpush1.xpose.msra.mxu0 0.0
          %5257 = vmatprep.subr.mxu0 0.0
          %5258 = vmatpush1.xpose.msra.mxu0 0.0
          %5259 = vmatprep.subr.mxu0 0.0
          %5260 = vmatpush1.xpose.msra.mxu0 0.0
          %5261 = vmatprep.subr.mxu0 0.0
          %5262 = vmatpush1.xpose.msra.mxu0 0.0
          %5263 = vmatprep.subr.mxu0 0.0
          %5264 = vmatpush1.xpose.msra.mxu0 0.0
          %5265 = vmatprep.subr.mxu0 0.0
          %5266 = vmatpush1.xpose.msra.mxu0 0.0
          %5267 = vmatprep.subr.mxu0 0.0
          %5268 = vmatpush1.xpose.msra.mxu0 0.0
          %5269 = vmatprep.subr.mxu0 0.0
          %5270 = vmatpush1.xpose.msra.mxu0 0.0
          %5271 = vmatprep.subr.mxu0 0.0
          %5272 = vmatpush1.xpose.msra.mxu0 0.0
          %5273 = vmatprep.subr.mxu0 0.0
          %5274 = vmatpush1.xpose.msra.mxu0 0.0
          %5275 = vmatprep.subr.mxu0 0.0
          %5276 = vmatpush1.xpose.msra.mxu0 0.0
          %5277 = vmatprep.subr.mxu0 0.0
          %5278 = vmatpush1.xpose.msra.mxu0 0.0
          %5279 = vmatprep.subr.mxu0 0.0
          %5280 = vmatpush1.xpose.msra.mxu0 0.0
          %5281 = vmatprep.subr.mxu0 0.0
          %5282 = vmatpush1.xpose.msra.mxu0 0.0
          %5283 = vmatprep.subr.mxu0 0.0
          %5284 = vmatpush1.xpose.msra.mxu0 0.0
          %5285 = vmatprep.subr.mxu0 0.0
          %5286 = vmatpush1.xpose.msra.mxu0 0.0
          %5287 = vmatprep.subr.mxu0 0.0
          %5288 = vmatpush1.xpose.msra.mxu0 0.0
          %5289 = vmatprep.subr.mxu0 0.0
          %5290 = vmatpush1.xpose.msra.mxu0 0.0
          %5291 = vmatprep.subr.mxu0 0.0
          %5292 = vmatpush1.xpose.msra.mxu0 0.0
          %5293 = vmatprep.mubr.f32.mxu0 0.0
          %5294 = vmatmul.mubr.f32.gmra.mrb[0].mxu0 %v5173
          %v5295 = vpop.f32.mrb[0].mxu0
          %v5296 = vadd.f32 0.0, %v5295
          %v5297 = vpop.f32.mrb[0].mxu0
          %5298 = vmatprep.mubr.f32.mxu0 0.0
          %5299 = vmatmul.mubr.f32.gmra.mrb[0].mxu0 %v5176
          %v5300 = vpop.f32.mrb[0].mxu0
          %v5301 = vadd.f32 0.0, %v5300
          %v5302 = vpop.f32.mrb[0].mxu0
          %5303 = vmatprep.mubr.f32.mxu0 0.0
          %5304 = vmatmul.mubr.f32.gmra.mrb[0].mxu0 %v5179
          %v5305 = vpop.f32.mrb[0].mxu0
          %v5306 = vadd.f32 0.0, %v5305
          %v5307 = vpop.f32.mrb[0].mxu0
          %5308 = vmatprep.mubr.f32.mxu0 0.0
          %5309 = vmatmul.mubr.f32.gmra.mrb[0].mxu0 %v5182
          %v5310 = vpop.f32.mrb[0].mxu0
          %v5311 = vadd.f32 0.0, %v5310
          %v5312 = vpop.f32.mrb[0].mxu0
          %5313 = vmatprep.mubr.f32.mxu0 0.0
          %5314 = vmatmul.mubr.f32.gmra.mrb[0].mxu0 %v5185
          %v5315 = vpop.f32.mrb[0].mxu0
          %v5316 = vadd.f32 0.0, %v5315
          %v5317 = vpop.f32.mrb[0].mxu0
          %5318 = vmatprep.mubr.f32.mxu0 0.0
          %5319 = vmatmul.mubr.f32.gmra.mrb[0].mxu0 %v5188
          %v5320 = vpop.f32.mrb[0].mxu0
          %v5321 = vadd.f32 0.0, %v5320
          %v5322 = vpop.f32.mrb[0].mxu0
          %5323 = vmatprep.mubr.f32.mxu0 0.0
          %5324 = vmatmul.mubr.f32.gmra.mrb[0].mxu0 %v5191
          %v5325 = vpop.f32.mrb[0].mxu0
          %v5326 = vadd.f32 0.0, %v5325
          %v5327 = vpop.f32.mrb[0].mxu0
          %5328 = vmatprep.mubr.f32.mxu0 0.0
          %5329 = vmatmul.mubr.f32.gmra.mrb[0].mxu0 %v5194
          %v5330 = vpop.f32.mrb[0].mxu0
          %v5331 = vadd.f32 0.0, %v5330
          %v5332 = vpop.f32.mrb[0].mxu0
          %5333 = vmatprep.mubr.f32.mxu0 0.0
          %5334 = vmatmul.mubr.f32.gmra.mrb[0].mxu0 %v5197
          %v5335 = vpop.f32.mrb[0].mxu0
          %v5336 = vadd.f32 0.0, %v5335
          %v5337 = vpop.f32.mrb[0].mxu0
          %5338 = vmatprep.mubr.f32.mxu0 0.0
          %5339 = vmatmul.mubr.f32.gmra.mrb[0].mxu0 %v5200
          %v5340 = vpop.f32.mrb[0].mxu0
          %v5341 = vadd.f32 0.0, %v5340
          %v5342 = vpop.f32.mrb[0].mxu0
          %5343 = vmatprep.mubr.f32.mxu0 0.0
          %5344 = vmatmul.mubr.f32.gmra.mrb[0].mxu0 %v5203
          %v5345 = vpop.f32.mrb[0].mxu0
          %v5346 = vadd.f32 0.0, %v5345
          %v5347 = vpop.f32.mrb[0].mxu0
          %5348 = vmatprep.mubr.f32.mxu0 0.0
          %5349 = vmatmul.mubr.f32.gmra.mrb[0].mxu0 %v5206
          %v5350 = vpop.f32.mrb[0].mxu0
          %v5351 = vadd.f32 0.0, %v5350
          %v5352 = vpop.f32.mrb[0].mxu0
          %5353 = vmatprep.mubr.f32.mxu0 0.0
          %5354 = vmatmul.mubr.f32.gmra.mrb[0].mxu0 %v5209
          %v5355 = vpop.f32.mrb[0].mxu0
          %v5356 = vadd.f32 0.0, %v5355
          %v5357 = vpop.f32.mrb[0].mxu0
          %5358 = vmatprep.mubr.f32.mxu0 0.0
          %5359 = vmatmul.mubr.f32.gmra.mrb[0].mxu0 %v5212
          %v5360 = vpop.f32.mrb[0].mxu0
          %v5361 = vadd.f32 0.0, %v5360
          %v5362 = vpop.f32.mrb[0].mxu0
          %5363 = vmatprep.mubr.f32.mxu0 0.0
          %5364 = vmatmul.mubr.f32.gmra.mrb[0].mxu0 %v5215
          %v5365 = vpop.f32.mrb[0].mxu0
          %v5366 = vadd.f32 0.0, %v5365
          %v5367 = vpop.f32.mrb[0].mxu0
          %5368 = vmatprep.mubr.f32.mxu0 0.0
          %5369 = vmatmul.mubr.f32.gmra.mrb[0].mxu0 %v5218
          %v5370 = vpop.f32.mrb[0].mxu0
          %v5371 = vadd.f32 0.0, %v5370
          %v5372 = vpop.f32.mrb[0].mxu0
          %5373 = vdwg.mxu0
          %v5374 = vld [vmem:[%s55] sm:$0xff]
          %v5375 = vld [vmem:[%s55 + $0x8] sm:$0xff]
          %v5376 = vld [vmem:[%s55 + $0x10] sm:$0xff]
          %v5377 = vld [vmem:[%s57] sm:$0x1]
          %v5379 = vlaneseq
          %v5380 = vshrl.u32 %v5379, 7
          %v5381 = vsub.s32 0, %v5380
          %v5382 = vrot.slane %v5377, %v5381
          %v5385 = vsel %vm3341, %v5296, 0
          %v5388 = vsel %vm3341, %v5301, 0
          %v5391 = vsel %vm3341, %v5306, 0
          %v5394 = vsel %vm3341, %v5311, 0
          %v5397 = vsel %vm3341, %v5316, 0
          %v5400 = vsel %vm3341, %v5321, 0
          %v5403 = vsel %vm3341, %v5326, 0
          %v5406 = vsel %vm3341, %v5331, 0
          %v5409 = vsel %vm3341, %v5336, 0
          %v5412 = vsel %vm3341, %v5341, 0
          %v5415 = vsel %vm3341, %v5346, 0
          %v5418 = vsel %vm3341, %v5351, 0
          %v5421 = vsel %vm3341, %v5356, 0
          %v5424 = vsel %vm3341, %v5361, 0
          %v5427 = vsel %vm3341, %v5366, 0
          %v5430 = vsel %vm3341, %v5371, 0
          %5432 = vmatprep.subr.mxu0 0.0
          %5433 = vmatpush1.msra.mxu0 %v5374
          %5434 = vmatprep.subr.mxu0 0.0
          %5435 = vmatpush1.msra.mxu0 %v5375
          %5436 = vmatprep.subr.mxu0 0.0
          %5437 = vmatpush1.msra.mxu0 %v5376
          %5438 = vmatprep.subr.mxu0 0.0
          %5439 = vmatpush1.msra.mxu0 0.0
          %5440 = vmatprep.subr.mxu0 0.0
          %5441 = vmatpush1.msra.mxu0 0.0
          %5442 = vmatprep.subr.mxu0 0.0
          %5443 = vmatpush1.msra.mxu0 0.0
          %5444 = vmatprep.subr.mxu0 0.0
          %5445 = vmatpush1.msra.mxu0 0.0
          %5446 = vmatprep.subr.mxu0 0.0
          %5447 = vmatpush1.msra.mxu0 0.0
          %5448 = vmatprep.subr.mxu0 0.0
          %5449 = vmatpush1.msra.mxu0 0.0
          %5450 = vmatprep.subr.mxu0 0.0
          %5451 = vmatpush1.msra.mxu0 0.0
          %5452 = vmatprep.subr.mxu0 0.0
          %5453 = vmatpush1.msra.mxu0 0.0
          %5454 = vmatprep.subr.mxu0 0.0
          %5455 = vmatpush1.msra.mxu0 0.0
          %5456 = vmatprep.subr.mxu0 0.0
          %5457 = vmatpush1.msra.mxu0 0.0
          %5458 = vmatprep.subr.mxu0 0.0
          %5459 = vmatpush1.msra.mxu0 0.0
          %5460 = vmatprep.subr.mxu0 0.0
          %5461 = vmatpush1.msra.mxu0 0.0
          %5462 = vmatprep.subr.mxu0 0.0
          %5463 = vmatpush1.msra.mxu0 0.0
          %5464 = vmatprep.subr.mxu0 0.0
          %5465 = vmatpush1.msra.mxu0 0.0
          %5466 = vmatprep.subr.mxu0 0.0
          %5467 = vmatpush1.msra.mxu0 0.0
          %5468 = vmatprep.subr.mxu0 0.0
          %5469 = vmatpush1.msra.mxu0 0.0
          %5470 = vmatprep.subr.mxu0 0.0
          %5471 = vmatpush1.msra.mxu0 0.0
          %5472 = vmatprep.subr.mxu0 0.0
          %5473 = vmatpush1.msra.mxu0 0.0
          %5474 = vmatprep.subr.mxu0 0.0
          %5475 = vmatpush1.msra.mxu0 0.0
          %5476 = vmatprep.subr.mxu0 0.0
          %5477 = vmatpush1.msra.mxu0 0.0
          %5478 = vmatprep.subr.mxu0 0.0
          %5479 = vmatpush1.msra.mxu0 0.0
          %5480 = vmatprep.subr.mxu0 0.0
          %5481 = vmatpush1.msra.mxu0 0.0
          %5482 = vmatprep.subr.mxu0 0.0
          %5483 = vmatpush1.msra.mxu0 0.0
          %5484 = vmatprep.subr.mxu0 0.0
          %5485 = vmatpush1.msra.mxu0 0.0
          %5486 = vmatprep.subr.mxu0 0.0
          %5487 = vmatpush1.msra.mxu0 0.0
          %5488 = vmatprep.subr.mxu0 0.0
          %5489 = vmatpush1.msra.mxu0 0.0
          %5490 = vmatprep.subr.mxu0 0.0
          %5491 = vmatpush1.msra.mxu0 0.0
          %5492 = vmatprep.subr.mxu0 0.0
          %5493 = vmatpush1.msra.mxu0 0.0
          %5494 = vmatprep.subr.mxu0 0.0
          %5495 = vmatpush1.msra.mxu0 0.0
          %5496 = vmatprep.mubr.f32.mxu0 0.0
          %5497 = vmatmul.mubr.f32.gmra.mrb[0].mxu0 %v5385
          %v5498 = vpop.f32.mrb[0].mxu0
          %v5499 = vadd.f32 %v5382, %v5498
          %v5500 = vpop.f32.mrb[0].mxu0
          %5501 = vmatprep.mubr.f32.mxu0 0.0
          %5502 = vmatmul.mubr.f32.gmra.mrb[0].mxu0 %v5388
          %v5503 = vpop.f32.mrb[0].mxu0
          %v5504 = vadd.f32 %v5382, %v5503
          %v5505 = vpop.f32.mrb[0].mxu0
          %5506 = vmatprep.mubr.f32.mxu0 0.0
          %5507 = vmatmul.mubr.f32.gmra.mrb[0].mxu0 %v5391
          %v5508 = vpop.f32.mrb[0].mxu0
          %v5509 = vadd.f32 %v5382, %v5508
          %v5510 = vpop.f32.mrb[0].mxu0
          %5511 = vmatprep.mubr.f32.mxu0 0.0
          %5512 = vmatmul.mubr.f32.gmra.mrb[0].mxu0 %v5394
          %v5513 = vpop.f32.mrb[0].mxu0
          %v5514 = vadd.f32 %v5382, %v5513
          %v5515 = vpop.f32.mrb[0].mxu0
          %5516 = vmatprep.mubr.f32.mxu0 0.0
          %5517 = vmatmul.mubr.f32.gmra.mrb[0].mxu0 %v5397
          %v5518 = vpop.f32.mrb[0].mxu0
          %v5519 = vadd.f32 %v5382, %v5518
          %v5520 = vpop.f32.mrb[0].mxu0
          %5521 = vmatprep.mubr.f32.mxu0 0.0
          %5522 = vmatmul.mubr.f32.gmra.mrb[0].mxu0 %v5400
          %v5523 = vpop.f32.mrb[0].mxu0
          %v5524 = vadd.f32 %v5382, %v5523
          %v5525 = vpop.f32.mrb[0].mxu0
          %5526 = vmatprep.mubr.f32.mxu0 0.0
          %5527 = vmatmul.mubr.f32.gmra.mrb[0].mxu0 %v5403
          %v5528 = vpop.f32.mrb[0].mxu0
          %v5529 = vadd.f32 %v5382, %v5528
          %v5530 = vpop.f32.mrb[0].mxu0
          %5531 = vmatprep.mubr.f32.mxu0 0.0
          %5532 = vmatmul.mubr.f32.gmra.mrb[0].mxu0 %v5406
          %v5533 = vpop.f32.mrb[0].mxu0
          %v5534 = vadd.f32 %v5382, %v5533
          %v5535 = vpop.f32.mrb[0].mxu0
          %5536 = vmatprep.mubr.f32.mxu0 0.0
          %5537 = vmatmul.mubr.f32.gmra.mrb[0].mxu0 %v5409
          %v5538 = vpop.f32.mrb[0].mxu0
          %v5539 = vadd.f32 %v5382, %v5538
          %v5540 = vpop.f32.mrb[0].mxu0
          %5541 = vmatprep.mubr.f32.mxu0 0.0
          %5542 = vmatmul.mubr.f32.gmra.mrb[0].mxu0 %v5412
          %v5543 = vpop.f32.mrb[0].mxu0
          %v5544 = vadd.f32 %v5382, %v5543
          %v5545 = vpop.f32.mrb[0].mxu0
          %5546 = vmatprep.mubr.f32.mxu0 0.0
          %5547 = vmatmul.mubr.f32.gmra.mrb[0].mxu0 %v5415
          %v5548 = vpop.f32.mrb[0].mxu0
          %v5549 = vadd.f32 %v5382, %v5548
          %v5550 = vpop.f32.mrb[0].mxu0
          %5551 = vmatprep.mubr.f32.mxu0 0.0
          %5552 = vmatmul.mubr.f32.gmra.mrb[0].mxu0 %v5418
          %v5553 = vpop.f32.mrb[0].mxu0
          %v5554 = vadd.f32 %v5382, %v5553
          %v5555 = vpop.f32.mrb[0].mxu0
          %5556 = vmatprep.mubr.f32.mxu0 0.0
          %5557 = vmatmul.mubr.f32.gmra.mrb[0].mxu0 %v5421
          %v5558 = vpop.f32.mrb[0].mxu0
          %v5559 = vadd.f32 %v5382, %v5558
          %v5560 = vpop.f32.mrb[0].mxu0
          %5561 = vmatprep.mubr.f32.mxu0 0.0
          %5562 = vmatmul.mubr.f32.gmra.mrb[0].mxu0 %v5424
          %v5563 = vpop.f32.mrb[0].mxu0
          %v5564 = vadd.f32 %v5382, %v5563
          %v5565 = vpop.f32.mrb[0].mxu0
          %5566 = vmatprep.mubr.f32.mxu0 0.0
          %5567 = vmatmul.mubr.f32.gmra.mrb[0].mxu0 %v5427
          %v5568 = vpop.f32.mrb[0].mxu0
          %v5569 = vadd.f32 %v5382, %v5568
          %v5570 = vpop.f32.mrb[0].mxu0
          %5571 = vmatprep.mubr.f32.mxu0 0.0
          %5572 = vmatmul.mubr.f32.gmra.mrb[0].mxu0 %v5430
          %v5573 = vpop.f32.mrb[0].mxu0
          %v5574 = vadd.f32 %v5382, %v5573
          %v5575 = vpop.f32.mrb[0].mxu0
          %5576 = vdwg.mxu0
          %v5577 = vld [vmem:[%s61] sm:$0xff]
          %v5578 = vld [vmem:[%s61 + $0x8] sm:$0xff]
          %v5579 = vld [vmem:[%s61 + $0x10] sm:$0xff]
          %v5580 = vld [vmem:[%s61 + $0x18] sm:$0xff]
          %v5581 = vld [vmem:[%s61 + $0x20] sm:$0xff]
          %v5582 = vld [vmem:[%s61 + $0x28] sm:$0xff]
          %v5583 = vld [vmem:[%s61 + $0x30] sm:$0xff]
          %v5584 = vld [vmem:[%s61 + $0x38] sm:$0xff]
          %v5585 = vld [vmem:[%s61 + $0x40] sm:$0xff]
          %v5586 = vld [vmem:[%s61 + $0x48] sm:$0xff]
          %v5587 = vld [vmem:[%s61 + $0x50] sm:$0xff]
          %v5588 = vld [vmem:[%s61 + $0x58] sm:$0xff]
          %v5589 = vld [vmem:[%s61 + $0x60] sm:$0xff]
          %v5590 = vld [vmem:[%s61 + $0x68] sm:$0xff]
          %v5591 = vld [vmem:[%s61 + $0x70] sm:$0xff]
          %v5592 = vld [vmem:[%s61 + $0x78] sm:$0xff]
          %v5594 = vsel %vm2357, %v5499, 0
          %v5597 = vsel %vm2357, %v5504, 0
          %v5600 = vsel %vm2357, %v5509, 0
          %v5603 = vsel %vm2357, %v5514, 0
          %v5606 = vsel %vm2357, %v5519, 0
          %v5609 = vsel %vm2357, %v5524, 0
          %v5612 = vsel %vm2357, %v5529, 0
          %v5615 = vsel %vm2357, %v5534, 0
          %v5618 = vsel %vm2357, %v5539, 0
          %v5621 = vsel %vm2357, %v5544, 0
          %v5624 = vsel %vm2357, %v5549, 0
          %v5627 = vsel %vm2357, %v5554, 0
          %v5630 = vsel %vm2357, %v5559, 0
          %v5633 = vsel %vm2357, %v5564, 0
          %v5636 = vsel %vm2357, %v5569, 0
          %v5639 = vsel %vm2357, %v5574, 0
          %v5642 = vsel %vm2357, %v5577, 0
          %v5645 = vsel %vm2357, %v5578, 0
          %v5648 = vsel %vm2357, %v5579, 0
          %v5651 = vsel %vm2357, %v5580, 0
          %v5654 = vsel %vm2357, %v5581, 0
          %v5657 = vsel %vm2357, %v5582, 0
          %v5660 = vsel %vm2357, %v5583, 0
          %v5663 = vsel %vm2357, %v5584, 0
          %v5666 = vsel %vm2357, %v5585, 0
          %v5669 = vsel %vm2357, %v5586, 0
          %v5672 = vsel %vm2357, %v5587, 0
          %v5675 = vsel %vm2357, %v5588, 0
          %v5678 = vsel %vm2357, %v5589, 0
          %v5681 = vsel %vm2357, %v5590, 0
          %v5684 = vsel %vm2357, %v5591, 0
          %v5687 = vsel %vm2357, %v5592, 0
          %5689 = vmatprep.subr.mxu0 0.0
          %5690 = vmatpush1.xpose.msra.mxu0 %v5642
          %5691 = vmatprep.subr.mxu0 0.0
          %5692 = vmatpush1.xpose.msra.mxu0 %v5645
          %5693 = vmatprep.subr.mxu0 0.0
          %5694 = vmatpush1.xpose.msra.mxu0 %v5648
          %5695 = vmatprep.subr.mxu0 0.0
          %5696 = vmatpush1.xpose.msra.mxu0 %v5651
          %5697 = vmatprep.subr.mxu0 0.0
          %5698 = vmatpush1.xpose.msra.mxu0 %v5654
          %5699 = vmatprep.subr.mxu0 0.0
          %5700 = vmatpush1.xpose.msra.mxu0 %v5657
          %5701 = vmatprep.subr.mxu0 0.0
          %5702 = vmatpush1.xpose.msra.mxu0 %v5660
          %5703 = vmatprep.subr.mxu0 0.0
          %5704 = vmatpush1.xpose.msra.mxu0 %v5663
          %5705 = vmatprep.subr.mxu0 0.0
          %5706 = vmatpush1.xpose.msra.mxu0 %v5666
          %5707 = vmatprep.subr.mxu0 0.0
          %5708 = vmatpush1.xpose.msra.mxu0 %v5669
          %5709 = vmatprep.subr.mxu0 0.0
          %5710 = vmatpush1.xpose.msra.mxu0 %v5672
          %5711 = vmatprep.subr.mxu0 0.0
          %5712 = vmatpush1.xpose.msra.mxu0 %v5675
          %5713 = vmatprep.subr.mxu0 0.0
          %5714 = vmatpush1.xpose.msra.mxu0 %v5678
          %5715 = vmatprep.subr.mxu0 0.0
          %5716 = vmatpush1.xpose.msra.mxu0 %v5681
          %5717 = vmatprep.subr.mxu0 0.0
          %5718 = vmatpush1.xpose.msra.mxu0 %v5684
          %5719 = vmatprep.subr.mxu0 0.0
          %5720 = vmatpush1.xpose.msra.mxu0 %v5687
          %5721 = vmatprep.subr.mxu0 0.0
          %5722 = vmatpush1.xpose.msra.mxu0 0.0
          %5723 = vmatprep.subr.mxu0 0.0
          %5724 = vmatpush1.xpose.msra.mxu0 0.0
          %5725 = vmatprep.subr.mxu0 0.0
          %5726 = vmatpush1.xpose.msra.mxu0 0.0
          %5727 = vmatprep.subr.mxu0 0.0
          %5728 = vmatpush1.xpose.msra.mxu0 0.0
          %5729 = vmatprep.subr.mxu0 0.0
          %5730 = vmatpush1.xpose.msra.mxu0 0.0
          %5731 = vmatprep.subr.mxu0 0.0
          %5732 = vmatpush1.xpose.msra.mxu0 0.0
          %5733 = vmatprep.subr.mxu0 0.0
          %5734 = vmatpush1.xpose.msra.mxu0 0.0
          %5735 = vmatprep.subr.mxu0 0.0
          %5736 = vmatpush1.xpose.msra.mxu0 0.0
          %5737 = vmatprep.subr.mxu0 0.0
          %5738 = vmatpush1.xpose.msra.mxu0 0.0
          %5739 = vmatprep.subr.mxu0 0.0
          %5740 = vmatpush1.xpose.msra.mxu0 0.0
          %5741 = vmatprep.subr.mxu0 0.0
          %5742 = vmatpush1.xpose.msra.mxu0 0.0
          %5743 = vmatprep.subr.mxu0 0.0
          %5744 = vmatpush1.xpose.msra.mxu0 0.0
          %5745 = vmatprep.subr.mxu0 0.0
          %5746 = vmatpush1.xpose.msra.mxu0 0.0
          %5747 = vmatprep.subr.mxu0 0.0
          %5748 = vmatpush1.xpose.msra.mxu0 0.0
          %5749 = vmatprep.subr.mxu0 0.0
          %5750 = vmatpush1.xpose.msra.mxu0 0.0
          %5751 = vmatprep.subr.mxu0 0.0
          %5752 = vmatpush1.xpose.msra.mxu0 0.0
          %5753 = vmatprep.mubr.f32.mxu0 0.0
          %5754 = vmatmul.mubr.f32.gmra.mrb[0].mxu0 %v5594
          %v5755 = vpop.f32.mrb[0].mxu0
          %v5756 = vadd.f32 0.0, %v5755
          %v5757 = vpop.f32.mrb[0].mxu0
          %5758 = vmatprep.mubr.f32.mxu0 0.0
          %5759 = vmatmul.mubr.f32.gmra.mrb[0].mxu0 %v5597
          %v5760 = vpop.f32.mrb[0].mxu0
          %v5761 = vadd.f32 0.0, %v5760
          %v5762 = vpop.f32.mrb[0].mxu0
          %5763 = vmatprep.mubr.f32.mxu0 0.0
          %5764 = vmatmul.mubr.f32.gmra.mrb[0].mxu0 %v5600
          %v5765 = vpop.f32.mrb[0].mxu0
          %v5766 = vadd.f32 0.0, %v5765
          %v5767 = vpop.f32.mrb[0].mxu0
          %5768 = vmatprep.mubr.f32.mxu0 0.0
          %5769 = vmatmul.mubr.f32.gmra.mrb[0].mxu0 %v5603
          %v5770 = vpop.f32.mrb[0].mxu0
          %v5771 = vadd.f32 0.0, %v5770
          %v5772 = vpop.f32.mrb[0].mxu0
          %5773 = vmatprep.mubr.f32.mxu0 0.0
          %5774 = vmatmul.mubr.f32.gmra.mrb[0].mxu0 %v5606
          %v5775 = vpop.f32.mrb[0].mxu0
          %v5776 = vadd.f32 0.0, %v5775
          %v5777 = vpop.f32.mrb[0].mxu0
          %5778 = vmatprep.mubr.f32.mxu0 0.0
          %5779 = vmatmul.mubr.f32.gmra.mrb[0].mxu0 %v5609
          %v5780 = vpop.f32.mrb[0].mxu0
          %v5781 = vadd.f32 0.0, %v5780
          %v5782 = vpop.f32.mrb[0].mxu0
          %5783 = vmatprep.mubr.f32.mxu0 0.0
          %5784 = vmatmul.mubr.f32.gmra.mrb[0].mxu0 %v5612
          %v5785 = vpop.f32.mrb[0].mxu0
          %v5786 = vadd.f32 0.0, %v5785
          %v5787 = vpop.f32.mrb[0].mxu0
          %5788 = vmatprep.mubr.f32.mxu0 0.0
          %5789 = vmatmul.mubr.f32.gmra.mrb[0].mxu0 %v5615
          %v5790 = vpop.f32.mrb[0].mxu0
          %v5791 = vadd.f32 0.0, %v5790
          %v5792 = vpop.f32.mrb[0].mxu0
          %5793 = vmatprep.mubr.f32.mxu0 0.0
          %5794 = vmatmul.mubr.f32.gmra.mrb[0].mxu0 %v5618
          %v5795 = vpop.f32.mrb[0].mxu0
          %v5796 = vadd.f32 0.0, %v5795
          %v5797 = vpop.f32.mrb[0].mxu0
          %5798 = vmatprep.mubr.f32.mxu0 0.0
          %5799 = vmatmul.mubr.f32.gmra.mrb[0].mxu0 %v5621
          %v5800 = vpop.f32.mrb[0].mxu0
          %v5801 = vadd.f32 0.0, %v5800
          %v5802 = vpop.f32.mrb[0].mxu0
          %5803 = vmatprep.mubr.f32.mxu0 0.0
          %5804 = vmatmul.mubr.f32.gmra.mrb[0].mxu0 %v5624
          %v5805 = vpop.f32.mrb[0].mxu0
          %v5806 = vadd.f32 0.0, %v5805
          %v5807 = vpop.f32.mrb[0].mxu0
          %5808 = vmatprep.mubr.f32.mxu0 0.0
          %5809 = vmatmul.mubr.f32.gmra.mrb[0].mxu0 %v5627
          %v5810 = vpop.f32.mrb[0].mxu0
          %v5811 = vadd.f32 0.0, %v5810
          %v5812 = vpop.f32.mrb[0].mxu0
          %5813 = vmatprep.mubr.f32.mxu0 0.0
          %5814 = vmatmul.mubr.f32.gmra.mrb[0].mxu0 %v5630
          %v5815 = vpop.f32.mrb[0].mxu0
          %v5816 = vadd.f32 0.0, %v5815
          %v5817 = vpop.f32.mrb[0].mxu0
          %5818 = vmatprep.mubr.f32.mxu0 0.0
          %5819 = vmatmul.mubr.f32.gmra.mrb[0].mxu0 %v5633
          %v5820 = vpop.f32.mrb[0].mxu0
          %v5821 = vadd.f32 0.0, %v5820
          %v5822 = vpop.f32.mrb[0].mxu0
          %5823 = vmatprep.mubr.f32.mxu0 0.0
          %5824 = vmatmul.mubr.f32.gmra.mrb[0].mxu0 %v5636
          %v5825 = vpop.f32.mrb[0].mxu0
          %v5826 = vadd.f32 0.0, %v5825
          %v5827 = vpop.f32.mrb[0].mxu0
          %5828 = vmatprep.mubr.f32.mxu0 0.0
          %5829 = vmatmul.mubr.f32.gmra.mrb[0].mxu0 %v5639
          %v5830 = vpop.f32.mrb[0].mxu0
          %v5831 = vadd.f32 0.0, %v5830
          %v5832 = vpop.f32.mrb[0].mxu0
          %5833 = vdwg.mxu0
          %v5834 = vmax.f32 %v4825, %v5756
          %v5835 = vmax.f32 %v4826, %v5761
          %v5836 = vmax.f32 %v4827, %v5766
          %v5837 = vmax.f32 %v4828, %v5771
          %v5838 = vmax.f32 %v4829, %v5776
          %v5839 = vmax.f32 %v4830, %v5781
          %v5840 = vmax.f32 %v4831, %v5786
          %v5841 = vmax.f32 %v4832, %v5791
          %v5842 = vmax.f32 %v4833, %v5796
          %v5843 = vmax.f32 %v4834, %v5801
          %v5844 = vmax.f32 %v4835, %v5806
          %v5845 = vmax.f32 %v4836, %v5811
          %v5846 = vmax.f32 %v4837, %v5816
          %v5847 = vmax.f32 %v4838, %v5821
          %v5848 = vmax.f32 %v4839, %v5826
          %v5849 = vmax.f32 %v4840, %v5831
          %5850 = vst [vmem:[%s1145] sm:$0xff] %v5834
          %5851 = vst [vmem:[%s1145 + $0x8] sm:$0xff] %v5835
          %5852 = vst [vmem:[%s1145 + $0x10] sm:$0xff] %v5836
          %5853 = vst [vmem:[%s1145 + $0x18] sm:$0xff] %v5837
          %5854 = vst [vmem:[%s1145 + $0x20] sm:$0xff] %v5838
          %5855 = vst [vmem:[%s1145 + $0x28] sm:$0xff] %v5839
          %5856 = vst [vmem:[%s1145 + $0x30] sm:$0xff] %v5840
          %5857 = vst [vmem:[%s1145 + $0x38] sm:$0xff] %v5841
          %5858 = vst [vmem:[%s1145 + $0x40] sm:$0xff] %v5842
          %5859 = vst [vmem:[%s1145 + $0x48] sm:$0xff] %v5843
          %5860 = vst [vmem:[%s1145 + $0x50] sm:$0xff] %v5844
          %5861 = vst [vmem:[%s1145 + $0x58] sm:$0xff] %v5845
          %5862 = vst [vmem:[%s1145 + $0x60] sm:$0xff] %v5846
          %5863 = vst [vmem:[%s1145 + $0x68] sm:$0xff] %v5847
          %5864 = vst [vmem:[%s1145 + $0x70] sm:$0xff] %v5848
          %5865 = vst [vmem:[%s1145 + $0x78] sm:$0xff] %v5849
        $region175: #{mes_head_forward.3} parent=162 // pred_fallthru
          _
        %s5866 = smul.u32 16, %s81
        %p5867 = scmp.lt.s32.totalorder %s5866, 31
        %s5868 = scalar_select %p5867, %s5866, 31
        %s5869 = smul.addr %s5868, 8
        %s5870 = scalar_lea.vmem %s63, %s5869
        %s5871 = smul.u32 16, %s81
        %p5872 = scmp.lt.s32.totalorder %s5871, 31
        %s5873 = scalar_select %p5872, %s5871, 31
        %s5874 = smul.addr %s5873, 8
        %s5875 = scalar_lea.vmem %s65, %s5874
        // Predicated region
        $region176: #{mes_head_forward.3} parent=162 // pred_check
          %p5876 = pneg %p775
        $region177: #{mes_head_forward.3} parent=162 // pred_check_branch
          %5878 = sbr.rel (%p5876) target = $region179
        $region178: #{mes_head_forward.3} parent=162 // pred_region
          %s5879 = smul.u32 16, %s81
        $region179: #{mes_head_forward.3} parent=162 // pred_fallthru
          _
        // Predicated region
        $region180: #{mes_head_forward.3} parent=162 // pred_check
          %p5880 = pneg %p801
        $region181: #{mes_head_forward.3} parent=162 // pred_check_branch
          %5882 = sbr.rel (%p5880) target = $region183
        $region182: #{mes_head_forward.3} parent=162 // pred_region
          %s5883 = smul.u32 16, %s81
        $region183: #{mes_head_forward.3} parent=162 // pred_fallthru
          _
      $region163: #{mes_head_forward.3} parent=5 // pred_fallthru
        _
      %p5884 = scmp.le.s32.totalorder 2, %s72
      // Predicated region
      $region184: #{mes_head_forward.3} parent=5 // pred_check
        %p5885 = pneg %p5884
      $region185: #{mes_head_forward.3} parent=5 // pred_check_branch
        %5887 = sbr.rel (%p5885) target = $region187
      $region186: #{mes_head_forward.3} parent=5 // pred_region
        %s5888 = ssub.s32 %s72, 2
        // Predicated region
        $region188: #{mes_head_forward.3} parent=186 // pred_check
          %p5889 = pneg %p781
        $region189: #{mes_head_forward.3} parent=186 // pred_check_branch
          %5891 = sbr.rel (%p5889) target = $region191
        $region190: #{mes_head_forward.3} parent=186 // pred_region
          %s5892 = smul.u32 16, %s83
          %p5893 = scmp.lt.s32.totalorder %s5892, 31
          %s5894 = scalar_select %p5893, %s5892, 31
          %s5895 = smul.addr %s5894, 8
          %s5896 = scalar_lea.vmem %s63, %s5895
        $region191: #{mes_head_forward.3} parent=186 // pred_fallthru
          _
        // Predicated region
        $region192: #{mes_head_forward.3} parent=186 // pred_check
          %p5897 = pneg %p807
        $region193: #{mes_head_forward.3} parent=186 // pred_check_branch
          %5899 = sbr.rel (%p5897) target = $region195
        $region194: #{mes_head_forward.3} parent=186 // pred_region
          %s5900 = smul.u32 16, %s83
          %p5901 = scmp.lt.s32.totalorder %s5900, 31
          %s5902 = scalar_select %p5901, %s5900, 31
          %s5903 = smul.addr %s5902, 8
          %s5904 = scalar_lea.vmem %s65, %s5903
        $region195: #{mes_head_forward.3} parent=186 // pred_fallthru
          _
      $region187: #{mes_head_forward.3} parent=5 // pred_fallthru
        _
    $region6: #{mes_head_forward.3} parent=1 // loop_footer
      %s76 = sadd.s32 1, %s72
    $region7: #{mes_head_forward.3} parent=1 // loop_footer_branch
      %71 = sbr.rel target = $region3
    $region8: #{mes_head_forward.3} parent=1 // loop_exit
      _

</llo_original>
